<compile_context>
chip_gen: v5e
topology: v5e:2x2
jax: 0.10.0
libtpu: 0.0.40
codegen_flags: <defaults>
</compile_context>

<pallas_src>
import functools
import math

import jax
import jax.numpy as jnp
from jax import lax
from jax.experimental import pallas as pl
from jax.experimental.pallas import tpu as pltpu

GRID_SIZE = 4        # eKAN grid_size
SPLINE_ORDER = 4     # eKAN spline_order
NUM_BASES = GRID_SIZE + SPLINE_ORDER          # 8 basis functions per input dim
GRID_RANGE = (-1.0, 1.0)
_H = (GRID_RANGE[1] - GRID_RANGE[0]) / GRID_SIZE   # uniform knot spacing (0.5)

# Truncated-power coefficients of the degree-SPLINE_ORDER cardinal B-spline:
#   B_k(t) = sum_i coef[i] * max(t - i, 0)**k
# The i = k+1 term is identically zero once t is clamped to k+1, so only
# i = 0..k are kept (exact, per perf review).
_CARDINAL_COEFS = tuple(
    ((-1) ** i) * math.comb(SPLINE_ORDER + 1, i) / math.factorial(SPLINE_ORDER)
    for i in range(SPLINE_ORDER + 1))


def _knots():
    """Knot vector of the KANLinear grid (identical for every input feature)."""
    return [GRID_RANGE[0] + _H * j
            for j in range(-SPLINE_ORDER, GRID_SIZE + SPLINE_ORDER + 1)]  # 13 knots


def _ipow(v, n):
    """v**n for a small positive int n via repeated squaring (VPU muls only)."""
    result = None
    while n:
        if n & 1:
            result = v if result is None else result * v
        n >>= 1
        if n:
            v = v * v
    return result


# ----------------------------- Pallas kernel --------------------------------
def node_embed_kernel(x_ref, ctx_ref, attn_ref, cnt_ref,
                      wnu_ref, wcu_ref, rexp_ref, wb_ref, wsp_ref,
                      off_ref, bnu_ref, bcu_ref,
                      out_ref):
    dot = functools.partial(jnp.dot, preferred_element_type=jnp.float32)

    x = x_ref[...]                                    # [tn, F]
    ctx = ctx_ref[...].astype(jnp.float32)            # [tn, C*F]  lane-dense contexts
    attn = attn_ref[...]                              # [tn, C]
    cnt = cnt_ref[...]                                # [tn, 1]

    # -------- fused node/context/update transforms (wu folded upstream) ------
    inv_cnt = 1.0 / jnp.maximum(cnt, 1.0)             # exact; counts are tiny ints
    attn_sum = jnp.sum(attn, axis=-1, keepdims=True)  # sum_c attn_c, [tn, 1]
    # in-kernel lane expansion of attention: [tn, C] @ [C, C*F] 0/1 matrix
    attn_rep = dot(attn, rexp_ref[...])                # [tn, C*F]
    # sum_c attn_c * (ctx_c @ (Wc@Wu)) == (attn-weighted flat ctx) @ tiled(Wc@Wu)
    ctx_proj = dot(ctx * attn_rep, wcu_ref[...])       # [tn, D], K = C*F
    u = (dot(x, wnu_ref[...])                          # x @ (Wn@Wu)
         + (ctx_proj + bcu_ref[...] * attn_sum) * inv_cnt
         + bnu_ref[...])                               # [tn, D]

    # ------------------------ eKAN KANLinear(D, D) ---------------------------
    base = dot(u * jax.nn.sigmoid(u), wb_ref[...])     # silu branch, [tn, D]

    # B-spline branch, lane-dense: x_all[:, j*D + d] = (u[:, d] - g_j) / h.
    # Structural replication is done with exact lane copies (no MXU pass).
    u_rep = jnp.concatenate([u] * NUM_BASES, axis=-1)  # [tn, NUM_BASES*D]
    x_all = u_rep * (1.0 / _H) + off_ref[...]
    x_all = jnp.minimum(x_all, float(SPLINE_ORDER + 1))   # past-support clamp (exact 0 there)
    bases = None
    for i, coef in enumerate(_CARDINAL_COEFS):             # truncated powers, unrolled
        t = jnp.maximum(x_all - float(i), 0.0) if i else jnp.maximum(x_all, 0.0)
        term = coef * _ipow(t, SPLINE_ORDER)
        bases = term if bases is None else bases + term    # [tn, NUM_BASES*D]
    spline = dot(bases, wsp_ref[...])                      # single fused K = NUM_BASES*D matmul

    kan = base + spline
    out_ref[...] = jnp.where(cnt > 0.0, kan, x)             # nodes w/o contexts pass through


# ------------------------------- wrapper -------------------------------------
def node_embedding_layer(x, contexts, attn, counts, params, *, tile_n=512,
                         ctx_dtype=jnp.float32):
    n, f = x.shape
    c = contexts.shape[1]
    d = params["wu"].shape[1]
    assert f == d, "0-context passthrough requires num_features == output_dim"
    assert tile_n % 8 == 0

    # pad node dimension to a multiple of tile_n (padded rows have count == 0)
    pad = (-n) % tile_n
    if pad:
        x = jnp.pad(x, ((0, pad), (0, 0)))
        contexts = jnp.pad(contexts, ((0, pad), (0, 0), (0, 0)))
        attn = jnp.pad(attn, ((0, pad), (0, 0)))
        counts = jnp.pad(counts, ((0, pad), (0, 0)))
    n_pad = n + pad

    # lane-dense context layout (layout plumbing only, outside the kernel);
    # ctx_dtype=jnp.bfloat16 halves the dominant HBM stream (useful on v5e).
    ctx_flat = contexts.reshape(n_pad, c * f).astype(ctx_dtype)     # [N, C*F]

    # fold update_transform into the upstream weights (exact reassociation;
    # done once at HIGHEST precision so no bf16 truncation enters the weights)
    hp = functools.partial(jnp.dot, precision=lax.Precision.HIGHEST)
    wnu = hp(params["wn"], params["wu"])                            # [F, D]
    wcu_rep = jnp.tile(hp(params["wc"], params["wu"]), (c, 1))      # [C*F, D]
    bcu = hp(params["bc"], params["wu"])                            # [1, D]
    bnu = hp(params["bn"], params["wu"]) + params["bu"]             # [1, D]
    wsp_flat = params["wsp"].reshape(NUM_BASES * d, d)              # [NB*D, D]
    # [C, C*F] 0/1 replication matrix: (attn @ rexp)[:, c*F + k] = attn[:, c]
    rexp = jnp.repeat(jnp.eye(c, dtype=jnp.float32), f, axis=1)     # [C, C*F]
    off = (SPLINE_ORDER - GRID_RANGE[0] / _H
           - jnp.repeat(jnp.arange(NUM_BASES), d)).astype(jnp.float32)[None, :]  # [1, NB*D]

    weights = (wnu, wcu_rep, rexp, params["wb"], wsp_flat, off, bnu, bcu)

    def row_spec(width):
        return pl.BlockSpec((tile_n, width), lambda i: (i, 0))

    def const_spec(arr):
        return pl.BlockSpec(arr.shape, lambda i: (0, 0))

    out = pl.pallas_call(
        node_embed_kernel,
        out_shape=jax.ShapeDtypeStruct((n_pad, d), jnp.float32),
        grid=(n_pad // tile_n,),
        in_specs=[row_spec(f), row_spec(c * f), row_spec(c), row_spec(1)]
                 + [const_spec(w) for w in weights],
        out_specs=pl.BlockSpec((tile_n, d), lambda i: (i, 0)),
        compiler_params=pltpu.CompilerParams(
            dimension_semantics=("parallel",)),
    )(x, ctx_flat, attn, counts, *weights)
    return out[:n]


# --------------------------- pure-JAX reference -------------------------------
def _bspline_bases_ref(u):
    g = jnp.array(_knots(), dtype=u.dtype)
    x = u[..., None]
    bases = jnp.where((x >= g[:-1]) & (x < g[1:]), 1.0, 0.0)
    for k in range(1, SPLINE_ORDER + 1):
        bases = ((x - g[:-(k + 1)]) / (g[k:-1] - g[:-(k + 1)]) * bases[..., :-1]
                 + (g[k + 1:] - x) / (g[k + 1:] - g[1:-k]) * bases[..., 1:])
    return bases  # [..., NUM_BASES]


def reference(x, contexts, attn, counts, params):
    x_t = x @ params["wn"] + params["bn"]
    ctx_t = jnp.einsum("ncf,fh->nch", contexts, params["wc"]) + params["bc"]
    weighted = ctx_t * attn[:, :, None]
    agg = weighted.sum(axis=1) / jnp.maximum(counts, 1.0)
    u = (x_t + agg) @ params["wu"] + params["bu"]
    base = jax.nn.silu(u) @ params["wb"]
    spline = jnp.einsum("ndk,kdo->no", _bspline_bases_ref(u), params["wsp"])
    return jnp.where(counts > 0.0, base + spline, x)


# --------------------------------- main ---------------------------------------
if __name__ == "__main__":
    N, F, C = 1024, 32, 4         # nodes, num_features(=hidden=output), max contexts
    H = D = F
    TILE_N = 512                  # 2 grid steps -> both v7x TensorCores get work

    key = jax.random.PRNGKey(0)
    keys = jax.random.split(key, 12)

    def linear_init(kw, kb, fan_in, fan_out):
        bound = 1.0 / (fan_in ** 0.5)
        w = jax.random.uniform(kw, (fan_in, fan_out), jnp.float32, -bound, bound)
        b = jax.random.uniform(kb, (1, fan_out), jnp.float32, -bound, bound)
        return w, b

    wn, bn = linear_init(keys[0], keys[1], F, H)     # node_transform
    wc, bc = linear_init(keys[2], keys[3], F, H)     # context_transform
    wu, bu = linear_init(keys[4], keys[5], H, D)     # update_transform
    # eKAN KANLinear(D, D): base weight + (spline_weight * spline_scaler)
    wb = jax.random.uniform(keys[6], (D, D), jnp.float32, -1.0, 1.0) / (D ** 0.5)
    wsp = 0.1 * jax.random.normal(keys[7], (NUM_BASES, D, D), jnp.float32)
    params = dict(wn=wn, bn=bn, wc=wc, bc=bc, wu=wu, bu=bu, wb=wb, wsp=wsp)

    # inputs: dense padded representation of the ragged context / attention maps
    x = jax.random.normal(keys[8], (N, F), jnp.float32)
    contexts_raw = jax.random.normal(keys[9], (N, C, F), jnp.float32)
    attn_raw = jax.random.uniform(keys[10], (N, C), jnp.float32)
    counts_int = jax.random.randint(keys[11], (N,), 0, C + 1)      # some nodes get 0 contexts
    slot = jnp.arange(C)[None, :]
    mask = (slot < counts_int[:, None]).astype(jnp.float32)        # [N, C]
    contexts = contexts_raw * mask[:, :, None]
    attn = attn_raw * mask
    counts = counts_int.astype(jnp.float32)[:, None]               # [N, 1]

    out = node_embedding_layer(x, contexts, attn, counts, params, tile_n=TILE_N)
    out = jax.block_until_ready(out)

    ref = reference(x, contexts, attn, counts, params)
    err = float(jnp.max(jnp.abs(out - ref)))
    assert out.shape == (N, D) and out.dtype == jnp.float32
    assert jnp.all(jnp.isfinite(out))
    # matmuls run at default MXU precision -> tolerance accounts for bf16 operands
    assert jnp.allclose(out, ref, atol=3e-2, rtol=3e-2), err

    print("KERNEL_OK")
</pallas_src>

<mosaic_0001>
module attributes {stable_mosaic.version = 11 : i64} {
  func.func @node_embed_kernel(%arg0: i32, %arg1: memref<512x32xf32, #tpu.memory_space<vmem>>, %arg2: memref<512x128xf32, #tpu.memory_space<vmem>>, %arg3: memref<512x4xf32, #tpu.memory_space<vmem>>, %arg4: memref<512x1xf32, #tpu.memory_space<vmem>>, %arg5: memref<32x32xf32, #tpu.memory_space<vmem>>, %arg6: memref<128x32xf32, #tpu.memory_space<vmem>>, %arg7: memref<4x128xf32, #tpu.memory_space<vmem>>, %arg8: memref<32x32xf32, #tpu.memory_space<vmem>>, %arg9: memref<256x32xf32, #tpu.memory_space<vmem>>, %arg10: memref<1x256xf32, #tpu.memory_space<vmem>>, %arg11: memref<1x32xf32, #tpu.memory_space<vmem>>, %arg12: memref<1x32xf32, #tpu.memory_space<vmem>>, %arg13: memref<512x32xf32, #tpu.memory_space<vmem>>) attributes {dimension_semantics = [#tpu.dimension_semantics<parallel>], iteration_bounds = array<i64: 2>, scalar_prefetch = 0 : i64, scratch_operands = 0 : i64, tpu.core_type = #tpu.core_type<tc>, window_params = [{transform_indices = @transform_0, window_bounds = array<i64: 512, 32>}, {transform_indices = @transform_1, window_bounds = array<i64: 512, 128>}, {transform_indices = @transform_2, window_bounds = array<i64: 512, 4>}, {transform_indices = @transform_3, window_bounds = array<i64: 512, 1>}, {pipeline_mode = #tpu.pipeline_mode<synchronous>, transform_indices = @transform_4, window_bounds = array<i64: 32, 32>}, {pipeline_mode = #tpu.pipeline_mode<synchronous>, transform_indices = @transform_5, window_bounds = array<i64: 128, 32>}, {pipeline_mode = #tpu.pipeline_mode<synchronous>, transform_indices = @transform_6, window_bounds = array<i64: 4, 128>}, {pipeline_mode = #tpu.pipeline_mode<synchronous>, transform_indices = @transform_7, window_bounds = array<i64: 32, 32>}, {pipeline_mode = #tpu.pipeline_mode<synchronous>, transform_indices = @transform_8, window_bounds = array<i64: 256, 32>}, {pipeline_mode = #tpu.pipeline_mode<synchronous>, transform_indices = @transform_9, window_bounds = array<i64: 1, 256>}, {pipeline_mode = #tpu.pipeline_mode<synchronous>, transform_indices = @transform_10, window_bounds = array<i64: 1, 32>}, {pipeline_mode = #tpu.pipeline_mode<synchronous>, transform_indices = @transform_11, window_bounds = array<i64: 1, 32>}, {transform_indices = @transform_12, window_bounds = array<i64: 512, 32>}]} {
    %c0 = arith.constant 0 : index
    %c0_0 = arith.constant 0 : index
    %0 = vector.load %arg1[%c0, %c0_0] : memref<512x32xf32, #tpu.memory_space<vmem>>, vector<512x32xf32>
    %c0_1 = arith.constant 0 : index
    %c0_2 = arith.constant 0 : index
    %1 = vector.load %arg2[%c0_1, %c0_2] : memref<512x128xf32, #tpu.memory_space<vmem>>, vector<512x128xf32>
    %c0_3 = arith.constant 0 : index
    %c0_4 = arith.constant 0 : index
    %2 = vector.load %arg3[%c0_3, %c0_4] : memref<512x4xf32, #tpu.memory_space<vmem>>, vector<512x4xf32>
    %c0_5 = arith.constant 0 : index
    %c0_6 = arith.constant 0 : index
    %3 = vector.load %arg4[%c0_5, %c0_6] : memref<512x1xf32, #tpu.memory_space<vmem>>, vector<512x1xf32>
    %cst = arith.constant 1.000000e+00 : f32
    %4 = vector.broadcast %cst : f32 to vector<512x1xf32>
    %5 = arith.maximumf %3, %4 : vector<512x1xf32>
    %cst_7 = arith.constant 1.000000e+00 : f32
    %6 = vector.broadcast %cst_7 : f32 to vector<512x1xf32>
    %7 = arith.divf %6, %5 : vector<512x1xf32>
    %cst_8 = arith.constant dense<0.000000e+00> : vector<512xf32>
    %8 = vector.multi_reduction <add>, %2, %cst_8 [1] : vector<512x4xf32> to vector<512xf32>
    %9 = vector.shape_cast %8 : vector<512xf32> to vector<512x1xf32>
    %c0_9 = arith.constant 0 : index
    %c0_10 = arith.constant 0 : index
    %10 = vector.load %arg7[%c0_9, %c0_10] : memref<4x128xf32, #tpu.memory_space<vmem>>, vector<4x128xf32>
    %cst_11 = arith.constant dense<0.000000e+00> : vector<512x128xf32>
    %11 = tpu.matmul %2, %10, %cst_11 {dimension_numbers = #tpu.dot_dimension_numbers<[1], [0], [0], [1], [0, 0, 1, 1], [], []>} : vector<512x4xf32>, vector<4x128xf32>, vector<512x128xf32> -> vector<512x128xf32>
    %12 = arith.mulf %1, %11 : vector<512x128xf32>
    %c0_12 = arith.constant 0 : index
    %c0_13 = arith.constant 0 : index
    %13 = vector.load %arg6[%c0_12, %c0_13] : memref<128x32xf32, #tpu.memory_space<vmem>>, vector<128x32xf32>
    %cst_14 = arith.constant dense<0.000000e+00> : vector<512x32xf32>
    %14 = tpu.matmul %12, %13, %cst_14 {dimension_numbers = #tpu.dot_dimension_numbers<[1], [0], [0], [1], [0, 0, 1, 1], [], []>} : vector<512x128xf32>, vector<128x32xf32>, vector<512x32xf32> -> vector<512x32xf32>
    %c0_15 = arith.constant 0 : index
    %c0_16 = arith.constant 0 : index
    %15 = vector.load %arg5[%c0_15, %c0_16] : memref<32x32xf32, #tpu.memory_space<vmem>>, vector<32x32xf32>
    %cst_17 = arith.constant dense<0.000000e+00> : vector<512x32xf32>
    %16 = tpu.matmul %0, %15, %cst_17 {dimension_numbers = #tpu.dot_dimension_numbers<[1], [0], [0], [1], [0, 0, 1, 1], [], []>} : vector<512x32xf32>, vector<32x32xf32>, vector<512x32xf32> -> vector<512x32xf32>
    %c0_18 = arith.constant 0 : index
    %c0_19 = arith.constant 0 : index
    %17 = vector.load %arg12[%c0_18, %c0_19] : memref<1x32xf32, #tpu.memory_space<vmem>>, vector<1x32xf32>
    %18 = vector.broadcast %17 : vector<1x32xf32> to vector<512x32xf32>
    %19 = vector.broadcast %9 : vector<512x1xf32> to vector<512x32xf32>
    %20 = arith.mulf %18, %19 : vector<512x32xf32>
    %21 = arith.addf %14, %20 : vector<512x32xf32>
    %22 = vector.broadcast %7 : vector<512x1xf32> to vector<512x32xf32>
    %23 = arith.mulf %21, %22 : vector<512x32xf32>
    %24 = arith.addf %16, %23 : vector<512x32xf32>
    %c0_20 = arith.constant 0 : index
    %c0_21 = arith.constant 0 : index
    %25 = vector.load %arg11[%c0_20, %c0_21] : memref<1x32xf32, #tpu.memory_space<vmem>>, vector<1x32xf32>
    %26 = vector.broadcast %25 : vector<1x32xf32> to vector<512x32xf32>
    %27 = arith.addf %24, %26 : vector<512x32xf32>
    %28 = arith.negf %27 : vector<512x32xf32>
    %29 = math.exp %28 : vector<512x32xf32>
    %cst_22 = arith.constant 1.000000e+00 : f32
    %30 = vector.broadcast %cst_22 : f32 to vector<512x32xf32>
    %31 = arith.addf %30, %29 : vector<512x32xf32>
    %32 = arith.divf %30, %31 : vector<512x32xf32>
    %33 = arith.mulf %27, %32 : vector<512x32xf32>
    %c0_23 = arith.constant 0 : index
    %c0_24 = arith.constant 0 : index
    %34 = vector.load %arg8[%c0_23, %c0_24] : memref<32x32xf32, #tpu.memory_space<vmem>>, vector<32x32xf32>
    %cst_25 = arith.constant dense<0.000000e+00> : vector<512x32xf32>
    %35 = tpu.matmul %33, %34, %cst_25 {dimension_numbers = #tpu.dot_dimension_numbers<[1], [0], [0], [1], [0, 0, 1, 1], [], []>} : vector<512x32xf32>, vector<32x32xf32>, vector<512x32xf32> -> vector<512x32xf32>
    %36 = tpu.concatenate %27, %27, %27, %27, %27, %27, %27, %27 in 1 : vector<512x32xf32>, vector<512x32xf32>, vector<512x32xf32>, vector<512x32xf32>, vector<512x32xf32>, vector<512x32xf32>, vector<512x32xf32>, vector<512x32xf32> -> vector<512x256xf32>
    %cst_26 = arith.constant 2.000000e+00 : f32
    %37 = vector.broadcast %cst_26 : f32 to vector<512x256xf32>
    %38 = arith.mulf %36, %37 : vector<512x256xf32>
    %c0_27 = arith.constant 0 : index
    %c0_28 = arith.constant 0 : index
    %39 = vector.load %arg10[%c0_27, %c0_28] : memref<1x256xf32, #tpu.memory_space<vmem>>, vector<1x256xf32>
    %40 = vector.broadcast %39 : vector<1x256xf32> to vector<512x256xf32>
    %41 = arith.addf %38, %40 : vector<512x256xf32>
    %cst_29 = arith.constant 5.000000e+00 : f32
    %42 = vector.broadcast %cst_29 : f32 to vector<512x256xf32>
    %43 = arith.minimumf %41, %42 : vector<512x256xf32>
    %cst_30 = arith.constant 0.000000e+00 : f32
    %44 = vector.broadcast %cst_30 : f32 to vector<512x256xf32>
    %45 = arith.maximumf %43, %44 : vector<512x256xf32>
    %46 = arith.mulf %45, %45 : vector<512x256xf32>
    %47 = arith.mulf %46, %46 : vector<512x256xf32>
    %cst_31 = arith.constant 0.0416666679 : f32
    %48 = vector.broadcast %cst_31 : f32 to vector<512x256xf32>
    %49 = arith.mulf %48, %47 : vector<512x256xf32>
    %cst_32 = arith.constant 1.000000e+00 : f32
    %50 = vector.broadcast %cst_32 : f32 to vector<512x256xf32>
    %51 = arith.subf %43, %50 : vector<512x256xf32>
    %cst_33 = arith.constant 0.000000e+00 : f32
    %52 = vector.broadcast %cst_33 : f32 to vector<512x256xf32>
    %53 = arith.maximumf %51, %52 : vector<512x256xf32>
    %54 = arith.mulf %53, %53 : vector<512x256xf32>
    %55 = arith.mulf %54, %54 : vector<512x256xf32>
    %cst_34 = arith.constant -0.208333328 : f32
    %56 = vector.broadcast %cst_34 : f32 to vector<512x256xf32>
    %57 = arith.mulf %56, %55 : vector<512x256xf32>
    %58 = arith.addf %49, %57 : vector<512x256xf32>
    %cst_35 = arith.constant 2.000000e+00 : f32
    %59 = vector.broadcast %cst_35 : f32 to vector<512x256xf32>
    %60 = arith.subf %43, %59 : vector<512x256xf32>
    %cst_36 = arith.constant 0.000000e+00 : f32
    %61 = vector.broadcast %cst_36 : f32 to vector<512x256xf32>
    %62 = arith.maximumf %60, %61 : vector<512x256xf32>
    %63 = arith.mulf %62, %62 : vector<512x256xf32>
    %64 = arith.mulf %63, %63 : vector<512x256xf32>
    %cst_37 = arith.constant 0.416666657 : f32
    %65 = vector.broadcast %cst_37 : f32 to vector<512x256xf32>
    %66 = arith.mulf %65, %64 : vector<512x256xf32>
    %67 = arith.addf %58, %66 : vector<512x256xf32>
    %cst_38 = arith.constant 3.000000e+00 : f32
    %68 = vector.broadcast %cst_38 : f32 to vector<512x256xf32>
    %69 = arith.subf %43, %68 : vector<512x256xf32>
    %cst_39 = arith.constant 0.000000e+00 : f32
    %70 = vector.broadcast %cst_39 : f32 to vector<512x256xf32>
    %71 = arith.maximumf %69, %70 : vector<512x256xf32>
    %72 = arith.mulf %71, %71 : vector<512x256xf32>
    %73 = arith.mulf %72, %72 : vector<512x256xf32>
    %cst_40 = arith.constant -0.416666657 : f32
    %74 = vector.broadcast %cst_40 : f32 to vector<512x256xf32>
    %75 = arith.mulf %74, %73 : vector<512x256xf32>
    %76 = arith.addf %67, %75 : vector<512x256xf32>
    %cst_41 = arith.constant 4.000000e+00 : f32
    %77 = vector.broadcast %cst_41 : f32 to vector<512x256xf32>
    %78 = arith.subf %43, %77 : vector<512x256xf32>
    %cst_42 = arith.constant 0.000000e+00 : f32
    %79 = vector.broadcast %cst_42 : f32 to vector<512x256xf32>
    %80 = arith.maximumf %78, %79 : vector<512x256xf32>
    %81 = arith.mulf %80, %80 : vector<512x256xf32>
    %82 = arith.mulf %81, %81 : vector<512x256xf32>
    %cst_43 = arith.constant 0.208333328 : f32
    %83 = vector.broadcast %cst_43 : f32 to vector<512x256xf32>
    %84 = arith.mulf %83, %82 : vector<512x256xf32>
    %85 = arith.addf %76, %84 : vector<512x256xf32>
    %c0_44 = arith.constant 0 : index
    %c0_45 = arith.constant 0 : index
    %86 = vector.load %arg9[%c0_44, %c0_45] : memref<256x32xf32, #tpu.memory_space<vmem>>, vector<256x32xf32>
    %cst_46 = arith.constant dense<0.000000e+00> : vector<512x32xf32>
    %87 = tpu.matmul %85, %86, %cst_46 {dimension_numbers = #tpu.dot_dimension_numbers<[1], [0], [0], [1], [0, 0, 1, 1], [], []>} : vector<512x256xf32>, vector<256x32xf32>, vector<512x32xf32> -> vector<512x32xf32>
    %88 = arith.addf %35, %87 : vector<512x32xf32>
    %cst_47 = arith.constant 0.000000e+00 : f32
    %89 = vector.broadcast %cst_47 : f32 to vector<512x1xf32>
    %90 = arith.cmpf ogt, %3, %89 : vector<512x1xf32>
    %91 = vector.shape_cast %90 : vector<512x1xi1> to vector<512x1xi1>
    %92 = vector.broadcast %91 : vector<512x1xi1> to vector<512x32xi1>
    %93 = arith.select %92, %88, %0 : vector<512x32xi1>, vector<512x32xf32>
    %c0_48 = arith.constant 0 : index
    %c0_49 = arith.constant 0 : index
    %94 = vector.load %arg13[%c0_48, %c0_49] : memref<512x32xf32, #tpu.memory_space<vmem>>, vector<512x32xf32>
    tpu.vector_store %arg13[%c0_48, %c0_49], %93 {strides = array<i32>} : memref<512x32xf32, #tpu.memory_space<vmem>>, vector<512x32xf32>,
    return
  }
  func.func @transform_0(%arg0: i32) -> (i32, i32) {
    %c0_i32 = arith.constant 0 : i32
    %c0_i32_0 = arith.constant 0 : i32
    return %arg0, %c0_i32 : i32, i32
  }
  func.func @transform_1(%arg0: i32) -> (i32, i32) {
    %c0_i32 = arith.constant 0 : i32
    %c0_i32_0 = arith.constant 0 : i32
    return %arg0, %c0_i32 : i32, i32
  }
  func.func @transform_2(%arg0: i32) -> (i32, i32) {
    %c0_i32 = arith.constant 0 : i32
    %c0_i32_0 = arith.constant 0 : i32
    return %arg0, %c0_i32 : i32, i32
  }
  func.func @transform_3(%arg0: i32) -> (i32, i32) {
    %c0_i32 = arith.constant 0 : i32
    %c0_i32_0 = arith.constant 0 : i32
    return %arg0, %c0_i32 : i32, i32
  }
  func.func @transform_4(%arg0: i32) -> (i32, i32) {
    %c0_i32 = arith.constant 0 : i32
    %c0_i32_0 = arith.constant 0 : i32
    %c0_i32_1 = arith.constant 0 : i32
    return %c0_i32, %c0_i32_0 : i32, i32
  }
  func.func @transform_5(%arg0: i32) -> (i32, i32) {
    %c0_i32 = arith.constant 0 : i32
    %c0_i32_0 = arith.constant 0 : i32
    %c0_i32_1 = arith.constant 0 : i32
    return %c0_i32, %c0_i32_0 : i32, i32
  }
  func.func @transform_6(%arg0: i32) -> (i32, i32) {
    %c0_i32 = arith.constant 0 : i32
    %c0_i32_0 = arith.constant 0 : i32
    %c0_i32_1 = arith.constant 0 : i32
    return %c0_i32, %c0_i32_0 : i32, i32
  }
  func.func @transform_7(%arg0: i32) -> (i32, i32) {
    %c0_i32 = arith.constant 0 : i32
    %c0_i32_0 = arith.constant 0 : i32
    %c0_i32_1 = arith.constant 0 : i32
    return %c0_i32, %c0_i32_0 : i32, i32
  }
  func.func @transform_8(%arg0: i32) -> (i32, i32) {
    %c0_i32 = arith.constant 0 : i32
    %c0_i32_0 = arith.constant 0 : i32
    %c0_i32_1 = arith.constant 0 : i32
    return %c0_i32, %c0_i32_0 : i32, i32
  }
  func.func @transform_9(%arg0: i32) -> (i32, i32) {
    %c0_i32 = arith.constant 0 : i32
    %c0_i32_0 = arith.constant 0 : i32
    %c0_i32_1 = arith.constant 0 : i32
    return %c0_i32, %c0_i32_0 : i32, i32
  }
  func.func @transform_10(%arg0: i32) -> (i32, i32) {
    %c0_i32 = arith.constant 0 : i32
    %c0_i32_0 = arith.constant 0 : i32
    %c0_i32_1 = arith.constant 0 : i32
    return %c0_i32, %c0_i32_0 : i32, i32
  }
  func.func @transform_11(%arg0: i32) -> (i32, i32) {
    %c0_i32 = arith.constant 0 : i32
    %c0_i32_0 = arith.constant 0 : i32
    %c0_i32_1 = arith.constant 0 : i32
    return %c0_i32, %c0_i32_0 : i32, i32
  }
  func.func @transform_12(%arg0: i32) -> (i32, i32) {
    %c0_i32 = arith.constant 0 : i32
    %c0_i32_0 = arith.constant 0 : i32
    return %arg0, %c0_i32 : i32, i32
  }
}

</mosaic_0001>

<llo_original>
// kernel: tpu_custom_call.1
$region0: #{tpu_custom_call.1}
  #allocation0 [shape = 'u32[]', space=smem, size = 0x4, offset = 0x4, fixed_abs, tag = 'smem constant byte address 0x4 - core index']
  #allocation1 [shape = 'u32[72,128]{1,0:T(1,128)}', space=vmem, size = 0x9000, scoped, tag = 'internal scratch']
  %s0 = inlined_call_operand.vmem [shape: f32[1024,32], index: 0, kind: input, shape index: {}]
  %s1 = inlined_call_operand.vmem [shape: f32[1024,128], index: 1, kind: input, shape index: {}]
  %s2 = inlined_call_operand.vmem [shape: f32[1024,4], index: 2, kind: input, shape index: {}]
  %s3 = inlined_call_operand.vmem [shape: f32[1024,1], index: 3, kind: input, shape index: {}]
  %s4 = inlined_call_operand.vmem [shape: f32[32,32], index: 4, kind: input, shape index: {}]
  %s5 = inlined_call_operand.vmem [shape: f32[128,32], index: 5, kind: input, shape index: {}]
  %s6 = inlined_call_operand.vmem [shape: f32[4,128], index: 6, kind: input, shape index: {}]
  %s7 = inlined_call_operand.vmem [shape: f32[32,32], index: 7, kind: input, shape index: {}]
  %s8 = inlined_call_operand.vmem [shape: f32[256,32], index: 8, kind: input, shape index: {}]
  %s9 = inlined_call_operand.vmem [shape: f32[1,256], index: 9, kind: input, shape index: {}]
  %s10 = inlined_call_operand.vmem [shape: f32[1,32], index: 10, kind: input, shape index: {}]
  %s11 = inlined_call_operand.vmem [shape: f32[1,32], index: 11, kind: input, shape index: {}]
  %s12 = inlined_call_operand.vmem [shape: f32[1024,32], index: 12, kind: output, shape index: {}]
  %s13 = sld [smem:[#allocation0]]
  $region81: #{tpu_custom_call.1} parent=0
    _
  %s15 = ssub.s32 1, %s13
  %s16 = scalar_select 0, %s15, %s13
  loop: start=0, step=1, limit=4
  $region2: #{tpu_custom_call.1} parent=0 // loop_pre_header
    _
  $region3: #{tpu_custom_call.1} parent=0 // loop_header
    %s18 = sphi 0, %s22
    %p19 = scmp.ge.s32.totalorder %s18, 4
    %s28 = sphi 0, %s30
    %s31 = sphi 0, %s28
    %s32 = sphi 0, %s31
    %s48 = sphi 0, %s32
    %s54 = sphi 0, %s56
    %s57 = sphi 0, %s54
    %s58 = sphi 0, %s57
    %s74 = sphi 0, %s58
    %s80 = sphi 0, %s82
    %s83 = sphi 0, %s80
    %s84 = sphi 0, %s83
    %s100 = sphi 0, %s84
    %s106 = sphi 0, %s108
    %s109 = sphi 0, %s106
    %s110 = sphi 0, %s109
    %s126 = sphi 0, %s110
    %s130 = sphi 0, %s130
    %s132 = sphi 0, %s130
    %s133 = sphi 0, %s132
    %s147 = sphi 0, %s133
    %s151 = sphi 0, %s151
    %s153 = sphi 0, %s151
    %s154 = sphi 0, %s153
    %s168 = sphi 0, %s154
    %s172 = sphi 0, %s172
    %s174 = sphi 0, %s172
    %s175 = sphi 0, %s174
    %s189 = sphi 0, %s175
    %s193 = sphi 0, %s193
    %s195 = sphi 0, %s193
    %s196 = sphi 0, %s195
    %s210 = sphi 0, %s196
    %s214 = sphi 0, %s214
    %s216 = sphi 0, %s214
    %s217 = sphi 0, %s216
    %s231 = sphi 0, %s217
    %s235 = sphi 0, %s235
    %s237 = sphi 0, %s235
    %s238 = sphi 0, %s237
    %s252 = sphi 0, %s238
    %s256 = sphi 0, %s256
    %s258 = sphi 0, %s256
    %s259 = sphi 0, %s258
    %s273 = sphi 0, %s259
    %s277 = sphi 0, %s277
    %s279 = sphi 0, %s277
    %s280 = sphi 0, %s279
    %s294 = sphi 0, %s280
    %s300 = sphi 0, %s302
    %s303 = sphi 0, %s300
    %s304 = sphi 0, %s303
    %s320 = sphi 0, %s304
  $region4: #{tpu_custom_call.1} parent=0 // loop_header_branch
    %21 = sbr.rel (%p19) target = $region8
  $region5: #{tpu_custom_call.1} parent=0 // loop_body
    %s23 = ssub.s32 %s18, 1
    %s24 = ssub.s32 %s18, 2
    %s25 = sadd.s32 %s18, 1
    %s26 = ssub.s32 %s18, %s25
    %p27 = scmp.eq.s32.totalorder %s26, 0
    %s29 = sadd.s32 %s28, 1
    %s30 = scalar_select %p27, %s28, %s29
    %p33 = pneg %p27
    %p34 = scmp.eq.s32.totalorder %s18, 1
    %p35 = por %p33, %p34
    %p36 = scmp.ne.s32.totalorder %s28, %s31
    %p37 = scmp.eq.s32.totalorder %s18, 0
    %p38 = por %p36, %p37
    %p39 = scmp.ne.s32.totalorder %s28, %s31
    %p40 = scmp.eq.s32.totalorder %s23, 1
    %p41 = por %p39, %p40
    %p42 = scmp.ne.s32.totalorder %s31, %s32
    %p43 = scmp.eq.s32.totalorder %s23, 0
    %p44 = por %p42, %p43
    %p45 = scmp.ne.s32.totalorder %s31, %s32
    %p46 = scmp.eq.s32.totalorder %s24, 1
    %p47 = por %p45, %p46
    %p49 = scmp.ne.s32.totalorder %s32, %s48
    %p50 = scmp.eq.s32.totalorder %s24, 0
    %p51 = por %p49, %p50
    %s52 = ssub.s32 %s18, %s25
    %p53 = scmp.eq.s32.totalorder %s52, 0
    %s55 = sadd.s32 %s54, 1
    %s56 = scalar_select %p53, %s54, %s55
    %p59 = pneg %p53
    %p60 = scmp.eq.s32.totalorder %s18, 1
    %p61 = por %p59, %p60
    %p62 = scmp.ne.s32.totalorder %s54, %s57
    %p63 = scmp.eq.s32.totalorder %s18, 0
    %p64 = por %p62, %p63
    %p65 = scmp.ne.s32.totalorder %s54, %s57
    %p66 = scmp.eq.s32.totalorder %s23, 1
    %p67 = por %p65, %p66
    %p68 = scmp.ne.s32.totalorder %s57, %s58
    %p69 = scmp.eq.s32.totalorder %s23, 0
    %p70 = por %p68, %p69
    %p71 = scmp.ne.s32.totalorder %s57, %s58
    %p72 = scmp.eq.s32.totalorder %s24, 1
    %p73 = por %p71, %p72
    %p75 = scmp.ne.s32.totalorder %s58, %s74
    %p76 = scmp.eq.s32.totalorder %s24, 0
    %p77 = por %p75, %p76
    %s78 = ssub.s32 %s18, %s25
    %p79 = scmp.eq.s32.totalorder %s78, 0
    %s81 = sadd.s32 %s80, 1
    %s82 = scalar_select %p79, %s80, %s81
    %p85 = pneg %p79
    %p86 = scmp.eq.s32.totalorder %s18, 1
    %p87 = por %p85, %p86
    %p88 = scmp.ne.s32.totalorder %s80, %s83
    %p89 = scmp.eq.s32.totalorder %s18, 0
    %p90 = por %p88, %p89
    %p91 = scmp.ne.s32.totalorder %s80, %s83
    %p92 = scmp.eq.s32.totalorder %s23, 1
    %p93 = por %p91, %p92
    %p94 = scmp.ne.s32.totalorder %s83, %s84
    %p95 = scmp.eq.s32.totalorder %s23, 0
    %p96 = por %p94, %p95
    %p97 = scmp.ne.s32.totalorder %s83, %s84
    %p98 = scmp.eq.s32.totalorder %s24, 1
    %p99 = por %p97, %p98
    %p101 = scmp.ne.s32.totalorder %s84, %s100
    %p102 = scmp.eq.s32.totalorder %s24, 0
    %p103 = por %p101, %p102
    %s104 = ssub.s32 %s18, %s25
    %p105 = scmp.eq.s32.totalorder %s104, 0
    %s107 = sadd.s32 %s106, 1
    %s108 = scalar_select %p105, %s106, %s107
    %p111 = pneg %p105
    %p112 = scmp.eq.s32.totalorder %s18, 1
    %p113 = por %p111, %p112
    %p114 = scmp.ne.s32.totalorder %s106, %s109
    %p115 = scmp.eq.s32.totalorder %s18, 0
    %p116 = por %p114, %p115
    %p117 = scmp.ne.s32.totalorder %s106, %s109
    %p118 = scmp.eq.s32.totalorder %s23, 1
    %p119 = por %p117, %p118
    %p120 = scmp.ne.s32.totalorder %s109, %s110
    %p121 = scmp.eq.s32.totalorder %s23, 0
    %p122 = por %p120, %p121
    %p123 = scmp.ne.s32.totalorder %s109, %s110
    %p124 = scmp.eq.s32.totalorder %s24, 1
    %p125 = por %p123, %p124
    %p127 = scmp.ne.s32.totalorder %s110, %s126
    %p128 = scmp.eq.s32.totalorder %s24, 0
    %p129 = por %p127, %p128
    %s131 = sadd.s32 %s130, 1
    %p134 = scmp.eq.s32.totalorder %s18, 1
    %p135 = scmp.ne.s32.totalorder %s130, %s132
    %p136 = scmp.eq.s32.totalorder %s18, 0
    %p137 = por %p135, %p136
    %p138 = scmp.ne.s32.totalorder %s130, %s132
    %p139 = scmp.eq.s32.totalorder %s23, 1
    %p140 = por %p138, %p139
    %p141 = scmp.ne.s32.totalorder %s132, %s133
    %p142 = scmp.eq.s32.totalorder %s23, 0
    %p143 = por %p141, %p142
    %p144 = scmp.ne.s32.totalorder %s132, %s133
    %p145 = scmp.eq.s32.totalorder %s24, 1
    %p146 = por %p144, %p145
    %p148 = scmp.ne.s32.totalorder %s133, %s147
    %p149 = scmp.eq.s32.totalorder %s24, 0
    %p150 = por %p148, %p149
    %s152 = sadd.s32 %s151, 1
    %p155 = scmp.eq.s32.totalorder %s18, 1
    %p156 = scmp.ne.s32.totalorder %s151, %s153
    %p157 = scmp.eq.s32.totalorder %s18, 0
    %p158 = por %p156, %p157
    %p159 = scmp.ne.s32.totalorder %s151, %s153
    %p160 = scmp.eq.s32.totalorder %s23, 1
    %p161 = por %p159, %p160
    %p162 = scmp.ne.s32.totalorder %s153, %s154
    %p163 = scmp.eq.s32.totalorder %s23, 0
    %p164 = por %p162, %p163
    %p165 = scmp.ne.s32.totalorder %s153, %s154
    %p166 = scmp.eq.s32.totalorder %s24, 1
    %p167 = por %p165, %p166
    %p169 = scmp.ne.s32.totalorder %s154, %s168
    %p170 = scmp.eq.s32.totalorder %s24, 0
    %p171 = por %p169, %p170
    %s173 = sadd.s32 %s172, 1
    %p176 = scmp.eq.s32.totalorder %s18, 1
    %p177 = scmp.ne.s32.totalorder %s172, %s174
    %p178 = scmp.eq.s32.totalorder %s18, 0
    %p179 = por %p177, %p178
    %p180 = scmp.ne.s32.totalorder %s172, %s174
    %p181 = scmp.eq.s32.totalorder %s23, 1
    %p182 = por %p180, %p181
    %p183 = scmp.ne.s32.totalorder %s174, %s175
    %p184 = scmp.eq.s32.totalorder %s23, 0
    %p185 = por %p183, %p184
    %p186 = scmp.ne.s32.totalorder %s174, %s175
    %p187 = scmp.eq.s32.totalorder %s24, 1
    %p188 = por %p186, %p187
    %p190 = scmp.ne.s32.totalorder %s175, %s189
    %p191 = scmp.eq.s32.totalorder %s24, 0
    %p192 = por %p190, %p191
    %s194 = sadd.s32 %s193, 1
    %p197 = scmp.eq.s32.totalorder %s18, 1
    %p198 = scmp.ne.s32.totalorder %s193, %s195
    %p199 = scmp.eq.s32.totalorder %s18, 0
    %p200 = por %p198, %p199
    %p201 = scmp.ne.s32.totalorder %s193, %s195
    %p202 = scmp.eq.s32.totalorder %s23, 1
    %p203 = por %p201, %p202
    %p204 = scmp.ne.s32.totalorder %s195, %s196
    %p205 = scmp.eq.s32.totalorder %s23, 0
    %p206 = por %p204, %p205
    %p207 = scmp.ne.s32.totalorder %s195, %s196
    %p208 = scmp.eq.s32.totalorder %s24, 1
    %p209 = por %p207, %p208
    %p211 = scmp.ne.s32.totalorder %s196, %s210
    %p212 = scmp.eq.s32.totalorder %s24, 0
    %p213 = por %p211, %p212
    %s215 = sadd.s32 %s214, 1
    %p218 = scmp.eq.s32.totalorder %s18, 1
    %p219 = scmp.ne.s32.totalorder %s214, %s216
    %p220 = scmp.eq.s32.totalorder %s18, 0
    %p221 = por %p219, %p220
    %p222 = scmp.ne.s32.totalorder %s214, %s216
    %p223 = scmp.eq.s32.totalorder %s23, 1
    %p224 = por %p222, %p223
    %p225 = scmp.ne.s32.totalorder %s216, %s217
    %p226 = scmp.eq.s32.totalorder %s23, 0
    %p227 = por %p225, %p226
    %p228 = scmp.ne.s32.totalorder %s216, %s217
    %p229 = scmp.eq.s32.totalorder %s24, 1
    %p230 = por %p228, %p229
    %p232 = scmp.ne.s32.totalorder %s217, %s231
    %p233 = scmp.eq.s32.totalorder %s24, 0
    %p234 = por %p232, %p233
    %s236 = sadd.s32 %s235, 1
    %p239 = scmp.eq.s32.totalorder %s18, 1
    %p240 = scmp.ne.s32.totalorder %s235, %s237
    %p241 = scmp.eq.s32.totalorder %s18, 0
    %p242 = por %p240, %p241
    %p243 = scmp.ne.s32.totalorder %s235, %s237
    %p244 = scmp.eq.s32.totalorder %s23, 1
    %p245 = por %p243, %p244
    %p246 = scmp.ne.s32.totalorder %s237, %s238
    %p247 = scmp.eq.s32.totalorder %s23, 0
    %p248 = por %p246, %p247
    %p249 = scmp.ne.s32.totalorder %s237, %s238
    %p250 = scmp.eq.s32.totalorder %s24, 1
    %p251 = por %p249, %p250
    %p253 = scmp.ne.s32.totalorder %s238, %s252
    %p254 = scmp.eq.s32.totalorder %s24, 0
    %p255 = por %p253, %p254
    %s257 = sadd.s32 %s256, 1
    %p260 = scmp.eq.s32.totalorder %s18, 1
    %p261 = scmp.ne.s32.totalorder %s256, %s258
    %p262 = scmp.eq.s32.totalorder %s18, 0
    %p263 = por %p261, %p262
    %p264 = scmp.ne.s32.totalorder %s256, %s258
    %p265 = scmp.eq.s32.totalorder %s23, 1
    %p266 = por %p264, %p265
    %p267 = scmp.ne.s32.totalorder %s258, %s259
    %p268 = scmp.eq.s32.totalorder %s23, 0
    %p269 = por %p267, %p268
    %p270 = scmp.ne.s32.totalorder %s258, %s259
    %p271 = scmp.eq.s32.totalorder %s24, 1
    %p272 = por %p270, %p271
    %p274 = scmp.ne.s32.totalorder %s259, %s273
    %p275 = scmp.eq.s32.totalorder %s24, 0
    %p276 = por %p274, %p275
    %s278 = sadd.s32 %s277, 1
    %p281 = scmp.eq.s32.totalorder %s18, 1
    %p282 = scmp.ne.s32.totalorder %s277, %s279
    %p283 = scmp.eq.s32.totalorder %s18, 0
    %p284 = por %p282, %p283
    %p285 = scmp.ne.s32.totalorder %s277, %s279
    %p286 = scmp.eq.s32.totalorder %s23, 1
    %p287 = por %p285, %p286
    %p288 = scmp.ne.s32.totalorder %s279, %s280
    %p289 = scmp.eq.s32.totalorder %s23, 0
    %p290 = por %p288, %p289
    %p291 = scmp.ne.s32.totalorder %s279, %s280
    %p292 = scmp.eq.s32.totalorder %s24, 1
    %p293 = por %p291, %p292
    %p295 = scmp.ne.s32.totalorder %s280, %s294
    %p296 = scmp.eq.s32.totalorder %s24, 0
    %p297 = por %p295, %p296
    %s298 = ssub.s32 %s18, %s25
    %p299 = scmp.eq.s32.totalorder %s298, 0
    %s301 = sadd.s32 %s300, 1
    %s302 = scalar_select %p299, %s300, %s301
    %p305 = pneg %p299
    %p306 = scmp.eq.s32.totalorder %s18, 1
    %p307 = por %p305, %p306
    %p308 = scmp.ne.s32.totalorder %s300, %s303
    %p309 = scmp.eq.s32.totalorder %s18, 0
    %p310 = por %p308, %p309
    %p311 = scmp.ne.s32.totalorder %s300, %s303
    %p312 = scmp.eq.s32.totalorder %s23, 1
    %p313 = por %p311, %p312
    %p314 = scmp.ne.s32.totalorder %s303, %s304
    %p315 = scmp.eq.s32.totalorder %s23, 0
    %p316 = por %p314, %p315
    %p317 = scmp.ne.s32.totalorder %s303, %s304
    %p318 = scmp.eq.s32.totalorder %s24, 1
    %p319 = por %p317, %p318
    %p321 = scmp.ne.s32.totalorder %s304, %s320
    %p322 = scmp.eq.s32.totalorder %s24, 0
    %p323 = por %p321, %p322
    %p324 = scmp.le.s32.totalorder 1, %s18
    %p325 = scmp.lt.s32.totalorder %s18, 3
    %p326 = pnand %p324, %p325
    %p327 = pneg %p326
    // Predicated region
    $region9: #{tpu_custom_call.1} parent=5 // pred_check
      _
    $region10: #{tpu_custom_call.1} parent=5 // pred_check_branch
      %329 = sbr.rel (%p326) target = $region12
    $region11: #{tpu_custom_call.1} parent=5 // pred_region
      %s330 = ssub.s32 %s18, 1
      // Predicated region
      $region13: #{tpu_custom_call.1} parent=11 // pred_check
        %p331 = pneg %p143
      $region14: #{tpu_custom_call.1} parent=11 // pred_check_branch
        %333 = sbr.rel (%p331) target = $region16
      $region15: #{tpu_custom_call.1} parent=11 // pred_region
        _
      $region16: #{tpu_custom_call.1} parent=11 // pred_fallthru
        _
      // Predicated region
      $region17: #{tpu_custom_call.1} parent=11 // pred_check
        %p334 = pneg %p164
      $region18: #{tpu_custom_call.1} parent=11 // pred_check_branch
        %336 = sbr.rel (%p334) target = $region20
      $region19: #{tpu_custom_call.1} parent=11 // pred_region
        _
      $region20: #{tpu_custom_call.1} parent=11 // pred_fallthru
        _
      // Predicated region
      $region21: #{tpu_custom_call.1} parent=11 // pred_check
        %p337 = pneg %p185
      $region22: #{tpu_custom_call.1} parent=11 // pred_check_branch
        %339 = sbr.rel (%p337) target = $region24
      $region23: #{tpu_custom_call.1} parent=11 // pred_region
        _
      $region24: #{tpu_custom_call.1} parent=11 // pred_fallthru
        _
      // Predicated region
      $region25: #{tpu_custom_call.1} parent=11 // pred_check
        %p340 = pneg %p206
      $region26: #{tpu_custom_call.1} parent=11 // pred_check_branch
        %342 = sbr.rel (%p340) target = $region28
      $region27: #{tpu_custom_call.1} parent=11 // pred_region
        _
      $region28: #{tpu_custom_call.1} parent=11 // pred_fallthru
        _
      // Predicated region
      $region29: #{tpu_custom_call.1} parent=11 // pred_check
        %p343 = pneg %p227
      $region30: #{tpu_custom_call.1} parent=11 // pred_check_branch
        %345 = sbr.rel (%p343) target = $region32
      $region31: #{tpu_custom_call.1} parent=11 // pred_region
        _
      $region32: #{tpu_custom_call.1} parent=11 // pred_fallthru
        _
      // Predicated region
      $region33: #{tpu_custom_call.1} parent=11 // pred_check
        %p346 = pneg %p248
      $region34: #{tpu_custom_call.1} parent=11 // pred_check_branch
        %348 = sbr.rel (%p346) target = $region36
      $region35: #{tpu_custom_call.1} parent=11 // pred_region
        _
      $region36: #{tpu_custom_call.1} parent=11 // pred_fallthru
        _
      // Predicated region
      $region37: #{tpu_custom_call.1} parent=11 // pred_check
        %p349 = pneg %p269
      $region38: #{tpu_custom_call.1} parent=11 // pred_check_branch
        %351 = sbr.rel (%p349) target = $region40
      $region39: #{tpu_custom_call.1} parent=11 // pred_region
        _
      $region40: #{tpu_custom_call.1} parent=11 // pred_fallthru
        _
      // Predicated region
      $region41: #{tpu_custom_call.1} parent=11 // pred_check
        %p352 = pneg %p290
      $region42: #{tpu_custom_call.1} parent=11 // pred_check_branch
        %354 = sbr.rel (%p352) target = $region44
      $region43: #{tpu_custom_call.1} parent=11 // pred_region
        _
      $region44: #{tpu_custom_call.1} parent=11 // pred_fallthru
        _
    $region12: #{tpu_custom_call.1} parent=5 // pred_fallthru
      _
    %p355 = scmp.lt.s32.totalorder %s18, 2
    // Predicated region
    $region45: #{tpu_custom_call.1} parent=5 // pred_check
      %p356 = pneg %p355
    $region46: #{tpu_custom_call.1} parent=5 // pred_check_branch
      %358 = sbr.rel (%p356) target = $region48
    $region47: #{tpu_custom_call.1} parent=5 // pred_region
      // Predicated region
      $region49: #{tpu_custom_call.1} parent=47 // pred_check
        %p359 = pneg %p38
      $region50: #{tpu_custom_call.1} parent=47 // pred_check_branch
        %361 = sbr.rel (%p359) target = $region52
      $region51: #{tpu_custom_call.1} parent=47 // pred_region
        %s362 = smul.u32 64, %s18
        %p363 = scmp.lt.s32.totalorder %s362, 127
        %s364 = scalar_select %p363, %s362, 127
        %s365 = smul.addr %s364, 8
        %s366 = scalar_lea.vmem %s0, %s365
        %s367 = smul.u32 64, %s18
      $region52: #{tpu_custom_call.1} parent=47 // pred_fallthru
        _
      // Predicated region
      $region53: #{tpu_custom_call.1} parent=47 // pred_check
        %p368 = pneg %p64
      $region54: #{tpu_custom_call.1} parent=47 // pred_check_branch
        %370 = sbr.rel (%p368) target = $region56
      $region55: #{tpu_custom_call.1} parent=47 // pred_region
        %s371 = smul.u32 64, %s18
        %p372 = scmp.lt.s32.totalorder %s371, 127
        %s373 = scalar_select %p372, %s371, 127
        %s374 = smul.addr %s373, 8
        %s375 = scalar_lea.vmem %s1, %s374
        %s376 = smul.u32 64, %s18
      $region56: #{tpu_custom_call.1} parent=47 // pred_fallthru
        _
      // Predicated region
      $region57: #{tpu_custom_call.1} parent=47 // pred_check
        %p377 = pneg %p90
      $region58: #{tpu_custom_call.1} parent=47 // pred_check_branch
        %379 = sbr.rel (%p377) target = $region60
      $region59: #{tpu_custom_call.1} parent=47 // pred_region
        %s380 = smul.u32 64, %s18
        %p381 = scmp.lt.s32.totalorder %s380, 127
        %s382 = scalar_select %p381, %s380, 127
        %s383 = smul.addr %s382, 8
        %s384 = scalar_lea.vmem %s2, %s383
        %s385 = smul.u32 64, %s18
      $region60: #{tpu_custom_call.1} parent=47 // pred_fallthru
        _
      // Predicated region
      $region61: #{tpu_custom_call.1} parent=47 // pred_check
        %p386 = pneg %p116
      $region62: #{tpu_custom_call.1} parent=47 // pred_check_branch
        %388 = sbr.rel (%p386) target = $region64
      $region63: #{tpu_custom_call.1} parent=47 // pred_region
        %s389 = smul.u32 64, %s18
        %p390 = scmp.lt.s32.totalorder %s389, 127
        %s391 = scalar_select %p390, %s389, 127
        %s392 = smul.addr %s391, 8
        %s393 = scalar_lea.vmem %s3, %s392
        %s394 = smul.u32 64, %s18
      $region64: #{tpu_custom_call.1} parent=47 // pred_fallthru
        _
    $region48: #{tpu_custom_call.1} parent=5 // pred_fallthru
      _
    %p395 = scmp.le.s32.totalorder 1, %s18
    %p396 = scmp.lt.s32.totalorder %s18, 3
    %p397 = pnand %p395, %p396
    %p398 = pneg %p397
    // Predicated region
    $region65: #{tpu_custom_call.1} parent=5 // pred_check
      _
    $region66: #{tpu_custom_call.1} parent=5 // pred_check_branch
      %400 = sbr.rel (%p397) target = $region68
    $region67: #{tpu_custom_call.1} parent=5 // pred_region
      %s401 = ssub.s32 %s18, 1
      %s402 = smul.u32 64, %s23
      %p403 = scmp.lt.s32.totalorder %s402, 127
      %s404 = scalar_select %p403, %s402, 127
      %s405 = smul.addr %s404, 8
      %s406 = scalar_lea.vmem %s0, %s405
      %p407 = pneg %p44
      %p408 = pneg %p41
      %s409 = smul.u32 64, %s23
      %p410 = scmp.lt.s32.totalorder %s409, 127
      %s411 = scalar_select %p410, %s409, 127
      %s412 = smul.addr %s411, 8
      %s413 = scalar_lea.vmem %s1, %s412
      %p414 = pneg %p70
      %p415 = pneg %p67
      %s416 = smul.u32 64, %s23
      %p417 = scmp.lt.s32.totalorder %s416, 127
      %s418 = scalar_select %p417, %s416, 127
      %s419 = smul.addr %s418, 8
      %s420 = scalar_lea.vmem %s2, %s419
      %p421 = pneg %p96
      %p422 = pneg %p93
      %s423 = smul.u32 64, %s23
      %p424 = scmp.lt.s32.totalorder %s423, 127
      %s425 = scalar_select %p424, %s423, 127
      %s426 = smul.addr %s425, 8
      %s427 = scalar_lea.vmem %s3, %s426
      %p428 = pneg %p122
      %p429 = pneg %p119
      %p430 = pneg %p143
      %p431 = pneg %p140
      %p432 = pneg %p164
      %p433 = pneg %p161
      %p434 = pneg %p185
      %p435 = pneg %p182
      %p436 = pneg %p206
      %p437 = pneg %p203
      %p438 = pneg %p227
      %p439 = pneg %p224
      %p440 = pneg %p248
      %p441 = pneg %p245
      %p442 = pneg %p269
      %p443 = pneg %p266
      %p444 = pneg %p290
      %p445 = pneg %p287
      %p446 = pneg %p316
      %p447 = pneg %p313
      %s448 = smul.u32 64, %s23
      %p449 = scmp.lt.s32.totalorder %s448, 127
      %s450 = scalar_select %p449, %s448, 127
      %s451 = smul.addr %s450, 8
      %s452 = scalar_lea.vmem %s12, %s451
      %s453 = smul.u32 64, %s23
      %p454 = scmp.lt.s32.totalorder %s453, 127
      %s455 = scalar_select %p454, %s453, 127
      %s456 = smul.addr %s455, 8
      %s457 = scalar_lea.vmem %s0, %s456
      %s458 = smul.u32 64, %s23
      %s459 = smul.u32 64, %s23
      %p460 = scmp.lt.s32.totalorder %s459, 127
      %s461 = scalar_select %p460, %s459, 127
      %s462 = smul.addr %s461, 8
      %s463 = scalar_lea.vmem %s1, %s462
      %s464 = smul.u32 64, %s23
      %s465 = smul.u32 64, %s23
      %p466 = scmp.lt.s32.totalorder %s465, 127
      %s467 = scalar_select %p466, %s465, 127
      %s468 = smul.addr %s467, 8
      %s469 = scalar_lea.vmem %s2, %s468
      %s470 = smul.u32 64, %s23
      %s471 = smul.u32 64, %s23
      %p472 = scmp.lt.s32.totalorder %s471, 127
      %s473 = scalar_select %p472, %s471, 127
      %s474 = smul.addr %s473, 8
      %s475 = scalar_lea.vmem %s3, %s474
      %s476 = smul.u32 64, %s23
      %s477 = smul.u32 64, %s23
      %p478 = scmp.lt.s32.totalorder %s477, 127
      %s479 = scalar_select %p478, %s477, 127
      %s480 = smul.addr %s479, 8
      %s481 = scalar_lea.vmem %s12, %s480
      %s482 = smul.u32 64, %s23
      %v483 = vld [vmem:[%s457] sm:$0xff]
      %v484 = vld [vmem:[%s457 + $0x8] sm:$0xff]
      %v485 = vld [vmem:[%s457 + $0x10] sm:$0xff]
      %v486 = vld [vmem:[%s457 + $0x18] sm:$0xff]
      %v487 = vld [vmem:[%s457 + $0x20] sm:$0xff]
      %v488 = vld [vmem:[%s457 + $0x28] sm:$0xff]
      %v489 = vld [vmem:[%s457 + $0x30] sm:$0xff]
      %v490 = vld [vmem:[%s457 + $0x38] sm:$0xff]
      %v491 = vld [vmem:[%s457 + $0x40] sm:$0xff]
      %v492 = vld [vmem:[%s457 + $0x48] sm:$0xff]
      %v493 = vld [vmem:[%s457 + $0x50] sm:$0xff]
      %v494 = vld [vmem:[%s457 + $0x58] sm:$0xff]
      %v495 = vld [vmem:[%s457 + $0x60] sm:$0xff]
      %v496 = vld [vmem:[%s457 + $0x68] sm:$0xff]
      %v497 = vld [vmem:[%s457 + $0x70] sm:$0xff]
      %v498 = vld [vmem:[%s457 + $0x78] sm:$0xff]
      %v499 = vld [vmem:[%s457 + $0x80] sm:$0xff]
      %v500 = vld [vmem:[%s457 + $0x88] sm:$0xff]
      %v501 = vld [vmem:[%s457 + $0x90] sm:$0xff]
      %v502 = vld [vmem:[%s457 + $0x98] sm:$0xff]
      %v503 = vld [vmem:[%s457 + $0xa0] sm:$0xff]
      %v504 = vld [vmem:[%s457 + $0xa8] sm:$0xff]
      %v505 = vld [vmem:[%s457 + $0xb0] sm:$0xff]
      %v506 = vld [vmem:[%s457 + $0xb8] sm:$0xff]
      %v507 = vld [vmem:[%s457 + $0xc0] sm:$0xff]
      %v508 = vld [vmem:[%s457 + $0xc8] sm:$0xff]
      %v509 = vld [vmem:[%s457 + $0xd0] sm:$0xff]
      %v510 = vld [vmem:[%s457 + $0xd8] sm:$0xff]
      %v511 = vld [vmem:[%s457 + $0xe0] sm:$0xff]
      %v512 = vld [vmem:[%s457 + $0xe8] sm:$0xff]
      %v513 = vld [vmem:[%s457 + $0xf0] sm:$0xff]
      %v514 = vld [vmem:[%s457 + $0xf8] sm:$0xff]
      %v515 = vld [vmem:[%s457 + $0x100] sm:$0xff]
      %v516 = vld [vmem:[%s457 + $0x108] sm:$0xff]
      %v517 = vld [vmem:[%s457 + $0x110] sm:$0xff]
      %v518 = vld [vmem:[%s457 + $0x118] sm:$0xff]
      %v519 = vld [vmem:[%s457 + $0x120] sm:$0xff]
      %v520 = vld [vmem:[%s457 + $0x128] sm:$0xff]
      %v521 = vld [vmem:[%s457 + $0x130] sm:$0xff]
      %v522 = vld [vmem:[%s457 + $0x138] sm:$0xff]
      %v523 = vld [vmem:[%s457 + $0x140] sm:$0xff]
      %v524 = vld [vmem:[%s457 + $0x148] sm:$0xff]
      %v525 = vld [vmem:[%s457 + $0x150] sm:$0xff]
      %v526 = vld [vmem:[%s457 + $0x158] sm:$0xff]
      %v527 = vld [vmem:[%s457 + $0x160] sm:$0xff]
      %v528 = vld [vmem:[%s457 + $0x168] sm:$0xff]
      %v529 = vld [vmem:[%s457 + $0x170] sm:$0xff]
      %v530 = vld [vmem:[%s457 + $0x178] sm:$0xff]
      %v531 = vld [vmem:[%s457 + $0x180] sm:$0xff]
      %v532 = vld [vmem:[%s457 + $0x188] sm:$0xff]
      %v533 = vld [vmem:[%s457 + $0x190] sm:$0xff]
      %v534 = vld [vmem:[%s457 + $0x198] sm:$0xff]
      %v535 = vld [vmem:[%s457 + $0x1a0] sm:$0xff]
      %v536 = vld [vmem:[%s457 + $0x1a8] sm:$0xff]
      %v537 = vld [vmem:[%s457 + $0x1b0] sm:$0xff]
      %v538 = vld [vmem:[%s457 + $0x1b8] sm:$0xff]
      %v539 = vld [vmem:[%s457 + $0x1c0] sm:$0xff]
      %v540 = vld [vmem:[%s457 + $0x1c8] sm:$0xff]
      %v541 = vld [vmem:[%s457 + $0x1d0] sm:$0xff]
      %v542 = vld [vmem:[%s457 + $0x1d8] sm:$0xff]
      %v543 = vld [vmem:[%s457 + $0x1e0] sm:$0xff]
      %v544 = vld [vmem:[%s457 + $0x1e8] sm:$0xff]
      %v545 = vld [vmem:[%s457 + $0x1f0] sm:$0xff]
      %v546 = vld [vmem:[%s457 + $0x1f8] sm:$0xff]
      %v547 = vld [vmem:[%s463] sm:$0xff]
      %v548 = vld [vmem:[%s463 + $0x8] sm:$0xff]
      %v549 = vld [vmem:[%s463 + $0x10] sm:$0xff]
      %v550 = vld [vmem:[%s463 + $0x18] sm:$0xff]
      %v551 = vld [vmem:[%s463 + $0x20] sm:$0xff]
      %v552 = vld [vmem:[%s463 + $0x28] sm:$0xff]
      %v553 = vld [vmem:[%s463 + $0x30] sm:$0xff]
      %v554 = vld [vmem:[%s463 + $0x38] sm:$0xff]
      %v555 = vld [vmem:[%s463 + $0x40] sm:$0xff]
      %v556 = vld [vmem:[%s463 + $0x48] sm:$0xff]
      %v557 = vld [vmem:[%s463 + $0x50] sm:$0xff]
      %v558 = vld [vmem:[%s463 + $0x58] sm:$0xff]
      %v559 = vld [vmem:[%s463 + $0x60] sm:$0xff]
      %v560 = vld [vmem:[%s463 + $0x68] sm:$0xff]
      %v561 = vld [vmem:[%s463 + $0x70] sm:$0xff]
      %v562 = vld [vmem:[%s463 + $0x78] sm:$0xff]
      %v563 = vld [vmem:[%s463 + $0x80] sm:$0xff]
      %v564 = vld [vmem:[%s463 + $0x88] sm:$0xff]
      %v565 = vld [vmem:[%s463 + $0x90] sm:$0xff]
      %v566 = vld [vmem:[%s463 + $0x98] sm:$0xff]
      %v567 = vld [vmem:[%s463 + $0xa0] sm:$0xff]
      %v568 = vld [vmem:[%s463 + $0xa8] sm:$0xff]
      %v569 = vld [vmem:[%s463 + $0xb0] sm:$0xff]
      %v570 = vld [vmem:[%s463 + $0xb8] sm:$0xff]
      %v571 = vld [vmem:[%s463 + $0xc0] sm:$0xff]
      %v572 = vld [vmem:[%s463 + $0xc8] sm:$0xff]
      %v573 = vld [vmem:[%s463 + $0xd0] sm:$0xff]
      %v574 = vld [vmem:[%s463 + $0xd8] sm:$0xff]
      %v575 = vld [vmem:[%s463 + $0xe0] sm:$0xff]
      %v576 = vld [vmem:[%s463 + $0xe8] sm:$0xff]
      %v577 = vld [vmem:[%s463 + $0xf0] sm:$0xff]
      %v578 = vld [vmem:[%s463 + $0xf8] sm:$0xff]
      %v579 = vld [vmem:[%s463 + $0x100] sm:$0xff]
      %v580 = vld [vmem:[%s463 + $0x108] sm:$0xff]
      %v581 = vld [vmem:[%s463 + $0x110] sm:$0xff]
      %v582 = vld [vmem:[%s463 + $0x118] sm:$0xff]
      %v583 = vld [vmem:[%s463 + $0x120] sm:$0xff]
      %v584 = vld [vmem:[%s463 + $0x128] sm:$0xff]
      %v585 = vld [vmem:[%s463 + $0x130] sm:$0xff]
      %v586 = vld [vmem:[%s463 + $0x138] sm:$0xff]
      %v587 = vld [vmem:[%s463 + $0x140] sm:$0xff]
      %v588 = vld [vmem:[%s463 + $0x148] sm:$0xff]
      %v589 = vld [vmem:[%s463 + $0x150] sm:$0xff]
      %v590 = vld [vmem:[%s463 + $0x158] sm:$0xff]
      %v591 = vld [vmem:[%s463 + $0x160] sm:$0xff]
      %v592 = vld [vmem:[%s463 + $0x168] sm:$0xff]
      %v593 = vld [vmem:[%s463 + $0x170] sm:$0xff]
      %v594 = vld [vmem:[%s463 + $0x178] sm:$0xff]
      %v595 = vld [vmem:[%s463 + $0x180] sm:$0xff]
      %v596 = vld [vmem:[%s463 + $0x188] sm:$0xff]
      %v597 = vld [vmem:[%s463 + $0x190] sm:$0xff]
      %v598 = vld [vmem:[%s463 + $0x198] sm:$0xff]
      %v599 = vld [vmem:[%s463 + $0x1a0] sm:$0xff]
      %v600 = vld [vmem:[%s463 + $0x1a8] sm:$0xff]
      %v601 = vld [vmem:[%s463 + $0x1b0] sm:$0xff]
      %v602 = vld [vmem:[%s463 + $0x1b8] sm:$0xff]
      %v603 = vld [vmem:[%s463 + $0x1c0] sm:$0xff]
      %v604 = vld [vmem:[%s463 + $0x1c8] sm:$0xff]
      %v605 = vld [vmem:[%s463 + $0x1d0] sm:$0xff]
      %v606 = vld [vmem:[%s463 + $0x1d8] sm:$0xff]
      %v607 = vld [vmem:[%s463 + $0x1e0] sm:$0xff]
      %v608 = vld [vmem:[%s463 + $0x1e8] sm:$0xff]
      %v609 = vld [vmem:[%s463 + $0x1f0] sm:$0xff]
      %v610 = vld [vmem:[%s463 + $0x1f8] sm:$0xff]
      %v611 = vld [vmem:[%s469] sm:$0xff]
      %v612 = vld [vmem:[%s469 + $0x8] sm:$0xff]
      %v613 = vld [vmem:[%s469 + $0x10] sm:$0xff]
      %v614 = vld [vmem:[%s469 + $0x18] sm:$0xff]
      %v615 = vld [vmem:[%s469 + $0x20] sm:$0xff]
      %v616 = vld [vmem:[%s469 + $0x28] sm:$0xff]
      %v617 = vld [vmem:[%s469 + $0x30] sm:$0xff]
      %v618 = vld [vmem:[%s469 + $0x38] sm:$0xff]
      %v619 = vld [vmem:[%s469 + $0x40] sm:$0xff]
      %v620 = vld [vmem:[%s469 + $0x48] sm:$0xff]
      %v621 = vld [vmem:[%s469 + $0x50] sm:$0xff]
      %v622 = vld [vmem:[%s469 + $0x58] sm:$0xff]
      %v623 = vld [vmem:[%s469 + $0x60] sm:$0xff]
      %v624 = vld [vmem:[%s469 + $0x68] sm:$0xff]
      %v625 = vld [vmem:[%s469 + $0x70] sm:$0xff]
      %v626 = vld [vmem:[%s469 + $0x78] sm:$0xff]
      %v627 = vld [vmem:[%s469 + $0x80] sm:$0xff]
      %v628 = vld [vmem:[%s469 + $0x88] sm:$0xff]
      %v629 = vld [vmem:[%s469 + $0x90] sm:$0xff]
      %v630 = vld [vmem:[%s469 + $0x98] sm:$0xff]
      %v631 = vld [vmem:[%s469 + $0xa0] sm:$0xff]
      %v632 = vld [vmem:[%s469 + $0xa8] sm:$0xff]
      %v633 = vld [vmem:[%s469 + $0xb0] sm:$0xff]
      %v634 = vld [vmem:[%s469 + $0xb8] sm:$0xff]
      %v635 = vld [vmem:[%s469 + $0xc0] sm:$0xff]
      %v636 = vld [vmem:[%s469 + $0xc8] sm:$0xff]
      %v637 = vld [vmem:[%s469 + $0xd0] sm:$0xff]
      %v638 = vld [vmem:[%s469 + $0xd8] sm:$0xff]
      %v639 = vld [vmem:[%s469 + $0xe0] sm:$0xff]
      %v640 = vld [vmem:[%s469 + $0xe8] sm:$0xff]
      %v641 = vld [vmem:[%s469 + $0xf0] sm:$0xff]
      %v642 = vld [vmem:[%s469 + $0xf8] sm:$0xff]
      %v643 = vld [vmem:[%s469 + $0x100] sm:$0xff]
      %v644 = vld [vmem:[%s469 + $0x108] sm:$0xff]
      %v645 = vld [vmem:[%s469 + $0x110] sm:$0xff]
      %v646 = vld [vmem:[%s469 + $0x118] sm:$0xff]
      %v647 = vld [vmem:[%s469 + $0x120] sm:$0xff]
      %v648 = vld [vmem:[%s469 + $0x128] sm:$0xff]
      %v649 = vld [vmem:[%s469 + $0x130] sm:$0xff]
      %v650 = vld [vmem:[%s469 + $0x138] sm:$0xff]
      %v651 = vld [vmem:[%s469 + $0x140] sm:$0xff]
      %v652 = vld [vmem:[%s469 + $0x148] sm:$0xff]
      %v653 = vld [vmem:[%s469 + $0x150] sm:$0xff]
      %v654 = vld [vmem:[%s469 + $0x158] sm:$0xff]
      %v655 = vld [vmem:[%s469 + $0x160] sm:$0xff]
      %v656 = vld [vmem:[%s469 + $0x168] sm:$0xff]
      %v657 = vld [vmem:[%s469 + $0x170] sm:$0xff]
      %v658 = vld [vmem:[%s469 + $0x178] sm:$0xff]
      %v659 = vld [vmem:[%s469 + $0x180] sm:$0xff]
      %v660 = vld [vmem:[%s469 + $0x188] sm:$0xff]
      %v661 = vld [vmem:[%s469 + $0x190] sm:$0xff]
      %v662 = vld [vmem:[%s469 + $0x198] sm:$0xff]
      %v663 = vld [vmem:[%s469 + $0x1a0] sm:$0xff]
      %v664 = vld [vmem:[%s469 + $0x1a8] sm:$0xff]
      %v665 = vld [vmem:[%s469 + $0x1b0] sm:$0xff]
      %v666 = vld [vmem:[%s469 + $0x1b8] sm:$0xff]
      %v667 = vld [vmem:[%s469 + $0x1c0] sm:$0xff]
      %v668 = vld [vmem:[%s469 + $0x1c8] sm:$0xff]
      %v669 = vld [vmem:[%s469 + $0x1d0] sm:$0xff]
      %v670 = vld [vmem:[%s469 + $0x1d8] sm:$0xff]
      %v671 = vld [vmem:[%s469 + $0x1e0] sm:$0xff]
      %v672 = vld [vmem:[%s469 + $0x1e8] sm:$0xff]
      %v673 = vld [vmem:[%s469 + $0x1f0] sm:$0xff]
      %v674 = vld [vmem:[%s469 + $0x1f8] sm:$0xff]
      %v675 = vld [vmem:[%s475] sm:$0xff]
      %v676 = vld [vmem:[%s475 + $0x8] sm:$0xff]
      %v677 = vld [vmem:[%s475 + $0x10] sm:$0xff]
      %v678 = vld [vmem:[%s475 + $0x18] sm:$0xff]
      %v679 = vld [vmem:[%s475 + $0x20] sm:$0xff]
      %v680 = vld [vmem:[%s475 + $0x28] sm:$0xff]
      %v681 = vld [vmem:[%s475 + $0x30] sm:$0xff]
      %v682 = vld [vmem:[%s475 + $0x38] sm:$0xff]
      %v683 = vld [vmem:[%s475 + $0x40] sm:$0xff]
      %v684 = vld [vmem:[%s475 + $0x48] sm:$0xff]
      %v685 = vld [vmem:[%s475 + $0x50] sm:$0xff]
      %v686 = vld [vmem:[%s475 + $0x58] sm:$0xff]
      %v687 = vld [vmem:[%s475 + $0x60] sm:$0xff]
      %v688 = vld [vmem:[%s475 + $0x68] sm:$0xff]
      %v689 = vld [vmem:[%s475 + $0x70] sm:$0xff]
      %v690 = vld [vmem:[%s475 + $0x78] sm:$0xff]
      %v691 = vld [vmem:[%s475 + $0x80] sm:$0xff]
      %v692 = vld [vmem:[%s475 + $0x88] sm:$0xff]
      %v693 = vld [vmem:[%s475 + $0x90] sm:$0xff]
      %v694 = vld [vmem:[%s475 + $0x98] sm:$0xff]
      %v695 = vld [vmem:[%s475 + $0xa0] sm:$0xff]
      %v696 = vld [vmem:[%s475 + $0xa8] sm:$0xff]
      %v697 = vld [vmem:[%s475 + $0xb0] sm:$0xff]
      %v698 = vld [vmem:[%s475 + $0xb8] sm:$0xff]
      %v699 = vld [vmem:[%s475 + $0xc0] sm:$0xff]
      %v700 = vld [vmem:[%s475 + $0xc8] sm:$0xff]
      %v701 = vld [vmem:[%s475 + $0xd0] sm:$0xff]
      %v702 = vld [vmem:[%s475 + $0xd8] sm:$0xff]
      %v703 = vld [vmem:[%s475 + $0xe0] sm:$0xff]
      %v704 = vld [vmem:[%s475 + $0xe8] sm:$0xff]
      %v705 = vld [vmem:[%s475 + $0xf0] sm:$0xff]
      %v706 = vld [vmem:[%s475 + $0xf8] sm:$0xff]
      %v707 = vld [vmem:[%s475 + $0x100] sm:$0xff]
      %v708 = vld [vmem:[%s475 + $0x108] sm:$0xff]
      %v709 = vld [vmem:[%s475 + $0x110] sm:$0xff]
      %v710 = vld [vmem:[%s475 + $0x118] sm:$0xff]
      %v711 = vld [vmem:[%s475 + $0x120] sm:$0xff]
      %v712 = vld [vmem:[%s475 + $0x128] sm:$0xff]
      %v713 = vld [vmem:[%s475 + $0x130] sm:$0xff]
      %v714 = vld [vmem:[%s475 + $0x138] sm:$0xff]
      %v715 = vld [vmem:[%s475 + $0x140] sm:$0xff]
      %v716 = vld [vmem:[%s475 + $0x148] sm:$0xff]
      %v717 = vld [vmem:[%s475 + $0x150] sm:$0xff]
      %v718 = vld [vmem:[%s475 + $0x158] sm:$0xff]
      %v719 = vld [vmem:[%s475 + $0x160] sm:$0xff]
      %v720 = vld [vmem:[%s475 + $0x168] sm:$0xff]
      %v721 = vld [vmem:[%s475 + $0x170] sm:$0xff]
      %v722 = vld [vmem:[%s475 + $0x178] sm:$0xff]
      %v723 = vld [vmem:[%s475 + $0x180] sm:$0xff]
      %v724 = vld [vmem:[%s475 + $0x188] sm:$0xff]
      %v725 = vld [vmem:[%s475 + $0x190] sm:$0xff]
      %v726 = vld [vmem:[%s475 + $0x198] sm:$0xff]
      %v727 = vld [vmem:[%s475 + $0x1a0] sm:$0xff]
      %v728 = vld [vmem:[%s475 + $0x1a8] sm:$0xff]
      %v729 = vld [vmem:[%s475 + $0x1b0] sm:$0xff]
      %v730 = vld [vmem:[%s475 + $0x1b8] sm:$0xff]
      %v731 = vld [vmem:[%s475 + $0x1c0] sm:$0xff]
      %v732 = vld [vmem:[%s475 + $0x1c8] sm:$0xff]
      %v733 = vld [vmem:[%s475 + $0x1d0] sm:$0xff]
      %v734 = vld [vmem:[%s475 + $0x1d8] sm:$0xff]
      %v735 = vld [vmem:[%s475 + $0x1e0] sm:$0xff]
      %v736 = vld [vmem:[%s475 + $0x1e8] sm:$0xff]
      %v737 = vld [vmem:[%s475 + $0x1f0] sm:$0xff]
      %v738 = vld [vmem:[%s475 + $0x1f8] sm:$0xff]
      %v739 = vmax.f32 %v675, 1.0
      %v740 = vmax.f32 %v676, 1.0
      %v741 = vmax.f32 %v677, 1.0
      %v742 = vmax.f32 %v678, 1.0
      %v743 = vmax.f32 %v679, 1.0
      %v744 = vmax.f32 %v680, 1.0
      %v745 = vmax.f32 %v681, 1.0
      %v746 = vmax.f32 %v682, 1.0
      %v747 = vmax.f32 %v683, 1.0
      %v748 = vmax.f32 %v684, 1.0
      %v749 = vmax.f32 %v685, 1.0
      %v750 = vmax.f32 %v686, 1.0
      %v751 = vmax.f32 %v687, 1.0
      %v752 = vmax.f32 %v688, 1.0
      %v753 = vmax.f32 %v689, 1.0
      %v754 = vmax.f32 %v690, 1.0
      %v755 = vmax.f32 %v691, 1.0
      %v756 = vmax.f32 %v692, 1.0
      %v757 = vmax.f32 %v693, 1.0
      %v758 = vmax.f32 %v694, 1.0
      %v759 = vmax.f32 %v695, 1.0
      %v760 = vmax.f32 %v696, 1.0
      %v761 = vmax.f32 %v697, 1.0
      %v762 = vmax.f32 %v698, 1.0
      %v763 = vmax.f32 %v699, 1.0
      %v764 = vmax.f32 %v700, 1.0
      %v765 = vmax.f32 %v701, 1.0
      %v766 = vmax.f32 %v702, 1.0
      %v767 = vmax.f32 %v703, 1.0
      %v768 = vmax.f32 %v704, 1.0
      %v769 = vmax.f32 %v705, 1.0
      %v770 = vmax.f32 %v706, 1.0
      %v771 = vmax.f32 %v707, 1.0
      %v772 = vmax.f32 %v708, 1.0
      %v773 = vmax.f32 %v709, 1.0
      %v774 = vmax.f32 %v710, 1.0
      %v775 = vmax.f32 %v711, 1.0
      %v776 = vmax.f32 %v712, 1.0
      %v777 = vmax.f32 %v713, 1.0
      %v778 = vmax.f32 %v714, 1.0
      %v779 = vmax.f32 %v715, 1.0
      %v780 = vmax.f32 %v716, 1.0
      %v781 = vmax.f32 %v717, 1.0
      %v782 = vmax.f32 %v718, 1.0
      %v783 = vmax.f32 %v719, 1.0
      %v784 = vmax.f32 %v720, 1.0
      %v785 = vmax.f32 %v721, 1.0
      %v786 = vmax.f32 %v722, 1.0
      %v787 = vmax.f32 %v723, 1.0
      %v788 = vmax.f32 %v724, 1.0
      %v789 = vmax.f32 %v725, 1.0
      %v790 = vmax.f32 %v726, 1.0
      %v791 = vmax.f32 %v727, 1.0
      %v792 = vmax.f32 %v728, 1.0
      %v793 = vmax.f32 %v729, 1.0
      %v794 = vmax.f32 %v730, 1.0
      %v795 = vmax.f32 %v731, 1.0
      %v796 = vmax.f32 %v732, 1.0
      %v797 = vmax.f32 %v733, 1.0
      %v798 = vmax.f32 %v734, 1.0
      %v799 = vmax.f32 %v735, 1.0
      %v800 = vmax.f32 %v736, 1.0
      %v801 = vmax.f32 %v737, 1.0
      %v802 = vmax.f32 %v738, 1.0
      %v803 = vrcp.pop %v739
      %v804 = vmul.f32 %v739, %v803
      %v805 = vsub.f32 1.0, %v804
      %v806 = vmul.f32 %v803, %v805
      %v807 = vadd.f32 %v803, %v806
      %vm808 = vweird.f32 %v739
      %vm809 = vweird.f32 %v803
      %vm810 = vmor %vm808, %vm809
      %v811 = vsel %vm810, %v803, %v807
      %v812 = vand.u32 2147483647, %v739
      %vm813 = vcmp.eq.f32.partialorder %v812, 8.507059e+37
      %v814 = vand.u32 %v739, 2147483648
      %v815 = vor.u32 1.1754944e-38, %v814
      %v816 = vsel %vm813, %v815, %v811
      %v817 = vmul.f32 1.0, %v816
      %v818 = vrcp.pop %v740
      %v819 = vmul.f32 %v740, %v818
      %v820 = vsub.f32 1.0, %v819
      %v821 = vmul.f32 %v818, %v820
      %v822 = vadd.f32 %v818, %v821
      %vm823 = vweird.f32 %v740
      %vm824 = vweird.f32 %v818
      %vm825 = vmor %vm823, %vm824
      %v826 = vsel %vm825, %v818, %v822
      %v827 = vand.u32 2147483647, %v740
      %vm828 = vcmp.eq.f32.partialorder %v827, 8.507059e+37
      %v829 = vand.u32 %v740, 2147483648
      %v830 = vor.u32 1.1754944e-38, %v829
      %v831 = vsel %vm828, %v830, %v826
      %v832 = vmul.f32 1.0, %v831
      %v833 = vrcp.pop %v741
      %v834 = vmul.f32 %v741, %v833
      %v835 = vsub.f32 1.0, %v834
      %v836 = vmul.f32 %v833, %v835
      %v837 = vadd.f32 %v833, %v836
      %vm838 = vweird.f32 %v741
      %vm839 = vweird.f32 %v833
      %vm840 = vmor %vm838, %vm839
      %v841 = vsel %vm840, %v833, %v837
      %v842 = vand.u32 2147483647, %v741
      %vm843 = vcmp.eq.f32.partialorder %v842, 8.507059e+37
      %v844 = vand.u32 %v741, 2147483648
      %v845 = vor.u32 1.1754944e-38, %v844
      %v846 = vsel %vm843, %v845, %v841
      %v847 = vmul.f32 1.0, %v846
      %v848 = vrcp.pop %v742
      %v849 = vmul.f32 %v742, %v848
      %v850 = vsub.f32 1.0, %v849
      %v851 = vmul.f32 %v848, %v850
      %v852 = vadd.f32 %v848, %v851
      %vm853 = vweird.f32 %v742
      %vm854 = vweird.f32 %v848
      %vm855 = vmor %vm853, %vm854
      %v856 = vsel %vm855, %v848, %v852
      %v857 = vand.u32 2147483647, %v742
      %vm858 = vcmp.eq.f32.partialorder %v857, 8.507059e+37
      %v859 = vand.u32 %v742, 2147483648
      %v860 = vor.u32 1.1754944e-38, %v859
      %v861 = vsel %vm858, %v860, %v856
      %v862 = vmul.f32 1.0, %v861
      %v863 = vrcp.pop %v743
      %v864 = vmul.f32 %v743, %v863
      %v865 = vsub.f32 1.0, %v864
      %v866 = vmul.f32 %v863, %v865
      %v867 = vadd.f32 %v863, %v866
      %vm868 = vweird.f32 %v743
      %vm869 = vweird.f32 %v863
      %vm870 = vmor %vm868, %vm869
      %v871 = vsel %vm870, %v863, %v867
      %v872 = vand.u32 2147483647, %v743
      %vm873 = vcmp.eq.f32.partialorder %v872, 8.507059e+37
      %v874 = vand.u32 %v743, 2147483648
      %v875 = vor.u32 1.1754944e-38, %v874
      %v876 = vsel %vm873, %v875, %v871
      %v877 = vmul.f32 1.0, %v876
      %v878 = vrcp.pop %v744
      %v879 = vmul.f32 %v744, %v878
      %v880 = vsub.f32 1.0, %v879
      %v881 = vmul.f32 %v878, %v880
      %v882 = vadd.f32 %v878, %v881
      %vm883 = vweird.f32 %v744
      %vm884 = vweird.f32 %v878
      %vm885 = vmor %vm883, %vm884
      %v886 = vsel %vm885, %v878, %v882
      %v887 = vand.u32 2147483647, %v744
      %vm888 = vcmp.eq.f32.partialorder %v887, 8.507059e+37
      %v889 = vand.u32 %v744, 2147483648
      %v890 = vor.u32 1.1754944e-38, %v889
      %v891 = vsel %vm888, %v890, %v886
      %v892 = vmul.f32 1.0, %v891
      %v893 = vrcp.pop %v745
      %v894 = vmul.f32 %v745, %v893
      %v895 = vsub.f32 1.0, %v894
      %v896 = vmul.f32 %v893, %v895
      %v897 = vadd.f32 %v893, %v896
      %vm898 = vweird.f32 %v745
      %vm899 = vweird.f32 %v893
      %vm900 = vmor %vm898, %vm899
      %v901 = vsel %vm900, %v893, %v897
      %v902 = vand.u32 2147483647, %v745
      %vm903 = vcmp.eq.f32.partialorder %v902, 8.507059e+37
      %v904 = vand.u32 %v745, 2147483648
      %v905 = vor.u32 1.1754944e-38, %v904
      %v906 = vsel %vm903, %v905, %v901
      %v907 = vmul.f32 1.0, %v906
      %v908 = vrcp.pop %v746
      %v909 = vmul.f32 %v746, %v908
      %v910 = vsub.f32 1.0, %v909
      %v911 = vmul.f32 %v908, %v910
      %v912 = vadd.f32 %v908, %v911
      %vm913 = vweird.f32 %v746
      %vm914 = vweird.f32 %v908
      %vm915 = vmor %vm913, %vm914
      %v916 = vsel %vm915, %v908, %v912
      %v917 = vand.u32 2147483647, %v746
      %vm918 = vcmp.eq.f32.partialorder %v917, 8.507059e+37
      %v919 = vand.u32 %v746, 2147483648
      %v920 = vor.u32 1.1754944e-38, %v919
      %v921 = vsel %vm918, %v920, %v916
      %v922 = vmul.f32 1.0, %v921
      %v923 = vrcp.pop %v747
      %v924 = vmul.f32 %v747, %v923
      %v925 = vsub.f32 1.0, %v924
      %v926 = vmul.f32 %v923, %v925
      %v927 = vadd.f32 %v923, %v926
      %vm928 = vweird.f32 %v747
      %vm929 = vweird.f32 %v923
      %vm930 = vmor %vm928, %vm929
      %v931 = vsel %vm930, %v923, %v927
      %v932 = vand.u32 2147483647, %v747
      %vm933 = vcmp.eq.f32.partialorder %v932, 8.507059e+37
      %v934 = vand.u32 %v747, 2147483648
      %v935 = vor.u32 1.1754944e-38, %v934
      %v936 = vsel %vm933, %v935, %v931
      %v937 = vmul.f32 1.0, %v936
      %v938 = vrcp.pop %v748
      %v939 = vmul.f32 %v748, %v938
      %v940 = vsub.f32 1.0, %v939
      %v941 = vmul.f32 %v938, %v940
      %v942 = vadd.f32 %v938, %v941
      %vm943 = vweird.f32 %v748
      %vm944 = vweird.f32 %v938
      %vm945 = vmor %vm943, %vm944
      %v946 = vsel %vm945, %v938, %v942
      %v947 = vand.u32 2147483647, %v748
      %vm948 = vcmp.eq.f32.partialorder %v947, 8.507059e+37
      %v949 = vand.u32 %v748, 2147483648
      %v950 = vor.u32 1.1754944e-38, %v949
      %v951 = vsel %vm948, %v950, %v946
      %v952 = vmul.f32 1.0, %v951
      %v953 = vrcp.pop %v749
      %v954 = vmul.f32 %v749, %v953
      %v955 = vsub.f32 1.0, %v954
      %v956 = vmul.f32 %v953, %v955
      %v957 = vadd.f32 %v953, %v956
      %vm958 = vweird.f32 %v749
      %vm959 = vweird.f32 %v953
      %vm960 = vmor %vm958, %vm959
      %v961 = vsel %vm960, %v953, %v957
      %v962 = vand.u32 2147483647, %v749
      %vm963 = vcmp.eq.f32.partialorder %v962, 8.507059e+37
      %v964 = vand.u32 %v749, 2147483648
      %v965 = vor.u32 1.1754944e-38, %v964
      %v966 = vsel %vm963, %v965, %v961
      %v967 = vmul.f32 1.0, %v966
      %v968 = vrcp.pop %v750
      %v969 = vmul.f32 %v750, %v968
      %v970 = vsub.f32 1.0, %v969
      %v971 = vmul.f32 %v968, %v970
      %v972 = vadd.f32 %v968, %v971
      %vm973 = vweird.f32 %v750
      %vm974 = vweird.f32 %v968
      %vm975 = vmor %vm973, %vm974
      %v976 = vsel %vm975, %v968, %v972
      %v977 = vand.u32 2147483647, %v750
      %vm978 = vcmp.eq.f32.partialorder %v977, 8.507059e+37
      %v979 = vand.u32 %v750, 2147483648
      %v980 = vor.u32 1.1754944e-38, %v979
      %v981 = vsel %vm978, %v980, %v976
      %v982 = vmul.f32 1.0, %v981
      %v983 = vrcp.pop %v751
      %v984 = vmul.f32 %v751, %v983
      %v985 = vsub.f32 1.0, %v984
      %v986 = vmul.f32 %v983, %v985
      %v987 = vadd.f32 %v983, %v986
      %vm988 = vweird.f32 %v751
      %vm989 = vweird.f32 %v983
      %vm990 = vmor %vm988, %vm989
      %v991 = vsel %vm990, %v983, %v987
      %v992 = vand.u32 2147483647, %v751
      %vm993 = vcmp.eq.f32.partialorder %v992, 8.507059e+37
      %v994 = vand.u32 %v751, 2147483648
      %v995 = vor.u32 1.1754944e-38, %v994
      %v996 = vsel %vm993, %v995, %v991
      %v997 = vmul.f32 1.0, %v996
      %v998 = vrcp.pop %v752
      %v999 = vmul.f32 %v752, %v998
      %v1000 = vsub.f32 1.0, %v999
      %v1001 = vmul.f32 %v998, %v1000
      %v1002 = vadd.f32 %v998, %v1001
      %vm1003 = vweird.f32 %v752
      %vm1004 = vweird.f32 %v998
      %vm1005 = vmor %vm1003, %vm1004
      %v1006 = vsel %vm1005, %v998, %v1002
      %v1007 = vand.u32 2147483647, %v752
      %vm1008 = vcmp.eq.f32.partialorder %v1007, 8.507059e+37
      %v1009 = vand.u32 %v752, 2147483648
      %v1010 = vor.u32 1.1754944e-38, %v1009
      %v1011 = vsel %vm1008, %v1010, %v1006
      %v1012 = vmul.f32 1.0, %v1011
      %v1013 = vrcp.pop %v753
      %v1014 = vmul.f32 %v753, %v1013
      %v1015 = vsub.f32 1.0, %v1014
      %v1016 = vmul.f32 %v1013, %v1015
      %v1017 = vadd.f32 %v1013, %v1016
      %vm1018 = vweird.f32 %v753
      %vm1019 = vweird.f32 %v1013
      %vm1020 = vmor %vm1018, %vm1019
      %v1021 = vsel %vm1020, %v1013, %v1017
      %v1022 = vand.u32 2147483647, %v753
      %vm1023 = vcmp.eq.f32.partialorder %v1022, 8.507059e+37
      %v1024 = vand.u32 %v753, 2147483648
      %v1025 = vor.u32 1.1754944e-38, %v1024
      %v1026 = vsel %vm1023, %v1025, %v1021
      %v1027 = vmul.f32 1.0, %v1026
      %v1028 = vrcp.pop %v754
      %v1029 = vmul.f32 %v754, %v1028
      %v1030 = vsub.f32 1.0, %v1029
      %v1031 = vmul.f32 %v1028, %v1030
      %v1032 = vadd.f32 %v1028, %v1031
      %vm1033 = vweird.f32 %v754
      %vm1034 = vweird.f32 %v1028
      %vm1035 = vmor %vm1033, %vm1034
      %v1036 = vsel %vm1035, %v1028, %v1032
      %v1037 = vand.u32 2147483647, %v754
      %vm1038 = vcmp.eq.f32.partialorder %v1037, 8.507059e+37
      %v1039 = vand.u32 %v754, 2147483648
      %v1040 = vor.u32 1.1754944e-38, %v1039
      %v1041 = vsel %vm1038, %v1040, %v1036
      %v1042 = vmul.f32 1.0, %v1041
      %v1043 = vrcp.pop %v755
      %v1044 = vmul.f32 %v755, %v1043
      %v1045 = vsub.f32 1.0, %v1044
      %v1046 = vmul.f32 %v1043, %v1045
      %v1047 = vadd.f32 %v1043, %v1046
      %vm1048 = vweird.f32 %v755
      %vm1049 = vweird.f32 %v1043
      %vm1050 = vmor %vm1048, %vm1049
      %v1051 = vsel %vm1050, %v1043, %v1047
      %v1052 = vand.u32 2147483647, %v755
      %vm1053 = vcmp.eq.f32.partialorder %v1052, 8.507059e+37
      %v1054 = vand.u32 %v755, 2147483648
      %v1055 = vor.u32 1.1754944e-38, %v1054
      %v1056 = vsel %vm1053, %v1055, %v1051
      %v1057 = vmul.f32 1.0, %v1056
      %v1058 = vrcp.pop %v756
      %v1059 = vmul.f32 %v756, %v1058
      %v1060 = vsub.f32 1.0, %v1059
      %v1061 = vmul.f32 %v1058, %v1060
      %v1062 = vadd.f32 %v1058, %v1061
      %vm1063 = vweird.f32 %v756
      %vm1064 = vweird.f32 %v1058
      %vm1065 = vmor %vm1063, %vm1064
      %v1066 = vsel %vm1065, %v1058, %v1062
      %v1067 = vand.u32 2147483647, %v756
      %vm1068 = vcmp.eq.f32.partialorder %v1067, 8.507059e+37
      %v1069 = vand.u32 %v756, 2147483648
      %v1070 = vor.u32 1.1754944e-38, %v1069
      %v1071 = vsel %vm1068, %v1070, %v1066
      %v1072 = vmul.f32 1.0, %v1071
      %v1073 = vrcp.pop %v757
      %v1074 = vmul.f32 %v757, %v1073
      %v1075 = vsub.f32 1.0, %v1074
      %v1076 = vmul.f32 %v1073, %v1075
      %v1077 = vadd.f32 %v1073, %v1076
      %vm1078 = vweird.f32 %v757
      %vm1079 = vweird.f32 %v1073
      %vm1080 = vmor %vm1078, %vm1079
      %v1081 = vsel %vm1080, %v1073, %v1077
      %v1082 = vand.u32 2147483647, %v757
      %vm1083 = vcmp.eq.f32.partialorder %v1082, 8.507059e+37
      %v1084 = vand.u32 %v757, 2147483648
      %v1085 = vor.u32 1.1754944e-38, %v1084
      %v1086 = vsel %vm1083, %v1085, %v1081
      %v1087 = vmul.f32 1.0, %v1086
      %v1088 = vrcp.pop %v758
      %v1089 = vmul.f32 %v758, %v1088
      %v1090 = vsub.f32 1.0, %v1089
      %v1091 = vmul.f32 %v1088, %v1090
      %v1092 = vadd.f32 %v1088, %v1091
      %vm1093 = vweird.f32 %v758
      %vm1094 = vweird.f32 %v1088
      %vm1095 = vmor %vm1093, %vm1094
      %v1096 = vsel %vm1095, %v1088, %v1092
      %v1097 = vand.u32 2147483647, %v758
      %vm1098 = vcmp.eq.f32.partialorder %v1097, 8.507059e+37
      %v1099 = vand.u32 %v758, 2147483648
      %v1100 = vor.u32 1.1754944e-38, %v1099
      %v1101 = vsel %vm1098, %v1100, %v1096
      %v1102 = vmul.f32 1.0, %v1101
      %v1103 = vrcp.pop %v759
      %v1104 = vmul.f32 %v759, %v1103
      %v1105 = vsub.f32 1.0, %v1104
      %v1106 = vmul.f32 %v1103, %v1105
      %v1107 = vadd.f32 %v1103, %v1106
      %vm1108 = vweird.f32 %v759
      %vm1109 = vweird.f32 %v1103
      %vm1110 = vmor %vm1108, %vm1109
      %v1111 = vsel %vm1110, %v1103, %v1107
      %v1112 = vand.u32 2147483647, %v759
      %vm1113 = vcmp.eq.f32.partialorder %v1112, 8.507059e+37
      %v1114 = vand.u32 %v759, 2147483648
      %v1115 = vor.u32 1.1754944e-38, %v1114
      %v1116 = vsel %vm1113, %v1115, %v1111
      %v1117 = vmul.f32 1.0, %v1116
      %v1118 = vrcp.pop %v760
      %v1119 = vmul.f32 %v760, %v1118
      %v1120 = vsub.f32 1.0, %v1119
      %v1121 = vmul.f32 %v1118, %v1120
      %v1122 = vadd.f32 %v1118, %v1121
      %vm1123 = vweird.f32 %v760
      %vm1124 = vweird.f32 %v1118
      %vm1125 = vmor %vm1123, %vm1124
      %v1126 = vsel %vm1125, %v1118, %v1122
      %v1127 = vand.u32 2147483647, %v760
      %vm1128 = vcmp.eq.f32.partialorder %v1127, 8.507059e+37
      %v1129 = vand.u32 %v760, 2147483648
      %v1130 = vor.u32 1.1754944e-38, %v1129
      %v1131 = vsel %vm1128, %v1130, %v1126
      %v1132 = vmul.f32 1.0, %v1131
      %v1133 = vrcp.pop %v761
      %v1134 = vmul.f32 %v761, %v1133
      %v1135 = vsub.f32 1.0, %v1134
      %v1136 = vmul.f32 %v1133, %v1135
      %v1137 = vadd.f32 %v1133, %v1136
      %vm1138 = vweird.f32 %v761
      %vm1139 = vweird.f32 %v1133
      %vm1140 = vmor %vm1138, %vm1139
      %v1141 = vsel %vm1140, %v1133, %v1137
      %v1142 = vand.u32 2147483647, %v761
      %vm1143 = vcmp.eq.f32.partialorder %v1142, 8.507059e+37
      %v1144 = vand.u32 %v761, 2147483648
      %v1145 = vor.u32 1.1754944e-38, %v1144
      %v1146 = vsel %vm1143, %v1145, %v1141
      %v1147 = vmul.f32 1.0, %v1146
      %v1148 = vrcp.pop %v762
      %v1149 = vmul.f32 %v762, %v1148
      %v1150 = vsub.f32 1.0, %v1149
      %v1151 = vmul.f32 %v1148, %v1150
      %v1152 = vadd.f32 %v1148, %v1151
      %vm1153 = vweird.f32 %v762
      %vm1154 = vweird.f32 %v1148
      %vm1155 = vmor %vm1153, %vm1154
      %v1156 = vsel %vm1155, %v1148, %v1152
      %v1157 = vand.u32 2147483647, %v762
      %vm1158 = vcmp.eq.f32.partialorder %v1157, 8.507059e+37
      %v1159 = vand.u32 %v762, 2147483648
      %v1160 = vor.u32 1.1754944e-38, %v1159
      %v1161 = vsel %vm1158, %v1160, %v1156
      %v1162 = vmul.f32 1.0, %v1161
      %v1163 = vrcp.pop %v763
      %v1164 = vmul.f32 %v763, %v1163
      %v1165 = vsub.f32 1.0, %v1164
      %v1166 = vmul.f32 %v1163, %v1165
      %v1167 = vadd.f32 %v1163, %v1166
      %vm1168 = vweird.f32 %v763
      %vm1169 = vweird.f32 %v1163
      %vm1170 = vmor %vm1168, %vm1169
      %v1171 = vsel %vm1170, %v1163, %v1167
      %v1172 = vand.u32 2147483647, %v763
      %vm1173 = vcmp.eq.f32.partialorder %v1172, 8.507059e+37
      %v1174 = vand.u32 %v763, 2147483648
      %v1175 = vor.u32 1.1754944e-38, %v1174
      %v1176 = vsel %vm1173, %v1175, %v1171
      %v1177 = vmul.f32 1.0, %v1176
      %v1178 = vrcp.pop %v764
      %v1179 = vmul.f32 %v764, %v1178
      %v1180 = vsub.f32 1.0, %v1179
      %v1181 = vmul.f32 %v1178, %v1180
      %v1182 = vadd.f32 %v1178, %v1181
      %vm1183 = vweird.f32 %v764
      %vm1184 = vweird.f32 %v1178
      %vm1185 = vmor %vm1183, %vm1184
      %v1186 = vsel %vm1185, %v1178, %v1182
      %v1187 = vand.u32 2147483647, %v764
      %vm1188 = vcmp.eq.f32.partialorder %v1187, 8.507059e+37
      %v1189 = vand.u32 %v764, 2147483648
      %v1190 = vor.u32 1.1754944e-38, %v1189
      %v1191 = vsel %vm1188, %v1190, %v1186
      %v1192 = vmul.f32 1.0, %v1191
      %v1193 = vrcp.pop %v765
      %v1194 = vmul.f32 %v765, %v1193
      %v1195 = vsub.f32 1.0, %v1194
      %v1196 = vmul.f32 %v1193, %v1195
      %v1197 = vadd.f32 %v1193, %v1196
      %vm1198 = vweird.f32 %v765
      %vm1199 = vweird.f32 %v1193
      %vm1200 = vmor %vm1198, %vm1199
      %v1201 = vsel %vm1200, %v1193, %v1197
      %v1202 = vand.u32 2147483647, %v765
      %vm1203 = vcmp.eq.f32.partialorder %v1202, 8.507059e+37
      %v1204 = vand.u32 %v765, 2147483648
      %v1205 = vor.u32 1.1754944e-38, %v1204
      %v1206 = vsel %vm1203, %v1205, %v1201
      %v1207 = vmul.f32 1.0, %v1206
      %v1208 = vrcp.pop %v766
      %v1209 = vmul.f32 %v766, %v1208
      %v1210 = vsub.f32 1.0, %v1209
      %v1211 = vmul.f32 %v1208, %v1210
      %v1212 = vadd.f32 %v1208, %v1211
      %vm1213 = vweird.f32 %v766
      %vm1214 = vweird.f32 %v1208
      %vm1215 = vmor %vm1213, %vm1214
      %v1216 = vsel %vm1215, %v1208, %v1212
      %v1217 = vand.u32 2147483647, %v766
      %vm1218 = vcmp.eq.f32.partialorder %v1217, 8.507059e+37
      %v1219 = vand.u32 %v766, 2147483648
      %v1220 = vor.u32 1.1754944e-38, %v1219
      %v1221 = vsel %vm1218, %v1220, %v1216
      %v1222 = vmul.f32 1.0, %v1221
      %v1223 = vrcp.pop %v767
      %v1224 = vmul.f32 %v767, %v1223
      %v1225 = vsub.f32 1.0, %v1224
      %v1226 = vmul.f32 %v1223, %v1225
      %v1227 = vadd.f32 %v1223, %v1226
      %vm1228 = vweird.f32 %v767
      %vm1229 = vweird.f32 %v1223
      %vm1230 = vmor %vm1228, %vm1229
      %v1231 = vsel %vm1230, %v1223, %v1227
      %v1232 = vand.u32 2147483647, %v767
      %vm1233 = vcmp.eq.f32.partialorder %v1232, 8.507059e+37
      %v1234 = vand.u32 %v767, 2147483648
      %v1235 = vor.u32 1.1754944e-38, %v1234
      %v1236 = vsel %vm1233, %v1235, %v1231
      %v1237 = vmul.f32 1.0, %v1236
      %v1238 = vrcp.pop %v768
      %v1239 = vmul.f32 %v768, %v1238
      %v1240 = vsub.f32 1.0, %v1239
      %v1241 = vmul.f32 %v1238, %v1240
      %v1242 = vadd.f32 %v1238, %v1241
      %vm1243 = vweird.f32 %v768
      %vm1244 = vweird.f32 %v1238
      %vm1245 = vmor %vm1243, %vm1244
      %v1246 = vsel %vm1245, %v1238, %v1242
      %v1247 = vand.u32 2147483647, %v768
      %vm1248 = vcmp.eq.f32.partialorder %v1247, 8.507059e+37
      %v1249 = vand.u32 %v768, 2147483648
      %v1250 = vor.u32 1.1754944e-38, %v1249
      %v1251 = vsel %vm1248, %v1250, %v1246
      %v1252 = vmul.f32 1.0, %v1251
      %v1253 = vrcp.pop %v769
      %v1254 = vmul.f32 %v769, %v1253
      %v1255 = vsub.f32 1.0, %v1254
      %v1256 = vmul.f32 %v1253, %v1255
      %v1257 = vadd.f32 %v1253, %v1256
      %vm1258 = vweird.f32 %v769
      %vm1259 = vweird.f32 %v1253
      %vm1260 = vmor %vm1258, %vm1259
      %v1261 = vsel %vm1260, %v1253, %v1257
      %v1262 = vand.u32 2147483647, %v769
      %vm1263 = vcmp.eq.f32.partialorder %v1262, 8.507059e+37
      %v1264 = vand.u32 %v769, 2147483648
      %v1265 = vor.u32 1.1754944e-38, %v1264
      %v1266 = vsel %vm1263, %v1265, %v1261
      %v1267 = vmul.f32 1.0, %v1266
      %v1268 = vrcp.pop %v770
      %v1269 = vmul.f32 %v770, %v1268
      %v1270 = vsub.f32 1.0, %v1269
      %v1271 = vmul.f32 %v1268, %v1270
      %v1272 = vadd.f32 %v1268, %v1271
      %vm1273 = vweird.f32 %v770
      %vm1274 = vweird.f32 %v1268
      %vm1275 = vmor %vm1273, %vm1274
      %v1276 = vsel %vm1275, %v1268, %v1272
      %v1277 = vand.u32 2147483647, %v770
      %vm1278 = vcmp.eq.f32.partialorder %v1277, 8.507059e+37
      %v1279 = vand.u32 %v770, 2147483648
      %v1280 = vor.u32 1.1754944e-38, %v1279
      %v1281 = vsel %vm1278, %v1280, %v1276
      %v1282 = vmul.f32 1.0, %v1281
      %v1283 = vrcp.pop %v771
      %v1284 = vmul.f32 %v771, %v1283
      %v1285 = vsub.f32 1.0, %v1284
      %v1286 = vmul.f32 %v1283, %v1285
      %v1287 = vadd.f32 %v1283, %v1286
      %vm1288 = vweird.f32 %v771
      %vm1289 = vweird.f32 %v1283
      %vm1290 = vmor %vm1288, %vm1289
      %v1291 = vsel %vm1290, %v1283, %v1287
      %v1292 = vand.u32 2147483647, %v771
      %vm1293 = vcmp.eq.f32.partialorder %v1292, 8.507059e+37
      %v1294 = vand.u32 %v771, 2147483648
      %v1295 = vor.u32 1.1754944e-38, %v1294
      %v1296 = vsel %vm1293, %v1295, %v1291
      %v1297 = vmul.f32 1.0, %v1296
      %v1298 = vrcp.pop %v772
      %v1299 = vmul.f32 %v772, %v1298
      %v1300 = vsub.f32 1.0, %v1299
      %v1301 = vmul.f32 %v1298, %v1300
      %v1302 = vadd.f32 %v1298, %v1301
      %vm1303 = vweird.f32 %v772
      %vm1304 = vweird.f32 %v1298
      %vm1305 = vmor %vm1303, %vm1304
      %v1306 = vsel %vm1305, %v1298, %v1302
      %v1307 = vand.u32 2147483647, %v772
      %vm1308 = vcmp.eq.f32.partialorder %v1307, 8.507059e+37
      %v1309 = vand.u32 %v772, 2147483648
      %v1310 = vor.u32 1.1754944e-38, %v1309
      %v1311 = vsel %vm1308, %v1310, %v1306
      %v1312 = vmul.f32 1.0, %v1311
      %v1313 = vrcp.pop %v773
      %v1314 = vmul.f32 %v773, %v1313
      %v1315 = vsub.f32 1.0, %v1314
      %v1316 = vmul.f32 %v1313, %v1315
      %v1317 = vadd.f32 %v1313, %v1316
      %vm1318 = vweird.f32 %v773
      %vm1319 = vweird.f32 %v1313
      %vm1320 = vmor %vm1318, %vm1319
      %v1321 = vsel %vm1320, %v1313, %v1317
      %v1322 = vand.u32 2147483647, %v773
      %vm1323 = vcmp.eq.f32.partialorder %v1322, 8.507059e+37
      %v1324 = vand.u32 %v773, 2147483648
      %v1325 = vor.u32 1.1754944e-38, %v1324
      %v1326 = vsel %vm1323, %v1325, %v1321
      %v1327 = vmul.f32 1.0, %v1326
      %v1328 = vrcp.pop %v774
      %v1329 = vmul.f32 %v774, %v1328
      %v1330 = vsub.f32 1.0, %v1329
      %v1331 = vmul.f32 %v1328, %v1330
      %v1332 = vadd.f32 %v1328, %v1331
      %vm1333 = vweird.f32 %v774
      %vm1334 = vweird.f32 %v1328
      %vm1335 = vmor %vm1333, %vm1334
      %v1336 = vsel %vm1335, %v1328, %v1332
      %v1337 = vand.u32 2147483647, %v774
      %vm1338 = vcmp.eq.f32.partialorder %v1337, 8.507059e+37
      %v1339 = vand.u32 %v774, 2147483648
      %v1340 = vor.u32 1.1754944e-38, %v1339
      %v1341 = vsel %vm1338, %v1340, %v1336
      %v1342 = vmul.f32 1.0, %v1341
      %v1343 = vrcp.pop %v775
      %v1344 = vmul.f32 %v775, %v1343
      %v1345 = vsub.f32 1.0, %v1344
      %v1346 = vmul.f32 %v1343, %v1345
      %v1347 = vadd.f32 %v1343, %v1346
      %vm1348 = vweird.f32 %v775
      %vm1349 = vweird.f32 %v1343
      %vm1350 = vmor %vm1348, %vm1349
      %v1351 = vsel %vm1350, %v1343, %v1347
      %v1352 = vand.u32 2147483647, %v775
      %vm1353 = vcmp.eq.f32.partialorder %v1352, 8.507059e+37
      %v1354 = vand.u32 %v775, 2147483648
      %v1355 = vor.u32 1.1754944e-38, %v1354
      %v1356 = vsel %vm1353, %v1355, %v1351
      %v1357 = vmul.f32 1.0, %v1356
      %v1358 = vrcp.pop %v776
      %v1359 = vmul.f32 %v776, %v1358
      %v1360 = vsub.f32 1.0, %v1359
      %v1361 = vmul.f32 %v1358, %v1360
      %v1362 = vadd.f32 %v1358, %v1361
      %vm1363 = vweird.f32 %v776
      %vm1364 = vweird.f32 %v1358
      %vm1365 = vmor %vm1363, %vm1364
      %v1366 = vsel %vm1365, %v1358, %v1362
      %v1367 = vand.u32 2147483647, %v776
      %vm1368 = vcmp.eq.f32.partialorder %v1367, 8.507059e+37
      %v1369 = vand.u32 %v776, 2147483648
      %v1370 = vor.u32 1.1754944e-38, %v1369
      %v1371 = vsel %vm1368, %v1370, %v1366
      %v1372 = vmul.f32 1.0, %v1371
      %v1373 = vrcp.pop %v777
      %v1374 = vmul.f32 %v777, %v1373
      %v1375 = vsub.f32 1.0, %v1374
      %v1376 = vmul.f32 %v1373, %v1375
      %v1377 = vadd.f32 %v1373, %v1376
      %vm1378 = vweird.f32 %v777
      %vm1379 = vweird.f32 %v1373
      %vm1380 = vmor %vm1378, %vm1379
      %v1381 = vsel %vm1380, %v1373, %v1377
      %v1382 = vand.u32 2147483647, %v777
      %vm1383 = vcmp.eq.f32.partialorder %v1382, 8.507059e+37
      %v1384 = vand.u32 %v777, 2147483648
      %v1385 = vor.u32 1.1754944e-38, %v1384
      %v1386 = vsel %vm1383, %v1385, %v1381
      %v1387 = vmul.f32 1.0, %v1386
      %v1388 = vrcp.pop %v778
      %v1389 = vmul.f32 %v778, %v1388
      %v1390 = vsub.f32 1.0, %v1389
      %v1391 = vmul.f32 %v1388, %v1390
      %v1392 = vadd.f32 %v1388, %v1391
      %vm1393 = vweird.f32 %v778
      %vm1394 = vweird.f32 %v1388
      %vm1395 = vmor %vm1393, %vm1394
      %v1396 = vsel %vm1395, %v1388, %v1392
      %v1397 = vand.u32 2147483647, %v778
      %vm1398 = vcmp.eq.f32.partialorder %v1397, 8.507059e+37
      %v1399 = vand.u32 %v778, 2147483648
      %v1400 = vor.u32 1.1754944e-38, %v1399
      %v1401 = vsel %vm1398, %v1400, %v1396
      %v1402 = vmul.f32 1.0, %v1401
      %v1403 = vrcp.pop %v779
      %v1404 = vmul.f32 %v779, %v1403
      %v1405 = vsub.f32 1.0, %v1404
      %v1406 = vmul.f32 %v1403, %v1405
      %v1407 = vadd.f32 %v1403, %v1406
      %vm1408 = vweird.f32 %v779
      %vm1409 = vweird.f32 %v1403
      %vm1410 = vmor %vm1408, %vm1409
      %v1411 = vsel %vm1410, %v1403, %v1407
      %v1412 = vand.u32 2147483647, %v779
      %vm1413 = vcmp.eq.f32.partialorder %v1412, 8.507059e+37
      %v1414 = vand.u32 %v779, 2147483648
      %v1415 = vor.u32 1.1754944e-38, %v1414
      %v1416 = vsel %vm1413, %v1415, %v1411
      %v1417 = vmul.f32 1.0, %v1416
      %v1418 = vrcp.pop %v780
      %v1419 = vmul.f32 %v780, %v1418
      %v1420 = vsub.f32 1.0, %v1419
      %v1421 = vmul.f32 %v1418, %v1420
      %v1422 = vadd.f32 %v1418, %v1421
      %vm1423 = vweird.f32 %v780
      %vm1424 = vweird.f32 %v1418
      %vm1425 = vmor %vm1423, %vm1424
      %v1426 = vsel %vm1425, %v1418, %v1422
      %v1427 = vand.u32 2147483647, %v780
      %vm1428 = vcmp.eq.f32.partialorder %v1427, 8.507059e+37
      %v1429 = vand.u32 %v780, 2147483648
      %v1430 = vor.u32 1.1754944e-38, %v1429
      %v1431 = vsel %vm1428, %v1430, %v1426
      %v1432 = vmul.f32 1.0, %v1431
      %v1433 = vrcp.pop %v781
      %v1434 = vmul.f32 %v781, %v1433
      %v1435 = vsub.f32 1.0, %v1434
      %v1436 = vmul.f32 %v1433, %v1435
      %v1437 = vadd.f32 %v1433, %v1436
      %vm1438 = vweird.f32 %v781
      %vm1439 = vweird.f32 %v1433
      %vm1440 = vmor %vm1438, %vm1439
      %v1441 = vsel %vm1440, %v1433, %v1437
      %v1442 = vand.u32 2147483647, %v781
      %vm1443 = vcmp.eq.f32.partialorder %v1442, 8.507059e+37
      %v1444 = vand.u32 %v781, 2147483648
      %v1445 = vor.u32 1.1754944e-38, %v1444
      %v1446 = vsel %vm1443, %v1445, %v1441
      %v1447 = vmul.f32 1.0, %v1446
      %v1448 = vrcp.pop %v782
      %v1449 = vmul.f32 %v782, %v1448
      %v1450 = vsub.f32 1.0, %v1449
      %v1451 = vmul.f32 %v1448, %v1450
      %v1452 = vadd.f32 %v1448, %v1451
      %vm1453 = vweird.f32 %v782
      %vm1454 = vweird.f32 %v1448
      %vm1455 = vmor %vm1453, %vm1454
      %v1456 = vsel %vm1455, %v1448, %v1452
      %v1457 = vand.u32 2147483647, %v782
      %vm1458 = vcmp.eq.f32.partialorder %v1457, 8.507059e+37
      %v1459 = vand.u32 %v782, 2147483648
      %v1460 = vor.u32 1.1754944e-38, %v1459
      %v1461 = vsel %vm1458, %v1460, %v1456
      %v1462 = vmul.f32 1.0, %v1461
      %v1463 = vrcp.pop %v783
      %v1464 = vmul.f32 %v783, %v1463
      %v1465 = vsub.f32 1.0, %v1464
      %v1466 = vmul.f32 %v1463, %v1465
      %v1467 = vadd.f32 %v1463, %v1466
      %vm1468 = vweird.f32 %v783
      %vm1469 = vweird.f32 %v1463
      %vm1470 = vmor %vm1468, %vm1469
      %v1471 = vsel %vm1470, %v1463, %v1467
      %v1472 = vand.u32 2147483647, %v783
      %vm1473 = vcmp.eq.f32.partialorder %v1472, 8.507059e+37
      %v1474 = vand.u32 %v783, 2147483648
      %v1475 = vor.u32 1.1754944e-38, %v1474
      %v1476 = vsel %vm1473, %v1475, %v1471
      %v1477 = vmul.f32 1.0, %v1476
      %v1478 = vrcp.pop %v784
      %v1479 = vmul.f32 %v784, %v1478
      %v1480 = vsub.f32 1.0, %v1479
      %v1481 = vmul.f32 %v1478, %v1480
      %v1482 = vadd.f32 %v1478, %v1481
      %vm1483 = vweird.f32 %v784
      %vm1484 = vweird.f32 %v1478
      %vm1485 = vmor %vm1483, %vm1484
      %v1486 = vsel %vm1485, %v1478, %v1482
      %v1487 = vand.u32 2147483647, %v784
      %vm1488 = vcmp.eq.f32.partialorder %v1487, 8.507059e+37
      %v1489 = vand.u32 %v784, 2147483648
      %v1490 = vor.u32 1.1754944e-38, %v1489
      %v1491 = vsel %vm1488, %v1490, %v1486
      %v1492 = vmul.f32 1.0, %v1491
      %v1493 = vrcp.pop %v785
      %v1494 = vmul.f32 %v785, %v1493
      %v1495 = vsub.f32 1.0, %v1494
      %v1496 = vmul.f32 %v1493, %v1495
      %v1497 = vadd.f32 %v1493, %v1496
      %vm1498 = vweird.f32 %v785
      %vm1499 = vweird.f32 %v1493
      %vm1500 = vmor %vm1498, %vm1499
      %v1501 = vsel %vm1500, %v1493, %v1497
      %v1502 = vand.u32 2147483647, %v785
      %vm1503 = vcmp.eq.f32.partialorder %v1502, 8.507059e+37
      %v1504 = vand.u32 %v785, 2147483648
      %v1505 = vor.u32 1.1754944e-38, %v1504
      %v1506 = vsel %vm1503, %v1505, %v1501
      %v1507 = vmul.f32 1.0, %v1506
      %v1508 = vrcp.pop %v786
      %v1509 = vmul.f32 %v786, %v1508
      %v1510 = vsub.f32 1.0, %v1509
      %v1511 = vmul.f32 %v1508, %v1510
      %v1512 = vadd.f32 %v1508, %v1511
      %vm1513 = vweird.f32 %v786
      %vm1514 = vweird.f32 %v1508
      %vm1515 = vmor %vm1513, %vm1514
      %v1516 = vsel %vm1515, %v1508, %v1512
      %v1517 = vand.u32 2147483647, %v786
      %vm1518 = vcmp.eq.f32.partialorder %v1517, 8.507059e+37
      %v1519 = vand.u32 %v786, 2147483648
      %v1520 = vor.u32 1.1754944e-38, %v1519
      %v1521 = vsel %vm1518, %v1520, %v1516
      %v1522 = vmul.f32 1.0, %v1521
      %v1523 = vrcp.pop %v787
      %v1524 = vmul.f32 %v787, %v1523
      %v1525 = vsub.f32 1.0, %v1524
      %v1526 = vmul.f32 %v1523, %v1525
      %v1527 = vadd.f32 %v1523, %v1526
      %vm1528 = vweird.f32 %v787
      %vm1529 = vweird.f32 %v1523
      %vm1530 = vmor %vm1528, %vm1529
      %v1531 = vsel %vm1530, %v1523, %v1527
      %v1532 = vand.u32 2147483647, %v787
      %vm1533 = vcmp.eq.f32.partialorder %v1532, 8.507059e+37
      %v1534 = vand.u32 %v787, 2147483648
      %v1535 = vor.u32 1.1754944e-38, %v1534
      %v1536 = vsel %vm1533, %v1535, %v1531
      %v1537 = vmul.f32 1.0, %v1536
      %v1538 = vrcp.pop %v788
      %v1539 = vmul.f32 %v788, %v1538
      %v1540 = vsub.f32 1.0, %v1539
      %v1541 = vmul.f32 %v1538, %v1540
      %v1542 = vadd.f32 %v1538, %v1541
      %vm1543 = vweird.f32 %v788
      %vm1544 = vweird.f32 %v1538
      %vm1545 = vmor %vm1543, %vm1544
      %v1546 = vsel %vm1545, %v1538, %v1542
      %v1547 = vand.u32 2147483647, %v788
      %vm1548 = vcmp.eq.f32.partialorder %v1547, 8.507059e+37
      %v1549 = vand.u32 %v788, 2147483648
      %v1550 = vor.u32 1.1754944e-38, %v1549
      %v1551 = vsel %vm1548, %v1550, %v1546
      %v1552 = vmul.f32 1.0, %v1551
      %v1553 = vrcp.pop %v789
      %v1554 = vmul.f32 %v789, %v1553
      %v1555 = vsub.f32 1.0, %v1554
      %v1556 = vmul.f32 %v1553, %v1555
      %v1557 = vadd.f32 %v1553, %v1556
      %vm1558 = vweird.f32 %v789
      %vm1559 = vweird.f32 %v1553
      %vm1560 = vmor %vm1558, %vm1559
      %v1561 = vsel %vm1560, %v1553, %v1557
      %v1562 = vand.u32 2147483647, %v789
      %vm1563 = vcmp.eq.f32.partialorder %v1562, 8.507059e+37
      %v1564 = vand.u32 %v789, 2147483648
      %v1565 = vor.u32 1.1754944e-38, %v1564
      %v1566 = vsel %vm1563, %v1565, %v1561
      %v1567 = vmul.f32 1.0, %v1566
      %v1568 = vrcp.pop %v790
      %v1569 = vmul.f32 %v790, %v1568
      %v1570 = vsub.f32 1.0, %v1569
      %v1571 = vmul.f32 %v1568, %v1570
      %v1572 = vadd.f32 %v1568, %v1571
      %vm1573 = vweird.f32 %v790
      %vm1574 = vweird.f32 %v1568
      %vm1575 = vmor %vm1573, %vm1574
      %v1576 = vsel %vm1575, %v1568, %v1572
      %v1577 = vand.u32 2147483647, %v790
      %vm1578 = vcmp.eq.f32.partialorder %v1577, 8.507059e+37
      %v1579 = vand.u32 %v790, 2147483648
      %v1580 = vor.u32 1.1754944e-38, %v1579
      %v1581 = vsel %vm1578, %v1580, %v1576
      %v1582 = vmul.f32 1.0, %v1581
      %v1583 = vrcp.pop %v791
      %v1584 = vmul.f32 %v791, %v1583
      %v1585 = vsub.f32 1.0, %v1584
      %v1586 = vmul.f32 %v1583, %v1585
      %v1587 = vadd.f32 %v1583, %v1586
      %vm1588 = vweird.f32 %v791
      %vm1589 = vweird.f32 %v1583
      %vm1590 = vmor %vm1588, %vm1589
      %v1591 = vsel %vm1590, %v1583, %v1587
      %v1592 = vand.u32 2147483647, %v791
      %vm1593 = vcmp.eq.f32.partialorder %v1592, 8.507059e+37
      %v1594 = vand.u32 %v791, 2147483648
      %v1595 = vor.u32 1.1754944e-38, %v1594
      %v1596 = vsel %vm1593, %v1595, %v1591
      %v1597 = vmul.f32 1.0, %v1596
      %v1598 = vrcp.pop %v792
      %v1599 = vmul.f32 %v792, %v1598
      %v1600 = vsub.f32 1.0, %v1599
      %v1601 = vmul.f32 %v1598, %v1600
      %v1602 = vadd.f32 %v1598, %v1601
      %vm1603 = vweird.f32 %v792
      %vm1604 = vweird.f32 %v1598
      %vm1605 = vmor %vm1603, %vm1604
      %v1606 = vsel %vm1605, %v1598, %v1602
      %v1607 = vand.u32 2147483647, %v792
      %vm1608 = vcmp.eq.f32.partialorder %v1607, 8.507059e+37
      %v1609 = vand.u32 %v792, 2147483648
      %v1610 = vor.u32 1.1754944e-38, %v1609
      %v1611 = vsel %vm1608, %v1610, %v1606
      %v1612 = vmul.f32 1.0, %v1611
      %v1613 = vrcp.pop %v793
      %v1614 = vmul.f32 %v793, %v1613
      %v1615 = vsub.f32 1.0, %v1614
      %v1616 = vmul.f32 %v1613, %v1615
      %v1617 = vadd.f32 %v1613, %v1616
      %vm1618 = vweird.f32 %v793
      %vm1619 = vweird.f32 %v1613
      %vm1620 = vmor %vm1618, %vm1619
      %v1621 = vsel %vm1620, %v1613, %v1617
      %v1622 = vand.u32 2147483647, %v793
      %vm1623 = vcmp.eq.f32.partialorder %v1622, 8.507059e+37
      %v1624 = vand.u32 %v793, 2147483648
      %v1625 = vor.u32 1.1754944e-38, %v1624
      %v1626 = vsel %vm1623, %v1625, %v1621
      %v1627 = vmul.f32 1.0, %v1626
      %v1628 = vrcp.pop %v794
      %v1629 = vmul.f32 %v794, %v1628
      %v1630 = vsub.f32 1.0, %v1629
      %v1631 = vmul.f32 %v1628, %v1630
      %v1632 = vadd.f32 %v1628, %v1631
      %vm1633 = vweird.f32 %v794
      %vm1634 = vweird.f32 %v1628
      %vm1635 = vmor %vm1633, %vm1634
      %v1636 = vsel %vm1635, %v1628, %v1632
      %v1637 = vand.u32 2147483647, %v794
      %vm1638 = vcmp.eq.f32.partialorder %v1637, 8.507059e+37
      %v1639 = vand.u32 %v794, 2147483648
      %v1640 = vor.u32 1.1754944e-38, %v1639
      %v1641 = vsel %vm1638, %v1640, %v1636
      %v1642 = vmul.f32 1.0, %v1641
      %v1643 = vrcp.pop %v795
      %v1644 = vmul.f32 %v795, %v1643
      %v1645 = vsub.f32 1.0, %v1644
      %v1646 = vmul.f32 %v1643, %v1645
      %v1647 = vadd.f32 %v1643, %v1646
      %vm1648 = vweird.f32 %v795
      %vm1649 = vweird.f32 %v1643
      %vm1650 = vmor %vm1648, %vm1649
      %v1651 = vsel %vm1650, %v1643, %v1647
      %v1652 = vand.u32 2147483647, %v795
      %vm1653 = vcmp.eq.f32.partialorder %v1652, 8.507059e+37
      %v1654 = vand.u32 %v795, 2147483648
      %v1655 = vor.u32 1.1754944e-38, %v1654
      %v1656 = vsel %vm1653, %v1655, %v1651
      %v1657 = vmul.f32 1.0, %v1656
      %v1658 = vrcp.pop %v796
      %v1659 = vmul.f32 %v796, %v1658
      %v1660 = vsub.f32 1.0, %v1659
      %v1661 = vmul.f32 %v1658, %v1660
      %v1662 = vadd.f32 %v1658, %v1661
      %vm1663 = vweird.f32 %v796
      %vm1664 = vweird.f32 %v1658
      %vm1665 = vmor %vm1663, %vm1664
      %v1666 = vsel %vm1665, %v1658, %v1662
      %v1667 = vand.u32 2147483647, %v796
      %vm1668 = vcmp.eq.f32.partialorder %v1667, 8.507059e+37
      %v1669 = vand.u32 %v796, 2147483648
      %v1670 = vor.u32 1.1754944e-38, %v1669
      %v1671 = vsel %vm1668, %v1670, %v1666
      %v1672 = vmul.f32 1.0, %v1671
      %v1673 = vrcp.pop %v797
      %v1674 = vmul.f32 %v797, %v1673
      %v1675 = vsub.f32 1.0, %v1674
      %v1676 = vmul.f32 %v1673, %v1675
      %v1677 = vadd.f32 %v1673, %v1676
      %vm1678 = vweird.f32 %v797
      %vm1679 = vweird.f32 %v1673
      %vm1680 = vmor %vm1678, %vm1679
      %v1681 = vsel %vm1680, %v1673, %v1677
      %v1682 = vand.u32 2147483647, %v797
      %vm1683 = vcmp.eq.f32.partialorder %v1682, 8.507059e+37
      %v1684 = vand.u32 %v797, 2147483648
      %v1685 = vor.u32 1.1754944e-38, %v1684
      %v1686 = vsel %vm1683, %v1685, %v1681
      %v1687 = vmul.f32 1.0, %v1686
      %v1688 = vrcp.pop %v798
      %v1689 = vmul.f32 %v798, %v1688
      %v1690 = vsub.f32 1.0, %v1689
      %v1691 = vmul.f32 %v1688, %v1690
      %v1692 = vadd.f32 %v1688, %v1691
      %vm1693 = vweird.f32 %v798
      %vm1694 = vweird.f32 %v1688
      %vm1695 = vmor %vm1693, %vm1694
      %v1696 = vsel %vm1695, %v1688, %v1692
      %v1697 = vand.u32 2147483647, %v798
      %vm1698 = vcmp.eq.f32.partialorder %v1697, 8.507059e+37
      %v1699 = vand.u32 %v798, 2147483648
      %v1700 = vor.u32 1.1754944e-38, %v1699
      %v1701 = vsel %vm1698, %v1700, %v1696
      %v1702 = vmul.f32 1.0, %v1701
      %v1703 = vrcp.pop %v799
      %v1704 = vmul.f32 %v799, %v1703
      %v1705 = vsub.f32 1.0, %v1704
      %v1706 = vmul.f32 %v1703, %v1705
      %v1707 = vadd.f32 %v1703, %v1706
      %vm1708 = vweird.f32 %v799
      %vm1709 = vweird.f32 %v1703
      %vm1710 = vmor %vm1708, %vm1709
      %v1711 = vsel %vm1710, %v1703, %v1707
      %v1712 = vand.u32 2147483647, %v799
      %vm1713 = vcmp.eq.f32.partialorder %v1712, 8.507059e+37
      %v1714 = vand.u32 %v799, 2147483648
      %v1715 = vor.u32 1.1754944e-38, %v1714
      %v1716 = vsel %vm1713, %v1715, %v1711
      %v1717 = vmul.f32 1.0, %v1716
      %v1718 = vrcp.pop %v800
      %v1719 = vmul.f32 %v800, %v1718
      %v1720 = vsub.f32 1.0, %v1719
      %v1721 = vmul.f32 %v1718, %v1720
      %v1722 = vadd.f32 %v1718, %v1721
      %vm1723 = vweird.f32 %v800
      %vm1724 = vweird.f32 %v1718
      %vm1725 = vmor %vm1723, %vm1724
      %v1726 = vsel %vm1725, %v1718, %v1722
      %v1727 = vand.u32 2147483647, %v800
      %vm1728 = vcmp.eq.f32.partialorder %v1727, 8.507059e+37
      %v1729 = vand.u32 %v800, 2147483648
      %v1730 = vor.u32 1.1754944e-38, %v1729
      %v1731 = vsel %vm1728, %v1730, %v1726
      %v1732 = vmul.f32 1.0, %v1731
      %v1733 = vrcp.pop %v801
      %v1734 = vmul.f32 %v801, %v1733
      %v1735 = vsub.f32 1.0, %v1734
      %v1736 = vmul.f32 %v1733, %v1735
      %v1737 = vadd.f32 %v1733, %v1736
      %vm1738 = vweird.f32 %v801
      %vm1739 = vweird.f32 %v1733
      %vm1740 = vmor %vm1738, %vm1739
      %v1741 = vsel %vm1740, %v1733, %v1737
      %v1742 = vand.u32 2147483647, %v801
      %vm1743 = vcmp.eq.f32.partialorder %v1742, 8.507059e+37
      %v1744 = vand.u32 %v801, 2147483648
      %v1745 = vor.u32 1.1754944e-38, %v1744
      %v1746 = vsel %vm1743, %v1745, %v1741
      %v1747 = vmul.f32 1.0, %v1746
      %v1748 = vrcp.pop %v802
      %v1749 = vmul.f32 %v802, %v1748
      %v1750 = vsub.f32 1.0, %v1749
      %v1751 = vmul.f32 %v1748, %v1750
      %v1752 = vadd.f32 %v1748, %v1751
      %vm1753 = vweird.f32 %v802
      %vm1754 = vweird.f32 %v1748
      %vm1755 = vmor %vm1753, %vm1754
      %v1756 = vsel %vm1755, %v1748, %v1752
      %v1757 = vand.u32 2147483647, %v802
      %vm1758 = vcmp.eq.f32.partialorder %v1757, 8.507059e+37
      %v1759 = vand.u32 %v802, 2147483648
      %v1760 = vor.u32 1.1754944e-38, %v1759
      %v1761 = vsel %vm1758, %v1760, %v1756
      %v1762 = vmul.f32 1.0, %v1761
      %vm1763 = vcmask 31744
      %v1764 = vsel %vm1763, %v611, 0.0
      %1765 = vadd.xlane.f32.xlu0 %v1764
      %v1766 = vpop.xlane.xlu0 %1765
      %v1767 = vsel %vm1763, %v612, 0.0
      %1768 = vadd.xlane.f32.xlu0 %v1767
      %v1769 = vpop.xlane.xlu0 %1768
      %v1770 = vsel %vm1763, %v613, 0.0
      %1771 = vadd.xlane.f32.xlu0 %v1770
      %v1772 = vpop.xlane.xlu0 %1771
      %v1773 = vsel %vm1763, %v614, 0.0
      %1774 = vadd.xlane.f32.xlu0 %v1773
      %v1775 = vpop.xlane.xlu0 %1774
      %v1776 = vsel %vm1763, %v615, 0.0
      %1777 = vadd.xlane.f32.xlu0 %v1776
      %v1778 = vpop.xlane.xlu0 %1777
      %v1779 = vsel %vm1763, %v616, 0.0
      %1780 = vadd.xlane.f32.xlu0 %v1779
      %v1781 = vpop.xlane.xlu0 %1780
      %v1782 = vsel %vm1763, %v617, 0.0
      %1783 = vadd.xlane.f32.xlu0 %v1782
      %v1784 = vpop.xlane.xlu0 %1783
      %v1785 = vsel %vm1763, %v618, 0.0
      %1786 = vadd.xlane.f32.xlu0 %v1785
      %v1787 = vpop.xlane.xlu0 %1786
      %v1788 = vsel %vm1763, %v619, 0.0
      %1789 = vadd.xlane.f32.xlu0 %v1788
      %v1790 = vpop.xlane.xlu0 %1789
      %v1791 = vsel %vm1763, %v620, 0.0
      %1792 = vadd.xlane.f32.xlu0 %v1791
      %v1793 = vpop.xlane.xlu0 %1792
      %v1794 = vsel %vm1763, %v621, 0.0
      %1795 = vadd.xlane.f32.xlu0 %v1794
      %v1796 = vpop.xlane.xlu0 %1795
      %v1797 = vsel %vm1763, %v622, 0.0
      %1798 = vadd.xlane.f32.xlu0 %v1797
      %v1799 = vpop.xlane.xlu0 %1798
      %v1800 = vsel %vm1763, %v623, 0.0
      %1801 = vadd.xlane.f32.xlu0 %v1800
      %v1802 = vpop.xlane.xlu0 %1801
      %v1803 = vsel %vm1763, %v624, 0.0
      %1804 = vadd.xlane.f32.xlu0 %v1803
      %v1805 = vpop.xlane.xlu0 %1804
      %v1806 = vsel %vm1763, %v625, 0.0
      %1807 = vadd.xlane.f32.xlu0 %v1806
      %v1808 = vpop.xlane.xlu0 %1807
      %v1809 = vsel %vm1763, %v626, 0.0
      %1810 = vadd.xlane.f32.xlu0 %v1809
      %v1811 = vpop.xlane.xlu0 %1810
      %v1812 = vsel %vm1763, %v627, 0.0
      %1813 = vadd.xlane.f32.xlu0 %v1812
      %v1814 = vpop.xlane.xlu0 %1813
      %v1815 = vsel %vm1763, %v628, 0.0
      %1816 = vadd.xlane.f32.xlu0 %v1815
      %v1817 = vpop.xlane.xlu0 %1816
      %v1818 = vsel %vm1763, %v629, 0.0
      %1819 = vadd.xlane.f32.xlu0 %v1818
      %v1820 = vpop.xlane.xlu0 %1819
      %v1821 = vsel %vm1763, %v630, 0.0
      %1822 = vadd.xlane.f32.xlu0 %v1821
      %v1823 = vpop.xlane.xlu0 %1822
      %v1824 = vsel %vm1763, %v631, 0.0
      %1825 = vadd.xlane.f32.xlu0 %v1824
      %v1826 = vpop.xlane.xlu0 %1825
      %v1827 = vsel %vm1763, %v632, 0.0
      %1828 = vadd.xlane.f32.xlu0 %v1827
      %v1829 = vpop.xlane.xlu0 %1828
      %v1830 = vsel %vm1763, %v633, 0.0
      %1831 = vadd.xlane.f32.xlu0 %v1830
      %v1832 = vpop.xlane.xlu0 %1831
      %v1833 = vsel %vm1763, %v634, 0.0
      %1834 = vadd.xlane.f32.xlu0 %v1833
      %v1835 = vpop.xlane.xlu0 %1834
      %v1836 = vsel %vm1763, %v635, 0.0
      %1837 = vadd.xlane.f32.xlu0 %v1836
      %v1838 = vpop.xlane.xlu0 %1837
      %v1839 = vsel %vm1763, %v636, 0.0
      %1840 = vadd.xlane.f32.xlu0 %v1839
      %v1841 = vpop.xlane.xlu0 %1840
      %v1842 = vsel %vm1763, %v637, 0.0
      %1843 = vadd.xlane.f32.xlu0 %v1842
      %v1844 = vpop.xlane.xlu0 %1843
      %v1845 = vsel %vm1763, %v638, 0.0
      %1846 = vadd.xlane.f32.xlu0 %v1845
      %v1847 = vpop.xlane.xlu0 %1846
      %v1848 = vsel %vm1763, %v639, 0.0
      %1849 = vadd.xlane.f32.xlu0 %v1848
      %v1850 = vpop.xlane.xlu0 %1849
      %v1851 = vsel %vm1763, %v640, 0.0
      %1852 = vadd.xlane.f32.xlu0 %v1851
      %v1853 = vpop.xlane.xlu0 %1852
      %v1854 = vsel %vm1763, %v641, 0.0
      %1855 = vadd.xlane.f32.xlu0 %v1854
      %v1856 = vpop.xlane.xlu0 %1855
      %v1857 = vsel %vm1763, %v642, 0.0
      %1858 = vadd.xlane.f32.xlu0 %v1857
      %v1859 = vpop.xlane.xlu0 %1858
      %v1860 = vsel %vm1763, %v643, 0.0
      %1861 = vadd.xlane.f32.xlu0 %v1860
      %v1862 = vpop.xlane.xlu0 %1861
      %v1863 = vsel %vm1763, %v644, 0.0
      %1864 = vadd.xlane.f32.xlu0 %v1863
      %v1865 = vpop.xlane.xlu0 %1864
      %v1866 = vsel %vm1763, %v645, 0.0
      %1867 = vadd.xlane.f32.xlu0 %v1866
      %v1868 = vpop.xlane.xlu0 %1867
      %v1869 = vsel %vm1763, %v646, 0.0
      %1870 = vadd.xlane.f32.xlu0 %v1869
      %v1871 = vpop.xlane.xlu0 %1870
      %v1872 = vsel %vm1763, %v647, 0.0
      %1873 = vadd.xlane.f32.xlu0 %v1872
      %v1874 = vpop.xlane.xlu0 %1873
      %v1875 = vsel %vm1763, %v648, 0.0
      %1876 = vadd.xlane.f32.xlu0 %v1875
      %v1877 = vpop.xlane.xlu0 %1876
      %v1878 = vsel %vm1763, %v649, 0.0
      %1879 = vadd.xlane.f32.xlu0 %v1878
      %v1880 = vpop.xlane.xlu0 %1879
      %v1881 = vsel %vm1763, %v650, 0.0
      %1882 = vadd.xlane.f32.xlu0 %v1881
      %v1883 = vpop.xlane.xlu0 %1882
      %v1884 = vsel %vm1763, %v651, 0.0
      %1885 = vadd.xlane.f32.xlu0 %v1884
      %v1886 = vpop.xlane.xlu0 %1885
      %v1887 = vsel %vm1763, %v652, 0.0
      %1888 = vadd.xlane.f32.xlu0 %v1887
      %v1889 = vpop.xlane.xlu0 %1888
      %v1890 = vsel %vm1763, %v653, 0.0
      %1891 = vadd.xlane.f32.xlu0 %v1890
      %v1892 = vpop.xlane.xlu0 %1891
      %v1893 = vsel %vm1763, %v654, 0.0
      %1894 = vadd.xlane.f32.xlu0 %v1893
      %v1895 = vpop.xlane.xlu0 %1894
      %v1896 = vsel %vm1763, %v655, 0.0
      %1897 = vadd.xlane.f32.xlu0 %v1896
      %v1898 = vpop.xlane.xlu0 %1897
      %v1899 = vsel %vm1763, %v656, 0.0
      %1900 = vadd.xlane.f32.xlu0 %v1899
      %v1901 = vpop.xlane.xlu0 %1900
      %v1902 = vsel %vm1763, %v657, 0.0
      %1903 = vadd.xlane.f32.xlu0 %v1902
      %v1904 = vpop.xlane.xlu0 %1903
      %v1905 = vsel %vm1763, %v658, 0.0
      %1906 = vadd.xlane.f32.xlu0 %v1905
      %v1907 = vpop.xlane.xlu0 %1906
      %v1908 = vsel %vm1763, %v659, 0.0
      %1909 = vadd.xlane.f32.xlu0 %v1908
      %v1910 = vpop.xlane.xlu0 %1909
      %v1911 = vsel %vm1763, %v660, 0.0
      %1912 = vadd.xlane.f32.xlu0 %v1911
      %v1913 = vpop.xlane.xlu0 %1912
      %v1914 = vsel %vm1763, %v661, 0.0
      %1915 = vadd.xlane.f32.xlu0 %v1914
      %v1916 = vpop.xlane.xlu0 %1915
      %v1917 = vsel %vm1763, %v662, 0.0
      %1918 = vadd.xlane.f32.xlu0 %v1917
      %v1919 = vpop.xlane.xlu0 %1918
      %v1920 = vsel %vm1763, %v663, 0.0
      %1921 = vadd.xlane.f32.xlu0 %v1920
      %v1922 = vpop.xlane.xlu0 %1921
      %v1923 = vsel %vm1763, %v664, 0.0
      %1924 = vadd.xlane.f32.xlu0 %v1923
      %v1925 = vpop.xlane.xlu0 %1924
      %v1926 = vsel %vm1763, %v665, 0.0
      %1927 = vadd.xlane.f32.xlu0 %v1926
      %v1928 = vpop.xlane.xlu0 %1927
      %v1929 = vsel %vm1763, %v666, 0.0
      %1930 = vadd.xlane.f32.xlu0 %v1929
      %v1931 = vpop.xlane.xlu0 %1930
      %v1932 = vsel %vm1763, %v667, 0.0
      %1933 = vadd.xlane.f32.xlu0 %v1932
      %v1934 = vpop.xlane.xlu0 %1933
      %v1935 = vsel %vm1763, %v668, 0.0
      %1936 = vadd.xlane.f32.xlu0 %v1935
      %v1937 = vpop.xlane.xlu0 %1936
      %v1938 = vsel %vm1763, %v669, 0.0
      %1939 = vadd.xlane.f32.xlu0 %v1938
      %v1940 = vpop.xlane.xlu0 %1939
      %v1941 = vsel %vm1763, %v670, 0.0
      %1942 = vadd.xlane.f32.xlu0 %v1941
      %v1943 = vpop.xlane.xlu0 %1942
      %v1944 = vsel %vm1763, %v671, 0.0
      %1945 = vadd.xlane.f32.xlu0 %v1944
      %v1946 = vpop.xlane.xlu0 %1945
      %v1947 = vsel %vm1763, %v672, 0.0
      %1948 = vadd.xlane.f32.xlu0 %v1947
      %v1949 = vpop.xlane.xlu0 %1948
      %v1950 = vsel %vm1763, %v673, 0.0
      %1951 = vadd.xlane.f32.xlu0 %v1950
      %v1952 = vpop.xlane.xlu0 %1951
      %v1953 = vsel %vm1763, %v674, 0.0
      %1954 = vadd.xlane.f32.xlu0 %v1953
      %v1955 = vpop.xlane.xlu0 %1954
      %v1956 = vld [vmem:[%s6] sm:$0xf]
      %v1958 = vsel %vm1763, %v611, 0
      %v1961 = vsel %vm1763, %v612, 0
      %v1964 = vsel %vm1763, %v613, 0
      %v1967 = vsel %vm1763, %v614, 0
      %v1970 = vsel %vm1763, %v615, 0
      %v1973 = vsel %vm1763, %v616, 0
      %v1976 = vsel %vm1763, %v617, 0
      %v1979 = vsel %vm1763, %v618, 0
      %v1982 = vsel %vm1763, %v619, 0
      %v1985 = vsel %vm1763, %v620, 0
      %v1988 = vsel %vm1763, %v621, 0
      %v1991 = vsel %vm1763, %v622, 0
      %v1994 = vsel %vm1763, %v623, 0
      %v1997 = vsel %vm1763, %v624, 0
      %v2000 = vsel %vm1763, %v625, 0
      %v2003 = vsel %vm1763, %v626, 0
      %v2006 = vsel %vm1763, %v627, 0
      %v2009 = vsel %vm1763, %v628, 0
      %v2012 = vsel %vm1763, %v629, 0
      %v2015 = vsel %vm1763, %v630, 0
      %v2018 = vsel %vm1763, %v631, 0
      %v2021 = vsel %vm1763, %v632, 0
      %v2024 = vsel %vm1763, %v633, 0
      %v2027 = vsel %vm1763, %v634, 0
      %v2030 = vsel %vm1763, %v635, 0
      %v2033 = vsel %vm1763, %v636, 0
      %v2036 = vsel %vm1763, %v637, 0
      %v2039 = vsel %vm1763, %v638, 0
      %v2042 = vsel %vm1763, %v639, 0
      %v2045 = vsel %vm1763, %v640, 0
      %v2048 = vsel %vm1763, %v641, 0
      %v2051 = vsel %vm1763, %v642, 0
      %v2054 = vsel %vm1763, %v643, 0
      %v2057 = vsel %vm1763, %v644, 0
      %v2060 = vsel %vm1763, %v645, 0
      %v2063 = vsel %vm1763, %v646, 0
      %v2066 = vsel %vm1763, %v647, 0
      %v2069 = vsel %vm1763, %v648, 0
      %v2072 = vsel %vm1763, %v649, 0
      %v2075 = vsel %vm1763, %v650, 0
      %v2078 = vsel %vm1763, %v651, 0
      %v2081 = vsel %vm1763, %v652, 0
      %v2084 = vsel %vm1763, %v653, 0
      %v2087 = vsel %vm1763, %v654, 0
      %v2090 = vsel %vm1763, %v655, 0
      %v2093 = vsel %vm1763, %v656, 0
      %v2096 = vsel %vm1763, %v657, 0
      %v2099 = vsel %vm1763, %v658, 0
      %v2102 = vsel %vm1763, %v659, 0
      %v2105 = vsel %vm1763, %v660, 0
      %v2108 = vsel %vm1763, %v661, 0
      %v2111 = vsel %vm1763, %v662, 0
      %v2114 = vsel %vm1763, %v663, 0
      %v2117 = vsel %vm1763, %v664, 0
      %v2120 = vsel %vm1763, %v665, 0
      %v2123 = vsel %vm1763, %v666, 0
      %v2126 = vsel %vm1763, %v667, 0
      %v2129 = vsel %vm1763, %v668, 0
      %v2132 = vsel %vm1763, %v669, 0
      %v2135 = vsel %vm1763, %v670, 0
      %v2138 = vsel %vm1763, %v671, 0
      %v2141 = vsel %vm1763, %v672, 0
      %v2144 = vsel %vm1763, %v673, 0
      %v2147 = vsel %vm1763, %v674, 0
      %vm2149 = vcmask 1043456
      %v2151 = vsel %vm2149, %v1956, 0
      %2153 = vmatpush.msra.mxu0 0.0
      %2154 = vmatpush.msra.mxu0 0.0
      %2155 = vmatpush.msra.mxu0 0.0
      %2156 = vmatpush.msra.mxu0 0.0
      %2157 = vmatpush.msra.mxu0 0.0
      %2158 = vmatpush.msra.mxu0 0.0
      %2159 = vmatpush.msra.mxu0 0.0
      %2160 = vmatpush.msra.mxu0 0.0
      %2161 = vmatpush.msra.mxu0 0.0
      %2162 = vmatpush.msra.mxu0 0.0
      %2163 = vmatpush.msra.mxu0 0.0
      %2164 = vmatpush.msra.mxu0 0.0
      %2165 = vmatpush.msra.mxu0 0.0
      %2166 = vmatpush.msra.mxu0 0.0
      %2167 = vmatpush.msra.mxu0 0.0
      %2168 = vmatpush.msra.mxu0 %v2151
      %2169 = vmatmul.f32.gmra.mxu0 %v1958
      %v2170 = vpop.f32.mrf.mxu0
      %v2171 = vadd.f32 0.0, %v2170
      %2172 = vmatmul.f32.gmra.mxu0 %v1961
      %v2173 = vpop.f32.mrf.mxu0
      %v2174 = vadd.f32 0.0, %v2173
      %2175 = vmatmul.f32.gmra.mxu0 %v1964
      %v2176 = vpop.f32.mrf.mxu0
      %v2177 = vadd.f32 0.0, %v2176
      %2178 = vmatmul.f32.gmra.mxu0 %v1967
      %v2179 = vpop.f32.mrf.mxu0
      %v2180 = vadd.f32 0.0, %v2179
      %2181 = vmatmul.f32.gmra.mxu0 %v1970
      %v2182 = vpop.f32.mrf.mxu0
      %v2183 = vadd.f32 0.0, %v2182
      %2184 = vmatmul.f32.gmra.mxu0 %v1973
      %v2185 = vpop.f32.mrf.mxu0
      %v2186 = vadd.f32 0.0, %v2185
      %2187 = vmatmul.f32.gmra.mxu0 %v1976
      %v2188 = vpop.f32.mrf.mxu0
      %v2189 = vadd.f32 0.0, %v2188
      %2190 = vmatmul.f32.gmra.mxu0 %v1979
      %v2191 = vpop.f32.mrf.mxu0
      %v2192 = vadd.f32 0.0, %v2191
      %2193 = vmatmul.f32.gmra.mxu0 %v1982
      %v2194 = vpop.f32.mrf.mxu0
      %v2195 = vadd.f32 0.0, %v2194
      %2196 = vmatmul.f32.gmra.mxu0 %v1985
      %v2197 = vpop.f32.mrf.mxu0
      %v2198 = vadd.f32 0.0, %v2197
      %2199 = vmatmul.f32.gmra.mxu0 %v1988
      %v2200 = vpop.f32.mrf.mxu0
      %v2201 = vadd.f32 0.0, %v2200
      %2202 = vmatmul.f32.gmra.mxu0 %v1991
      %v2203 = vpop.f32.mrf.mxu0
      %v2204 = vadd.f32 0.0, %v2203
      %2205 = vmatmul.f32.gmra.mxu0 %v1994
      %v2206 = vpop.f32.mrf.mxu0
      %v2207 = vadd.f32 0.0, %v2206
      %2208 = vmatmul.f32.gmra.mxu0 %v1997
      %v2209 = vpop.f32.mrf.mxu0
      %v2210 = vadd.f32 0.0, %v2209
      %2211 = vmatmul.f32.gmra.mxu0 %v2000
      %v2212 = vpop.f32.mrf.mxu0
      %v2213 = vadd.f32 0.0, %v2212
      %2214 = vmatmul.f32.gmra.mxu0 %v2003
      %v2215 = vpop.f32.mrf.mxu0
      %v2216 = vadd.f32 0.0, %v2215
      %2217 = vmatmul.f32.gmra.mxu0 %v2006
      %v2218 = vpop.f32.mrf.mxu0
      %v2219 = vadd.f32 0.0, %v2218
      %2220 = vmatmul.f32.gmra.mxu0 %v2009
      %v2221 = vpop.f32.mrf.mxu0
      %v2222 = vadd.f32 0.0, %v2221
      %2223 = vmatmul.f32.gmra.mxu0 %v2012
      %v2224 = vpop.f32.mrf.mxu0
      %v2225 = vadd.f32 0.0, %v2224
      %2226 = vmatmul.f32.gmra.mxu0 %v2015
      %v2227 = vpop.f32.mrf.mxu0
      %v2228 = vadd.f32 0.0, %v2227
      %2229 = vmatmul.f32.gmra.mxu0 %v2018
      %v2230 = vpop.f32.mrf.mxu0
      %v2231 = vadd.f32 0.0, %v2230
      %2232 = vmatmul.f32.gmra.mxu0 %v2021
      %v2233 = vpop.f32.mrf.mxu0
      %v2234 = vadd.f32 0.0, %v2233
      %2235 = vmatmul.f32.gmra.mxu0 %v2024
      %v2236 = vpop.f32.mrf.mxu0
      %v2237 = vadd.f32 0.0, %v2236
      %2238 = vmatmul.f32.gmra.mxu0 %v2027
      %v2239 = vpop.f32.mrf.mxu0
      %v2240 = vadd.f32 0.0, %v2239
      %2241 = vmatmul.f32.gmra.mxu0 %v2030
      %v2242 = vpop.f32.mrf.mxu0
      %v2243 = vadd.f32 0.0, %v2242
      %2244 = vmatmul.f32.gmra.mxu0 %v2033
      %v2245 = vpop.f32.mrf.mxu0
      %v2246 = vadd.f32 0.0, %v2245
      %2247 = vmatmul.f32.gmra.mxu0 %v2036
      %v2248 = vpop.f32.mrf.mxu0
      %v2249 = vadd.f32 0.0, %v2248
      %2250 = vmatmul.f32.gmra.mxu0 %v2039
      %v2251 = vpop.f32.mrf.mxu0
      %v2252 = vadd.f32 0.0, %v2251
      %2253 = vmatmul.f32.gmra.mxu0 %v2042
      %v2254 = vpop.f32.mrf.mxu0
      %v2255 = vadd.f32 0.0, %v2254
      %2256 = vmatmul.f32.gmra.mxu0 %v2045
      %v2257 = vpop.f32.mrf.mxu0
      %v2258 = vadd.f32 0.0, %v2257
      %2259 = vmatmul.f32.gmra.mxu0 %v2048
      %v2260 = vpop.f32.mrf.mxu0
      %v2261 = vadd.f32 0.0, %v2260
      %2262 = vmatmul.f32.gmra.mxu0 %v2051
      %v2263 = vpop.f32.mrf.mxu0
      %v2264 = vadd.f32 0.0, %v2263
      %2265 = vmatmul.f32.gmra.mxu0 %v2054
      %v2266 = vpop.f32.mrf.mxu0
      %v2267 = vadd.f32 0.0, %v2266
      %2268 = vmatmul.f32.gmra.mxu0 %v2057
      %v2269 = vpop.f32.mrf.mxu0
      %v2270 = vadd.f32 0.0, %v2269
      %2271 = vmatmul.f32.gmra.mxu0 %v2060
      %v2272 = vpop.f32.mrf.mxu0
      %v2273 = vadd.f32 0.0, %v2272
      %2274 = vmatmul.f32.gmra.mxu0 %v2063
      %v2275 = vpop.f32.mrf.mxu0
      %v2276 = vadd.f32 0.0, %v2275
      %2277 = vmatmul.f32.gmra.mxu0 %v2066
      %v2278 = vpop.f32.mrf.mxu0
      %v2279 = vadd.f32 0.0, %v2278
      %2280 = vmatmul.f32.gmra.mxu0 %v2069
      %v2281 = vpop.f32.mrf.mxu0
      %v2282 = vadd.f32 0.0, %v2281
      %2283 = vmatmul.f32.gmra.mxu0 %v2072
      %v2284 = vpop.f32.mrf.mxu0
      %v2285 = vadd.f32 0.0, %v2284
      %2286 = vmatmul.f32.gmra.mxu0 %v2075
      %v2287 = vpop.f32.mrf.mxu0
      %v2288 = vadd.f32 0.0, %v2287
      %2289 = vmatmul.f32.gmra.mxu0 %v2078
      %v2290 = vpop.f32.mrf.mxu0
      %v2291 = vadd.f32 0.0, %v2290
      %2292 = vmatmul.f32.gmra.mxu0 %v2081
      %v2293 = vpop.f32.mrf.mxu0
      %v2294 = vadd.f32 0.0, %v2293
      %2295 = vmatmul.f32.gmra.mxu0 %v2084
      %v2296 = vpop.f32.mrf.mxu0
      %v2297 = vadd.f32 0.0, %v2296
      %2298 = vmatmul.f32.gmra.mxu0 %v2087
      %v2299 = vpop.f32.mrf.mxu0
      %v2300 = vadd.f32 0.0, %v2299
      %2301 = vmatmul.f32.gmra.mxu0 %v2090
      %v2302 = vpop.f32.mrf.mxu0
      %v2303 = vadd.f32 0.0, %v2302
      %2304 = vmatmul.f32.gmra.mxu0 %v2093
      %v2305 = vpop.f32.mrf.mxu0
      %v2306 = vadd.f32 0.0, %v2305
      %2307 = vmatmul.f32.gmra.mxu0 %v2096
      %v2308 = vpop.f32.mrf.mxu0
      %v2309 = vadd.f32 0.0, %v2308
      %2310 = vmatmul.f32.gmra.mxu0 %v2099
      %v2311 = vpop.f32.mrf.mxu0
      %v2312 = vadd.f32 0.0, %v2311
      %2313 = vmatmul.f32.gmra.mxu0 %v2102
      %v2314 = vpop.f32.mrf.mxu0
      %v2315 = vadd.f32 0.0, %v2314
      %2316 = vmatmul.f32.gmra.mxu0 %v2105
      %v2317 = vpop.f32.mrf.mxu0
      %v2318 = vadd.f32 0.0, %v2317
      %2319 = vmatmul.f32.gmra.mxu0 %v2108
      %v2320 = vpop.f32.mrf.mxu0
      %v2321 = vadd.f32 0.0, %v2320
      %2322 = vmatmul.f32.gmra.mxu0 %v2111
      %v2323 = vpop.f32.mrf.mxu0
      %v2324 = vadd.f32 0.0, %v2323
      %2325 = vmatmul.f32.gmra.mxu0 %v2114
      %v2326 = vpop.f32.mrf.mxu0
      %v2327 = vadd.f32 0.0, %v2326
      %2328 = vmatmul.f32.gmra.mxu0 %v2117
      %v2329 = vpop.f32.mrf.mxu0
      %v2330 = vadd.f32 0.0, %v2329
      %2331 = vmatmul.f32.gmra.mxu0 %v2120
      %v2332 = vpop.f32.mrf.mxu0
      %v2333 = vadd.f32 0.0, %v2332
      %2334 = vmatmul.f32.gmra.mxu0 %v2123
      %v2335 = vpop.f32.mrf.mxu0
      %v2336 = vadd.f32 0.0, %v2335
      %2337 = vmatmul.f32.gmra.mxu0 %v2126
      %v2338 = vpop.f32.mrf.mxu0
      %v2339 = vadd.f32 0.0, %v2338
      %2340 = vmatmul.f32.gmra.mxu0 %v2129
      %v2341 = vpop.f32.mrf.mxu0
      %v2342 = vadd.f32 0.0, %v2341
      %2343 = vmatmul.f32.gmra.mxu0 %v2132
      %v2344 = vpop.f32.mrf.mxu0
      %v2345 = vadd.f32 0.0, %v2344
      %2346 = vmatmul.f32.gmra.mxu0 %v2135
      %v2347 = vpop.f32.mrf.mxu0
      %v2348 = vadd.f32 0.0, %v2347
      %2349 = vmatmul.f32.gmra.mxu0 %v2138
      %v2350 = vpop.f32.mrf.mxu0
      %v2351 = vadd.f32 0.0, %v2350
      %2352 = vmatmul.f32.gmra.mxu0 %v2141
      %v2353 = vpop.f32.mrf.mxu0
      %v2354 = vadd.f32 0.0, %v2353
      %2355 = vmatmul.f32.gmra.mxu0 %v2144
      %v2356 = vpop.f32.mrf.mxu0
      %v2357 = vadd.f32 0.0, %v2356
      %2358 = vmatmul.f32.gmra.mxu0 %v2147
      %v2359 = vpop.f32.mrf.mxu0
      %v2360 = vadd.f32 0.0, %v2359
      %2361 = vdwg.mxu0
      %v2362 = vmul.f32 %v547, %v2171
      %v2363 = vmul.f32 %v548, %v2174
      %v2364 = vmul.f32 %v549, %v2177
      %v2365 = vmul.f32 %v550, %v2180
      %v2366 = vmul.f32 %v551, %v2183
      %v2367 = vmul.f32 %v552, %v2186
      %v2368 = vmul.f32 %v553, %v2189
      %v2369 = vmul.f32 %v554, %v2192
      %v2370 = vmul.f32 %v555, %v2195
      %v2371 = vmul.f32 %v556, %v2198
      %v2372 = vmul.f32 %v557, %v2201
      %v2373 = vmul.f32 %v558, %v2204
      %v2374 = vmul.f32 %v559, %v2207
      %v2375 = vmul.f32 %v560, %v2210
      %v2376 = vmul.f32 %v561, %v2213
      %v2377 = vmul.f32 %v562, %v2216
      %v2378 = vmul.f32 %v563, %v2219
      %v2379 = vmul.f32 %v564, %v2222
      %v2380 = vmul.f32 %v565, %v2225
      %v2381 = vmul.f32 %v566, %v2228
      %v2382 = vmul.f32 %v567, %v2231
      %v2383 = vmul.f32 %v568, %v2234
      %v2384 = vmul.f32 %v569, %v2237
      %v2385 = vmul.f32 %v570, %v2240
      %v2386 = vmul.f32 %v571, %v2243
      %v2387 = vmul.f32 %v572, %v2246
      %v2388 = vmul.f32 %v573, %v2249
      %v2389 = vmul.f32 %v574, %v2252
      %v2390 = vmul.f32 %v575, %v2255
      %v2391 = vmul.f32 %v576, %v2258
      %v2392 = vmul.f32 %v577, %v2261
      %v2393 = vmul.f32 %v578, %v2264
      %v2394 = vmul.f32 %v579, %v2267
      %v2395 = vmul.f32 %v580, %v2270
      %v2396 = vmul.f32 %v581, %v2273
      %v2397 = vmul.f32 %v582, %v2276
      %v2398 = vmul.f32 %v583, %v2279
      %v2399 = vmul.f32 %v584, %v2282
      %v2400 = vmul.f32 %v585, %v2285
      %v2401 = vmul.f32 %v586, %v2288
      %v2402 = vmul.f32 %v587, %v2291
      %v2403 = vmul.f32 %v588, %v2294
      %v2404 = vmul.f32 %v589, %v2297
      %v2405 = vmul.f32 %v590, %v2300
      %v2406 = vmul.f32 %v591, %v2303
      %v2407 = vmul.f32 %v592, %v2306
      %v2408 = vmul.f32 %v593, %v2309
      %v2409 = vmul.f32 %v594, %v2312
      %v2410 = vmul.f32 %v595, %v2315
      %v2411 = vmul.f32 %v596, %v2318
      %v2412 = vmul.f32 %v597, %v2321
      %v2413 = vmul.f32 %v598, %v2324
      %v2414 = vmul.f32 %v599, %v2327
      %v2415 = vmul.f32 %v600, %v2330
      %v2416 = vmul.f32 %v601, %v2333
      %v2417 = vmul.f32 %v602, %v2336
      %v2418 = vmul.f32 %v603, %v2339
      %v2419 = vmul.f32 %v604, %v2342
      %v2420 = vmul.f32 %v605, %v2345
      %v2421 = vmul.f32 %v606, %v2348
      %v2422 = vmul.f32 %v607, %v2351
      %v2423 = vmul.f32 %v608, %v2354
      %v2424 = vmul.f32 %v609, %v2357
      %v2425 = vmul.f32 %v610, %v2360
      %v2426 = vld [vmem:[%s5] sm:$0xff]
      %v2427 = vld [vmem:[%s5 + $0x8] sm:$0xff]
      %v2428 = vld [vmem:[%s5 + $0x10] sm:$0xff]
      %v2429 = vld [vmem:[%s5 + $0x18] sm:$0xff]
      %v2430 = vld [vmem:[%s5 + $0x20] sm:$0xff]
      %v2431 = vld [vmem:[%s5 + $0x28] sm:$0xff]
      %v2432 = vld [vmem:[%s5 + $0x30] sm:$0xff]
      %v2433 = vld [vmem:[%s5 + $0x38] sm:$0xff]
      %v2434 = vld [vmem:[%s5 + $0x40] sm:$0xff]
      %v2435 = vld [vmem:[%s5 + $0x48] sm:$0xff]
      %v2436 = vld [vmem:[%s5 + $0x50] sm:$0xff]
      %v2437 = vld [vmem:[%s5 + $0x58] sm:$0xff]
      %v2438 = vld [vmem:[%s5 + $0x60] sm:$0xff]
      %v2439 = vld [vmem:[%s5 + $0x68] sm:$0xff]
      %v2440 = vld [vmem:[%s5 + $0x70] sm:$0xff]
      %v2441 = vld [vmem:[%s5 + $0x78] sm:$0xff]
      %v2442 = vld [vmem:[%s4] sm:$0xff]
      %v2443 = vld [vmem:[%s4 + $0x8] sm:$0xff]
      %v2444 = vld [vmem:[%s4 + $0x10] sm:$0xff]
      %v2445 = vld [vmem:[%s4 + $0x18] sm:$0xff]
      %v2446 = vld [vmem:[%s11] sm:$0x1]
      %v2448 = vperm.slane %v2446, 0
      %v2450 = vmul.f32 %v2448, %v1766
      %v2451 = vmul.f32 %v2448, %v1769
      %v2452 = vmul.f32 %v2448, %v1772
      %v2453 = vmul.f32 %v2448, %v1775
      %v2454 = vmul.f32 %v2448, %v1778
      %v2455 = vmul.f32 %v2448, %v1781
      %v2456 = vmul.f32 %v2448, %v1784
      %v2457 = vmul.f32 %v2448, %v1787
      %v2458 = vmul.f32 %v2448, %v1790
      %v2459 = vmul.f32 %v2448, %v1793
      %v2460 = vmul.f32 %v2448, %v1796
      %v2461 = vmul.f32 %v2448, %v1799
      %v2462 = vmul.f32 %v2448, %v1802
      %v2463 = vmul.f32 %v2448, %v1805
      %v2464 = vmul.f32 %v2448, %v1808
      %v2465 = vmul.f32 %v2448, %v1811
      %v2466 = vmul.f32 %v2448, %v1814
      %v2467 = vmul.f32 %v2448, %v1817
      %v2468 = vmul.f32 %v2448, %v1820
      %v2469 = vmul.f32 %v2448, %v1823
      %v2470 = vmul.f32 %v2448, %v1826
      %v2471 = vmul.f32 %v2448, %v1829
      %v2472 = vmul.f32 %v2448, %v1832
      %v2473 = vmul.f32 %v2448, %v1835
      %v2474 = vmul.f32 %v2448, %v1838
      %v2475 = vmul.f32 %v2448, %v1841
      %v2476 = vmul.f32 %v2448, %v1844
      %v2477 = vmul.f32 %v2448, %v1847
      %v2478 = vmul.f32 %v2448, %v1850
      %v2479 = vmul.f32 %v2448, %v1853
      %v2480 = vmul.f32 %v2448, %v1856
      %v2481 = vmul.f32 %v2448, %v1859
      %v2482 = vmul.f32 %v2448, %v1862
      %v2483 = vmul.f32 %v2448, %v1865
      %v2484 = vmul.f32 %v2448, %v1868
      %v2485 = vmul.f32 %v2448, %v1871
      %v2486 = vmul.f32 %v2448, %v1874
      %v2487 = vmul.f32 %v2448, %v1877
      %v2488 = vmul.f32 %v2448, %v1880
      %v2489 = vmul.f32 %v2448, %v1883
      %v2490 = vmul.f32 %v2448, %v1886
      %v2491 = vmul.f32 %v2448, %v1889
      %v2492 = vmul.f32 %v2448, %v1892
      %v2493 = vmul.f32 %v2448, %v1895
      %v2494 = vmul.f32 %v2448, %v1898
      %v2495 = vmul.f32 %v2448, %v1901
      %v2496 = vmul.f32 %v2448, %v1904
      %v2497 = vmul.f32 %v2448, %v1907
      %v2498 = vmul.f32 %v2448, %v1910
      %v2499 = vmul.f32 %v2448, %v1913
      %v2500 = vmul.f32 %v2448, %v1916
      %v2501 = vmul.f32 %v2448, %v1919
      %v2502 = vmul.f32 %v2448, %v1922
      %v2503 = vmul.f32 %v2448, %v1925
      %v2504 = vmul.f32 %v2448, %v1928
      %v2505 = vmul.f32 %v2448, %v1931
      %v2506 = vmul.f32 %v2448, %v1934
      %v2507 = vmul.f32 %v2448, %v1937
      %v2508 = vmul.f32 %v2448, %v1940
      %v2509 = vmul.f32 %v2448, %v1943
      %v2510 = vmul.f32 %v2448, %v1946
      %v2511 = vmul.f32 %v2448, %v1949
      %v2512 = vmul.f32 %v2448, %v1952
      %v2513 = vmul.f32 %v2448, %v1955
      %2514 = vmatpush.msra.mxu0 %v2441
      %2515 = vmatpush.msra.mxu0 %v2440
      %2516 = vmatpush.msra.mxu0 %v2439
      %2517 = vmatpush.msra.mxu0 %v2438
      %2518 = vmatpush.msra.mxu0 %v2437
      %2519 = vmatpush.msra.mxu0 %v2436
      %2520 = vmatpush.msra.mxu0 %v2435
      %2521 = vmatpush.msra.mxu0 %v2434
      %2522 = vmatpush.msra.mxu0 %v2433
      %2523 = vmatpush.msra.mxu0 %v2432
      %2524 = vmatpush.msra.mxu0 %v2431
      %2525 = vmatpush.msra.mxu0 %v2430
      %2526 = vmatpush.msra.mxu0 %v2429
      %2527 = vmatpush.msra.mxu0 %v2428
      %2528 = vmatpush.msra.mxu0 %v2427
      %2529 = vmatpush.msra.mxu0 %v2426
      %2530 = vmatmul.f32.gmra.mxu0 %v2362
      %v2531 = vpop.f32.mrf.mxu0
      %v2532 = vadd.f32 %v2450, %v2531
      %2533 = vmatmul.f32.gmra.mxu0 %v2363
      %v2534 = vpop.f32.mrf.mxu0
      %v2535 = vadd.f32 %v2451, %v2534
      %2536 = vmatmul.f32.gmra.mxu0 %v2364
      %v2537 = vpop.f32.mrf.mxu0
      %v2538 = vadd.f32 %v2452, %v2537
      %2539 = vmatmul.f32.gmra.mxu0 %v2365
      %v2540 = vpop.f32.mrf.mxu0
      %v2541 = vadd.f32 %v2453, %v2540
      %2542 = vmatmul.f32.gmra.mxu0 %v2366
      %v2543 = vpop.f32.mrf.mxu0
      %v2544 = vadd.f32 %v2454, %v2543
      %2545 = vmatmul.f32.gmra.mxu0 %v2367
      %v2546 = vpop.f32.mrf.mxu0
      %v2547 = vadd.f32 %v2455, %v2546
      %2548 = vmatmul.f32.gmra.mxu0 %v2368
      %v2549 = vpop.f32.mrf.mxu0
      %v2550 = vadd.f32 %v2456, %v2549
      %2551 = vmatmul.f32.gmra.mxu0 %v2369
      %v2552 = vpop.f32.mrf.mxu0
      %v2553 = vadd.f32 %v2457, %v2552
      %2554 = vmatmul.f32.gmra.mxu0 %v2370
      %v2555 = vpop.f32.mrf.mxu0
      %v2556 = vadd.f32 %v2458, %v2555
      %2557 = vmatmul.f32.gmra.mxu0 %v2371
      %v2558 = vpop.f32.mrf.mxu0
      %v2559 = vadd.f32 %v2459, %v2558
      %2560 = vmatmul.f32.gmra.mxu0 %v2372
      %v2561 = vpop.f32.mrf.mxu0
      %v2562 = vadd.f32 %v2460, %v2561
      %2563 = vmatmul.f32.gmra.mxu0 %v2373
      %v2564 = vpop.f32.mrf.mxu0
      %v2565 = vadd.f32 %v2461, %v2564
      %2566 = vmatmul.f32.gmra.mxu0 %v2374
      %v2567 = vpop.f32.mrf.mxu0
      %v2568 = vadd.f32 %v2462, %v2567
      %2569 = vmatmul.f32.gmra.mxu0 %v2375
      %v2570 = vpop.f32.mrf.mxu0
      %v2571 = vadd.f32 %v2463, %v2570
      %2572 = vmatmul.f32.gmra.mxu0 %v2376
      %v2573 = vpop.f32.mrf.mxu0
      %v2574 = vadd.f32 %v2464, %v2573
      %2575 = vmatmul.f32.gmra.mxu0 %v2377
      %v2576 = vpop.f32.mrf.mxu0
      %v2577 = vadd.f32 %v2465, %v2576
      %2578 = vmatmul.f32.gmra.mxu0 %v2378
      %v2579 = vpop.f32.mrf.mxu0
      %v2580 = vadd.f32 %v2466, %v2579
      %2581 = vmatmul.f32.gmra.mxu0 %v2379
      %v2582 = vpop.f32.mrf.mxu0
      %v2583 = vadd.f32 %v2467, %v2582
      %2584 = vmatmul.f32.gmra.mxu0 %v2380
      %v2585 = vpop.f32.mrf.mxu0
      %v2586 = vadd.f32 %v2468, %v2585
      %2587 = vmatmul.f32.gmra.mxu0 %v2381
      %v2588 = vpop.f32.mrf.mxu0
      %v2589 = vadd.f32 %v2469, %v2588
      %2590 = vmatmul.f32.gmra.mxu0 %v2382
      %v2591 = vpop.f32.mrf.mxu0
      %v2592 = vadd.f32 %v2470, %v2591
      %2593 = vmatmul.f32.gmra.mxu0 %v2383
      %v2594 = vpop.f32.mrf.mxu0
      %v2595 = vadd.f32 %v2471, %v2594
      %2596 = vmatmul.f32.gmra.mxu0 %v2384
      %v2597 = vpop.f32.mrf.mxu0
      %v2598 = vadd.f32 %v2472, %v2597
      %2599 = vmatmul.f32.gmra.mxu0 %v2385
      %v2600 = vpop.f32.mrf.mxu0
      %v2601 = vadd.f32 %v2473, %v2600
      %2602 = vmatmul.f32.gmra.mxu0 %v2386
      %v2603 = vpop.f32.mrf.mxu0
      %v2604 = vadd.f32 %v2474, %v2603
      %2605 = vmatmul.f32.gmra.mxu0 %v2387
      %v2606 = vpop.f32.mrf.mxu0
      %v2607 = vadd.f32 %v2475, %v2606
      %2608 = vmatmul.f32.gmra.mxu0 %v2388
      %v2609 = vpop.f32.mrf.mxu0
      %v2610 = vadd.f32 %v2476, %v2609
      %2611 = vmatmul.f32.gmra.mxu0 %v2389
      %v2612 = vpop.f32.mrf.mxu0
      %v2613 = vadd.f32 %v2477, %v2612
      %2614 = vmatmul.f32.gmra.mxu0 %v2390
      %v2615 = vpop.f32.mrf.mxu0
      %v2616 = vadd.f32 %v2478, %v2615
      %2617 = vmatmul.f32.gmra.mxu0 %v2391
      %v2618 = vpop.f32.mrf.mxu0
      %v2619 = vadd.f32 %v2479, %v2618
      %2620 = vmatmul.f32.gmra.mxu0 %v2392
      %v2621 = vpop.f32.mrf.mxu0
      %v2622 = vadd.f32 %v2480, %v2621
      %2623 = vmatmul.f32.gmra.mxu0 %v2393
      %v2624 = vpop.f32.mrf.mxu0
      %v2625 = vadd.f32 %v2481, %v2624
      %2626 = vmatmul.f32.gmra.mxu0 %v2394
      %v2627 = vpop.f32.mrf.mxu0
      %v2628 = vadd.f32 %v2482, %v2627
      %2629 = vmatmul.f32.gmra.mxu0 %v2395
      %v2630 = vpop.f32.mrf.mxu0
      %v2631 = vadd.f32 %v2483, %v2630
      %2632 = vmatmul.f32.gmra.mxu0 %v2396
      %v2633 = vpop.f32.mrf.mxu0
      %v2634 = vadd.f32 %v2484, %v2633
      %2635 = vmatmul.f32.gmra.mxu0 %v2397
      %v2636 = vpop.f32.mrf.mxu0
      %v2637 = vadd.f32 %v2485, %v2636
      %2638 = vmatmul.f32.gmra.mxu0 %v2398
      %v2639 = vpop.f32.mrf.mxu0
      %v2640 = vadd.f32 %v2486, %v2639
      %2641 = vmatmul.f32.gmra.mxu0 %v2399
      %v2642 = vpop.f32.mrf.mxu0
      %v2643 = vadd.f32 %v2487, %v2642
      %2644 = vmatmul.f32.gmra.mxu0 %v2400
      %v2645 = vpop.f32.mrf.mxu0
      %v2646 = vadd.f32 %v2488, %v2645
      %2647 = vmatmul.f32.gmra.mxu0 %v2401
      %v2648 = vpop.f32.mrf.mxu0
      %v2649 = vadd.f32 %v2489, %v2648
      %2650 = vmatmul.f32.gmra.mxu0 %v2402
      %v2651 = vpop.f32.mrf.mxu0
      %v2652 = vadd.f32 %v2490, %v2651
      %2653 = vmatmul.f32.gmra.mxu0 %v2403
      %v2654 = vpop.f32.mrf.mxu0
      %v2655 = vadd.f32 %v2491, %v2654
      %2656 = vmatmul.f32.gmra.mxu0 %v2404
      %v2657 = vpop.f32.mrf.mxu0
      %v2658 = vadd.f32 %v2492, %v2657
      %2659 = vmatmul.f32.gmra.mxu0 %v2405
      %v2660 = vpop.f32.mrf.mxu0
      %v2661 = vadd.f32 %v2493, %v2660
      %2662 = vmatmul.f32.gmra.mxu0 %v2406
      %v2663 = vpop.f32.mrf.mxu0
      %v2664 = vadd.f32 %v2494, %v2663
      %2665 = vmatmul.f32.gmra.mxu0 %v2407
      %v2666 = vpop.f32.mrf.mxu0
      %v2667 = vadd.f32 %v2495, %v2666
      %2668 = vmatmul.f32.gmra.mxu0 %v2408
      %v2669 = vpop.f32.mrf.mxu0
      %v2670 = vadd.f32 %v2496, %v2669
      %2671 = vmatmul.f32.gmra.mxu0 %v2409
      %v2672 = vpop.f32.mrf.mxu0
      %v2673 = vadd.f32 %v2497, %v2672
      %2674 = vmatmul.f32.gmra.mxu0 %v2410
      %v2675 = vpop.f32.mrf.mxu0
      %v2676 = vadd.f32 %v2498, %v2675
      %2677 = vmatmul.f32.gmra.mxu0 %v2411
      %v2678 = vpop.f32.mrf.mxu0
      %v2679 = vadd.f32 %v2499, %v2678
      %2680 = vmatmul.f32.gmra.mxu0 %v2412
      %v2681 = vpop.f32.mrf.mxu0
      %v2682 = vadd.f32 %v2500, %v2681
      %2683 = vmatmul.f32.gmra.mxu0 %v2413
      %v2684 = vpop.f32.mrf.mxu0
      %v2685 = vadd.f32 %v2501, %v2684
      %2686 = vmatmul.f32.gmra.mxu0 %v2414
      %v2687 = vpop.f32.mrf.mxu0
      %v2688 = vadd.f32 %v2502, %v2687
      %2689 = vmatmul.f32.gmra.mxu0 %v2415
      %v2690 = vpop.f32.mrf.mxu0
      %v2691 = vadd.f32 %v2503, %v2690
      %2692 = vmatmul.f32.gmra.mxu0 %v2416
      %v2693 = vpop.f32.mrf.mxu0
      %v2694 = vadd.f32 %v2504, %v2693
      %2695 = vmatmul.f32.gmra.mxu0 %v2417
      %v2696 = vpop.f32.mrf.mxu0
      %v2697 = vadd.f32 %v2505, %v2696
      %2698 = vmatmul.f32.gmra.mxu0 %v2418
      %v2699 = vpop.f32.mrf.mxu0
      %v2700 = vadd.f32 %v2506, %v2699
      %2701 = vmatmul.f32.gmra.mxu0 %v2419
      %v2702 = vpop.f32.mrf.mxu0
      %v2703 = vadd.f32 %v2507, %v2702
      %2704 = vmatmul.f32.gmra.mxu0 %v2420
      %v2705 = vpop.f32.mrf.mxu0
      %v2706 = vadd.f32 %v2508, %v2705
      %2707 = vmatmul.f32.gmra.mxu0 %v2421
      %v2708 = vpop.f32.mrf.mxu0
      %v2709 = vadd.f32 %v2509, %v2708
      %2710 = vmatmul.f32.gmra.mxu0 %v2422
      %v2711 = vpop.f32.mrf.mxu0
      %v2712 = vadd.f32 %v2510, %v2711
      %2713 = vmatmul.f32.gmra.mxu0 %v2423
      %v2714 = vpop.f32.mrf.mxu0
      %v2715 = vadd.f32 %v2511, %v2714
      %2716 = vmatmul.f32.gmra.mxu0 %v2424
      %v2717 = vpop.f32.mrf.mxu0
      %v2718 = vadd.f32 %v2512, %v2717
      %2719 = vmatmul.f32.gmra.mxu0 %v2425
      %v2720 = vpop.f32.mrf.mxu0
      %v2721 = vadd.f32 %v2513, %v2720
      %2722 = vdwg.mxu0
      %2724 = vset.pattern.permute.xlu0 0
      %2725 = vperm.xlu0 %2724, %v817
      %v2726 = vpop.permute.xlu0 %2725
      %2729 = vset.pattern.permute.xlu0 0
      %2730 = vperm.xlu0 %2729, %v832
      %v2731 = vpop.permute.xlu0 %2730
      %2734 = vset.pattern.permute.xlu0 0
      %2735 = vperm.xlu0 %2734, %v847
      %v2736 = vpop.permute.xlu0 %2735
      %2739 = vset.pattern.permute.xlu0 0
      %2740 = vperm.xlu0 %2739, %v862
      %v2741 = vpop.permute.xlu0 %2740
      %2744 = vset.pattern.permute.xlu0 0
      %2745 = vperm.xlu0 %2744, %v877
      %v2746 = vpop.permute.xlu0 %2745
      %2749 = vset.pattern.permute.xlu0 0
      %2750 = vperm.xlu0 %2749, %v892
      %v2751 = vpop.permute.xlu0 %2750
      %2754 = vset.pattern.permute.xlu0 0
      %2755 = vperm.xlu0 %2754, %v907
      %v2756 = vpop.permute.xlu0 %2755
      %2759 = vset.pattern.permute.xlu0 0
      %2760 = vperm.xlu0 %2759, %v922
      %v2761 = vpop.permute.xlu0 %2760
      %2764 = vset.pattern.permute.xlu0 0
      %2765 = vperm.xlu0 %2764, %v937
      %v2766 = vpop.permute.xlu0 %2765
      %2769 = vset.pattern.permute.xlu0 0
      %2770 = vperm.xlu0 %2769, %v952
      %v2771 = vpop.permute.xlu0 %2770
      %2774 = vset.pattern.permute.xlu0 0
      %2775 = vperm.xlu0 %2774, %v967
      %v2776 = vpop.permute.xlu0 %2775
      %2779 = vset.pattern.permute.xlu0 0
      %2780 = vperm.xlu0 %2779, %v982
      %v2781 = vpop.permute.xlu0 %2780
      %2784 = vset.pattern.permute.xlu0 0
      %2785 = vperm.xlu0 %2784, %v997
      %v2786 = vpop.permute.xlu0 %2785
      %2789 = vset.pattern.permute.xlu0 0
      %2790 = vperm.xlu0 %2789, %v1012
      %v2791 = vpop.permute.xlu0 %2790
      %2794 = vset.pattern.permute.xlu0 0
      %2795 = vperm.xlu0 %2794, %v1027
      %v2796 = vpop.permute.xlu0 %2795
      %2799 = vset.pattern.permute.xlu0 0
      %2800 = vperm.xlu0 %2799, %v1042
      %v2801 = vpop.permute.xlu0 %2800
      %2804 = vset.pattern.permute.xlu0 0
      %2805 = vperm.xlu0 %2804, %v1057
      %v2806 = vpop.permute.xlu0 %2805
      %2809 = vset.pattern.permute.xlu0 0
      %2810 = vperm.xlu0 %2809, %v1072
      %v2811 = vpop.permute.xlu0 %2810
      %2814 = vset.pattern.permute.xlu0 0
      %2815 = vperm.xlu0 %2814, %v1087
      %v2816 = vpop.permute.xlu0 %2815
      %2819 = vset.pattern.permute.xlu0 0
      %2820 = vperm.xlu0 %2819, %v1102
      %v2821 = vpop.permute.xlu0 %2820
      %2824 = vset.pattern.permute.xlu0 0
      %2825 = vperm.xlu0 %2824, %v1117
      %v2826 = vpop.permute.xlu0 %2825
      %2829 = vset.pattern.permute.xlu0 0
      %2830 = vperm.xlu0 %2829, %v1132
      %v2831 = vpop.permute.xlu0 %2830
      %2834 = vset.pattern.permute.xlu0 0
      %2835 = vperm.xlu0 %2834, %v1147
      %v2836 = vpop.permute.xlu0 %2835
      %2839 = vset.pattern.permute.xlu0 0
      %2840 = vperm.xlu0 %2839, %v1162
      %v2841 = vpop.permute.xlu0 %2840
      %2844 = vset.pattern.permute.xlu0 0
      %2845 = vperm.xlu0 %2844, %v1177
      %v2846 = vpop.permute.xlu0 %2845
      %2849 = vset.pattern.permute.xlu0 0
      %2850 = vperm.xlu0 %2849, %v1192
      %v2851 = vpop.permute.xlu0 %2850
      %2854 = vset.pattern.permute.xlu0 0
      %2855 = vperm.xlu0 %2854, %v1207
      %v2856 = vpop.permute.xlu0 %2855
      %2859 = vset.pattern.permute.xlu0 0
      %2860 = vperm.xlu0 %2859, %v1222
      %v2861 = vpop.permute.xlu0 %2860
      %2864 = vset.pattern.permute.xlu0 0
      %2865 = vperm.xlu0 %2864, %v1237
      %v2866 = vpop.permute.xlu0 %2865
      %2869 = vset.pattern.permute.xlu0 0
      %2870 = vperm.xlu0 %2869, %v1252
      %v2871 = vpop.permute.xlu0 %2870
      %2874 = vset.pattern.permute.xlu0 0
      %2875 = vperm.xlu0 %2874, %v1267
      %v2876 = vpop.permute.xlu0 %2875
      %2879 = vset.pattern.permute.xlu0 0
      %2880 = vperm.xlu0 %2879, %v1282
      %v2881 = vpop.permute.xlu0 %2880
      %2884 = vset.pattern.permute.xlu0 0
      %2885 = vperm.xlu0 %2884, %v1297
      %v2886 = vpop.permute.xlu0 %2885
      %2889 = vset.pattern.permute.xlu0 0
      %2890 = vperm.xlu0 %2889, %v1312
      %v2891 = vpop.permute.xlu0 %2890
      %2894 = vset.pattern.permute.xlu0 0
      %2895 = vperm.xlu0 %2894, %v1327
      %v2896 = vpop.permute.xlu0 %2895
      %2899 = vset.pattern.permute.xlu0 0
      %2900 = vperm.xlu0 %2899, %v1342
      %v2901 = vpop.permute.xlu0 %2900
      %2904 = vset.pattern.permute.xlu0 0
      %2905 = vperm.xlu0 %2904, %v1357
      %v2906 = vpop.permute.xlu0 %2905
      %2909 = vset.pattern.permute.xlu0 0
      %2910 = vperm.xlu0 %2909, %v1372
      %v2911 = vpop.permute.xlu0 %2910
      %2914 = vset.pattern.permute.xlu0 0
      %2915 = vperm.xlu0 %2914, %v1387
      %v2916 = vpop.permute.xlu0 %2915
      %2919 = vset.pattern.permute.xlu0 0
      %2920 = vperm.xlu0 %2919, %v1402
      %v2921 = vpop.permute.xlu0 %2920
      %2924 = vset.pattern.permute.xlu0 0
      %2925 = vperm.xlu0 %2924, %v1417
      %v2926 = vpop.permute.xlu0 %2925
      %2929 = vset.pattern.permute.xlu0 0
      %2930 = vperm.xlu0 %2929, %v1432
      %v2931 = vpop.permute.xlu0 %2930
      %2934 = vset.pattern.permute.xlu0 0
      %2935 = vperm.xlu0 %2934, %v1447
      %v2936 = vpop.permute.xlu0 %2935
      %2939 = vset.pattern.permute.xlu0 0
      %2940 = vperm.xlu0 %2939, %v1462
      %v2941 = vpop.permute.xlu0 %2940
      %2944 = vset.pattern.permute.xlu0 0
      %2945 = vperm.xlu0 %2944, %v1477
      %v2946 = vpop.permute.xlu0 %2945
      %2949 = vset.pattern.permute.xlu0 0
      %2950 = vperm.xlu0 %2949, %v1492
      %v2951 = vpop.permute.xlu0 %2950
      %2954 = vset.pattern.permute.xlu0 0
      %2955 = vperm.xlu0 %2954, %v1507
      %v2956 = vpop.permute.xlu0 %2955
      %2959 = vset.pattern.permute.xlu0 0
      %2960 = vperm.xlu0 %2959, %v1522
      %v2961 = vpop.permute.xlu0 %2960
      %2964 = vset.pattern.permute.xlu0 0
      %2965 = vperm.xlu0 %2964, %v1537
      %v2966 = vpop.permute.xlu0 %2965
      %2969 = vset.pattern.permute.xlu0 0
      %2970 = vperm.xlu0 %2969, %v1552
      %v2971 = vpop.permute.xlu0 %2970
      %2974 = vset.pattern.permute.xlu0 0
      %2975 = vperm.xlu0 %2974, %v1567
      %v2976 = vpop.permute.xlu0 %2975
      %2979 = vset.pattern.permute.xlu0 0
      %2980 = vperm.xlu0 %2979, %v1582
      %v2981 = vpop.permute.xlu0 %2980
      %2984 = vset.pattern.permute.xlu0 0
      %2985 = vperm.xlu0 %2984, %v1597
      %v2986 = vpop.permute.xlu0 %2985
      %2989 = vset.pattern.permute.xlu0 0
      %2990 = vperm.xlu0 %2989, %v1612
      %v2991 = vpop.permute.xlu0 %2990
      %2994 = vset.pattern.permute.xlu0 0
      %2995 = vperm.xlu0 %2994, %v1627
      %v2996 = vpop.permute.xlu0 %2995
      %2999 = vset.pattern.permute.xlu0 0
      %3000 = vperm.xlu0 %2999, %v1642
      %v3001 = vpop.permute.xlu0 %3000
      %3004 = vset.pattern.permute.xlu0 0
      %3005 = vperm.xlu0 %3004, %v1657
      %v3006 = vpop.permute.xlu0 %3005
      %3009 = vset.pattern.permute.xlu0 0
      %3010 = vperm.xlu0 %3009, %v1672
      %v3011 = vpop.permute.xlu0 %3010
      %3014 = vset.pattern.permute.xlu0 0
      %3015 = vperm.xlu0 %3014, %v1687
      %v3016 = vpop.permute.xlu0 %3015
      %3019 = vset.pattern.permute.xlu0 0
      %3020 = vperm.xlu0 %3019, %v1702
      %v3021 = vpop.permute.xlu0 %3020
      %3024 = vset.pattern.permute.xlu0 0
      %3025 = vperm.xlu0 %3024, %v1717
      %v3026 = vpop.permute.xlu0 %3025
      %3029 = vset.pattern.permute.xlu0 0
      %3030 = vperm.xlu0 %3029, %v1732
      %v3031 = vpop.permute.xlu0 %3030
      %3034 = vset.pattern.permute.xlu0 0
      %3035 = vperm.xlu0 %3034, %v1747
      %v3036 = vpop.permute.xlu0 %3035
      %3039 = vset.pattern.permute.xlu0 0
      %3040 = vperm.xlu0 %3039, %v1762
      %v3041 = vpop.permute.xlu0 %3040
      %v3043 = vmul.f32 %v2532, %v2726
      %v3044 = vmul.f32 %v2535, %v2731
      %v3045 = vmul.f32 %v2538, %v2736
      %v3046 = vmul.f32 %v2541, %v2741
      %v3047 = vmul.f32 %v2544, %v2746
      %v3048 = vmul.f32 %v2547, %v2751
      %v3049 = vmul.f32 %v2550, %v2756
      %v3050 = vmul.f32 %v2553, %v2761
      %v3051 = vmul.f32 %v2556, %v2766
      %v3052 = vmul.f32 %v2559, %v2771
      %v3053 = vmul.f32 %v2562, %v2776
      %v3054 = vmul.f32 %v2565, %v2781
      %v3055 = vmul.f32 %v2568, %v2786
      %v3056 = vmul.f32 %v2571, %v2791
      %v3057 = vmul.f32 %v2574, %v2796
      %v3058 = vmul.f32 %v2577, %v2801
      %v3059 = vmul.f32 %v2580, %v2806
      %v3060 = vmul.f32 %v2583, %v2811
      %v3061 = vmul.f32 %v2586, %v2816
      %v3062 = vmul.f32 %v2589, %v2821
      %v3063 = vmul.f32 %v2592, %v2826
      %v3064 = vmul.f32 %v2595, %v2831
      %v3065 = vmul.f32 %v2598, %v2836
      %v3066 = vmul.f32 %v2601, %v2841
      %v3067 = vmul.f32 %v2604, %v2846
      %v3068 = vmul.f32 %v2607, %v2851
      %v3069 = vmul.f32 %v2610, %v2856
      %v3070 = vmul.f32 %v2613, %v2861
      %v3071 = vmul.f32 %v2616, %v2866
      %v3072 = vmul.f32 %v2619, %v2871
      %v3073 = vmul.f32 %v2622, %v2876
      %v3074 = vmul.f32 %v2625, %v2881
      %v3075 = vmul.f32 %v2628, %v2886
      %v3076 = vmul.f32 %v2631, %v2891
      %v3077 = vmul.f32 %v2634, %v2896
      %v3078 = vmul.f32 %v2637, %v2901
      %v3079 = vmul.f32 %v2640, %v2906
      %v3080 = vmul.f32 %v2643, %v2911
      %v3081 = vmul.f32 %v2646, %v2916
      %v3082 = vmul.f32 %v2649, %v2921
      %v3083 = vmul.f32 %v2652, %v2926
      %v3084 = vmul.f32 %v2655, %v2931
      %v3085 = vmul.f32 %v2658, %v2936
      %v3086 = vmul.f32 %v2661, %v2941
      %v3087 = vmul.f32 %v2664, %v2946
      %v3088 = vmul.f32 %v2667, %v2951
      %v3089 = vmul.f32 %v2670, %v2956
      %v3090 = vmul.f32 %v2673, %v2961
      %v3091 = vmul.f32 %v2676, %v2966
      %v3092 = vmul.f32 %v2679, %v2971
      %v3093 = vmul.f32 %v2682, %v2976
      %v3094 = vmul.f32 %v2685, %v2981
      %v3095 = vmul.f32 %v2688, %v2986
      %v3096 = vmul.f32 %v2691, %v2991
      %v3097 = vmul.f32 %v2694, %v2996
      %v3098 = vmul.f32 %v2697, %v3001
      %v3099 = vmul.f32 %v2700, %v3006
      %v3100 = vmul.f32 %v2703, %v3011
      %v3101 = vmul.f32 %v2706, %v3016
      %v3102 = vmul.f32 %v2709, %v3021
      %v3103 = vmul.f32 %v2712, %v3026
      %v3104 = vmul.f32 %v2715, %v3031
      %v3105 = vmul.f32 %v2718, %v3036
      %v3106 = vmul.f32 %v2721, %v3041
      %vm3107 = vcmask 261120
      %v3109 = vsel %vm3107, %v483, 0
      %v3112 = vsel %vm3107, %v484, 0
      %v3115 = vsel %vm3107, %v485, 0
      %v3118 = vsel %vm3107, %v486, 0
      %v3121 = vsel %vm3107, %v487, 0
      %v3124 = vsel %vm3107, %v488, 0
      %v3127 = vsel %vm3107, %v489, 0
      %v3130 = vsel %vm3107, %v490, 0
      %v3133 = vsel %vm3107, %v491, 0
      %v3136 = vsel %vm3107, %v492, 0
      %v3139 = vsel %vm3107, %v493, 0
      %v3142 = vsel %vm3107, %v494, 0
      %v3145 = vsel %vm3107, %v495, 0
      %v3148 = vsel %vm3107, %v496, 0
      %v3151 = vsel %vm3107, %v497, 0
      %v3154 = vsel %vm3107, %v498, 0
      %v3157 = vsel %vm3107, %v499, 0
      %v3160 = vsel %vm3107, %v500, 0
      %v3163 = vsel %vm3107, %v501, 0
      %v3166 = vsel %vm3107, %v502, 0
      %v3169 = vsel %vm3107, %v503, 0
      %v3172 = vsel %vm3107, %v504, 0
      %v3175 = vsel %vm3107, %v505, 0
      %v3178 = vsel %vm3107, %v506, 0
      %v3181 = vsel %vm3107, %v507, 0
      %v3184 = vsel %vm3107, %v508, 0
      %v3187 = vsel %vm3107, %v509, 0
      %v3190 = vsel %vm3107, %v510, 0
      %v3193 = vsel %vm3107, %v511, 0
      %v3196 = vsel %vm3107, %v512, 0
      %v3199 = vsel %vm3107, %v513, 0
      %v3202 = vsel %vm3107, %v514, 0
      %v3205 = vsel %vm3107, %v515, 0
      %v3208 = vsel %vm3107, %v516, 0
      %v3211 = vsel %vm3107, %v517, 0
      %v3214 = vsel %vm3107, %v518, 0
      %v3217 = vsel %vm3107, %v519, 0
      %v3220 = vsel %vm3107, %v520, 0
      %v3223 = vsel %vm3107, %v521, 0
      %v3226 = vsel %vm3107, %v522, 0
      %v3229 = vsel %vm3107, %v523, 0
      %v3232 = vsel %vm3107, %v524, 0
      %v3235 = vsel %vm3107, %v525, 0
      %v3238 = vsel %vm3107, %v526, 0
      %v3241 = vsel %vm3107, %v527, 0
      %v3244 = vsel %vm3107, %v528, 0
      %v3247 = vsel %vm3107, %v529, 0
      %v3250 = vsel %vm3107, %v530, 0
      %v3253 = vsel %vm3107, %v531, 0
      %v3256 = vsel %vm3107, %v532, 0
      %v3259 = vsel %vm3107, %v533, 0
      %v3262 = vsel %vm3107, %v534, 0
      %v3265 = vsel %vm3107, %v535, 0
      %v3268 = vsel %vm3107, %v536, 0
      %v3271 = vsel %vm3107, %v537, 0
      %v3274 = vsel %vm3107, %v538, 0
      %v3277 = vsel %vm3107, %v539, 0
      %v3280 = vsel %vm3107, %v540, 0
      %v3283 = vsel %vm3107, %v541, 0
      %v3286 = vsel %vm3107, %v542, 0
      %v3289 = vsel %vm3107, %v543, 0
      %v3292 = vsel %vm3107, %v544, 0
      %v3295 = vsel %vm3107, %v545, 0
      %v3298 = vsel %vm3107, %v546, 0
      %3300 = vmatpush.msra.mxu0 0.0
      %3301 = vmatpush.msra.mxu0 0.0
      %3302 = vmatpush.msra.mxu0 0.0
      %3303 = vmatpush.msra.mxu0 0.0
      %3304 = vmatpush.msra.mxu0 0.0
      %3305 = vmatpush.msra.mxu0 0.0
      %3306 = vmatpush.msra.mxu0 0.0
      %3307 = vmatpush.msra.mxu0 0.0
      %3308 = vmatpush.msra.mxu0 0.0
      %3309 = vmatpush.msra.mxu0 0.0
      %3310 = vmatpush.msra.mxu0 0.0
      %3311 = vmatpush.msra.mxu0 0.0
      %3312 = vmatpush.msra.mxu0 %v2445
      %3313 = vmatpush.msra.mxu0 %v2444
      %3314 = vmatpush.msra.mxu0 %v2443
      %3315 = vmatpush.msra.mxu0 %v2442
      %3316 = vmatmul.f32.gmra.mxu0 %v3109
      %v3317 = vpop.f32.mrf.mxu0
      %v3318 = vadd.f32 %v3043, %v3317
      %3319 = vmatmul.f32.gmra.mxu0 %v3112
      %v3320 = vpop.f32.mrf.mxu0
      %v3321 = vadd.f32 %v3044, %v3320
      %3322 = vmatmul.f32.gmra.mxu0 %v3115
      %v3323 = vpop.f32.mrf.mxu0
      %v3324 = vadd.f32 %v3045, %v3323
      %3325 = vmatmul.f32.gmra.mxu0 %v3118
      %v3326 = vpop.f32.mrf.mxu0
      %v3327 = vadd.f32 %v3046, %v3326
      %3328 = vmatmul.f32.gmra.mxu0 %v3121
      %v3329 = vpop.f32.mrf.mxu0
      %v3330 = vadd.f32 %v3047, %v3329
      %3331 = vmatmul.f32.gmra.mxu0 %v3124
      %v3332 = vpop.f32.mrf.mxu0
      %v3333 = vadd.f32 %v3048, %v3332
      %3334 = vmatmul.f32.gmra.mxu0 %v3127
      %v3335 = vpop.f32.mrf.mxu0
      %v3336 = vadd.f32 %v3049, %v3335
      %3337 = vmatmul.f32.gmra.mxu0 %v3130
      %v3338 = vpop.f32.mrf.mxu0
      %v3339 = vadd.f32 %v3050, %v3338
      %3340 = vmatmul.f32.gmra.mxu0 %v3133
      %v3341 = vpop.f32.mrf.mxu0
      %v3342 = vadd.f32 %v3051, %v3341
      %3343 = vmatmul.f32.gmra.mxu0 %v3136
      %v3344 = vpop.f32.mrf.mxu0
      %v3345 = vadd.f32 %v3052, %v3344
      %3346 = vmatmul.f32.gmra.mxu0 %v3139
      %v3347 = vpop.f32.mrf.mxu0
      %v3348 = vadd.f32 %v3053, %v3347
      %3349 = vmatmul.f32.gmra.mxu0 %v3142
      %v3350 = vpop.f32.mrf.mxu0
      %v3351 = vadd.f32 %v3054, %v3350
      %3352 = vmatmul.f32.gmra.mxu0 %v3145
      %v3353 = vpop.f32.mrf.mxu0
      %v3354 = vadd.f32 %v3055, %v3353
      %3355 = vmatmul.f32.gmra.mxu0 %v3148
      %v3356 = vpop.f32.mrf.mxu0
      %v3357 = vadd.f32 %v3056, %v3356
      %3358 = vmatmul.f32.gmra.mxu0 %v3151
      %v3359 = vpop.f32.mrf.mxu0
      %v3360 = vadd.f32 %v3057, %v3359
      %3361 = vmatmul.f32.gmra.mxu0 %v3154
      %v3362 = vpop.f32.mrf.mxu0
      %v3363 = vadd.f32 %v3058, %v3362
      %3364 = vmatmul.f32.gmra.mxu0 %v3157
      %v3365 = vpop.f32.mrf.mxu0
      %v3366 = vadd.f32 %v3059, %v3365
      %3367 = vmatmul.f32.gmra.mxu0 %v3160
      %v3368 = vpop.f32.mrf.mxu0
      %v3369 = vadd.f32 %v3060, %v3368
      %3370 = vmatmul.f32.gmra.mxu0 %v3163
      %v3371 = vpop.f32.mrf.mxu0
      %v3372 = vadd.f32 %v3061, %v3371
      %3373 = vmatmul.f32.gmra.mxu0 %v3166
      %v3374 = vpop.f32.mrf.mxu0
      %v3375 = vadd.f32 %v3062, %v3374
      %3376 = vmatmul.f32.gmra.mxu0 %v3169
      %v3377 = vpop.f32.mrf.mxu0
      %v3378 = vadd.f32 %v3063, %v3377
      %3379 = vmatmul.f32.gmra.mxu0 %v3172
      %v3380 = vpop.f32.mrf.mxu0
      %v3381 = vadd.f32 %v3064, %v3380
      %3382 = vmatmul.f32.gmra.mxu0 %v3175
      %v3383 = vpop.f32.mrf.mxu0
      %v3384 = vadd.f32 %v3065, %v3383
      %3385 = vmatmul.f32.gmra.mxu0 %v3178
      %v3386 = vpop.f32.mrf.mxu0
      %v3387 = vadd.f32 %v3066, %v3386
      %3388 = vmatmul.f32.gmra.mxu0 %v3181
      %v3389 = vpop.f32.mrf.mxu0
      %v3390 = vadd.f32 %v3067, %v3389
      %3391 = vmatmul.f32.gmra.mxu0 %v3184
      %v3392 = vpop.f32.mrf.mxu0
      %v3393 = vadd.f32 %v3068, %v3392
      %3394 = vmatmul.f32.gmra.mxu0 %v3187
      %v3395 = vpop.f32.mrf.mxu0
      %v3396 = vadd.f32 %v3069, %v3395
      %3397 = vmatmul.f32.gmra.mxu0 %v3190
      %v3398 = vpop.f32.mrf.mxu0
      %v3399 = vadd.f32 %v3070, %v3398
      %3400 = vmatmul.f32.gmra.mxu0 %v3193
      %v3401 = vpop.f32.mrf.mxu0
      %v3402 = vadd.f32 %v3071, %v3401
      %3403 = vmatmul.f32.gmra.mxu0 %v3196
      %v3404 = vpop.f32.mrf.mxu0
      %v3405 = vadd.f32 %v3072, %v3404
      %3406 = vmatmul.f32.gmra.mxu0 %v3199
      %v3407 = vpop.f32.mrf.mxu0
      %v3408 = vadd.f32 %v3073, %v3407
      %3409 = vmatmul.f32.gmra.mxu0 %v3202
      %v3410 = vpop.f32.mrf.mxu0
      %v3411 = vadd.f32 %v3074, %v3410
      %3412 = vmatmul.f32.gmra.mxu0 %v3205
      %v3413 = vpop.f32.mrf.mxu0
      %v3414 = vadd.f32 %v3075, %v3413
      %3415 = vmatmul.f32.gmra.mxu0 %v3208
      %v3416 = vpop.f32.mrf.mxu0
      %v3417 = vadd.f32 %v3076, %v3416
      %3418 = vmatmul.f32.gmra.mxu0 %v3211
      %v3419 = vpop.f32.mrf.mxu0
      %v3420 = vadd.f32 %v3077, %v3419
      %3421 = vmatmul.f32.gmra.mxu0 %v3214
      %v3422 = vpop.f32.mrf.mxu0
      %v3423 = vadd.f32 %v3078, %v3422
      %3424 = vmatmul.f32.gmra.mxu0 %v3217
      %v3425 = vpop.f32.mrf.mxu0
      %v3426 = vadd.f32 %v3079, %v3425
      %3427 = vmatmul.f32.gmra.mxu0 %v3220
      %v3428 = vpop.f32.mrf.mxu0
      %v3429 = vadd.f32 %v3080, %v3428
      %3430 = vmatmul.f32.gmra.mxu0 %v3223
      %v3431 = vpop.f32.mrf.mxu0
      %v3432 = vadd.f32 %v3081, %v3431
      %3433 = vmatmul.f32.gmra.mxu0 %v3226
      %v3434 = vpop.f32.mrf.mxu0
      %v3435 = vadd.f32 %v3082, %v3434
      %3436 = vmatmul.f32.gmra.mxu0 %v3229
      %v3437 = vpop.f32.mrf.mxu0
      %v3438 = vadd.f32 %v3083, %v3437
      %3439 = vmatmul.f32.gmra.mxu0 %v3232
      %v3440 = vpop.f32.mrf.mxu0
      %v3441 = vadd.f32 %v3084, %v3440
      %3442 = vmatmul.f32.gmra.mxu0 %v3235
      %v3443 = vpop.f32.mrf.mxu0
      %v3444 = vadd.f32 %v3085, %v3443
      %3445 = vmatmul.f32.gmra.mxu0 %v3238
      %v3446 = vpop.f32.mrf.mxu0
      %v3447 = vadd.f32 %v3086, %v3446
      %3448 = vmatmul.f32.gmra.mxu0 %v3241
      %v3449 = vpop.f32.mrf.mxu0
      %v3450 = vadd.f32 %v3087, %v3449
      %3451 = vmatmul.f32.gmra.mxu0 %v3244
      %v3452 = vpop.f32.mrf.mxu0
      %v3453 = vadd.f32 %v3088, %v3452
      %3454 = vmatmul.f32.gmra.mxu0 %v3247
      %v3455 = vpop.f32.mrf.mxu0
      %v3456 = vadd.f32 %v3089, %v3455
      %3457 = vmatmul.f32.gmra.mxu0 %v3250
      %v3458 = vpop.f32.mrf.mxu0
      %v3459 = vadd.f32 %v3090, %v3458
      %3460 = vmatmul.f32.gmra.mxu0 %v3253
      %v3461 = vpop.f32.mrf.mxu0
      %v3462 = vadd.f32 %v3091, %v3461
      %3463 = vmatmul.f32.gmra.mxu0 %v3256
      %v3464 = vpop.f32.mrf.mxu0
      %v3465 = vadd.f32 %v3092, %v3464
      %3466 = vmatmul.f32.gmra.mxu0 %v3259
      %v3467 = vpop.f32.mrf.mxu0
      %v3468 = vadd.f32 %v3093, %v3467
      %3469 = vmatmul.f32.gmra.mxu0 %v3262
      %v3470 = vpop.f32.mrf.mxu0
      %v3471 = vadd.f32 %v3094, %v3470
      %3472 = vmatmul.f32.gmra.mxu0 %v3265
      %v3473 = vpop.f32.mrf.mxu0
      %v3474 = vadd.f32 %v3095, %v3473
      %3475 = vmatmul.f32.gmra.mxu0 %v3268
      %v3476 = vpop.f32.mrf.mxu0
      %v3477 = vadd.f32 %v3096, %v3476
      %3478 = vmatmul.f32.gmra.mxu0 %v3271
      %v3479 = vpop.f32.mrf.mxu0
      %v3480 = vadd.f32 %v3097, %v3479
      %3481 = vmatmul.f32.gmra.mxu0 %v3274
      %v3482 = vpop.f32.mrf.mxu0
      %v3483 = vadd.f32 %v3098, %v3482
      %3484 = vmatmul.f32.gmra.mxu0 %v3277
      %v3485 = vpop.f32.mrf.mxu0
      %v3486 = vadd.f32 %v3099, %v3485
      %3487 = vmatmul.f32.gmra.mxu0 %v3280
      %v3488 = vpop.f32.mrf.mxu0
      %v3489 = vadd.f32 %v3100, %v3488
      %3490 = vmatmul.f32.gmra.mxu0 %v3283
      %v3491 = vpop.f32.mrf.mxu0
      %v3492 = vadd.f32 %v3101, %v3491
      %3493 = vmatmul.f32.gmra.mxu0 %v3286
      %v3494 = vpop.f32.mrf.mxu0
      %v3495 = vadd.f32 %v3102, %v3494
      %3496 = vmatmul.f32.gmra.mxu0 %v3289
      %v3497 = vpop.f32.mrf.mxu0
      %v3498 = vadd.f32 %v3103, %v3497
      %3499 = vmatmul.f32.gmra.mxu0 %v3292
      %v3500 = vpop.f32.mrf.mxu0
      %v3501 = vadd.f32 %v3104, %v3500
      %3502 = vmatmul.f32.gmra.mxu0 %v3295
      %v3503 = vpop.f32.mrf.mxu0
      %v3504 = vadd.f32 %v3105, %v3503
      %3505 = vmatmul.f32.gmra.mxu0 %v3298
      %v3506 = vpop.f32.mrf.mxu0
      %v3507 = vadd.f32 %v3106, %v3506
      %3508 = vdwg.mxu0
      %v3509 = vld [vmem:[%s10] sm:$0x1]
      %v3511 = vperm.slane %v3509, 0
      %v3513 = vadd.f32 %v3318, %v3511
      %v3514 = vadd.f32 %v3321, %v3511
      %v3515 = vadd.f32 %v3324, %v3511
      %v3516 = vadd.f32 %v3327, %v3511
      %v3517 = vadd.f32 %v3330, %v3511
      %v3518 = vadd.f32 %v3333, %v3511
      %v3519 = vadd.f32 %v3336, %v3511
      %v3520 = vadd.f32 %v3339, %v3511
      %v3521 = vadd.f32 %v3342, %v3511
      %v3522 = vadd.f32 %v3345, %v3511
      %v3523 = vadd.f32 %v3348, %v3511
      %v3524 = vadd.f32 %v3351, %v3511
      %v3525 = vadd.f32 %v3354, %v3511
      %v3526 = vadd.f32 %v3357, %v3511
      %v3527 = vadd.f32 %v3360, %v3511
      %v3528 = vadd.f32 %v3363, %v3511
      %v3529 = vadd.f32 %v3366, %v3511
      %v3530 = vadd.f32 %v3369, %v3511
      %v3531 = vadd.f32 %v3372, %v3511
      %v3532 = vadd.f32 %v3375, %v3511
      %v3533 = vadd.f32 %v3378, %v3511
      %v3534 = vadd.f32 %v3381, %v3511
      %v3535 = vadd.f32 %v3384, %v3511
      %v3536 = vadd.f32 %v3387, %v3511
      %v3537 = vadd.f32 %v3390, %v3511
      %v3538 = vadd.f32 %v3393, %v3511
      %v3539 = vadd.f32 %v3396, %v3511
      %v3540 = vadd.f32 %v3399, %v3511
      %v3541 = vadd.f32 %v3402, %v3511
      %v3542 = vadd.f32 %v3405, %v3511
      %v3543 = vadd.f32 %v3408, %v3511
      %v3544 = vadd.f32 %v3411, %v3511
      %v3545 = vadd.f32 %v3414, %v3511
      %v3546 = vadd.f32 %v3417, %v3511
      %v3547 = vadd.f32 %v3420, %v3511
      %v3548 = vadd.f32 %v3423, %v3511
      %v3549 = vadd.f32 %v3426, %v3511
      %v3550 = vadd.f32 %v3429, %v3511
      %v3551 = vadd.f32 %v3432, %v3511
      %v3552 = vadd.f32 %v3435, %v3511
      %v3553 = vadd.f32 %v3438, %v3511
      %v3554 = vadd.f32 %v3441, %v3511
      %v3555 = vadd.f32 %v3444, %v3511
      %v3556 = vadd.f32 %v3447, %v3511
      %v3557 = vadd.f32 %v3450, %v3511
      %v3558 = vadd.f32 %v3453, %v3511
      %v3559 = vadd.f32 %v3456, %v3511
      %v3560 = vadd.f32 %v3459, %v3511
      %v3561 = vadd.f32 %v3462, %v3511
      %v3562 = vadd.f32 %v3465, %v3511
      %v3563 = vadd.f32 %v3468, %v3511
      %v3564 = vadd.f32 %v3471, %v3511
      %v3565 = vadd.f32 %v3474, %v3511
      %v3566 = vadd.f32 %v3477, %v3511
      %v3567 = vadd.f32 %v3480, %v3511
      %v3568 = vadd.f32 %v3483, %v3511
      %v3569 = vadd.f32 %v3486, %v3511
      %v3570 = vadd.f32 %v3489, %v3511
      %v3571 = vadd.f32 %v3492, %v3511
      %v3572 = vadd.f32 %v3495, %v3511
      %v3573 = vadd.f32 %v3498, %v3511
      %v3574 = vadd.f32 %v3501, %v3511
      %v3575 = vadd.f32 %v3504, %v3511
      %v3576 = vadd.f32 %v3507, %v3511
      %v3577 = vxor.u32 %v3513, 2147483648
      %v3578 = vxor.u32 %v3514, 2147483648
      %v3579 = vxor.u32 %v3515, 2147483648
      %v3580 = vxor.u32 %v3516, 2147483648
      %v3581 = vxor.u32 %v3517, 2147483648
      %v3582 = vxor.u32 %v3518, 2147483648
      %v3583 = vxor.u32 %v3519, 2147483648
      %v3584 = vxor.u32 %v3520, 2147483648
      %v3585 = vxor.u32 %v3521, 2147483648
      %v3586 = vxor.u32 %v3522, 2147483648
      %v3587 = vxor.u32 %v3523, 2147483648
      %v3588 = vxor.u32 %v3524, 2147483648
      %v3589 = vxor.u32 %v3525, 2147483648
      %v3590 = vxor.u32 %v3526, 2147483648
      %v3591 = vxor.u32 %v3527, 2147483648
      %v3592 = vxor.u32 %v3528, 2147483648
      %v3593 = vxor.u32 %v3529, 2147483648
      %v3594 = vxor.u32 %v3530, 2147483648
      %v3595 = vxor.u32 %v3531, 2147483648
      %v3596 = vxor.u32 %v3532, 2147483648
      %v3597 = vxor.u32 %v3533, 2147483648
      %v3598 = vxor.u32 %v3534, 2147483648
      %v3599 = vxor.u32 %v3535, 2147483648
      %v3600 = vxor.u32 %v3536, 2147483648
      %v3601 = vxor.u32 %v3537, 2147483648
      %v3602 = vxor.u32 %v3538, 2147483648
      %v3603 = vxor.u32 %v3539, 2147483648
      %v3604 = vxor.u32 %v3540, 2147483648
      %v3605 = vxor.u32 %v3541, 2147483648
      %v3606 = vxor.u32 %v3542, 2147483648
      %v3607 = vxor.u32 %v3543, 2147483648
      %v3608 = vxor.u32 %v3544, 2147483648
      %v3609 = vxor.u32 %v3545, 2147483648
      %v3610 = vxor.u32 %v3546, 2147483648
      %v3611 = vxor.u32 %v3547, 2147483648
      %v3612 = vxor.u32 %v3548, 2147483648
      %v3613 = vxor.u32 %v3549, 2147483648
      %v3614 = vxor.u32 %v3550, 2147483648
      %v3615 = vxor.u32 %v3551, 2147483648
      %v3616 = vxor.u32 %v3552, 2147483648
      %v3617 = vxor.u32 %v3553, 2147483648
      %v3618 = vxor.u32 %v3554, 2147483648
      %v3619 = vxor.u32 %v3555, 2147483648
      %v3620 = vxor.u32 %v3556, 2147483648
      %v3621 = vxor.u32 %v3557, 2147483648
      %v3622 = vxor.u32 %v3558, 2147483648
      %v3623 = vxor.u32 %v3559, 2147483648
      %v3624 = vxor.u32 %v3560, 2147483648
      %v3625 = vxor.u32 %v3561, 2147483648
      %v3626 = vxor.u32 %v3562, 2147483648
      %v3627 = vxor.u32 %v3563, 2147483648
      %v3628 = vxor.u32 %v3564, 2147483648
      %v3629 = vxor.u32 %v3565, 2147483648
      %v3630 = vxor.u32 %v3566, 2147483648
      %v3631 = vxor.u32 %v3567, 2147483648
      %v3632 = vxor.u32 %v3568, 2147483648
      %v3633 = vxor.u32 %v3569, 2147483648
      %v3634 = vxor.u32 %v3570, 2147483648
      %v3635 = vxor.u32 %v3571, 2147483648
      %v3636 = vxor.u32 %v3572, 2147483648
      %v3637 = vxor.u32 %v3573, 2147483648
      %v3638 = vxor.u32 %v3574, 2147483648
      %v3639 = vxor.u32 %v3575, 2147483648
      %v3640 = vxor.u32 %v3576, 2147483648
      %v3641 = vmul.f32 %v3577, 1.442695
      %v3642 = vpow.pop %v3641
      %v3643 = vmul.f32 %v3578, 1.442695
      %v3644 = vpow.pop %v3643
      %v3645 = vmul.f32 %v3579, 1.442695
      %v3646 = vpow.pop %v3645
      %v3647 = vmul.f32 %v3580, 1.442695
      %v3648 = vpow.pop %v3647
      %v3649 = vmul.f32 %v3581, 1.442695
      %v3650 = vpow.pop %v3649
      %v3651 = vmul.f32 %v3582, 1.442695
      %v3652 = vpow.pop %v3651
      %v3653 = vmul.f32 %v3583, 1.442695
      %v3654 = vpow.pop %v3653
      %v3655 = vmul.f32 %v3584, 1.442695
      %v3656 = vpow.pop %v3655
      %v3657 = vmul.f32 %v3585, 1.442695
      %v3658 = vpow.pop %v3657
      %v3659 = vmul.f32 %v3586, 1.442695
      %v3660 = vpow.pop %v3659
      %v3661 = vmul.f32 %v3587, 1.442695
      %v3662 = vpow.pop %v3661
      %v3663 = vmul.f32 %v3588, 1.442695
      %v3664 = vpow.pop %v3663
      %v3665 = vmul.f32 %v3589, 1.442695
      %v3666 = vpow.pop %v3665
      %v3667 = vmul.f32 %v3590, 1.442695
      %v3668 = vpow.pop %v3667
      %v3669 = vmul.f32 %v3591, 1.442695
      %v3670 = vpow.pop %v3669
      %v3671 = vmul.f32 %v3592, 1.442695
      %v3672 = vpow.pop %v3671
      %v3673 = vmul.f32 %v3593, 1.442695
      %v3674 = vpow.pop %v3673
      %v3675 = vmul.f32 %v3594, 1.442695
      %v3676 = vpow.pop %v3675
      %v3677 = vmul.f32 %v3595, 1.442695
      %v3678 = vpow.pop %v3677
      %v3679 = vmul.f32 %v3596, 1.442695
      %v3680 = vpow.pop %v3679
      %v3681 = vmul.f32 %v3597, 1.442695
      %v3682 = vpow.pop %v3681
      %v3683 = vmul.f32 %v3598, 1.442695
      %v3684 = vpow.pop %v3683
      %v3685 = vmul.f32 %v3599, 1.442695
      %v3686 = vpow.pop %v3685
      %v3687 = vmul.f32 %v3600, 1.442695
      %v3688 = vpow.pop %v3687
      %v3689 = vmul.f32 %v3601, 1.442695
      %v3690 = vpow.pop %v3689
      %v3691 = vmul.f32 %v3602, 1.442695
      %v3692 = vpow.pop %v3691
      %v3693 = vmul.f32 %v3603, 1.442695
      %v3694 = vpow.pop %v3693
      %v3695 = vmul.f32 %v3604, 1.442695
      %v3696 = vpow.pop %v3695
      %v3697 = vmul.f32 %v3605, 1.442695
      %v3698 = vpow.pop %v3697
      %v3699 = vmul.f32 %v3606, 1.442695
      %v3700 = vpow.pop %v3699
      %v3701 = vmul.f32 %v3607, 1.442695
      %v3702 = vpow.pop %v3701
      %v3703 = vmul.f32 %v3608, 1.442695
      %v3704 = vpow.pop %v3703
      %v3705 = vmul.f32 %v3609, 1.442695
      %v3706 = vpow.pop %v3705
      %v3707 = vmul.f32 %v3610, 1.442695
      %v3708 = vpow.pop %v3707
      %v3709 = vmul.f32 %v3611, 1.442695
      %v3710 = vpow.pop %v3709
      %v3711 = vmul.f32 %v3612, 1.442695
      %v3712 = vpow.pop %v3711
      %v3713 = vmul.f32 %v3613, 1.442695
      %v3714 = vpow.pop %v3713
      %v3715 = vmul.f32 %v3614, 1.442695
      %v3716 = vpow.pop %v3715
      %v3717 = vmul.f32 %v3615, 1.442695
      %v3718 = vpow.pop %v3717
      %v3719 = vmul.f32 %v3616, 1.442695
      %v3720 = vpow.pop %v3719
      %v3721 = vmul.f32 %v3617, 1.442695
      %v3722 = vpow.pop %v3721
      %v3723 = vmul.f32 %v3618, 1.442695
      %v3724 = vpow.pop %v3723
      %v3725 = vmul.f32 %v3619, 1.442695
      %v3726 = vpow.pop %v3725
      %v3727 = vmul.f32 %v3620, 1.442695
      %v3728 = vpow.pop %v3727
      %v3729 = vmul.f32 %v3621, 1.442695
      %v3730 = vpow.pop %v3729
      %v3731 = vmul.f32 %v3622, 1.442695
      %v3732 = vpow.pop %v3731
      %v3733 = vmul.f32 %v3623, 1.442695
      %v3734 = vpow.pop %v3733
      %v3735 = vmul.f32 %v3624, 1.442695
      %v3736 = vpow.pop %v3735
      %v3737 = vmul.f32 %v3625, 1.442695
      %v3738 = vpow.pop %v3737
      %v3739 = vmul.f32 %v3626, 1.442695
      %v3740 = vpow.pop %v3739
      %v3741 = vmul.f32 %v3627, 1.442695
      %v3742 = vpow.pop %v3741
      %v3743 = vmul.f32 %v3628, 1.442695
      %v3744 = vpow.pop %v3743
      %v3745 = vmul.f32 %v3629, 1.442695
      %v3746 = vpow.pop %v3745
      %v3747 = vmul.f32 %v3630, 1.442695
      %v3748 = vpow.pop %v3747
      %v3749 = vmul.f32 %v3631, 1.442695
      %v3750 = vpow.pop %v3749
      %v3751 = vmul.f32 %v3632, 1.442695
      %v3752 = vpow.pop %v3751
      %v3753 = vmul.f32 %v3633, 1.442695
      %v3754 = vpow.pop %v3753
      %v3755 = vmul.f32 %v3634, 1.442695
      %v3756 = vpow.pop %v3755
      %v3757 = vmul.f32 %v3635, 1.442695
      %v3758 = vpow.pop %v3757
      %v3759 = vmul.f32 %v3636, 1.442695
      %v3760 = vpow.pop %v3759
      %v3761 = vmul.f32 %v3637, 1.442695
      %v3762 = vpow.pop %v3761
      %v3763 = vmul.f32 %v3638, 1.442695
      %v3764 = vpow.pop %v3763
      %v3765 = vmul.f32 %v3639, 1.442695
      %v3766 = vpow.pop %v3765
      %v3767 = vmul.f32 %v3640, 1.442695
      %v3768 = vpow.pop %v3767
      %v3769 = vadd.f32 %v3642, 1.0
      %v3770 = vadd.f32 %v3644, 1.0
      %v3771 = vadd.f32 %v3646, 1.0
      %v3772 = vadd.f32 %v3648, 1.0
      %v3773 = vadd.f32 %v3650, 1.0
      %v3774 = vadd.f32 %v3652, 1.0
      %v3775 = vadd.f32 %v3654, 1.0
      %v3776 = vadd.f32 %v3656, 1.0
      %v3777 = vadd.f32 %v3658, 1.0
      %v3778 = vadd.f32 %v3660, 1.0
      %v3779 = vadd.f32 %v3662, 1.0
      %v3780 = vadd.f32 %v3664, 1.0
      %v3781 = vadd.f32 %v3666, 1.0
      %v3782 = vadd.f32 %v3668, 1.0
      %v3783 = vadd.f32 %v3670, 1.0
      %v3784 = vadd.f32 %v3672, 1.0
      %v3785 = vadd.f32 %v3674, 1.0
      %v3786 = vadd.f32 %v3676, 1.0
      %v3787 = vadd.f32 %v3678, 1.0
      %v3788 = vadd.f32 %v3680, 1.0
      %v3789 = vadd.f32 %v3682, 1.0
      %v3790 = vadd.f32 %v3684, 1.0
      %v3791 = vadd.f32 %v3686, 1.0
      %v3792 = vadd.f32 %v3688, 1.0
      %v3793 = vadd.f32 %v3690, 1.0
      %v3794 = vadd.f32 %v3692, 1.0
      %v3795 = vadd.f32 %v3694, 1.0
      %v3796 = vadd.f32 %v3696, 1.0
      %v3797 = vadd.f32 %v3698, 1.0
      %v3798 = vadd.f32 %v3700, 1.0
      %v3799 = vadd.f32 %v3702, 1.0
      %v3800 = vadd.f32 %v3704, 1.0
      %v3801 = vadd.f32 %v3706, 1.0
      %v3802 = vadd.f32 %v3708, 1.0
      %v3803 = vadd.f32 %v3710, 1.0
      %v3804 = vadd.f32 %v3712, 1.0
      %v3805 = vadd.f32 %v3714, 1.0
      %v3806 = vadd.f32 %v3716, 1.0
      %v3807 = vadd.f32 %v3718, 1.0
      %v3808 = vadd.f32 %v3720, 1.0
      %v3809 = vadd.f32 %v3722, 1.0
      %v3810 = vadd.f32 %v3724, 1.0
      %v3811 = vadd.f32 %v3726, 1.0
      %v3812 = vadd.f32 %v3728, 1.0
      %v3813 = vadd.f32 %v3730, 1.0
      %v3814 = vadd.f32 %v3732, 1.0
      %v3815 = vadd.f32 %v3734, 1.0
      %v3816 = vadd.f32 %v3736, 1.0
      %v3817 = vadd.f32 %v3738, 1.0
      %v3818 = vadd.f32 %v3740, 1.0
      %v3819 = vadd.f32 %v3742, 1.0
      %v3820 = vadd.f32 %v3744, 1.0
      %v3821 = vadd.f32 %v3746, 1.0
      %v3822 = vadd.f32 %v3748, 1.0
      %v3823 = vadd.f32 %v3750, 1.0
      %v3824 = vadd.f32 %v3752, 1.0
      %v3825 = vadd.f32 %v3754, 1.0
      %v3826 = vadd.f32 %v3756, 1.0
      %v3827 = vadd.f32 %v3758, 1.0
      %v3828 = vadd.f32 %v3760, 1.0
      %v3829 = vadd.f32 %v3762, 1.0
      %v3830 = vadd.f32 %v3764, 1.0
      %v3831 = vadd.f32 %v3766, 1.0
      %v3832 = vadd.f32 %v3768, 1.0
      %v3833 = vrcp.pop %v3769
      %v3834 = vmul.f32 %v3769, %v3833
      %v3835 = vsub.f32 1.0, %v3834
      %v3836 = vmul.f32 %v3833, %v3835
      %v3837 = vadd.f32 %v3833, %v3836
      %vm3838 = vweird.f32 %v3769
      %vm3839 = vweird.f32 %v3833
      %vm3840 = vmor %vm3838, %vm3839
      %v3841 = vsel %vm3840, %v3833, %v3837
      %v3842 = vand.u32 2147483647, %v3769
      %vm3843 = vcmp.eq.f32.partialorder %v3842, 8.507059e+37
      %v3844 = vand.u32 %v3769, 2147483648
      %v3845 = vor.u32 1.1754944e-38, %v3844
      %v3846 = vsel %vm3843, %v3845, %v3841
      %v3847 = vmul.f32 1.0, %v3846
      %v3848 = vrcp.pop %v3770
      %v3849 = vmul.f32 %v3770, %v3848
      %v3850 = vsub.f32 1.0, %v3849
      %v3851 = vmul.f32 %v3848, %v3850
      %v3852 = vadd.f32 %v3848, %v3851
      %vm3853 = vweird.f32 %v3770
      %vm3854 = vweird.f32 %v3848
      %vm3855 = vmor %vm3853, %vm3854
      %v3856 = vsel %vm3855, %v3848, %v3852
      %v3857 = vand.u32 2147483647, %v3770
      %vm3858 = vcmp.eq.f32.partialorder %v3857, 8.507059e+37
      %v3859 = vand.u32 %v3770, 2147483648
      %v3860 = vor.u32 1.1754944e-38, %v3859
      %v3861 = vsel %vm3858, %v3860, %v3856
      %v3862 = vmul.f32 1.0, %v3861
      %v3863 = vrcp.pop %v3771
      %v3864 = vmul.f32 %v3771, %v3863
      %v3865 = vsub.f32 1.0, %v3864
      %v3866 = vmul.f32 %v3863, %v3865
      %v3867 = vadd.f32 %v3863, %v3866
      %vm3868 = vweird.f32 %v3771
      %vm3869 = vweird.f32 %v3863
      %vm3870 = vmor %vm3868, %vm3869
      %v3871 = vsel %vm3870, %v3863, %v3867
      %v3872 = vand.u32 2147483647, %v3771
      %vm3873 = vcmp.eq.f32.partialorder %v3872, 8.507059e+37
      %v3874 = vand.u32 %v3771, 2147483648
      %v3875 = vor.u32 1.1754944e-38, %v3874
      %v3876 = vsel %vm3873, %v3875, %v3871
      %v3877 = vmul.f32 1.0, %v3876
      %v3878 = vrcp.pop %v3772
      %v3879 = vmul.f32 %v3772, %v3878
      %v3880 = vsub.f32 1.0, %v3879
      %v3881 = vmul.f32 %v3878, %v3880
      %v3882 = vadd.f32 %v3878, %v3881
      %vm3883 = vweird.f32 %v3772
      %vm3884 = vweird.f32 %v3878
      %vm3885 = vmor %vm3883, %vm3884
      %v3886 = vsel %vm3885, %v3878, %v3882
      %v3887 = vand.u32 2147483647, %v3772
      %vm3888 = vcmp.eq.f32.partialorder %v3887, 8.507059e+37
      %v3889 = vand.u32 %v3772, 2147483648
      %v3890 = vor.u32 1.1754944e-38, %v3889
      %v3891 = vsel %vm3888, %v3890, %v3886
      %v3892 = vmul.f32 1.0, %v3891
      %v3893 = vrcp.pop %v3773
      %v3894 = vmul.f32 %v3773, %v3893
      %v3895 = vsub.f32 1.0, %v3894
      %v3896 = vmul.f32 %v3893, %v3895
      %v3897 = vadd.f32 %v3893, %v3896
      %vm3898 = vweird.f32 %v3773
      %vm3899 = vweird.f32 %v3893
      %vm3900 = vmor %vm3898, %vm3899
      %v3901 = vsel %vm3900, %v3893, %v3897
      %v3902 = vand.u32 2147483647, %v3773
      %vm3903 = vcmp.eq.f32.partialorder %v3902, 8.507059e+37
      %v3904 = vand.u32 %v3773, 2147483648
      %v3905 = vor.u32 1.1754944e-38, %v3904
      %v3906 = vsel %vm3903, %v3905, %v3901
      %v3907 = vmul.f32 1.0, %v3906
      %v3908 = vrcp.pop %v3774
      %v3909 = vmul.f32 %v3774, %v3908
      %v3910 = vsub.f32 1.0, %v3909
      %v3911 = vmul.f32 %v3908, %v3910
      %v3912 = vadd.f32 %v3908, %v3911
      %vm3913 = vweird.f32 %v3774
      %vm3914 = vweird.f32 %v3908
      %vm3915 = vmor %vm3913, %vm3914
      %v3916 = vsel %vm3915, %v3908, %v3912
      %v3917 = vand.u32 2147483647, %v3774
      %vm3918 = vcmp.eq.f32.partialorder %v3917, 8.507059e+37
      %v3919 = vand.u32 %v3774, 2147483648
      %v3920 = vor.u32 1.1754944e-38, %v3919
      %v3921 = vsel %vm3918, %v3920, %v3916
      %v3922 = vmul.f32 1.0, %v3921
      %v3923 = vrcp.pop %v3775
      %v3924 = vmul.f32 %v3775, %v3923
      %v3925 = vsub.f32 1.0, %v3924
      %v3926 = vmul.f32 %v3923, %v3925
      %v3927 = vadd.f32 %v3923, %v3926
      %vm3928 = vweird.f32 %v3775
      %vm3929 = vweird.f32 %v3923
      %vm3930 = vmor %vm3928, %vm3929
      %v3931 = vsel %vm3930, %v3923, %v3927
      %v3932 = vand.u32 2147483647, %v3775
      %vm3933 = vcmp.eq.f32.partialorder %v3932, 8.507059e+37
      %v3934 = vand.u32 %v3775, 2147483648
      %v3935 = vor.u32 1.1754944e-38, %v3934
      %v3936 = vsel %vm3933, %v3935, %v3931
      %v3937 = vmul.f32 1.0, %v3936
      %v3938 = vrcp.pop %v3776
      %v3939 = vmul.f32 %v3776, %v3938
      %v3940 = vsub.f32 1.0, %v3939
      %v3941 = vmul.f32 %v3938, %v3940
      %v3942 = vadd.f32 %v3938, %v3941
      %vm3943 = vweird.f32 %v3776
      %vm3944 = vweird.f32 %v3938
      %vm3945 = vmor %vm3943, %vm3944
      %v3946 = vsel %vm3945, %v3938, %v3942
      %v3947 = vand.u32 2147483647, %v3776
      %vm3948 = vcmp.eq.f32.partialorder %v3947, 8.507059e+37
      %v3949 = vand.u32 %v3776, 2147483648
      %v3950 = vor.u32 1.1754944e-38, %v3949
      %v3951 = vsel %vm3948, %v3950, %v3946
      %v3952 = vmul.f32 1.0, %v3951
      %v3953 = vrcp.pop %v3777
      %v3954 = vmul.f32 %v3777, %v3953
      %v3955 = vsub.f32 1.0, %v3954
      %v3956 = vmul.f32 %v3953, %v3955
      %v3957 = vadd.f32 %v3953, %v3956
      %vm3958 = vweird.f32 %v3777
      %vm3959 = vweird.f32 %v3953
      %vm3960 = vmor %vm3958, %vm3959
      %v3961 = vsel %vm3960, %v3953, %v3957
      %v3962 = vand.u32 2147483647, %v3777
      %vm3963 = vcmp.eq.f32.partialorder %v3962, 8.507059e+37
      %v3964 = vand.u32 %v3777, 2147483648
      %v3965 = vor.u32 1.1754944e-38, %v3964
      %v3966 = vsel %vm3963, %v3965, %v3961
      %v3967 = vmul.f32 1.0, %v3966
      %v3968 = vrcp.pop %v3778
      %v3969 = vmul.f32 %v3778, %v3968
      %v3970 = vsub.f32 1.0, %v3969
      %v3971 = vmul.f32 %v3968, %v3970
      %v3972 = vadd.f32 %v3968, %v3971
      %vm3973 = vweird.f32 %v3778
      %vm3974 = vweird.f32 %v3968
      %vm3975 = vmor %vm3973, %vm3974
      %v3976 = vsel %vm3975, %v3968, %v3972
      %v3977 = vand.u32 2147483647, %v3778
      %vm3978 = vcmp.eq.f32.partialorder %v3977, 8.507059e+37
      %v3979 = vand.u32 %v3778, 2147483648
      %v3980 = vor.u32 1.1754944e-38, %v3979
      %v3981 = vsel %vm3978, %v3980, %v3976
      %v3982 = vmul.f32 1.0, %v3981
      %v3983 = vrcp.pop %v3779
      %v3984 = vmul.f32 %v3779, %v3983
      %v3985 = vsub.f32 1.0, %v3984
      %v3986 = vmul.f32 %v3983, %v3985
      %v3987 = vadd.f32 %v3983, %v3986
      %vm3988 = vweird.f32 %v3779
      %vm3989 = vweird.f32 %v3983
      %vm3990 = vmor %vm3988, %vm3989
      %v3991 = vsel %vm3990, %v3983, %v3987
      %v3992 = vand.u32 2147483647, %v3779
      %vm3993 = vcmp.eq.f32.partialorder %v3992, 8.507059e+37
      %v3994 = vand.u32 %v3779, 2147483648
      %v3995 = vor.u32 1.1754944e-38, %v3994
      %v3996 = vsel %vm3993, %v3995, %v3991
      %v3997 = vmul.f32 1.0, %v3996
      %v3998 = vrcp.pop %v3780
      %v3999 = vmul.f32 %v3780, %v3998
      %v4000 = vsub.f32 1.0, %v3999
      %v4001 = vmul.f32 %v3998, %v4000
      %v4002 = vadd.f32 %v3998, %v4001
      %vm4003 = vweird.f32 %v3780
      %vm4004 = vweird.f32 %v3998
      %vm4005 = vmor %vm4003, %vm4004
      %v4006 = vsel %vm4005, %v3998, %v4002
      %v4007 = vand.u32 2147483647, %v3780
      %vm4008 = vcmp.eq.f32.partialorder %v4007, 8.507059e+37
      %v4009 = vand.u32 %v3780, 2147483648
      %v4010 = vor.u32 1.1754944e-38, %v4009
      %v4011 = vsel %vm4008, %v4010, %v4006
      %v4012 = vmul.f32 1.0, %v4011
      %v4013 = vrcp.pop %v3781
      %v4014 = vmul.f32 %v3781, %v4013
      %v4015 = vsub.f32 1.0, %v4014
      %v4016 = vmul.f32 %v4013, %v4015
      %v4017 = vadd.f32 %v4013, %v4016
      %vm4018 = vweird.f32 %v3781
      %vm4019 = vweird.f32 %v4013
      %vm4020 = vmor %vm4018, %vm4019
      %v4021 = vsel %vm4020, %v4013, %v4017
      %v4022 = vand.u32 2147483647, %v3781
      %vm4023 = vcmp.eq.f32.partialorder %v4022, 8.507059e+37
      %v4024 = vand.u32 %v3781, 2147483648
      %v4025 = vor.u32 1.1754944e-38, %v4024
      %v4026 = vsel %vm4023, %v4025, %v4021
      %v4027 = vmul.f32 1.0, %v4026
      %v4028 = vrcp.pop %v3782
      %v4029 = vmul.f32 %v3782, %v4028
      %v4030 = vsub.f32 1.0, %v4029
      %v4031 = vmul.f32 %v4028, %v4030
      %v4032 = vadd.f32 %v4028, %v4031
      %vm4033 = vweird.f32 %v3782
      %vm4034 = vweird.f32 %v4028
      %vm4035 = vmor %vm4033, %vm4034
      %v4036 = vsel %vm4035, %v4028, %v4032
      %v4037 = vand.u32 2147483647, %v3782
      %vm4038 = vcmp.eq.f32.partialorder %v4037, 8.507059e+37
      %v4039 = vand.u32 %v3782, 2147483648
      %v4040 = vor.u32 1.1754944e-38, %v4039
      %v4041 = vsel %vm4038, %v4040, %v4036
      %v4042 = vmul.f32 1.0, %v4041
      %v4043 = vrcp.pop %v3783
      %v4044 = vmul.f32 %v3783, %v4043
      %v4045 = vsub.f32 1.0, %v4044
      %v4046 = vmul.f32 %v4043, %v4045
      %v4047 = vadd.f32 %v4043, %v4046
      %vm4048 = vweird.f32 %v3783
      %vm4049 = vweird.f32 %v4043
      %vm4050 = vmor %vm4048, %vm4049
      %v4051 = vsel %vm4050, %v4043, %v4047
      %v4052 = vand.u32 2147483647, %v3783
      %vm4053 = vcmp.eq.f32.partialorder %v4052, 8.507059e+37
      %v4054 = vand.u32 %v3783, 2147483648
      %v4055 = vor.u32 1.1754944e-38, %v4054
      %v4056 = vsel %vm4053, %v4055, %v4051
      %v4057 = vmul.f32 1.0, %v4056
      %v4058 = vrcp.pop %v3784
      %v4059 = vmul.f32 %v3784, %v4058
      %v4060 = vsub.f32 1.0, %v4059
      %v4061 = vmul.f32 %v4058, %v4060
      %v4062 = vadd.f32 %v4058, %v4061
      %vm4063 = vweird.f32 %v3784
      %vm4064 = vweird.f32 %v4058
      %vm4065 = vmor %vm4063, %vm4064
      %v4066 = vsel %vm4065, %v4058, %v4062
      %v4067 = vand.u32 2147483647, %v3784
      %vm4068 = vcmp.eq.f32.partialorder %v4067, 8.507059e+37
      %v4069 = vand.u32 %v3784, 2147483648
      %v4070 = vor.u32 1.1754944e-38, %v4069
      %v4071 = vsel %vm4068, %v4070, %v4066
      %v4072 = vmul.f32 1.0, %v4071
      %v4073 = vrcp.pop %v3785
      %v4074 = vmul.f32 %v3785, %v4073
      %v4075 = vsub.f32 1.0, %v4074
      %v4076 = vmul.f32 %v4073, %v4075
      %v4077 = vadd.f32 %v4073, %v4076
      %vm4078 = vweird.f32 %v3785
      %vm4079 = vweird.f32 %v4073
      %vm4080 = vmor %vm4078, %vm4079
      %v4081 = vsel %vm4080, %v4073, %v4077
      %v4082 = vand.u32 2147483647, %v3785
      %vm4083 = vcmp.eq.f32.partialorder %v4082, 8.507059e+37
      %v4084 = vand.u32 %v3785, 2147483648
      %v4085 = vor.u32 1.1754944e-38, %v4084
      %v4086 = vsel %vm4083, %v4085, %v4081
      %v4087 = vmul.f32 1.0, %v4086
      %v4088 = vrcp.pop %v3786
      %v4089 = vmul.f32 %v3786, %v4088
      %v4090 = vsub.f32 1.0, %v4089
      %v4091 = vmul.f32 %v4088, %v4090
      %v4092 = vadd.f32 %v4088, %v4091
      %vm4093 = vweird.f32 %v3786
      %vm4094 = vweird.f32 %v4088
      %vm4095 = vmor %vm4093, %vm4094
      %v4096 = vsel %vm4095, %v4088, %v4092
      %v4097 = vand.u32 2147483647, %v3786
      %vm4098 = vcmp.eq.f32.partialorder %v4097, 8.507059e+37
      %v4099 = vand.u32 %v3786, 2147483648
      %v4100 = vor.u32 1.1754944e-38, %v4099
      %v4101 = vsel %vm4098, %v4100, %v4096
      %v4102 = vmul.f32 1.0, %v4101
      %v4103 = vrcp.pop %v3787
      %v4104 = vmul.f32 %v3787, %v4103
      %v4105 = vsub.f32 1.0, %v4104
      %v4106 = vmul.f32 %v4103, %v4105
      %v4107 = vadd.f32 %v4103, %v4106
      %vm4108 = vweird.f32 %v3787
      %vm4109 = vweird.f32 %v4103
      %vm4110 = vmor %vm4108, %vm4109
      %v4111 = vsel %vm4110, %v4103, %v4107
      %v4112 = vand.u32 2147483647, %v3787
      %vm4113 = vcmp.eq.f32.partialorder %v4112, 8.507059e+37
      %v4114 = vand.u32 %v3787, 2147483648
      %v4115 = vor.u32 1.1754944e-38, %v4114
      %v4116 = vsel %vm4113, %v4115, %v4111
      %v4117 = vmul.f32 1.0, %v4116
      %v4118 = vrcp.pop %v3788
      %v4119 = vmul.f32 %v3788, %v4118
      %v4120 = vsub.f32 1.0, %v4119
      %v4121 = vmul.f32 %v4118, %v4120
      %v4122 = vadd.f32 %v4118, %v4121
      %vm4123 = vweird.f32 %v3788
      %vm4124 = vweird.f32 %v4118
      %vm4125 = vmor %vm4123, %vm4124
      %v4126 = vsel %vm4125, %v4118, %v4122
      %v4127 = vand.u32 2147483647, %v3788
      %vm4128 = vcmp.eq.f32.partialorder %v4127, 8.507059e+37
      %v4129 = vand.u32 %v3788, 2147483648
      %v4130 = vor.u32 1.1754944e-38, %v4129
      %v4131 = vsel %vm4128, %v4130, %v4126
      %v4132 = vmul.f32 1.0, %v4131
      %v4133 = vrcp.pop %v3789
      %v4134 = vmul.f32 %v3789, %v4133
      %v4135 = vsub.f32 1.0, %v4134
      %v4136 = vmul.f32 %v4133, %v4135
      %v4137 = vadd.f32 %v4133, %v4136
      %vm4138 = vweird.f32 %v3789
      %vm4139 = vweird.f32 %v4133
      %vm4140 = vmor %vm4138, %vm4139
      %v4141 = vsel %vm4140, %v4133, %v4137
      %v4142 = vand.u32 2147483647, %v3789
      %vm4143 = vcmp.eq.f32.partialorder %v4142, 8.507059e+37
      %v4144 = vand.u32 %v3789, 2147483648
      %v4145 = vor.u32 1.1754944e-38, %v4144
      %v4146 = vsel %vm4143, %v4145, %v4141
      %v4147 = vmul.f32 1.0, %v4146
      %v4148 = vrcp.pop %v3790
      %v4149 = vmul.f32 %v3790, %v4148
      %v4150 = vsub.f32 1.0, %v4149
      %v4151 = vmul.f32 %v4148, %v4150
      %v4152 = vadd.f32 %v4148, %v4151
      %vm4153 = vweird.f32 %v3790
      %vm4154 = vweird.f32 %v4148
      %vm4155 = vmor %vm4153, %vm4154
      %v4156 = vsel %vm4155, %v4148, %v4152
      %v4157 = vand.u32 2147483647, %v3790
      %vm4158 = vcmp.eq.f32.partialorder %v4157, 8.507059e+37
      %v4159 = vand.u32 %v3790, 2147483648
      %v4160 = vor.u32 1.1754944e-38, %v4159
      %v4161 = vsel %vm4158, %v4160, %v4156
      %v4162 = vmul.f32 1.0, %v4161
      %v4163 = vrcp.pop %v3791
      %v4164 = vmul.f32 %v3791, %v4163
      %v4165 = vsub.f32 1.0, %v4164
      %v4166 = vmul.f32 %v4163, %v4165
      %v4167 = vadd.f32 %v4163, %v4166
      %vm4168 = vweird.f32 %v3791
      %vm4169 = vweird.f32 %v4163
      %vm4170 = vmor %vm4168, %vm4169
      %v4171 = vsel %vm4170, %v4163, %v4167
      %v4172 = vand.u32 2147483647, %v3791
      %vm4173 = vcmp.eq.f32.partialorder %v4172, 8.507059e+37
      %v4174 = vand.u32 %v3791, 2147483648
      %v4175 = vor.u32 1.1754944e-38, %v4174
      %v4176 = vsel %vm4173, %v4175, %v4171
      %v4177 = vmul.f32 1.0, %v4176
      %v4178 = vrcp.pop %v3792
      %v4179 = vmul.f32 %v3792, %v4178
      %v4180 = vsub.f32 1.0, %v4179
      %v4181 = vmul.f32 %v4178, %v4180
      %v4182 = vadd.f32 %v4178, %v4181
      %vm4183 = vweird.f32 %v3792
      %vm4184 = vweird.f32 %v4178
      %vm4185 = vmor %vm4183, %vm4184
      %v4186 = vsel %vm4185, %v4178, %v4182
      %v4187 = vand.u32 2147483647, %v3792
      %vm4188 = vcmp.eq.f32.partialorder %v4187, 8.507059e+37
      %v4189 = vand.u32 %v3792, 2147483648
      %v4190 = vor.u32 1.1754944e-38, %v4189
      %v4191 = vsel %vm4188, %v4190, %v4186
      %v4192 = vmul.f32 1.0, %v4191
      %v4193 = vrcp.pop %v3793
      %v4194 = vmul.f32 %v3793, %v4193
      %v4195 = vsub.f32 1.0, %v4194
      %v4196 = vmul.f32 %v4193, %v4195
      %v4197 = vadd.f32 %v4193, %v4196
      %vm4198 = vweird.f32 %v3793
      %vm4199 = vweird.f32 %v4193
      %vm4200 = vmor %vm4198, %vm4199
      %v4201 = vsel %vm4200, %v4193, %v4197
      %v4202 = vand.u32 2147483647, %v3793
      %vm4203 = vcmp.eq.f32.partialorder %v4202, 8.507059e+37
      %v4204 = vand.u32 %v3793, 2147483648
      %v4205 = vor.u32 1.1754944e-38, %v4204
      %v4206 = vsel %vm4203, %v4205, %v4201
      %v4207 = vmul.f32 1.0, %v4206
      %v4208 = vrcp.pop %v3794
      %v4209 = vmul.f32 %v3794, %v4208
      %v4210 = vsub.f32 1.0, %v4209
      %v4211 = vmul.f32 %v4208, %v4210
      %v4212 = vadd.f32 %v4208, %v4211
      %vm4213 = vweird.f32 %v3794
      %vm4214 = vweird.f32 %v4208
      %vm4215 = vmor %vm4213, %vm4214
      %v4216 = vsel %vm4215, %v4208, %v4212
      %v4217 = vand.u32 2147483647, %v3794
      %vm4218 = vcmp.eq.f32.partialorder %v4217, 8.507059e+37
      %v4219 = vand.u32 %v3794, 2147483648
      %v4220 = vor.u32 1.1754944e-38, %v4219
      %v4221 = vsel %vm4218, %v4220, %v4216
      %v4222 = vmul.f32 1.0, %v4221
      %v4223 = vrcp.pop %v3795
      %v4224 = vmul.f32 %v3795, %v4223
      %v4225 = vsub.f32 1.0, %v4224
      %v4226 = vmul.f32 %v4223, %v4225
      %v4227 = vadd.f32 %v4223, %v4226
      %vm4228 = vweird.f32 %v3795
      %vm4229 = vweird.f32 %v4223
      %vm4230 = vmor %vm4228, %vm4229
      %v4231 = vsel %vm4230, %v4223, %v4227
      %v4232 = vand.u32 2147483647, %v3795
      %vm4233 = vcmp.eq.f32.partialorder %v4232, 8.507059e+37
      %v4234 = vand.u32 %v3795, 2147483648
      %v4235 = vor.u32 1.1754944e-38, %v4234
      %v4236 = vsel %vm4233, %v4235, %v4231
      %v4237 = vmul.f32 1.0, %v4236
      %v4238 = vrcp.pop %v3796
      %v4239 = vmul.f32 %v3796, %v4238
      %v4240 = vsub.f32 1.0, %v4239
      %v4241 = vmul.f32 %v4238, %v4240
      %v4242 = vadd.f32 %v4238, %v4241
      %vm4243 = vweird.f32 %v3796
      %vm4244 = vweird.f32 %v4238
      %vm4245 = vmor %vm4243, %vm4244
      %v4246 = vsel %vm4245, %v4238, %v4242
      %v4247 = vand.u32 2147483647, %v3796
      %vm4248 = vcmp.eq.f32.partialorder %v4247, 8.507059e+37
      %v4249 = vand.u32 %v3796, 2147483648
      %v4250 = vor.u32 1.1754944e-38, %v4249
      %v4251 = vsel %vm4248, %v4250, %v4246
      %v4252 = vmul.f32 1.0, %v4251
      %v4253 = vrcp.pop %v3797
      %v4254 = vmul.f32 %v3797, %v4253
      %v4255 = vsub.f32 1.0, %v4254
      %v4256 = vmul.f32 %v4253, %v4255
      %v4257 = vadd.f32 %v4253, %v4256
      %vm4258 = vweird.f32 %v3797
      %vm4259 = vweird.f32 %v4253
      %vm4260 = vmor %vm4258, %vm4259
      %v4261 = vsel %vm4260, %v4253, %v4257
      %v4262 = vand.u32 2147483647, %v3797
      %vm4263 = vcmp.eq.f32.partialorder %v4262, 8.507059e+37
      %v4264 = vand.u32 %v3797, 2147483648
      %v4265 = vor.u32 1.1754944e-38, %v4264
      %v4266 = vsel %vm4263, %v4265, %v4261
      %v4267 = vmul.f32 1.0, %v4266
      %v4268 = vrcp.pop %v3798
      %v4269 = vmul.f32 %v3798, %v4268
      %v4270 = vsub.f32 1.0, %v4269
      %v4271 = vmul.f32 %v4268, %v4270
      %v4272 = vadd.f32 %v4268, %v4271
      %vm4273 = vweird.f32 %v3798
      %vm4274 = vweird.f32 %v4268
      %vm4275 = vmor %vm4273, %vm4274
      %v4276 = vsel %vm4275, %v4268, %v4272
      %v4277 = vand.u32 2147483647, %v3798
      %vm4278 = vcmp.eq.f32.partialorder %v4277, 8.507059e+37
      %v4279 = vand.u32 %v3798, 2147483648
      %v4280 = vor.u32 1.1754944e-38, %v4279
      %v4281 = vsel %vm4278, %v4280, %v4276
      %v4282 = vmul.f32 1.0, %v4281
      %v4283 = vrcp.pop %v3799
      %v4284 = vmul.f32 %v3799, %v4283
      %v4285 = vsub.f32 1.0, %v4284
      %v4286 = vmul.f32 %v4283, %v4285
      %v4287 = vadd.f32 %v4283, %v4286
      %vm4288 = vweird.f32 %v3799
      %vm4289 = vweird.f32 %v4283
      %vm4290 = vmor %vm4288, %vm4289
      %v4291 = vsel %vm4290, %v4283, %v4287
      %v4292 = vand.u32 2147483647, %v3799
      %vm4293 = vcmp.eq.f32.partialorder %v4292, 8.507059e+37
      %v4294 = vand.u32 %v3799, 2147483648
      %v4295 = vor.u32 1.1754944e-38, %v4294
      %v4296 = vsel %vm4293, %v4295, %v4291
      %v4297 = vmul.f32 1.0, %v4296
      %v4298 = vrcp.pop %v3800
      %v4299 = vmul.f32 %v3800, %v4298
      %v4300 = vsub.f32 1.0, %v4299
      %v4301 = vmul.f32 %v4298, %v4300
      %v4302 = vadd.f32 %v4298, %v4301
      %vm4303 = vweird.f32 %v3800
      %vm4304 = vweird.f32 %v4298
      %vm4305 = vmor %vm4303, %vm4304
      %v4306 = vsel %vm4305, %v4298, %v4302
      %v4307 = vand.u32 2147483647, %v3800
      %vm4308 = vcmp.eq.f32.partialorder %v4307, 8.507059e+37
      %v4309 = vand.u32 %v3800, 2147483648
      %v4310 = vor.u32 1.1754944e-38, %v4309
      %v4311 = vsel %vm4308, %v4310, %v4306
      %v4312 = vmul.f32 1.0, %v4311
      %v4313 = vrcp.pop %v3801
      %v4314 = vmul.f32 %v3801, %v4313
      %v4315 = vsub.f32 1.0, %v4314
      %v4316 = vmul.f32 %v4313, %v4315
      %v4317 = vadd.f32 %v4313, %v4316
      %vm4318 = vweird.f32 %v3801
      %vm4319 = vweird.f32 %v4313
      %vm4320 = vmor %vm4318, %vm4319
      %v4321 = vsel %vm4320, %v4313, %v4317
      %v4322 = vand.u32 2147483647, %v3801
      %vm4323 = vcmp.eq.f32.partialorder %v4322, 8.507059e+37
      %v4324 = vand.u32 %v3801, 2147483648
      %v4325 = vor.u32 1.1754944e-38, %v4324
      %v4326 = vsel %vm4323, %v4325, %v4321
      %v4327 = vmul.f32 1.0, %v4326
      %v4328 = vrcp.pop %v3802
      %v4329 = vmul.f32 %v3802, %v4328
      %v4330 = vsub.f32 1.0, %v4329
      %v4331 = vmul.f32 %v4328, %v4330
      %v4332 = vadd.f32 %v4328, %v4331
      %vm4333 = vweird.f32 %v3802
      %vm4334 = vweird.f32 %v4328
      %vm4335 = vmor %vm4333, %vm4334
      %v4336 = vsel %vm4335, %v4328, %v4332
      %v4337 = vand.u32 2147483647, %v3802
      %vm4338 = vcmp.eq.f32.partialorder %v4337, 8.507059e+37
      %v4339 = vand.u32 %v3802, 2147483648
      %v4340 = vor.u32 1.1754944e-38, %v4339
      %v4341 = vsel %vm4338, %v4340, %v4336
      %v4342 = vmul.f32 1.0, %v4341
      %v4343 = vrcp.pop %v3803
      %v4344 = vmul.f32 %v3803, %v4343
      %v4345 = vsub.f32 1.0, %v4344
      %v4346 = vmul.f32 %v4343, %v4345
      %v4347 = vadd.f32 %v4343, %v4346
      %vm4348 = vweird.f32 %v3803
      %vm4349 = vweird.f32 %v4343
      %vm4350 = vmor %vm4348, %vm4349
      %v4351 = vsel %vm4350, %v4343, %v4347
      %v4352 = vand.u32 2147483647, %v3803
      %vm4353 = vcmp.eq.f32.partialorder %v4352, 8.507059e+37
      %v4354 = vand.u32 %v3803, 2147483648
      %v4355 = vor.u32 1.1754944e-38, %v4354
      %v4356 = vsel %vm4353, %v4355, %v4351
      %v4357 = vmul.f32 1.0, %v4356
      %v4358 = vrcp.pop %v3804
      %v4359 = vmul.f32 %v3804, %v4358
      %v4360 = vsub.f32 1.0, %v4359
      %v4361 = vmul.f32 %v4358, %v4360
      %v4362 = vadd.f32 %v4358, %v4361
      %vm4363 = vweird.f32 %v3804
      %vm4364 = vweird.f32 %v4358
      %vm4365 = vmor %vm4363, %vm4364
      %v4366 = vsel %vm4365, %v4358, %v4362
      %v4367 = vand.u32 2147483647, %v3804
      %vm4368 = vcmp.eq.f32.partialorder %v4367, 8.507059e+37
      %v4369 = vand.u32 %v3804, 2147483648
      %v4370 = vor.u32 1.1754944e-38, %v4369
      %v4371 = vsel %vm4368, %v4370, %v4366
      %v4372 = vmul.f32 1.0, %v4371
      %v4373 = vrcp.pop %v3805
      %v4374 = vmul.f32 %v3805, %v4373
      %v4375 = vsub.f32 1.0, %v4374
      %v4376 = vmul.f32 %v4373, %v4375
      %v4377 = vadd.f32 %v4373, %v4376
      %vm4378 = vweird.f32 %v3805
      %vm4379 = vweird.f32 %v4373
      %vm4380 = vmor %vm4378, %vm4379
      %v4381 = vsel %vm4380, %v4373, %v4377
      %v4382 = vand.u32 2147483647, %v3805
      %vm4383 = vcmp.eq.f32.partialorder %v4382, 8.507059e+37
      %v4384 = vand.u32 %v3805, 2147483648
      %v4385 = vor.u32 1.1754944e-38, %v4384
      %v4386 = vsel %vm4383, %v4385, %v4381
      %v4387 = vmul.f32 1.0, %v4386
      %v4388 = vrcp.pop %v3806
      %v4389 = vmul.f32 %v3806, %v4388
      %v4390 = vsub.f32 1.0, %v4389
      %v4391 = vmul.f32 %v4388, %v4390
      %v4392 = vadd.f32 %v4388, %v4391
      %vm4393 = vweird.f32 %v3806
      %vm4394 = vweird.f32 %v4388
      %vm4395 = vmor %vm4393, %vm4394
      %v4396 = vsel %vm4395, %v4388, %v4392
      %v4397 = vand.u32 2147483647, %v3806
      %vm4398 = vcmp.eq.f32.partialorder %v4397, 8.507059e+37
      %v4399 = vand.u32 %v3806, 2147483648
      %v4400 = vor.u32 1.1754944e-38, %v4399
      %v4401 = vsel %vm4398, %v4400, %v4396
      %v4402 = vmul.f32 1.0, %v4401
      %v4403 = vrcp.pop %v3807
      %v4404 = vmul.f32 %v3807, %v4403
      %v4405 = vsub.f32 1.0, %v4404
      %v4406 = vmul.f32 %v4403, %v4405
      %v4407 = vadd.f32 %v4403, %v4406
      %vm4408 = vweird.f32 %v3807
      %vm4409 = vweird.f32 %v4403
      %vm4410 = vmor %vm4408, %vm4409
      %v4411 = vsel %vm4410, %v4403, %v4407
      %v4412 = vand.u32 2147483647, %v3807
      %vm4413 = vcmp.eq.f32.partialorder %v4412, 8.507059e+37
      %v4414 = vand.u32 %v3807, 2147483648
      %v4415 = vor.u32 1.1754944e-38, %v4414
      %v4416 = vsel %vm4413, %v4415, %v4411
      %v4417 = vmul.f32 1.0, %v4416
      %v4418 = vrcp.pop %v3808
      %v4419 = vmul.f32 %v3808, %v4418
      %v4420 = vsub.f32 1.0, %v4419
      %v4421 = vmul.f32 %v4418, %v4420
      %v4422 = vadd.f32 %v4418, %v4421
      %vm4423 = vweird.f32 %v3808
      %vm4424 = vweird.f32 %v4418
      %vm4425 = vmor %vm4423, %vm4424
      %v4426 = vsel %vm4425, %v4418, %v4422
      %v4427 = vand.u32 2147483647, %v3808
      %vm4428 = vcmp.eq.f32.partialorder %v4427, 8.507059e+37
      %v4429 = vand.u32 %v3808, 2147483648
      %v4430 = vor.u32 1.1754944e-38, %v4429
      %v4431 = vsel %vm4428, %v4430, %v4426
      %v4432 = vmul.f32 1.0, %v4431
      %v4433 = vrcp.pop %v3809
      %v4434 = vmul.f32 %v3809, %v4433
      %v4435 = vsub.f32 1.0, %v4434
      %v4436 = vmul.f32 %v4433, %v4435
      %v4437 = vadd.f32 %v4433, %v4436
      %vm4438 = vweird.f32 %v3809
      %vm4439 = vweird.f32 %v4433
      %vm4440 = vmor %vm4438, %vm4439
      %v4441 = vsel %vm4440, %v4433, %v4437
      %v4442 = vand.u32 2147483647, %v3809
      %vm4443 = vcmp.eq.f32.partialorder %v4442, 8.507059e+37
      %v4444 = vand.u32 %v3809, 2147483648
      %v4445 = vor.u32 1.1754944e-38, %v4444
      %v4446 = vsel %vm4443, %v4445, %v4441
      %v4447 = vmul.f32 1.0, %v4446
      %v4448 = vrcp.pop %v3810
      %v4449 = vmul.f32 %v3810, %v4448
      %v4450 = vsub.f32 1.0, %v4449
      %v4451 = vmul.f32 %v4448, %v4450
      %v4452 = vadd.f32 %v4448, %v4451
      %vm4453 = vweird.f32 %v3810
      %vm4454 = vweird.f32 %v4448
      %vm4455 = vmor %vm4453, %vm4454
      %v4456 = vsel %vm4455, %v4448, %v4452
      %v4457 = vand.u32 2147483647, %v3810
      %vm4458 = vcmp.eq.f32.partialorder %v4457, 8.507059e+37
      %v4459 = vand.u32 %v3810, 2147483648
      %v4460 = vor.u32 1.1754944e-38, %v4459
      %v4461 = vsel %vm4458, %v4460, %v4456
      %v4462 = vmul.f32 1.0, %v4461
      %v4463 = vrcp.pop %v3811
      %v4464 = vmul.f32 %v3811, %v4463
      %v4465 = vsub.f32 1.0, %v4464
      %v4466 = vmul.f32 %v4463, %v4465
      %v4467 = vadd.f32 %v4463, %v4466
      %vm4468 = vweird.f32 %v3811
      %vm4469 = vweird.f32 %v4463
      %vm4470 = vmor %vm4468, %vm4469
      %v4471 = vsel %vm4470, %v4463, %v4467
      %v4472 = vand.u32 2147483647, %v3811
      %vm4473 = vcmp.eq.f32.partialorder %v4472, 8.507059e+37
      %v4474 = vand.u32 %v3811, 2147483648
      %v4475 = vor.u32 1.1754944e-38, %v4474
      %v4476 = vsel %vm4473, %v4475, %v4471
      %v4477 = vmul.f32 1.0, %v4476
      %v4478 = vrcp.pop %v3812
      %v4479 = vmul.f32 %v3812, %v4478
      %v4480 = vsub.f32 1.0, %v4479
      %v4481 = vmul.f32 %v4478, %v4480
      %v4482 = vadd.f32 %v4478, %v4481
      %vm4483 = vweird.f32 %v3812
      %vm4484 = vweird.f32 %v4478
      %vm4485 = vmor %vm4483, %vm4484
      %v4486 = vsel %vm4485, %v4478, %v4482
      %v4487 = vand.u32 2147483647, %v3812
      %vm4488 = vcmp.eq.f32.partialorder %v4487, 8.507059e+37
      %v4489 = vand.u32 %v3812, 2147483648
      %v4490 = vor.u32 1.1754944e-38, %v4489
      %v4491 = vsel %vm4488, %v4490, %v4486
      %v4492 = vmul.f32 1.0, %v4491
      %v4493 = vrcp.pop %v3813
      %v4494 = vmul.f32 %v3813, %v4493
      %v4495 = vsub.f32 1.0, %v4494
      %v4496 = vmul.f32 %v4493, %v4495
      %v4497 = vadd.f32 %v4493, %v4496
      %vm4498 = vweird.f32 %v3813
      %vm4499 = vweird.f32 %v4493
      %vm4500 = vmor %vm4498, %vm4499
      %v4501 = vsel %vm4500, %v4493, %v4497
      %v4502 = vand.u32 2147483647, %v3813
      %vm4503 = vcmp.eq.f32.partialorder %v4502, 8.507059e+37
      %v4504 = vand.u32 %v3813, 2147483648
      %v4505 = vor.u32 1.1754944e-38, %v4504
      %v4506 = vsel %vm4503, %v4505, %v4501
      %v4507 = vmul.f32 1.0, %v4506
      %v4508 = vrcp.pop %v3814
      %v4509 = vmul.f32 %v3814, %v4508
      %v4510 = vsub.f32 1.0, %v4509
      %v4511 = vmul.f32 %v4508, %v4510
      %v4512 = vadd.f32 %v4508, %v4511
      %vm4513 = vweird.f32 %v3814
      %vm4514 = vweird.f32 %v4508
      %vm4515 = vmor %vm4513, %vm4514
      %v4516 = vsel %vm4515, %v4508, %v4512
      %v4517 = vand.u32 2147483647, %v3814
      %vm4518 = vcmp.eq.f32.partialorder %v4517, 8.507059e+37
      %v4519 = vand.u32 %v3814, 2147483648
      %v4520 = vor.u32 1.1754944e-38, %v4519
      %v4521 = vsel %vm4518, %v4520, %v4516
      %v4522 = vmul.f32 1.0, %v4521
      %v4523 = vrcp.pop %v3815
      %v4524 = vmul.f32 %v3815, %v4523
      %v4525 = vsub.f32 1.0, %v4524
      %v4526 = vmul.f32 %v4523, %v4525
      %v4527 = vadd.f32 %v4523, %v4526
      %vm4528 = vweird.f32 %v3815
      %vm4529 = vweird.f32 %v4523
      %vm4530 = vmor %vm4528, %vm4529
      %v4531 = vsel %vm4530, %v4523, %v4527
      %v4532 = vand.u32 2147483647, %v3815
      %vm4533 = vcmp.eq.f32.partialorder %v4532, 8.507059e+37
      %v4534 = vand.u32 %v3815, 2147483648
      %v4535 = vor.u32 1.1754944e-38, %v4534
      %v4536 = vsel %vm4533, %v4535, %v4531
      %v4537 = vmul.f32 1.0, %v4536
      %v4538 = vrcp.pop %v3816
      %v4539 = vmul.f32 %v3816, %v4538
      %v4540 = vsub.f32 1.0, %v4539
      %v4541 = vmul.f32 %v4538, %v4540
      %v4542 = vadd.f32 %v4538, %v4541
      %vm4543 = vweird.f32 %v3816
      %vm4544 = vweird.f32 %v4538
      %vm4545 = vmor %vm4543, %vm4544
      %v4546 = vsel %vm4545, %v4538, %v4542
      %v4547 = vand.u32 2147483647, %v3816
      %vm4548 = vcmp.eq.f32.partialorder %v4547, 8.507059e+37
      %v4549 = vand.u32 %v3816, 2147483648
      %v4550 = vor.u32 1.1754944e-38, %v4549
      %v4551 = vsel %vm4548, %v4550, %v4546
      %v4552 = vmul.f32 1.0, %v4551
      %v4553 = vrcp.pop %v3817
      %v4554 = vmul.f32 %v3817, %v4553
      %v4555 = vsub.f32 1.0, %v4554
      %v4556 = vmul.f32 %v4553, %v4555
      %v4557 = vadd.f32 %v4553, %v4556
      %vm4558 = vweird.f32 %v3817
      %vm4559 = vweird.f32 %v4553
      %vm4560 = vmor %vm4558, %vm4559
      %v4561 = vsel %vm4560, %v4553, %v4557
      %v4562 = vand.u32 2147483647, %v3817
      %vm4563 = vcmp.eq.f32.partialorder %v4562, 8.507059e+37
      %v4564 = vand.u32 %v3817, 2147483648
      %v4565 = vor.u32 1.1754944e-38, %v4564
      %v4566 = vsel %vm4563, %v4565, %v4561
      %v4567 = vmul.f32 1.0, %v4566
      %v4568 = vrcp.pop %v3818
      %v4569 = vmul.f32 %v3818, %v4568
      %v4570 = vsub.f32 1.0, %v4569
      %v4571 = vmul.f32 %v4568, %v4570
      %v4572 = vadd.f32 %v4568, %v4571
      %vm4573 = vweird.f32 %v3818
      %vm4574 = vweird.f32 %v4568
      %vm4575 = vmor %vm4573, %vm4574
      %v4576 = vsel %vm4575, %v4568, %v4572
      %v4577 = vand.u32 2147483647, %v3818
      %vm4578 = vcmp.eq.f32.partialorder %v4577, 8.507059e+37
      %v4579 = vand.u32 %v3818, 2147483648
      %v4580 = vor.u32 1.1754944e-38, %v4579
      %v4581 = vsel %vm4578, %v4580, %v4576
      %v4582 = vmul.f32 1.0, %v4581
      %v4583 = vrcp.pop %v3819
      %v4584 = vmul.f32 %v3819, %v4583
      %v4585 = vsub.f32 1.0, %v4584
      %v4586 = vmul.f32 %v4583, %v4585
      %v4587 = vadd.f32 %v4583, %v4586
      %vm4588 = vweird.f32 %v3819
      %vm4589 = vweird.f32 %v4583
      %vm4590 = vmor %vm4588, %vm4589
      %v4591 = vsel %vm4590, %v4583, %v4587
      %v4592 = vand.u32 2147483647, %v3819
      %vm4593 = vcmp.eq.f32.partialorder %v4592, 8.507059e+37
      %v4594 = vand.u32 %v3819, 2147483648
      %v4595 = vor.u32 1.1754944e-38, %v4594
      %v4596 = vsel %vm4593, %v4595, %v4591
      %v4597 = vmul.f32 1.0, %v4596
      %v4598 = vrcp.pop %v3820
      %v4599 = vmul.f32 %v3820, %v4598
      %v4600 = vsub.f32 1.0, %v4599
      %v4601 = vmul.f32 %v4598, %v4600
      %v4602 = vadd.f32 %v4598, %v4601
      %vm4603 = vweird.f32 %v3820
      %vm4604 = vweird.f32 %v4598
      %vm4605 = vmor %vm4603, %vm4604
      %v4606 = vsel %vm4605, %v4598, %v4602
      %v4607 = vand.u32 2147483647, %v3820
      %vm4608 = vcmp.eq.f32.partialorder %v4607, 8.507059e+37
      %v4609 = vand.u32 %v3820, 2147483648
      %v4610 = vor.u32 1.1754944e-38, %v4609
      %v4611 = vsel %vm4608, %v4610, %v4606
      %v4612 = vmul.f32 1.0, %v4611
      %v4613 = vrcp.pop %v3821
      %v4614 = vmul.f32 %v3821, %v4613
      %v4615 = vsub.f32 1.0, %v4614
      %v4616 = vmul.f32 %v4613, %v4615
      %v4617 = vadd.f32 %v4613, %v4616
      %vm4618 = vweird.f32 %v3821
      %vm4619 = vweird.f32 %v4613
      %vm4620 = vmor %vm4618, %vm4619
      %v4621 = vsel %vm4620, %v4613, %v4617
      %v4622 = vand.u32 2147483647, %v3821
      %vm4623 = vcmp.eq.f32.partialorder %v4622, 8.507059e+37
      %v4624 = vand.u32 %v3821, 2147483648
      %v4625 = vor.u32 1.1754944e-38, %v4624
      %v4626 = vsel %vm4623, %v4625, %v4621
      %v4627 = vmul.f32 1.0, %v4626
      %v4628 = vrcp.pop %v3822
      %v4629 = vmul.f32 %v3822, %v4628
      %v4630 = vsub.f32 1.0, %v4629
      %v4631 = vmul.f32 %v4628, %v4630
      %v4632 = vadd.f32 %v4628, %v4631
      %vm4633 = vweird.f32 %v3822
      %vm4634 = vweird.f32 %v4628
      %vm4635 = vmor %vm4633, %vm4634
      %v4636 = vsel %vm4635, %v4628, %v4632
      %v4637 = vand.u32 2147483647, %v3822
      %vm4638 = vcmp.eq.f32.partialorder %v4637, 8.507059e+37
      %v4639 = vand.u32 %v3822, 2147483648
      %v4640 = vor.u32 1.1754944e-38, %v4639
      %v4641 = vsel %vm4638, %v4640, %v4636
      %v4642 = vmul.f32 1.0, %v4641
      %v4643 = vrcp.pop %v3823
      %v4644 = vmul.f32 %v3823, %v4643
      %v4645 = vsub.f32 1.0, %v4644
      %v4646 = vmul.f32 %v4643, %v4645
      %v4647 = vadd.f32 %v4643, %v4646
      %vm4648 = vweird.f32 %v3823
      %vm4649 = vweird.f32 %v4643
      %vm4650 = vmor %vm4648, %vm4649
      %v4651 = vsel %vm4650, %v4643, %v4647
      %v4652 = vand.u32 2147483647, %v3823
      %vm4653 = vcmp.eq.f32.partialorder %v4652, 8.507059e+37
      %v4654 = vand.u32 %v3823, 2147483648
      %v4655 = vor.u32 1.1754944e-38, %v4654
      %v4656 = vsel %vm4653, %v4655, %v4651
      %v4657 = vmul.f32 1.0, %v4656
      %v4658 = vrcp.pop %v3824
      %v4659 = vmul.f32 %v3824, %v4658
      %v4660 = vsub.f32 1.0, %v4659
      %v4661 = vmul.f32 %v4658, %v4660
      %v4662 = vadd.f32 %v4658, %v4661
      %vm4663 = vweird.f32 %v3824
      %vm4664 = vweird.f32 %v4658
      %vm4665 = vmor %vm4663, %vm4664
      %v4666 = vsel %vm4665, %v4658, %v4662
      %v4667 = vand.u32 2147483647, %v3824
      %vm4668 = vcmp.eq.f32.partialorder %v4667, 8.507059e+37
      %v4669 = vand.u32 %v3824, 2147483648
      %v4670 = vor.u32 1.1754944e-38, %v4669
      %v4671 = vsel %vm4668, %v4670, %v4666
      %v4672 = vmul.f32 1.0, %v4671
      %v4673 = vrcp.pop %v3825
      %v4674 = vmul.f32 %v3825, %v4673
      %v4675 = vsub.f32 1.0, %v4674
      %v4676 = vmul.f32 %v4673, %v4675
      %v4677 = vadd.f32 %v4673, %v4676
      %vm4678 = vweird.f32 %v3825
      %vm4679 = vweird.f32 %v4673
      %vm4680 = vmor %vm4678, %vm4679
      %v4681 = vsel %vm4680, %v4673, %v4677
      %v4682 = vand.u32 2147483647, %v3825
      %vm4683 = vcmp.eq.f32.partialorder %v4682, 8.507059e+37
      %v4684 = vand.u32 %v3825, 2147483648
      %v4685 = vor.u32 1.1754944e-38, %v4684
      %v4686 = vsel %vm4683, %v4685, %v4681
      %v4687 = vmul.f32 1.0, %v4686
      %v4688 = vrcp.pop %v3826
      %v4689 = vmul.f32 %v3826, %v4688
      %v4690 = vsub.f32 1.0, %v4689
      %v4691 = vmul.f32 %v4688, %v4690
      %v4692 = vadd.f32 %v4688, %v4691
      %vm4693 = vweird.f32 %v3826
      %vm4694 = vweird.f32 %v4688
      %vm4695 = vmor %vm4693, %vm4694
      %v4696 = vsel %vm4695, %v4688, %v4692
      %v4697 = vand.u32 2147483647, %v3826
      %vm4698 = vcmp.eq.f32.partialorder %v4697, 8.507059e+37
      %v4699 = vand.u32 %v3826, 2147483648
      %v4700 = vor.u32 1.1754944e-38, %v4699
      %v4701 = vsel %vm4698, %v4700, %v4696
      %v4702 = vmul.f32 1.0, %v4701
      %v4703 = vrcp.pop %v3827
      %v4704 = vmul.f32 %v3827, %v4703
      %v4705 = vsub.f32 1.0, %v4704
      %v4706 = vmul.f32 %v4703, %v4705
      %v4707 = vadd.f32 %v4703, %v4706
      %vm4708 = vweird.f32 %v3827
      %vm4709 = vweird.f32 %v4703
      %vm4710 = vmor %vm4708, %vm4709
      %v4711 = vsel %vm4710, %v4703, %v4707
      %v4712 = vand.u32 2147483647, %v3827
      %vm4713 = vcmp.eq.f32.partialorder %v4712, 8.507059e+37
      %v4714 = vand.u32 %v3827, 2147483648
      %v4715 = vor.u32 1.1754944e-38, %v4714
      %v4716 = vsel %vm4713, %v4715, %v4711
      %v4717 = vmul.f32 1.0, %v4716
      %v4718 = vrcp.pop %v3828
      %v4719 = vmul.f32 %v3828, %v4718
      %v4720 = vsub.f32 1.0, %v4719
      %v4721 = vmul.f32 %v4718, %v4720
      %v4722 = vadd.f32 %v4718, %v4721
      %vm4723 = vweird.f32 %v3828
      %vm4724 = vweird.f32 %v4718
      %vm4725 = vmor %vm4723, %vm4724
      %v4726 = vsel %vm4725, %v4718, %v4722
      %v4727 = vand.u32 2147483647, %v3828
      %vm4728 = vcmp.eq.f32.partialorder %v4727, 8.507059e+37
      %v4729 = vand.u32 %v3828, 2147483648
      %v4730 = vor.u32 1.1754944e-38, %v4729
      %v4731 = vsel %vm4728, %v4730, %v4726
      %v4732 = vmul.f32 1.0, %v4731
      %v4733 = vrcp.pop %v3829
      %v4734 = vmul.f32 %v3829, %v4733
      %v4735 = vsub.f32 1.0, %v4734
      %v4736 = vmul.f32 %v4733, %v4735
      %v4737 = vadd.f32 %v4733, %v4736
      %vm4738 = vweird.f32 %v3829
      %vm4739 = vweird.f32 %v4733
      %vm4740 = vmor %vm4738, %vm4739
      %v4741 = vsel %vm4740, %v4733, %v4737
      %v4742 = vand.u32 2147483647, %v3829
      %vm4743 = vcmp.eq.f32.partialorder %v4742, 8.507059e+37
      %v4744 = vand.u32 %v3829, 2147483648
      %v4745 = vor.u32 1.1754944e-38, %v4744
      %v4746 = vsel %vm4743, %v4745, %v4741
      %v4747 = vmul.f32 1.0, %v4746
      %v4748 = vrcp.pop %v3830
      %v4749 = vmul.f32 %v3830, %v4748
      %v4750 = vsub.f32 1.0, %v4749
      %v4751 = vmul.f32 %v4748, %v4750
      %v4752 = vadd.f32 %v4748, %v4751
      %vm4753 = vweird.f32 %v3830
      %vm4754 = vweird.f32 %v4748
      %vm4755 = vmor %vm4753, %vm4754
      %v4756 = vsel %vm4755, %v4748, %v4752
      %v4757 = vand.u32 2147483647, %v3830
      %vm4758 = vcmp.eq.f32.partialorder %v4757, 8.507059e+37
      %v4759 = vand.u32 %v3830, 2147483648
      %v4760 = vor.u32 1.1754944e-38, %v4759
      %v4761 = vsel %vm4758, %v4760, %v4756
      %v4762 = vmul.f32 1.0, %v4761
      %v4763 = vrcp.pop %v3831
      %v4764 = vmul.f32 %v3831, %v4763
      %v4765 = vsub.f32 1.0, %v4764
      %v4766 = vmul.f32 %v4763, %v4765
      %v4767 = vadd.f32 %v4763, %v4766
      %vm4768 = vweird.f32 %v3831
      %vm4769 = vweird.f32 %v4763
      %vm4770 = vmor %vm4768, %vm4769
      %v4771 = vsel %vm4770, %v4763, %v4767
      %v4772 = vand.u32 2147483647, %v3831
      %vm4773 = vcmp.eq.f32.partialorder %v4772, 8.507059e+37
      %v4774 = vand.u32 %v3831, 2147483648
      %v4775 = vor.u32 1.1754944e-38, %v4774
      %v4776 = vsel %vm4773, %v4775, %v4771
      %v4777 = vmul.f32 1.0, %v4776
      %v4778 = vrcp.pop %v3832
      %v4779 = vmul.f32 %v3832, %v4778
      %v4780 = vsub.f32 1.0, %v4779
      %v4781 = vmul.f32 %v4778, %v4780
      %v4782 = vadd.f32 %v4778, %v4781
      %vm4783 = vweird.f32 %v3832
      %vm4784 = vweird.f32 %v4778
      %vm4785 = vmor %vm4783, %vm4784
      %v4786 = vsel %vm4785, %v4778, %v4782
      %v4787 = vand.u32 2147483647, %v3832
      %vm4788 = vcmp.eq.f32.partialorder %v4787, 8.507059e+37
      %v4789 = vand.u32 %v3832, 2147483648
      %v4790 = vor.u32 1.1754944e-38, %v4789
      %v4791 = vsel %vm4788, %v4790, %v4786
      %v4792 = vmul.f32 1.0, %v4791
      %v4793 = vmul.f32 %v3513, %v3847
      %v4794 = vmul.f32 %v3514, %v3862
      %v4795 = vmul.f32 %v3515, %v3877
      %v4796 = vmul.f32 %v3516, %v3892
      %v4797 = vmul.f32 %v3517, %v3907
      %v4798 = vmul.f32 %v3518, %v3922
      %v4799 = vmul.f32 %v3519, %v3937
      %v4800 = vmul.f32 %v3520, %v3952
      %v4801 = vmul.f32 %v3521, %v3967
      %v4802 = vmul.f32 %v3522, %v3982
      %v4803 = vmul.f32 %v3523, %v3997
      %v4804 = vmul.f32 %v3524, %v4012
      %v4805 = vmul.f32 %v3525, %v4027
      %v4806 = vmul.f32 %v3526, %v4042
      %v4807 = vmul.f32 %v3527, %v4057
      %v4808 = vmul.f32 %v3528, %v4072
      %v4809 = vmul.f32 %v3529, %v4087
      %v4810 = vmul.f32 %v3530, %v4102
      %v4811 = vmul.f32 %v3531, %v4117
      %v4812 = vmul.f32 %v3532, %v4132
      %v4813 = vmul.f32 %v3533, %v4147
      %v4814 = vmul.f32 %v3534, %v4162
      %v4815 = vmul.f32 %v3535, %v4177
      %v4816 = vmul.f32 %v3536, %v4192
      %v4817 = vmul.f32 %v3537, %v4207
      %v4818 = vmul.f32 %v3538, %v4222
      %v4819 = vmul.f32 %v3539, %v4237
      %v4820 = vmul.f32 %v3540, %v4252
      %v4821 = vmul.f32 %v3541, %v4267
      %v4822 = vmul.f32 %v3542, %v4282
      %v4823 = vmul.f32 %v3543, %v4297
      %v4824 = vmul.f32 %v3544, %v4312
      %v4825 = vmul.f32 %v3545, %v4327
      %v4826 = vmul.f32 %v3546, %v4342
      %v4827 = vmul.f32 %v3547, %v4357
      %v4828 = vmul.f32 %v3548, %v4372
      %v4829 = vmul.f32 %v3549, %v4387
      %v4830 = vmul.f32 %v3550, %v4402
      %v4831 = vmul.f32 %v3551, %v4417
      %v4832 = vmul.f32 %v3552, %v4432
      %v4833 = vmul.f32 %v3553, %v4447
      %v4834 = vmul.f32 %v3554, %v4462
      %v4835 = vmul.f32 %v3555, %v4477
      %v4836 = vmul.f32 %v3556, %v4492
      %v4837 = vmul.f32 %v3557, %v4507
      %v4838 = vmul.f32 %v3558, %v4522
      %v4839 = vmul.f32 %v3559, %v4537
      %v4840 = vmul.f32 %v3560, %v4552
      %v4841 = vmul.f32 %v3561, %v4567
      %v4842 = vmul.f32 %v3562, %v4582
      %v4843 = vmul.f32 %v3563, %v4597
      %v4844 = vmul.f32 %v3564, %v4612
      %v4845 = vmul.f32 %v3565, %v4627
      %v4846 = vmul.f32 %v3566, %v4642
      %v4847 = vmul.f32 %v3567, %v4657
      %v4848 = vmul.f32 %v3568, %v4672
      %v4849 = vmul.f32 %v3569, %v4687
      %v4850 = vmul.f32 %v3570, %v4702
      %v4851 = vmul.f32 %v3571, %v4717
      %v4852 = vmul.f32 %v3572, %v4732
      %v4853 = vmul.f32 %v3573, %v4747
      %v4854 = vmul.f32 %v3574, %v4762
      %v4855 = vmul.f32 %v3575, %v4777
      %v4856 = vmul.f32 %v3576, %v4792
      %v4857 = vld [vmem:[%s7] sm:$0xff]
      %v4858 = vld [vmem:[%s7 + $0x8] sm:$0xff]
      %v4859 = vld [vmem:[%s7 + $0x10] sm:$0xff]
      %v4860 = vld [vmem:[%s7 + $0x18] sm:$0xff]
      %4925 = vrot.lane.b32.xlu0 %v3513, 32
      %v4926 = vpop.permute.xlu0 %4925
      %4927 = vrot.lane.b32.xlu0 %v3514, 32
      %v4928 = vpop.permute.xlu0 %4927
      %4929 = vrot.lane.b32.xlu0 %v3515, 32
      %v4930 = vpop.permute.xlu0 %4929
      %4931 = vrot.lane.b32.xlu0 %v3516, 32
      %v4932 = vpop.permute.xlu0 %4931
      %4933 = vrot.lane.b32.xlu0 %v3517, 32
      %v4934 = vpop.permute.xlu0 %4933
      %4935 = vrot.lane.b32.xlu0 %v3518, 32
      %v4936 = vpop.permute.xlu0 %4935
      %4937 = vrot.lane.b32.xlu0 %v3519, 32
      %v4938 = vpop.permute.xlu0 %4937
      %4939 = vrot.lane.b32.xlu0 %v3520, 32
      %v4940 = vpop.permute.xlu0 %4939
      %4941 = vrot.lane.b32.xlu0 %v3521, 32
      %v4942 = vpop.permute.xlu0 %4941
      %4943 = vrot.lane.b32.xlu0 %v3522, 32
      %v4944 = vpop.permute.xlu0 %4943
      %4945 = vrot.lane.b32.xlu0 %v3523, 32
      %v4946 = vpop.permute.xlu0 %4945
      %4947 = vrot.lane.b32.xlu0 %v3524, 32
      %v4948 = vpop.permute.xlu0 %4947
      %4949 = vrot.lane.b32.xlu0 %v3525, 32
      %v4950 = vpop.permute.xlu0 %4949
      %4951 = vrot.lane.b32.xlu0 %v3526, 32
      %v4952 = vpop.permute.xlu0 %4951
      %4953 = vrot.lane.b32.xlu0 %v3527, 32
      %v4954 = vpop.permute.xlu0 %4953
      %4955 = vrot.lane.b32.xlu0 %v3528, 32
      %v4956 = vpop.permute.xlu0 %4955
      %4957 = vrot.lane.b32.xlu0 %v3529, 32
      %v4958 = vpop.permute.xlu0 %4957
      %4959 = vrot.lane.b32.xlu0 %v3530, 32
      %v4960 = vpop.permute.xlu0 %4959
      %4961 = vrot.lane.b32.xlu0 %v3531, 32
      %v4962 = vpop.permute.xlu0 %4961
      %4963 = vrot.lane.b32.xlu0 %v3532, 32
      %v4964 = vpop.permute.xlu0 %4963
      %4965 = vrot.lane.b32.xlu0 %v3533, 32
      %v4966 = vpop.permute.xlu0 %4965
      %4967 = vrot.lane.b32.xlu0 %v3534, 32
      %v4968 = vpop.permute.xlu0 %4967
      %4969 = vrot.lane.b32.xlu0 %v3535, 32
      %v4970 = vpop.permute.xlu0 %4969
      %4971 = vrot.lane.b32.xlu0 %v3536, 32
      %v4972 = vpop.permute.xlu0 %4971
      %4973 = vrot.lane.b32.xlu0 %v3537, 32
      %v4974 = vpop.permute.xlu0 %4973
      %4975 = vrot.lane.b32.xlu0 %v3538, 32
      %v4976 = vpop.permute.xlu0 %4975
      %4977 = vrot.lane.b32.xlu0 %v3539, 32
      %v4978 = vpop.permute.xlu0 %4977
      %4979 = vrot.lane.b32.xlu0 %v3540, 32
      %v4980 = vpop.permute.xlu0 %4979
      %4981 = vrot.lane.b32.xlu0 %v3541, 32
      %v4982 = vpop.permute.xlu0 %4981
      %4983 = vrot.lane.b32.xlu0 %v3542, 32
      %v4984 = vpop.permute.xlu0 %4983
      %4985 = vrot.lane.b32.xlu0 %v3543, 32
      %v4986 = vpop.permute.xlu0 %4985
      %4987 = vrot.lane.b32.xlu0 %v3544, 32
      %v4988 = vpop.permute.xlu0 %4987
      %4989 = vrot.lane.b32.xlu0 %v3545, 32
      %v4990 = vpop.permute.xlu0 %4989
      %4991 = vrot.lane.b32.xlu0 %v3546, 32
      %v4992 = vpop.permute.xlu0 %4991
      %4993 = vrot.lane.b32.xlu0 %v3547, 32
      %v4994 = vpop.permute.xlu0 %4993
      %4995 = vrot.lane.b32.xlu0 %v3548, 32
      %v4996 = vpop.permute.xlu0 %4995
      %4997 = vrot.lane.b32.xlu0 %v3549, 32
      %v4998 = vpop.permute.xlu0 %4997
      %4999 = vrot.lane.b32.xlu0 %v3550, 32
      %v5000 = vpop.permute.xlu0 %4999
      %5001 = vrot.lane.b32.xlu0 %v3551, 32
      %v5002 = vpop.permute.xlu0 %5001
      %5003 = vrot.lane.b32.xlu0 %v3552, 32
      %v5004 = vpop.permute.xlu0 %5003
      %5005 = vrot.lane.b32.xlu0 %v3553, 32
      %v5006 = vpop.permute.xlu0 %5005
      %5007 = vrot.lane.b32.xlu0 %v3554, 32
      %v5008 = vpop.permute.xlu0 %5007
      %5009 = vrot.lane.b32.xlu0 %v3555, 32
      %v5010 = vpop.permute.xlu0 %5009
      %5011 = vrot.lane.b32.xlu0 %v3556, 32
      %v5012 = vpop.permute.xlu0 %5011
      %5013 = vrot.lane.b32.xlu0 %v3557, 32
      %v5014 = vpop.permute.xlu0 %5013
      %5015 = vrot.lane.b32.xlu0 %v3558, 32
      %v5016 = vpop.permute.xlu0 %5015
      %5017 = vrot.lane.b32.xlu0 %v3559, 32
      %v5018 = vpop.permute.xlu0 %5017
      %5019 = vrot.lane.b32.xlu0 %v3560, 32
      %v5020 = vpop.permute.xlu0 %5019
      %5021 = vrot.lane.b32.xlu0 %v3561, 32
      %v5022 = vpop.permute.xlu0 %5021
      %5023 = vrot.lane.b32.xlu0 %v3562, 32
      %v5024 = vpop.permute.xlu0 %5023
      %5025 = vrot.lane.b32.xlu0 %v3563, 32
      %v5026 = vpop.permute.xlu0 %5025
      %5027 = vrot.lane.b32.xlu0 %v3564, 32
      %v5028 = vpop.permute.xlu0 %5027
      %5029 = vrot.lane.b32.xlu0 %v3565, 32
      %v5030 = vpop.permute.xlu0 %5029
      %5031 = vrot.lane.b32.xlu0 %v3566, 32
      %v5032 = vpop.permute.xlu0 %5031
      %5033 = vrot.lane.b32.xlu0 %v3567, 32
      %v5034 = vpop.permute.xlu0 %5033
      %5035 = vrot.lane.b32.xlu0 %v3568, 32
      %v5036 = vpop.permute.xlu0 %5035
      %5037 = vrot.lane.b32.xlu0 %v3569, 32
      %v5038 = vpop.permute.xlu0 %5037
      %5039 = vrot.lane.b32.xlu0 %v3570, 32
      %v5040 = vpop.permute.xlu0 %5039
      %5041 = vrot.lane.b32.xlu0 %v3571, 32
      %v5042 = vpop.permute.xlu0 %5041
      %5043 = vrot.lane.b32.xlu0 %v3572, 32
      %v5044 = vpop.permute.xlu0 %5043
      %5045 = vrot.lane.b32.xlu0 %v3573, 32
      %v5046 = vpop.permute.xlu0 %5045
      %5047 = vrot.lane.b32.xlu0 %v3574, 32
      %v5048 = vpop.permute.xlu0 %5047
      %5049 = vrot.lane.b32.xlu0 %v3575, 32
      %v5050 = vpop.permute.xlu0 %5049
      %5051 = vrot.lane.b32.xlu0 %v3576, 32
      %v5052 = vpop.permute.xlu0 %5051
      %5117 = vrot.lane.b32.xlu0 %v3513, 64
      %v5118 = vpop.permute.xlu0 %5117
      %5119 = vrot.lane.b32.xlu0 %v3514, 64
      %v5120 = vpop.permute.xlu0 %5119
      %5121 = vrot.lane.b32.xlu0 %v3515, 64
      %v5122 = vpop.permute.xlu0 %5121
      %5123 = vrot.lane.b32.xlu0 %v3516, 64
      %v5124 = vpop.permute.xlu0 %5123
      %5125 = vrot.lane.b32.xlu0 %v3517, 64
      %v5126 = vpop.permute.xlu0 %5125
      %5127 = vrot.lane.b32.xlu0 %v3518, 64
      %v5128 = vpop.permute.xlu0 %5127
      %5129 = vrot.lane.b32.xlu0 %v3519, 64
      %v5130 = vpop.permute.xlu0 %5129
      %5131 = vrot.lane.b32.xlu0 %v3520, 64
      %v5132 = vpop.permute.xlu0 %5131
      %5133 = vrot.lane.b32.xlu0 %v3521, 64
      %v5134 = vpop.permute.xlu0 %5133
      %5135 = vrot.lane.b32.xlu0 %v3522, 64
      %v5136 = vpop.permute.xlu0 %5135
      %5137 = vrot.lane.b32.xlu0 %v3523, 64
      %v5138 = vpop.permute.xlu0 %5137
      %5139 = vrot.lane.b32.xlu0 %v3524, 64
      %v5140 = vpop.permute.xlu0 %5139
      %5141 = vrot.lane.b32.xlu0 %v3525, 64
      %v5142 = vpop.permute.xlu0 %5141
      %5143 = vrot.lane.b32.xlu0 %v3526, 64
      %v5144 = vpop.permute.xlu0 %5143
      %5145 = vrot.lane.b32.xlu0 %v3527, 64
      %v5146 = vpop.permute.xlu0 %5145
      %5147 = vrot.lane.b32.xlu0 %v3528, 64
      %v5148 = vpop.permute.xlu0 %5147
      %5149 = vrot.lane.b32.xlu0 %v3529, 64
      %v5150 = vpop.permute.xlu0 %5149
      %5151 = vrot.lane.b32.xlu0 %v3530, 64
      %v5152 = vpop.permute.xlu0 %5151
      %5153 = vrot.lane.b32.xlu0 %v3531, 64
      %v5154 = vpop.permute.xlu0 %5153
      %5155 = vrot.lane.b32.xlu0 %v3532, 64
      %v5156 = vpop.permute.xlu0 %5155
      %5157 = vrot.lane.b32.xlu0 %v3533, 64
      %v5158 = vpop.permute.xlu0 %5157
      %5159 = vrot.lane.b32.xlu0 %v3534, 64
      %v5160 = vpop.permute.xlu0 %5159
      %5161 = vrot.lane.b32.xlu0 %v3535, 64
      %v5162 = vpop.permute.xlu0 %5161
      %5163 = vrot.lane.b32.xlu0 %v3536, 64
      %v5164 = vpop.permute.xlu0 %5163
      %5165 = vrot.lane.b32.xlu0 %v3537, 64
      %v5166 = vpop.permute.xlu0 %5165
      %5167 = vrot.lane.b32.xlu0 %v3538, 64
      %v5168 = vpop.permute.xlu0 %5167
      %5169 = vrot.lane.b32.xlu0 %v3539, 64
      %v5170 = vpop.permute.xlu0 %5169
      %5171 = vrot.lane.b32.xlu0 %v3540, 64
      %v5172 = vpop.permute.xlu0 %5171
      %5173 = vrot.lane.b32.xlu0 %v3541, 64
      %v5174 = vpop.permute.xlu0 %5173
      %5175 = vrot.lane.b32.xlu0 %v3542, 64
      %v5176 = vpop.permute.xlu0 %5175
      %5177 = vrot.lane.b32.xlu0 %v3543, 64
      %v5178 = vpop.permute.xlu0 %5177
      %5179 = vrot.lane.b32.xlu0 %v3544, 64
      %v5180 = vpop.permute.xlu0 %5179
      %5181 = vrot.lane.b32.xlu0 %v3545, 64
      %v5182 = vpop.permute.xlu0 %5181
      %5183 = vrot.lane.b32.xlu0 %v3546, 64
      %v5184 = vpop.permute.xlu0 %5183
      %5185 = vrot.lane.b32.xlu0 %v3547, 64
      %v5186 = vpop.permute.xlu0 %5185
      %5187 = vrot.lane.b32.xlu0 %v3548, 64
      %v5188 = vpop.permute.xlu0 %5187
      %5189 = vrot.lane.b32.xlu0 %v3549, 64
      %v5190 = vpop.permute.xlu0 %5189
      %5191 = vrot.lane.b32.xlu0 %v3550, 64
      %v5192 = vpop.permute.xlu0 %5191
      %5193 = vrot.lane.b32.xlu0 %v3551, 64
      %v5194 = vpop.permute.xlu0 %5193
      %5195 = vrot.lane.b32.xlu0 %v3552, 64
      %v5196 = vpop.permute.xlu0 %5195
      %5197 = vrot.lane.b32.xlu0 %v3553, 64
      %v5198 = vpop.permute.xlu0 %5197
      %5199 = vrot.lane.b32.xlu0 %v3554, 64
      %v5200 = vpop.permute.xlu0 %5199
      %5201 = vrot.lane.b32.xlu0 %v3555, 64
      %v5202 = vpop.permute.xlu0 %5201
      %5203 = vrot.lane.b32.xlu0 %v3556, 64
      %v5204 = vpop.permute.xlu0 %5203
      %5205 = vrot.lane.b32.xlu0 %v3557, 64
      %v5206 = vpop.permute.xlu0 %5205
      %5207 = vrot.lane.b32.xlu0 %v3558, 64
      %v5208 = vpop.permute.xlu0 %5207
      %5209 = vrot.lane.b32.xlu0 %v3559, 64
      %v5210 = vpop.permute.xlu0 %5209
      %5211 = vrot.lane.b32.xlu0 %v3560, 64
      %v5212 = vpop.permute.xlu0 %5211
      %5213 = vrot.lane.b32.xlu0 %v3561, 64
      %v5214 = vpop.permute.xlu0 %5213
      %5215 = vrot.lane.b32.xlu0 %v3562, 64
      %v5216 = vpop.permute.xlu0 %5215
      %5217 = vrot.lane.b32.xlu0 %v3563, 64
      %v5218 = vpop.permute.xlu0 %5217
      %5219 = vrot.lane.b32.xlu0 %v3564, 64
      %v5220 = vpop.permute.xlu0 %5219
      %5221 = vrot.lane.b32.xlu0 %v3565, 64
      %v5222 = vpop.permute.xlu0 %5221
      %5223 = vrot.lane.b32.xlu0 %v3566, 64
      %v5224 = vpop.permute.xlu0 %5223
      %5225 = vrot.lane.b32.xlu0 %v3567, 64
      %v5226 = vpop.permute.xlu0 %5225
      %5227 = vrot.lane.b32.xlu0 %v3568, 64
      %v5228 = vpop.permute.xlu0 %5227
      %5229 = vrot.lane.b32.xlu0 %v3569, 64
      %v5230 = vpop.permute.xlu0 %5229
      %5231 = vrot.lane.b32.xlu0 %v3570, 64
      %v5232 = vpop.permute.xlu0 %5231
      %5233 = vrot.lane.b32.xlu0 %v3571, 64
      %v5234 = vpop.permute.xlu0 %5233
      %5235 = vrot.lane.b32.xlu0 %v3572, 64
      %v5236 = vpop.permute.xlu0 %5235
      %5237 = vrot.lane.b32.xlu0 %v3573, 64
      %v5238 = vpop.permute.xlu0 %5237
      %5239 = vrot.lane.b32.xlu0 %v3574, 64
      %v5240 = vpop.permute.xlu0 %5239
      %5241 = vrot.lane.b32.xlu0 %v3575, 64
      %v5242 = vpop.permute.xlu0 %5241
      %5243 = vrot.lane.b32.xlu0 %v3576, 64
      %v5244 = vpop.permute.xlu0 %5243
      %5309 = vrot.lane.b32.xlu0 %v3513, 96
      %v5310 = vpop.permute.xlu0 %5309
      %5311 = vrot.lane.b32.xlu0 %v3514, 96
      %v5312 = vpop.permute.xlu0 %5311
      %5313 = vrot.lane.b32.xlu0 %v3515, 96
      %v5314 = vpop.permute.xlu0 %5313
      %5315 = vrot.lane.b32.xlu0 %v3516, 96
      %v5316 = vpop.permute.xlu0 %5315
      %5317 = vrot.lane.b32.xlu0 %v3517, 96
      %v5318 = vpop.permute.xlu0 %5317
      %5319 = vrot.lane.b32.xlu0 %v3518, 96
      %v5320 = vpop.permute.xlu0 %5319
      %5321 = vrot.lane.b32.xlu0 %v3519, 96
      %v5322 = vpop.permute.xlu0 %5321
      %5323 = vrot.lane.b32.xlu0 %v3520, 96
      %v5324 = vpop.permute.xlu0 %5323
      %5325 = vrot.lane.b32.xlu0 %v3521, 96
      %v5326 = vpop.permute.xlu0 %5325
      %5327 = vrot.lane.b32.xlu0 %v3522, 96
      %v5328 = vpop.permute.xlu0 %5327
      %5329 = vrot.lane.b32.xlu0 %v3523, 96
      %v5330 = vpop.permute.xlu0 %5329
      %5331 = vrot.lane.b32.xlu0 %v3524, 96
      %v5332 = vpop.permute.xlu0 %5331
      %5333 = vrot.lane.b32.xlu0 %v3525, 96
      %v5334 = vpop.permute.xlu0 %5333
      %5335 = vrot.lane.b32.xlu0 %v3526, 96
      %v5336 = vpop.permute.xlu0 %5335
      %5337 = vrot.lane.b32.xlu0 %v3527, 96
      %v5338 = vpop.permute.xlu0 %5337
      %5339 = vrot.lane.b32.xlu0 %v3528, 96
      %v5340 = vpop.permute.xlu0 %5339
      %5341 = vrot.lane.b32.xlu0 %v3529, 96
      %v5342 = vpop.permute.xlu0 %5341
      %5343 = vrot.lane.b32.xlu0 %v3530, 96
      %v5344 = vpop.permute.xlu0 %5343
      %5345 = vrot.lane.b32.xlu0 %v3531, 96
      %v5346 = vpop.permute.xlu0 %5345
      %5347 = vrot.lane.b32.xlu0 %v3532, 96
      %v5348 = vpop.permute.xlu0 %5347
      %5349 = vrot.lane.b32.xlu0 %v3533, 96
      %v5350 = vpop.permute.xlu0 %5349
      %5351 = vrot.lane.b32.xlu0 %v3534, 96
      %v5352 = vpop.permute.xlu0 %5351
      %5353 = vrot.lane.b32.xlu0 %v3535, 96
      %v5354 = vpop.permute.xlu0 %5353
      %5355 = vrot.lane.b32.xlu0 %v3536, 96
      %v5356 = vpop.permute.xlu0 %5355
      %5357 = vrot.lane.b32.xlu0 %v3537, 96
      %v5358 = vpop.permute.xlu0 %5357
      %5359 = vrot.lane.b32.xlu0 %v3538, 96
      %v5360 = vpop.permute.xlu0 %5359
      %5361 = vrot.lane.b32.xlu0 %v3539, 96
      %v5362 = vpop.permute.xlu0 %5361
      %5363 = vrot.lane.b32.xlu0 %v3540, 96
      %v5364 = vpop.permute.xlu0 %5363
      %5365 = vrot.lane.b32.xlu0 %v3541, 96
      %v5366 = vpop.permute.xlu0 %5365
      %5367 = vrot.lane.b32.xlu0 %v3542, 96
      %v5368 = vpop.permute.xlu0 %5367
      %5369 = vrot.lane.b32.xlu0 %v3543, 96
      %v5370 = vpop.permute.xlu0 %5369
      %5371 = vrot.lane.b32.xlu0 %v3544, 96
      %v5372 = vpop.permute.xlu0 %5371
      %5373 = vrot.lane.b32.xlu0 %v3545, 96
      %v5374 = vpop.permute.xlu0 %5373
      %5375 = vrot.lane.b32.xlu0 %v3546, 96
      %v5376 = vpop.permute.xlu0 %5375
      %5377 = vrot.lane.b32.xlu0 %v3547, 96
      %v5378 = vpop.permute.xlu0 %5377
      %5379 = vrot.lane.b32.xlu0 %v3548, 96
      %v5380 = vpop.permute.xlu0 %5379
      %5381 = vrot.lane.b32.xlu0 %v3549, 96
      %v5382 = vpop.permute.xlu0 %5381
      %5383 = vrot.lane.b32.xlu0 %v3550, 96
      %v5384 = vpop.permute.xlu0 %5383
      %5385 = vrot.lane.b32.xlu0 %v3551, 96
      %v5386 = vpop.permute.xlu0 %5385
      %5387 = vrot.lane.b32.xlu0 %v3552, 96
      %v5388 = vpop.permute.xlu0 %5387
      %5389 = vrot.lane.b32.xlu0 %v3553, 96
      %v5390 = vpop.permute.xlu0 %5389
      %5391 = vrot.lane.b32.xlu0 %v3554, 96
      %v5392 = vpop.permute.xlu0 %5391
      %5393 = vrot.lane.b32.xlu0 %v3555, 96
      %v5394 = vpop.permute.xlu0 %5393
      %5395 = vrot.lane.b32.xlu0 %v3556, 96
      %v5396 = vpop.permute.xlu0 %5395
      %5397 = vrot.lane.b32.xlu0 %v3557, 96
      %v5398 = vpop.permute.xlu0 %5397
      %5399 = vrot.lane.b32.xlu0 %v3558, 96
      %v5400 = vpop.permute.xlu0 %5399
      %5401 = vrot.lane.b32.xlu0 %v3559, 96
      %v5402 = vpop.permute.xlu0 %5401
      %5403 = vrot.lane.b32.xlu0 %v3560, 96
      %v5404 = vpop.permute.xlu0 %5403
      %5405 = vrot.lane.b32.xlu0 %v3561, 96
      %v5406 = vpop.permute.xlu0 %5405
      %5407 = vrot.lane.b32.xlu0 %v3562, 96
      %v5408 = vpop.permute.xlu0 %5407
      %5409 = vrot.lane.b32.xlu0 %v3563, 96
      %v5410 = vpop.permute.xlu0 %5409
      %5411 = vrot.lane.b32.xlu0 %v3564, 96
      %v5412 = vpop.permute.xlu0 %5411
      %5413 = vrot.lane.b32.xlu0 %v3565, 96
      %v5414 = vpop.permute.xlu0 %5413
      %5415 = vrot.lane.b32.xlu0 %v3566, 96
      %v5416 = vpop.permute.xlu0 %5415
      %5417 = vrot.lane.b32.xlu0 %v3567, 96
      %v5418 = vpop.permute.xlu0 %5417
      %5419 = vrot.lane.b32.xlu0 %v3568, 96
      %v5420 = vpop.permute.xlu0 %5419
      %5421 = vrot.lane.b32.xlu0 %v3569, 96
      %v5422 = vpop.permute.xlu0 %5421
      %5423 = vrot.lane.b32.xlu0 %v3570, 96
      %v5424 = vpop.permute.xlu0 %5423
      %5425 = vrot.lane.b32.xlu0 %v3571, 96
      %v5426 = vpop.permute.xlu0 %5425
      %5427 = vrot.lane.b32.xlu0 %v3572, 96
      %v5428 = vpop.permute.xlu0 %5427
      %5429 = vrot.lane.b32.xlu0 %v3573, 96
      %v5430 = vpop.permute.xlu0 %5429
      %5431 = vrot.lane.b32.xlu0 %v3574, 96
      %v5432 = vpop.permute.xlu0 %5431
      %5433 = vrot.lane.b32.xlu0 %v3575, 96
      %v5434 = vpop.permute.xlu0 %5433
      %5435 = vrot.lane.b32.xlu0 %v3576, 96
      %v5436 = vpop.permute.xlu0 %5435
      %v5501 = vsel %vm3107, %v3513, %v4926
      %v5502 = vsel %vm3107, %v3514, %v4928
      %v5503 = vsel %vm3107, %v3515, %v4930
      %v5504 = vsel %vm3107, %v3516, %v4932
      %v5505 = vsel %vm3107, %v3517, %v4934
      %v5506 = vsel %vm3107, %v3518, %v4936
      %v5507 = vsel %vm3107, %v3519, %v4938
      %v5508 = vsel %vm3107, %v3520, %v4940
      %v5509 = vsel %vm3107, %v3521, %v4942
      %v5510 = vsel %vm3107, %v3522, %v4944
      %v5511 = vsel %vm3107, %v3523, %v4946
      %v5512 = vsel %vm3107, %v3524, %v4948
      %v5513 = vsel %vm3107, %v3525, %v4950
      %v5514 = vsel %vm3107, %v3526, %v4952
      %v5515 = vsel %vm3107, %v3527, %v4954
      %v5516 = vsel %vm3107, %v3528, %v4956
      %v5517 = vsel %vm3107, %v3529, %v4958
      %v5518 = vsel %vm3107, %v3530, %v4960
      %v5519 = vsel %vm3107, %v3531, %v4962
      %v5520 = vsel %vm3107, %v3532, %v4964
      %v5521 = vsel %vm3107, %v3533, %v4966
      %v5522 = vsel %vm3107, %v3534, %v4968
      %v5523 = vsel %vm3107, %v3535, %v4970
      %v5524 = vsel %vm3107, %v3536, %v4972
      %v5525 = vsel %vm3107, %v3537, %v4974
      %v5526 = vsel %vm3107, %v3538, %v4976
      %v5527 = vsel %vm3107, %v3539, %v4978
      %v5528 = vsel %vm3107, %v3540, %v4980
      %v5529 = vsel %vm3107, %v3541, %v4982
      %v5530 = vsel %vm3107, %v3542, %v4984
      %v5531 = vsel %vm3107, %v3543, %v4986
      %v5532 = vsel %vm3107, %v3544, %v4988
      %v5533 = vsel %vm3107, %v3545, %v4990
      %v5534 = vsel %vm3107, %v3546, %v4992
      %v5535 = vsel %vm3107, %v3547, %v4994
      %v5536 = vsel %vm3107, %v3548, %v4996
      %v5537 = vsel %vm3107, %v3549, %v4998
      %v5538 = vsel %vm3107, %v3550, %v5000
      %v5539 = vsel %vm3107, %v3551, %v5002
      %v5540 = vsel %vm3107, %v3552, %v5004
      %v5541 = vsel %vm3107, %v3553, %v5006
      %v5542 = vsel %vm3107, %v3554, %v5008
      %v5543 = vsel %vm3107, %v3555, %v5010
      %v5544 = vsel %vm3107, %v3556, %v5012
      %v5545 = vsel %vm3107, %v3557, %v5014
      %v5546 = vsel %vm3107, %v3558, %v5016
      %v5547 = vsel %vm3107, %v3559, %v5018
      %v5548 = vsel %vm3107, %v3560, %v5020
      %v5549 = vsel %vm3107, %v3561, %v5022
      %v5550 = vsel %vm3107, %v3562, %v5024
      %v5551 = vsel %vm3107, %v3563, %v5026
      %v5552 = vsel %vm3107, %v3564, %v5028
      %v5553 = vsel %vm3107, %v3565, %v5030
      %v5554 = vsel %vm3107, %v3566, %v5032
      %v5555 = vsel %vm3107, %v3567, %v5034
      %v5556 = vsel %vm3107, %v3568, %v5036
      %v5557 = vsel %vm3107, %v3569, %v5038
      %v5558 = vsel %vm3107, %v3570, %v5040
      %v5559 = vsel %vm3107, %v3571, %v5042
      %v5560 = vsel %vm3107, %v3572, %v5044
      %v5561 = vsel %vm3107, %v3573, %v5046
      %v5562 = vsel %vm3107, %v3574, %v5048
      %v5563 = vsel %vm3107, %v3575, %v5050
      %v5564 = vsel %vm3107, %v3576, %v5052
      %vm5565 = vcmask 523264
      %v5566 = vsel %vm5565, %v5501, %v5118
      %v5567 = vsel %vm5565, %v5502, %v5120
      %v5568 = vsel %vm5565, %v5503, %v5122
      %v5569 = vsel %vm5565, %v5504, %v5124
      %v5570 = vsel %vm5565, %v5505, %v5126
      %v5571 = vsel %vm5565, %v5506, %v5128
      %v5572 = vsel %vm5565, %v5507, %v5130
      %v5573 = vsel %vm5565, %v5508, %v5132
      %v5574 = vsel %vm5565, %v5509, %v5134
      %v5575 = vsel %vm5565, %v5510, %v5136
      %v5576 = vsel %vm5565, %v5511, %v5138
      %v5577 = vsel %vm5565, %v5512, %v5140
      %v5578 = vsel %vm5565, %v5513, %v5142
      %v5579 = vsel %vm5565, %v5514, %v5144
      %v5580 = vsel %vm5565, %v5515, %v5146
      %v5581 = vsel %vm5565, %v5516, %v5148
      %v5582 = vsel %vm5565, %v5517, %v5150
      %v5583 = vsel %vm5565, %v5518, %v5152
      %v5584 = vsel %vm5565, %v5519, %v5154
      %v5585 = vsel %vm5565, %v5520, %v5156
      %v5586 = vsel %vm5565, %v5521, %v5158
      %v5587 = vsel %vm5565, %v5522, %v5160
      %v5588 = vsel %vm5565, %v5523, %v5162
      %v5589 = vsel %vm5565, %v5524, %v5164
      %v5590 = vsel %vm5565, %v5525, %v5166
      %v5591 = vsel %vm5565, %v5526, %v5168
      %v5592 = vsel %vm5565, %v5527, %v5170
      %v5593 = vsel %vm5565, %v5528, %v5172
      %v5594 = vsel %vm5565, %v5529, %v5174
      %v5595 = vsel %vm5565, %v5530, %v5176
      %v5596 = vsel %vm5565, %v5531, %v5178
      %v5597 = vsel %vm5565, %v5532, %v5180
      %v5598 = vsel %vm5565, %v5533, %v5182
      %v5599 = vsel %vm5565, %v5534, %v5184
      %v5600 = vsel %vm5565, %v5535, %v5186
      %v5601 = vsel %vm5565, %v5536, %v5188
      %v5602 = vsel %vm5565, %v5537, %v5190
      %v5603 = vsel %vm5565, %v5538, %v5192
      %v5604 = vsel %vm5565, %v5539, %v5194
      %v5605 = vsel %vm5565, %v5540, %v5196
      %v5606 = vsel %vm5565, %v5541, %v5198
      %v5607 = vsel %vm5565, %v5542, %v5200
      %v5608 = vsel %vm5565, %v5543, %v5202
      %v5609 = vsel %vm5565, %v5544, %v5204
      %v5610 = vsel %vm5565, %v5545, %v5206
      %v5611 = vsel %vm5565, %v5546, %v5208
      %v5612 = vsel %vm5565, %v5547, %v5210
      %v5613 = vsel %vm5565, %v5548, %v5212
      %v5614 = vsel %vm5565, %v5549, %v5214
      %v5615 = vsel %vm5565, %v5550, %v5216
      %v5616 = vsel %vm5565, %v5551, %v5218
      %v5617 = vsel %vm5565, %v5552, %v5220
      %v5618 = vsel %vm5565, %v5553, %v5222
      %v5619 = vsel %vm5565, %v5554, %v5224
      %v5620 = vsel %vm5565, %v5555, %v5226
      %v5621 = vsel %vm5565, %v5556, %v5228
      %v5622 = vsel %vm5565, %v5557, %v5230
      %v5623 = vsel %vm5565, %v5558, %v5232
      %v5624 = vsel %vm5565, %v5559, %v5234
      %v5625 = vsel %vm5565, %v5560, %v5236
      %v5626 = vsel %vm5565, %v5561, %v5238
      %v5627 = vsel %vm5565, %v5562, %v5240
      %v5628 = vsel %vm5565, %v5563, %v5242
      %v5629 = vsel %vm5565, %v5564, %v5244
      %vm5630 = vcmask 785408
      %v5631 = vsel %vm5630, %v5566, %v5310
      %v5632 = vsel %vm5630, %v5567, %v5312
      %v5633 = vsel %vm5630, %v5568, %v5314
      %v5634 = vsel %vm5630, %v5569, %v5316
      %v5635 = vsel %vm5630, %v5570, %v5318
      %v5636 = vsel %vm5630, %v5571, %v5320
      %v5637 = vsel %vm5630, %v5572, %v5322
      %v5638 = vsel %vm5630, %v5573, %v5324
      %v5639 = vsel %vm5630, %v5574, %v5326
      %v5640 = vsel %vm5630, %v5575, %v5328
      %v5641 = vsel %vm5630, %v5576, %v5330
      %v5642 = vsel %vm5630, %v5577, %v5332
      %v5643 = vsel %vm5630, %v5578, %v5334
      %v5644 = vsel %vm5630, %v5579, %v5336
      %v5645 = vsel %vm5630, %v5580, %v5338
      %v5646 = vsel %vm5630, %v5581, %v5340
      %v5647 = vsel %vm5630, %v5582, %v5342
      %v5648 = vsel %vm5630, %v5583, %v5344
      %v5649 = vsel %vm5630, %v5584, %v5346
      %v5650 = vsel %vm5630, %v5585, %v5348
      %v5651 = vsel %vm5630, %v5586, %v5350
      %v5652 = vsel %vm5630, %v5587, %v5352
      %v5653 = vsel %vm5630, %v5588, %v5354
      %v5654 = vsel %vm5630, %v5589, %v5356
      %v5655 = vsel %vm5630, %v5590, %v5358
      %v5656 = vsel %vm5630, %v5591, %v5360
      %v5657 = vsel %vm5630, %v5592, %v5362
      %v5658 = vsel %vm5630, %v5593, %v5364
      %v5659 = vsel %vm5630, %v5594, %v5366
      %v5660 = vsel %vm5630, %v5595, %v5368
      %v5661 = vsel %vm5630, %v5596, %v5370
      %v5662 = vsel %vm5630, %v5597, %v5372
      %v5663 = vsel %vm5630, %v5598, %v5374
      %v5664 = vsel %vm5630, %v5599, %v5376
      %v5665 = vsel %vm5630, %v5600, %v5378
      %v5666 = vsel %vm5630, %v5601, %v5380
      %v5667 = vsel %vm5630, %v5602, %v5382
      %v5668 = vsel %vm5630, %v5603, %v5384
      %v5669 = vsel %vm5630, %v5604, %v5386
      %v5670 = vsel %vm5630, %v5605, %v5388
      %v5671 = vsel %vm5630, %v5606, %v5390
      %v5672 = vsel %vm5630, %v5607, %v5392
      %v5673 = vsel %vm5630, %v5608, %v5394
      %v5674 = vsel %vm5630, %v5609, %v5396
      %v5675 = vsel %vm5630, %v5610, %v5398
      %v5676 = vsel %vm5630, %v5611, %v5400
      %v5677 = vsel %vm5630, %v5612, %v5402
      %v5678 = vsel %vm5630, %v5613, %v5404
      %v5679 = vsel %vm5630, %v5614, %v5406
      %v5680 = vsel %vm5630, %v5615, %v5408
      %v5681 = vsel %vm5630, %v5616, %v5410
      %v5682 = vsel %vm5630, %v5617, %v5412
      %v5683 = vsel %vm5630, %v5618, %v5414
      %v5684 = vsel %vm5630, %v5619, %v5416
      %v5685 = vsel %vm5630, %v5620, %v5418
      %v5686 = vsel %vm5630, %v5621, %v5420
      %v5687 = vsel %vm5630, %v5622, %v5422
      %v5688 = vsel %vm5630, %v5623, %v5424
      %v5689 = vsel %vm5630, %v5624, %v5426
      %v5690 = vsel %vm5630, %v5625, %v5428
      %v5691 = vsel %vm5630, %v5626, %v5430
      %v5692 = vsel %vm5630, %v5627, %v5432
      %v5693 = vsel %vm5630, %v5628, %v5434
      %v5694 = vsel %vm5630, %v5629, %v5436
      %v5695 = vmul.f32 %v5631, 2.0
      %v5696 = vmul.f32 %v5632, 2.0
      %v5697 = vmul.f32 %v5633, 2.0
      %v5698 = vmul.f32 %v5634, 2.0
      %v5699 = vmul.f32 %v5635, 2.0
      %v5700 = vmul.f32 %v5636, 2.0
      %v5701 = vmul.f32 %v5637, 2.0
      %v5702 = vmul.f32 %v5638, 2.0
      %v5703 = vmul.f32 %v5639, 2.0
      %v5704 = vmul.f32 %v5640, 2.0
      %v5705 = vmul.f32 %v5641, 2.0
      %v5706 = vmul.f32 %v5642, 2.0
      %v5707 = vmul.f32 %v5643, 2.0
      %v5708 = vmul.f32 %v5644, 2.0
      %v5709 = vmul.f32 %v5645, 2.0
      %v5710 = vmul.f32 %v5646, 2.0
      %v5711 = vmul.f32 %v5647, 2.0
      %v5712 = vmul.f32 %v5648, 2.0
      %v5713 = vmul.f32 %v5649, 2.0
      %v5714 = vmul.f32 %v5650, 2.0
      %v5715 = vmul.f32 %v5651, 2.0
      %v5716 = vmul.f32 %v5652, 2.0
      %v5717 = vmul.f32 %v5653, 2.0
      %v5718 = vmul.f32 %v5654, 2.0
      %v5719 = vmul.f32 %v5655, 2.0
      %v5720 = vmul.f32 %v5656, 2.0
      %v5721 = vmul.f32 %v5657, 2.0
      %v5722 = vmul.f32 %v5658, 2.0
      %v5723 = vmul.f32 %v5659, 2.0
      %v5724 = vmul.f32 %v5660, 2.0
      %v5725 = vmul.f32 %v5661, 2.0
      %v5726 = vmul.f32 %v5662, 2.0
      %v5727 = vmul.f32 %v5663, 2.0
      %v5728 = vmul.f32 %v5664, 2.0
      %v5729 = vmul.f32 %v5665, 2.0
      %v5730 = vmul.f32 %v5666, 2.0
      %v5731 = vmul.f32 %v5667, 2.0
      %v5732 = vmul.f32 %v5668, 2.0
      %v5733 = vmul.f32 %v5669, 2.0
      %v5734 = vmul.f32 %v5670, 2.0
      %v5735 = vmul.f32 %v5671, 2.0
      %v5736 = vmul.f32 %v5672, 2.0
      %v5737 = vmul.f32 %v5673, 2.0
      %v5738 = vmul.f32 %v5674, 2.0
      %v5739 = vmul.f32 %v5675, 2.0
      %v5740 = vmul.f32 %v5676, 2.0
      %v5741 = vmul.f32 %v5677, 2.0
      %v5742 = vmul.f32 %v5678, 2.0
      %v5743 = vmul.f32 %v5679, 2.0
      %v5744 = vmul.f32 %v5680, 2.0
      %v5745 = vmul.f32 %v5681, 2.0
      %v5746 = vmul.f32 %v5682, 2.0
      %v5747 = vmul.f32 %v5683, 2.0
      %v5748 = vmul.f32 %v5684, 2.0
      %v5749 = vmul.f32 %v5685, 2.0
      %v5750 = vmul.f32 %v5686, 2.0
      %v5751 = vmul.f32 %v5687, 2.0
      %v5752 = vmul.f32 %v5688, 2.0
      %v5753 = vmul.f32 %v5689, 2.0
      %v5754 = vmul.f32 %v5690, 2.0
      %v5755 = vmul.f32 %v5691, 2.0
      %v5756 = vmul.f32 %v5692, 2.0
      %v5757 = vmul.f32 %v5693, 2.0
      %v5758 = vmul.f32 %v5694, 2.0
      %v5759 = vld [vmem:[%s9] sm:$0x3]
      %v5761 = vperm.slane %v5759, 0
      %v5762 = vperm.slane %v5759, 1
      %v5765 = vadd.f32 %v5695, %v5761
      %v5766 = vadd.f32 %v5695, %v5762
      %v5767 = vadd.f32 %v5696, %v5761
      %v5768 = vadd.f32 %v5696, %v5762
      %v5769 = vadd.f32 %v5697, %v5761
      %v5770 = vadd.f32 %v5697, %v5762
      %v5771 = vadd.f32 %v5698, %v5761
      %v5772 = vadd.f32 %v5698, %v5762
      %v5773 = vadd.f32 %v5699, %v5761
      %v5774 = vadd.f32 %v5699, %v5762
      %v5775 = vadd.f32 %v5700, %v5761
      %v5776 = vadd.f32 %v5700, %v5762
      %v5777 = vadd.f32 %v5701, %v5761
      %v5778 = vadd.f32 %v5701, %v5762
      %v5779 = vadd.f32 %v5702, %v5761
      %v5780 = vadd.f32 %v5702, %v5762
      %v5781 = vadd.f32 %v5703, %v5761
      %v5782 = vadd.f32 %v5703, %v5762
      %v5783 = vadd.f32 %v5704, %v5761
      %v5784 = vadd.f32 %v5704, %v5762
      %v5785 = vadd.f32 %v5705, %v5761
      %v5786 = vadd.f32 %v5705, %v5762
      %v5787 = vadd.f32 %v5706, %v5761
      %v5788 = vadd.f32 %v5706, %v5762
      %v5789 = vadd.f32 %v5707, %v5761
      %v5790 = vadd.f32 %v5707, %v5762
      %v5791 = vadd.f32 %v5708, %v5761
      %v5792 = vadd.f32 %v5708, %v5762
      %v5793 = vadd.f32 %v5709, %v5761
      %v5794 = vadd.f32 %v5709, %v5762
      %v5795 = vadd.f32 %v5710, %v5761
      %v5796 = vadd.f32 %v5710, %v5762
      %v5797 = vadd.f32 %v5711, %v5761
      %v5798 = vadd.f32 %v5711, %v5762
      %v5799 = vadd.f32 %v5712, %v5761
      %v5800 = vadd.f32 %v5712, %v5762
      %v5801 = vadd.f32 %v5713, %v5761
      %v5802 = vadd.f32 %v5713, %v5762
      %v5803 = vadd.f32 %v5714, %v5761
      %v5804 = vadd.f32 %v5714, %v5762
      %v5805 = vadd.f32 %v5715, %v5761
      %v5806 = vadd.f32 %v5715, %v5762
      %v5807 = vadd.f32 %v5716, %v5761
      %v5808 = vadd.f32 %v5716, %v5762
      %v5809 = vadd.f32 %v5717, %v5761
      %v5810 = vadd.f32 %v5717, %v5762
      %v5811 = vadd.f32 %v5718, %v5761
      %v5812 = vadd.f32 %v5718, %v5762
      %v5813 = vadd.f32 %v5719, %v5761
      %v5814 = vadd.f32 %v5719, %v5762
      %v5815 = vadd.f32 %v5720, %v5761
      %v5816 = vadd.f32 %v5720, %v5762
      %v5817 = vadd.f32 %v5721, %v5761
      %v5818 = vadd.f32 %v5721, %v5762
      %v5819 = vadd.f32 %v5722, %v5761
      %v5820 = vadd.f32 %v5722, %v5762
      %v5821 = vadd.f32 %v5723, %v5761
      %v5822 = vadd.f32 %v5723, %v5762
      %v5823 = vadd.f32 %v5724, %v5761
      %v5824 = vadd.f32 %v5724, %v5762
      %v5825 = vadd.f32 %v5725, %v5761
      %v5826 = vadd.f32 %v5725, %v5762
      %v5827 = vadd.f32 %v5726, %v5761
      %v5828 = vadd.f32 %v5726, %v5762
      %v5829 = vadd.f32 %v5727, %v5761
      %v5830 = vadd.f32 %v5727, %v5762
      %v5831 = vadd.f32 %v5728, %v5761
      %v5832 = vadd.f32 %v5728, %v5762
      %v5833 = vadd.f32 %v5729, %v5761
      %v5834 = vadd.f32 %v5729, %v5762
      %v5835 = vadd.f32 %v5730, %v5761
      %v5836 = vadd.f32 %v5730, %v5762
      %v5837 = vadd.f32 %v5731, %v5761
      %v5838 = vadd.f32 %v5731, %v5762
      %v5839 = vadd.f32 %v5732, %v5761
      %v5840 = vadd.f32 %v5732, %v5762
      %v5841 = vadd.f32 %v5733, %v5761
      %v5842 = vadd.f32 %v5733, %v5762
      %v5843 = vadd.f32 %v5734, %v5761
      %v5844 = vadd.f32 %v5734, %v5762
      %v5845 = vadd.f32 %v5735, %v5761
      %v5846 = vadd.f32 %v5735, %v5762
      %v5847 = vadd.f32 %v5736, %v5761
      %v5848 = vadd.f32 %v5736, %v5762
      %v5849 = vadd.f32 %v5737, %v5761
      %v5850 = vadd.f32 %v5737, %v5762
      %v5851 = vadd.f32 %v5738, %v5761
      %v5852 = vadd.f32 %v5738, %v5762
      %v5853 = vadd.f32 %v5739, %v5761
      %v5854 = vadd.f32 %v5739, %v5762
      %v5855 = vadd.f32 %v5740, %v5761
      %v5856 = vadd.f32 %v5740, %v5762
      %v5857 = vadd.f32 %v5741, %v5761
      %v5858 = vadd.f32 %v5741, %v5762
      %v5859 = vadd.f32 %v5742, %v5761
      %v5860 = vadd.f32 %v5742, %v5762
      %v5861 = vadd.f32 %v5743, %v5761
      %v5862 = vadd.f32 %v5743, %v5762
      %v5863 = vadd.f32 %v5744, %v5761
      %v5864 = vadd.f32 %v5744, %v5762
      %v5865 = vadd.f32 %v5745, %v5761
      %v5866 = vadd.f32 %v5745, %v5762
      %v5867 = vadd.f32 %v5746, %v5761
      %v5868 = vadd.f32 %v5746, %v5762
      %v5869 = vadd.f32 %v5747, %v5761
      %v5870 = vadd.f32 %v5747, %v5762
      %v5871 = vadd.f32 %v5748, %v5761
      %v5872 = vadd.f32 %v5748, %v5762
      %v5873 = vadd.f32 %v5749, %v5761
      %v5874 = vadd.f32 %v5749, %v5762
      %v5875 = vadd.f32 %v5750, %v5761
      %v5876 = vadd.f32 %v5750, %v5762
      %v5877 = vadd.f32 %v5751, %v5761
      %v5878 = vadd.f32 %v5751, %v5762
      %v5879 = vadd.f32 %v5752, %v5761
      %v5880 = vadd.f32 %v5752, %v5762
      %v5881 = vadd.f32 %v5753, %v5761
      %v5882 = vadd.f32 %v5753, %v5762
      %v5883 = vadd.f32 %v5754, %v5761
      %v5884 = vadd.f32 %v5754, %v5762
      %v5885 = vadd.f32 %v5755, %v5761
      %v5886 = vadd.f32 %v5755, %v5762
      %v5887 = vadd.f32 %v5756, %v5761
      %v5888 = vadd.f32 %v5756, %v5762
      %v5889 = vadd.f32 %v5757, %v5761
      %v5890 = vadd.f32 %v5757, %v5762
      %v5891 = vadd.f32 %v5758, %v5761
      %v5892 = vadd.f32 %v5758, %v5762
      %v5893 = vmin.f32 %v5765, 5.0
      %v5894 = vmin.f32 %v5766, 5.0
      %v5895 = vmin.f32 %v5767, 5.0
      %v5896 = vmin.f32 %v5768, 5.0
      %v5897 = vmin.f32 %v5769, 5.0
      %v5898 = vmin.f32 %v5770, 5.0
      %v5899 = vmin.f32 %v5771, 5.0
      %v5900 = vmin.f32 %v5772, 5.0
      %v5901 = vmin.f32 %v5773, 5.0
      %v5902 = vmin.f32 %v5774, 5.0
      %v5903 = vmin.f32 %v5775, 5.0
      %v5904 = vmin.f32 %v5776, 5.0
      %v5905 = vmin.f32 %v5777, 5.0
      %v5906 = vmin.f32 %v5778, 5.0
      %v5907 = vmin.f32 %v5779, 5.0
      %v5908 = vmin.f32 %v5780, 5.0
      %v5909 = vmin.f32 %v5781, 5.0
      %v5910 = vmin.f32 %v5782, 5.0
      %v5911 = vmin.f32 %v5783, 5.0
      %v5912 = vmin.f32 %v5784, 5.0
      %v5913 = vmin.f32 %v5785, 5.0
      %v5914 = vmin.f32 %v5786, 5.0
      %v5915 = vmin.f32 %v5787, 5.0
      %v5916 = vmin.f32 %v5788, 5.0
      %v5917 = vmin.f32 %v5789, 5.0
      %v5918 = vmin.f32 %v5790, 5.0
      %v5919 = vmin.f32 %v5791, 5.0
      %v5920 = vmin.f32 %v5792, 5.0
      %v5921 = vmin.f32 %v5793, 5.0
      %v5922 = vmin.f32 %v5794, 5.0
      %v5923 = vmin.f32 %v5795, 5.0
      %v5924 = vmin.f32 %v5796, 5.0
      %v5925 = vmin.f32 %v5797, 5.0
      %v5926 = vmin.f32 %v5798, 5.0
      %v5927 = vmin.f32 %v5799, 5.0
      %v5928 = vmin.f32 %v5800, 5.0
      %v5929 = vmin.f32 %v5801, 5.0
      %v5930 = vmin.f32 %v5802, 5.0
      %v5931 = vmin.f32 %v5803, 5.0
      %v5932 = vmin.f32 %v5804, 5.0
      %v5933 = vmin.f32 %v5805, 5.0
      %v5934 = vmin.f32 %v5806, 5.0
      %v5935 = vmin.f32 %v5807, 5.0
      %v5936 = vmin.f32 %v5808, 5.0
      %v5937 = vmin.f32 %v5809, 5.0
      %v5938 = vmin.f32 %v5810, 5.0
      %v5939 = vmin.f32 %v5811, 5.0
      %v5940 = vmin.f32 %v5812, 5.0
      %v5941 = vmin.f32 %v5813, 5.0
      %v5942 = vmin.f32 %v5814, 5.0
      %v5943 = vmin.f32 %v5815, 5.0
      %v5944 = vmin.f32 %v5816, 5.0
      %v5945 = vmin.f32 %v5817, 5.0
      %v5946 = vmin.f32 %v5818, 5.0
      %v5947 = vmin.f32 %v5819, 5.0
      %v5948 = vmin.f32 %v5820, 5.0
      %v5949 = vmin.f32 %v5821, 5.0
      %v5950 = vmin.f32 %v5822, 5.0
      %v5951 = vmin.f32 %v5823, 5.0
      %v5952 = vmin.f32 %v5824, 5.0
      %v5953 = vmin.f32 %v5825, 5.0
      %v5954 = vmin.f32 %v5826, 5.0
      %v5955 = vmin.f32 %v5827, 5.0
      %v5956 = vmin.f32 %v5828, 5.0
      %v5957 = vmin.f32 %v5829, 5.0
      %v5958 = vmin.f32 %v5830, 5.0
      %v5959 = vmin.f32 %v5831, 5.0
      %v5960 = vmin.f32 %v5832, 5.0
      %v5961 = vmin.f32 %v5833, 5.0
      %v5962 = vmin.f32 %v5834, 5.0
      %v5963 = vmin.f32 %v5835, 5.0
      %v5964 = vmin.f32 %v5836, 5.0
      %v5965 = vmin.f32 %v5837, 5.0
      %v5966 = vmin.f32 %v5838, 5.0
      %v5967 = vmin.f32 %v5839, 5.0
      %v5968 = vmin.f32 %v5840, 5.0
      %v5969 = vmin.f32 %v5841, 5.0
      %v5970 = vmin.f32 %v5842, 5.0
      %v5971 = vmin.f32 %v5843, 5.0
      %v5972 = vmin.f32 %v5844, 5.0
      %v5973 = vmin.f32 %v5845, 5.0
      %v5974 = vmin.f32 %v5846, 5.0
      %v5975 = vmin.f32 %v5847, 5.0
      %v5976 = vmin.f32 %v5848, 5.0
      %v5977 = vmin.f32 %v5849, 5.0
      %v5978 = vmin.f32 %v5850, 5.0
      %v5979 = vmin.f32 %v5851, 5.0
      %v5980 = vmin.f32 %v5852, 5.0
      %v5981 = vmin.f32 %v5853, 5.0
      %v5982 = vmin.f32 %v5854, 5.0
      %v5983 = vmin.f32 %v5855, 5.0
      %v5984 = vmin.f32 %v5856, 5.0
      %v5985 = vmin.f32 %v5857, 5.0
      %v5986 = vmin.f32 %v5858, 5.0
      %v5987 = vmin.f32 %v5859, 5.0
      %v5988 = vmin.f32 %v5860, 5.0
      %v5989 = vmin.f32 %v5861, 5.0
      %v5990 = vmin.f32 %v5862, 5.0
      %v5991 = vmin.f32 %v5863, 5.0
      %v5992 = vmin.f32 %v5864, 5.0
      %v5993 = vmin.f32 %v5865, 5.0
      %v5994 = vmin.f32 %v5866, 5.0
      %v5995 = vmin.f32 %v5867, 5.0
      %v5996 = vmin.f32 %v5868, 5.0
      %v5997 = vmin.f32 %v5869, 5.0
      %v5998 = vmin.f32 %v5870, 5.0
      %v5999 = vmin.f32 %v5871, 5.0
      %v6000 = vmin.f32 %v5872, 5.0
      %v6001 = vmin.f32 %v5873, 5.0
      %v6002 = vmin.f32 %v5874, 5.0
      %v6003 = vmin.f32 %v5875, 5.0
      %v6004 = vmin.f32 %v5876, 5.0
      %v6005 = vmin.f32 %v5877, 5.0
      %v6006 = vmin.f32 %v5878, 5.0
      %v6007 = vmin.f32 %v5879, 5.0
      %v6008 = vmin.f32 %v5880, 5.0
      %v6009 = vmin.f32 %v5881, 5.0
      %v6010 = vmin.f32 %v5882, 5.0
      %v6011 = vmin.f32 %v5883, 5.0
      %v6012 = vmin.f32 %v5884, 5.0
      %v6013 = vmin.f32 %v5885, 5.0
      %v6014 = vmin.f32 %v5886, 5.0
      %v6015 = vmin.f32 %v5887, 5.0
      %v6016 = vmin.f32 %v5888, 5.0
      %v6017 = vmin.f32 %v5889, 5.0
      %v6018 = vmin.f32 %v5890, 5.0
      %v6019 = vmin.f32 %v5891, 5.0
      %v6020 = vmin.f32 %v5892, 5.0
      %v6021 = vmax.f32 %v5893, 0.0
      %v6022 = vmax.f32 %v5894, 0.0
      %v6023 = vmax.f32 %v5895, 0.0
      %v6024 = vmax.f32 %v5896, 0.0
      %v6025 = vmax.f32 %v5897, 0.0
      %v6026 = vmax.f32 %v5898, 0.0
      %v6027 = vmax.f32 %v5899, 0.0
      %v6028 = vmax.f32 %v5900, 0.0
      %v6029 = vmax.f32 %v5901, 0.0
      %v6030 = vmax.f32 %v5902, 0.0
      %v6031 = vmax.f32 %v5903, 0.0
      %v6032 = vmax.f32 %v5904, 0.0
      %v6033 = vmax.f32 %v5905, 0.0
      %v6034 = vmax.f32 %v5906, 0.0
      %v6035 = vmax.f32 %v5907, 0.0
      %v6036 = vmax.f32 %v5908, 0.0
      %v6037 = vmax.f32 %v5909, 0.0
      %v6038 = vmax.f32 %v5910, 0.0
      %v6039 = vmax.f32 %v5911, 0.0
      %v6040 = vmax.f32 %v5912, 0.0
      %v6041 = vmax.f32 %v5913, 0.0
      %v6042 = vmax.f32 %v5914, 0.0
      %v6043 = vmax.f32 %v5915, 0.0
      %v6044 = vmax.f32 %v5916, 0.0
      %v6045 = vmax.f32 %v5917, 0.0
      %v6046 = vmax.f32 %v5918, 0.0
      %v6047 = vmax.f32 %v5919, 0.0
      %v6048 = vmax.f32 %v5920, 0.0
      %v6049 = vmax.f32 %v5921, 0.0
      %v6050 = vmax.f32 %v5922, 0.0
      %v6051 = vmax.f32 %v5923, 0.0
      %v6052 = vmax.f32 %v5924, 0.0
      %v6053 = vmax.f32 %v5925, 0.0
      %v6054 = vmax.f32 %v5926, 0.0
      %v6055 = vmax.f32 %v5927, 0.0
      %v6056 = vmax.f32 %v5928, 0.0
      %v6057 = vmax.f32 %v5929, 0.0
      %v6058 = vmax.f32 %v5930, 0.0
      %v6059 = vmax.f32 %v5931, 0.0
      %v6060 = vmax.f32 %v5932, 0.0
      %v6061 = vmax.f32 %v5933, 0.0
      %v6062 = vmax.f32 %v5934, 0.0
      %v6063 = vmax.f32 %v5935, 0.0
      %v6064 = vmax.f32 %v5936, 0.0
      %v6065 = vmax.f32 %v5937, 0.0
      %v6066 = vmax.f32 %v5938, 0.0
      %v6067 = vmax.f32 %v5939, 0.0
      %v6068 = vmax.f32 %v5940, 0.0
      %v6069 = vmax.f32 %v5941, 0.0
      %v6070 = vmax.f32 %v5942, 0.0
      %v6071 = vmax.f32 %v5943, 0.0
      %v6072 = vmax.f32 %v5944, 0.0
      %v6073 = vmax.f32 %v5945, 0.0
      %v6074 = vmax.f32 %v5946, 0.0
      %v6075 = vmax.f32 %v5947, 0.0
      %v6076 = vmax.f32 %v5948, 0.0
      %v6077 = vmax.f32 %v5949, 0.0
      %v6078 = vmax.f32 %v5950, 0.0
      %v6079 = vmax.f32 %v5951, 0.0
      %v6080 = vmax.f32 %v5952, 0.0
      %v6081 = vmax.f32 %v5953, 0.0
      %v6082 = vmax.f32 %v5954, 0.0
      %v6083 = vmax.f32 %v5955, 0.0
      %v6084 = vmax.f32 %v5956, 0.0
      %v6085 = vmax.f32 %v5957, 0.0
      %v6086 = vmax.f32 %v5958, 0.0
      %v6087 = vmax.f32 %v5959, 0.0
      %v6088 = vmax.f32 %v5960, 0.0
      %v6089 = vmax.f32 %v5961, 0.0
      %v6090 = vmax.f32 %v5962, 0.0
      %v6091 = vmax.f32 %v5963, 0.0
      %v6092 = vmax.f32 %v5964, 0.0
      %v6093 = vmax.f32 %v5965, 0.0
      %v6094 = vmax.f32 %v5966, 0.0
      %v6095 = vmax.f32 %v5967, 0.0
      %v6096 = vmax.f32 %v5968, 0.0
      %v6097 = vmax.f32 %v5969, 0.0
      %v6098 = vmax.f32 %v5970, 0.0
      %v6099 = vmax.f32 %v5971, 0.0
      %v6100 = vmax.f32 %v5972, 0.0
      %v6101 = vmax.f32 %v5973, 0.0
      %v6102 = vmax.f32 %v5974, 0.0
      %v6103 = vmax.f32 %v5975, 0.0
      %v6104 = vmax.f32 %v5976, 0.0
      %v6105 = vmax.f32 %v5977, 0.0
      %v6106 = vmax.f32 %v5978, 0.0
      %v6107 = vmax.f32 %v5979, 0.0
      %v6108 = vmax.f32 %v5980, 0.0
      %v6109 = vmax.f32 %v5981, 0.0
      %v6110 = vmax.f32 %v5982, 0.0
      %v6111 = vmax.f32 %v5983, 0.0
      %v6112 = vmax.f32 %v5984, 0.0
      %v6113 = vmax.f32 %v5985, 0.0
      %v6114 = vmax.f32 %v5986, 0.0
      %v6115 = vmax.f32 %v5987, 0.0
      %v6116 = vmax.f32 %v5988, 0.0
      %v6117 = vmax.f32 %v5989, 0.0
      %v6118 = vmax.f32 %v5990, 0.0
      %v6119 = vmax.f32 %v5991, 0.0
      %v6120 = vmax.f32 %v5992, 0.0
      %v6121 = vmax.f32 %v5993, 0.0
      %v6122 = vmax.f32 %v5994, 0.0
      %v6123 = vmax.f32 %v5995, 0.0
      %v6124 = vmax.f32 %v5996, 0.0
      %v6125 = vmax.f32 %v5997, 0.0
      %v6126 = vmax.f32 %v5998, 0.0
      %v6127 = vmax.f32 %v5999, 0.0
      %v6128 = vmax.f32 %v6000, 0.0
      %v6129 = vmax.f32 %v6001, 0.0
      %v6130 = vmax.f32 %v6002, 0.0
      %v6131 = vmax.f32 %v6003, 0.0
      %v6132 = vmax.f32 %v6004, 0.0
      %v6133 = vmax.f32 %v6005, 0.0
      %v6134 = vmax.f32 %v6006, 0.0
      %v6135 = vmax.f32 %v6007, 0.0
      %v6136 = vmax.f32 %v6008, 0.0
      %v6137 = vmax.f32 %v6009, 0.0
      %v6138 = vmax.f32 %v6010, 0.0
      %v6139 = vmax.f32 %v6011, 0.0
      %v6140 = vmax.f32 %v6012, 0.0
      %v6141 = vmax.f32 %v6013, 0.0
      %v6142 = vmax.f32 %v6014, 0.0
      %v6143 = vmax.f32 %v6015, 0.0
      %v6144 = vmax.f32 %v6016, 0.0
      %v6145 = vmax.f32 %v6017, 0.0
      %v6146 = vmax.f32 %v6018, 0.0
      %v6147 = vmax.f32 %v6019, 0.0
      %v6148 = vmax.f32 %v6020, 0.0
      %v6149 = vmul.f32 %v6021, %v6021
      %v6150 = vmul.f32 %v6022, %v6022
      %v6151 = vmul.f32 %v6023, %v6023
      %v6152 = vmul.f32 %v6024, %v6024
      %v6153 = vmul.f32 %v6025, %v6025
      %v6154 = vmul.f32 %v6026, %v6026
      %v6155 = vmul.f32 %v6027, %v6027
      %v6156 = vmul.f32 %v6028, %v6028
      %v6157 = vmul.f32 %v6029, %v6029
      %v6158 = vmul.f32 %v6030, %v6030
      %v6159 = vmul.f32 %v6031, %v6031
      %v6160 = vmul.f32 %v6032, %v6032
      %v6161 = vmul.f32 %v6033, %v6033
      %v6162 = vmul.f32 %v6034, %v6034
      %v6163 = vmul.f32 %v6035, %v6035
      %v6164 = vmul.f32 %v6036, %v6036
      %v6165 = vmul.f32 %v6037, %v6037
      %v6166 = vmul.f32 %v6038, %v6038
      %v6167 = vmul.f32 %v6039, %v6039
      %v6168 = vmul.f32 %v6040, %v6040
      %v6169 = vmul.f32 %v6041, %v6041
      %v6170 = vmul.f32 %v6042, %v6042
      %v6171 = vmul.f32 %v6043, %v6043
      %v6172 = vmul.f32 %v6044, %v6044
      %v6173 = vmul.f32 %v6045, %v6045
      %v6174 = vmul.f32 %v6046, %v6046
      %v6175 = vmul.f32 %v6047, %v6047
      %v6176 = vmul.f32 %v6048, %v6048
      %v6177 = vmul.f32 %v6049, %v6049
      %v6178 = vmul.f32 %v6050, %v6050
      %v6179 = vmul.f32 %v6051, %v6051
      %v6180 = vmul.f32 %v6052, %v6052
      %v6181 = vmul.f32 %v6053, %v6053
      %v6182 = vmul.f32 %v6054, %v6054
      %v6183 = vmul.f32 %v6055, %v6055
      %v6184 = vmul.f32 %v6056, %v6056
      %v6185 = vmul.f32 %v6057, %v6057
      %v6186 = vmul.f32 %v6058, %v6058
      %v6187 = vmul.f32 %v6059, %v6059
      %v6188 = vmul.f32 %v6060, %v6060
      %v6189 = vmul.f32 %v6061, %v6061
      %v6190 = vmul.f32 %v6062, %v6062
      %v6191 = vmul.f32 %v6063, %v6063
      %v6192 = vmul.f32 %v6064, %v6064
      %v6193 = vmul.f32 %v6065, %v6065
      %v6194 = vmul.f32 %v6066, %v6066
      %v6195 = vmul.f32 %v6067, %v6067
      %v6196 = vmul.f32 %v6068, %v6068
      %v6197 = vmul.f32 %v6069, %v6069
      %v6198 = vmul.f32 %v6070, %v6070
      %v6199 = vmul.f32 %v6071, %v6071
      %v6200 = vmul.f32 %v6072, %v6072
      %v6201 = vmul.f32 %v6073, %v6073
      %v6202 = vmul.f32 %v6074, %v6074
      %v6203 = vmul.f32 %v6075, %v6075
      %v6204 = vmul.f32 %v6076, %v6076
      %v6205 = vmul.f32 %v6077, %v6077
      %v6206 = vmul.f32 %v6078, %v6078
      %v6207 = vmul.f32 %v6079, %v6079
      %v6208 = vmul.f32 %v6080, %v6080
      %v6209 = vmul.f32 %v6081, %v6081
      %v6210 = vmul.f32 %v6082, %v6082
      %v6211 = vmul.f32 %v6083, %v6083
      %v6212 = vmul.f32 %v6084, %v6084
      %v6213 = vmul.f32 %v6085, %v6085
      %v6214 = vmul.f32 %v6086, %v6086
      %v6215 = vmul.f32 %v6087, %v6087
      %v6216 = vmul.f32 %v6088, %v6088
      %v6217 = vmul.f32 %v6089, %v6089
      %v6218 = vmul.f32 %v6090, %v6090
      %v6219 = vmul.f32 %v6091, %v6091
      %v6220 = vmul.f32 %v6092, %v6092
      %v6221 = vmul.f32 %v6093, %v6093
      %v6222 = vmul.f32 %v6094, %v6094
      %v6223 = vmul.f32 %v6095, %v6095
      %v6224 = vmul.f32 %v6096, %v6096
      %v6225 = vmul.f32 %v6097, %v6097
      %v6226 = vmul.f32 %v6098, %v6098
      %v6227 = vmul.f32 %v6099, %v6099
      %v6228 = vmul.f32 %v6100, %v6100
      %v6229 = vmul.f32 %v6101, %v6101
      %v6230 = vmul.f32 %v6102, %v6102
      %v6231 = vmul.f32 %v6103, %v6103
      %v6232 = vmul.f32 %v6104, %v6104
      %v6233 = vmul.f32 %v6105, %v6105
      %v6234 = vmul.f32 %v6106, %v6106
      %v6235 = vmul.f32 %v6107, %v6107
      %v6236 = vmul.f32 %v6108, %v6108
      %v6237 = vmul.f32 %v6109, %v6109
      %v6238 = vmul.f32 %v6110, %v6110
      %v6239 = vmul.f32 %v6111, %v6111
      %v6240 = vmul.f32 %v6112, %v6112
      %v6241 = vmul.f32 %v6113, %v6113
      %v6242 = vmul.f32 %v6114, %v6114
      %v6243 = vmul.f32 %v6115, %v6115
      %v6244 = vmul.f32 %v6116, %v6116
      %v6245 = vmul.f32 %v6117, %v6117
      %v6246 = vmul.f32 %v6118, %v6118
      %v6247 = vmul.f32 %v6119, %v6119
      %v6248 = vmul.f32 %v6120, %v6120
      %v6249 = vmul.f32 %v6121, %v6121
      %v6250 = vmul.f32 %v6122, %v6122
      %v6251 = vmul.f32 %v6123, %v6123
      %v6252 = vmul.f32 %v6124, %v6124
      %v6253 = vmul.f32 %v6125, %v6125
      %v6254 = vmul.f32 %v6126, %v6126
      %v6255 = vmul.f32 %v6127, %v6127
      %v6256 = vmul.f32 %v6128, %v6128
      %v6257 = vmul.f32 %v6129, %v6129
      %v6258 = vmul.f32 %v6130, %v6130
      %v6259 = vmul.f32 %v6131, %v6131
      %v6260 = vmul.f32 %v6132, %v6132
      %v6261 = vmul.f32 %v6133, %v6133
      %v6262 = vmul.f32 %v6134, %v6134
      %v6263 = vmul.f32 %v6135, %v6135
      %v6264 = vmul.f32 %v6136, %v6136
      %v6265 = vmul.f32 %v6137, %v6137
      %v6266 = vmul.f32 %v6138, %v6138
      %v6267 = vmul.f32 %v6139, %v6139
      %v6268 = vmul.f32 %v6140, %v6140
      %v6269 = vmul.f32 %v6141, %v6141
      %v6270 = vmul.f32 %v6142, %v6142
      %v6271 = vmul.f32 %v6143, %v6143
      %v6272 = vmul.f32 %v6144, %v6144
      %v6273 = vmul.f32 %v6145, %v6145
      %v6274 = vmul.f32 %v6146, %v6146
      %v6275 = vmul.f32 %v6147, %v6147
      %v6276 = vmul.f32 %v6148, %v6148
      %v6277 = vmul.f32 %v6149, %v6149
      %v6278 = vmul.f32 %v6150, %v6150
      %v6279 = vmul.f32 %v6151, %v6151
      %v6280 = vmul.f32 %v6152, %v6152
      %v6281 = vmul.f32 %v6153, %v6153
      %v6282 = vmul.f32 %v6154, %v6154
      %v6283 = vmul.f32 %v6155, %v6155
      %v6284 = vmul.f32 %v6156, %v6156
      %v6285 = vmul.f32 %v6157, %v6157
      %v6286 = vmul.f32 %v6158, %v6158
      %v6287 = vmul.f32 %v6159, %v6159
      %v6288 = vmul.f32 %v6160, %v6160
      %v6289 = vmul.f32 %v6161, %v6161
      %v6290 = vmul.f32 %v6162, %v6162
      %v6291 = vmul.f32 %v6163, %v6163
      %v6292 = vmul.f32 %v6164, %v6164
      %v6293 = vmul.f32 %v6165, %v6165
      %v6294 = vmul.f32 %v6166, %v6166
      %v6295 = vmul.f32 %v6167, %v6167
      %v6296 = vmul.f32 %v6168, %v6168
      %v6297 = vmul.f32 %v6169, %v6169
      %v6298 = vmul.f32 %v6170, %v6170
      %v6299 = vmul.f32 %v6171, %v6171
      %v6300 = vmul.f32 %v6172, %v6172
      %v6301 = vmul.f32 %v6173, %v6173
      %v6302 = vmul.f32 %v6174, %v6174
      %v6303 = vmul.f32 %v6175, %v6175
      %v6304 = vmul.f32 %v6176, %v6176
      %v6305 = vmul.f32 %v6177, %v6177
      %v6306 = vmul.f32 %v6178, %v6178
      %v6307 = vmul.f32 %v6179, %v6179
      %v6308 = vmul.f32 %v6180, %v6180
      %v6309 = vmul.f32 %v6181, %v6181
      %v6310 = vmul.f32 %v6182, %v6182
      %v6311 = vmul.f32 %v6183, %v6183
      %v6312 = vmul.f32 %v6184, %v6184
      %v6313 = vmul.f32 %v6185, %v6185
      %v6314 = vmul.f32 %v6186, %v6186
      %v6315 = vmul.f32 %v6187, %v6187
      %v6316 = vmul.f32 %v6188, %v6188
      %v6317 = vmul.f32 %v6189, %v6189
      %v6318 = vmul.f32 %v6190, %v6190
      %v6319 = vmul.f32 %v6191, %v6191
      %v6320 = vmul.f32 %v6192, %v6192
      %v6321 = vmul.f32 %v6193, %v6193
      %v6322 = vmul.f32 %v6194, %v6194
      %v6323 = vmul.f32 %v6195, %v6195
      %v6324 = vmul.f32 %v6196, %v6196
      %v6325 = vmul.f32 %v6197, %v6197
      %v6326 = vmul.f32 %v6198, %v6198
      %v6327 = vmul.f32 %v6199, %v6199
      %v6328 = vmul.f32 %v6200, %v6200
      %v6329 = vmul.f32 %v6201, %v6201
      %v6330 = vmul.f32 %v6202, %v6202
      %v6331 = vmul.f32 %v6203, %v6203
      %v6332 = vmul.f32 %v6204, %v6204
      %v6333 = vmul.f32 %v6205, %v6205
      %v6334 = vmul.f32 %v6206, %v6206
      %v6335 = vmul.f32 %v6207, %v6207
      %v6336 = vmul.f32 %v6208, %v6208
      %v6337 = vmul.f32 %v6209, %v6209
      %v6338 = vmul.f32 %v6210, %v6210
      %v6339 = vmul.f32 %v6211, %v6211
      %v6340 = vmul.f32 %v6212, %v6212
      %v6341 = vmul.f32 %v6213, %v6213
      %v6342 = vmul.f32 %v6214, %v6214
      %v6343 = vmul.f32 %v6215, %v6215
      %v6344 = vmul.f32 %v6216, %v6216
      %v6345 = vmul.f32 %v6217, %v6217
      %v6346 = vmul.f32 %v6218, %v6218
      %v6347 = vmul.f32 %v6219, %v6219
      %v6348 = vmul.f32 %v6220, %v6220
      %v6349 = vmul.f32 %v6221, %v6221
      %v6350 = vmul.f32 %v6222, %v6222
      %v6351 = vmul.f32 %v6223, %v6223
      %v6352 = vmul.f32 %v6224, %v6224
      %v6353 = vmul.f32 %v6225, %v6225
      %v6354 = vmul.f32 %v6226, %v6226
      %v6355 = vmul.f32 %v6227, %v6227
      %v6356 = vmul.f32 %v6228, %v6228
      %v6357 = vmul.f32 %v6229, %v6229
      %v6358 = vmul.f32 %v6230, %v6230
      %v6359 = vmul.f32 %v6231, %v6231
      %v6360 = vmul.f32 %v6232, %v6232
      %v6361 = vmul.f32 %v6233, %v6233
      %v6362 = vmul.f32 %v6234, %v6234
      %v6363 = vmul.f32 %v6235, %v6235
      %v6364 = vmul.f32 %v6236, %v6236
      %v6365 = vmul.f32 %v6237, %v6237
      %v6366 = vmul.f32 %v6238, %v6238
      %v6367 = vmul.f32 %v6239, %v6239
      %v6368 = vmul.f32 %v6240, %v6240
      %v6369 = vmul.f32 %v6241, %v6241
      %v6370 = vmul.f32 %v6242, %v6242
      %v6371 = vmul.f32 %v6243, %v6243
      %v6372 = vmul.f32 %v6244, %v6244
      %v6373 = vmul.f32 %v6245, %v6245
      %v6374 = vmul.f32 %v6246, %v6246
      %v6375 = vmul.f32 %v6247, %v6247
      %v6376 = vmul.f32 %v6248, %v6248
      %v6377 = vmul.f32 %v6249, %v6249
      %v6378 = vmul.f32 %v6250, %v6250
      %v6379 = vmul.f32 %v6251, %v6251
      %v6380 = vmul.f32 %v6252, %v6252
      %v6381 = vmul.f32 %v6253, %v6253
      %v6382 = vmul.f32 %v6254, %v6254
      %v6383 = vmul.f32 %v6255, %v6255
      %v6384 = vmul.f32 %v6256, %v6256
      %v6385 = vmul.f32 %v6257, %v6257
      %v6386 = vmul.f32 %v6258, %v6258
      %v6387 = vmul.f32 %v6259, %v6259
      %v6388 = vmul.f32 %v6260, %v6260
      %v6389 = vmul.f32 %v6261, %v6261
      %v6390 = vmul.f32 %v6262, %v6262
      %v6391 = vmul.f32 %v6263, %v6263
      %v6392 = vmul.f32 %v6264, %v6264
      %v6393 = vmul.f32 %v6265, %v6265
      %v6394 = vmul.f32 %v6266, %v6266
      %v6395 = vmul.f32 %v6267, %v6267
      %v6396 = vmul.f32 %v6268, %v6268
      %v6397 = vmul.f32 %v6269, %v6269
      %v6398 = vmul.f32 %v6270, %v6270
      %v6399 = vmul.f32 %v6271, %v6271
      %v6400 = vmul.f32 %v6272, %v6272
      %v6401 = vmul.f32 %v6273, %v6273
      %v6402 = vmul.f32 %v6274, %v6274
      %v6403 = vmul.f32 %v6275, %v6275
      %v6404 = vmul.f32 %v6276, %v6276
      %v6405 = vmul.f32 %v6277, 0.041666668
      %v6406 = vmul.f32 %v6278, 0.041666668
      %v6407 = vmul.f32 %v6279, 0.041666668
      %v6408 = vmul.f32 %v6280, 0.041666668
      %v6409 = vmul.f32 %v6281, 0.041666668
      %v6410 = vmul.f32 %v6282, 0.041666668
      %v6411 = vmul.f32 %v6283, 0.041666668
      %v6412 = vmul.f32 %v6284, 0.041666668
      %v6413 = vmul.f32 %v6285, 0.041666668
      %v6414 = vmul.f32 %v6286, 0.041666668
      %v6415 = vmul.f32 %v6287, 0.041666668
      %v6416 = vmul.f32 %v6288, 0.041666668
      %v6417 = vmul.f32 %v6289, 0.041666668
      %v6418 = vmul.f32 %v6290, 0.041666668
      %v6419 = vmul.f32 %v6291, 0.041666668
      %v6420 = vmul.f32 %v6292, 0.041666668
      %v6421 = vmul.f32 %v6293, 0.041666668
      %v6422 = vmul.f32 %v6294, 0.041666668
      %v6423 = vmul.f32 %v6295, 0.041666668
      %v6424 = vmul.f32 %v6296, 0.041666668
      %v6425 = vmul.f32 %v6297, 0.041666668
      %v6426 = vmul.f32 %v6298, 0.041666668
      %v6427 = vmul.f32 %v6299, 0.041666668
      %v6428 = vmul.f32 %v6300, 0.041666668
      %v6429 = vmul.f32 %v6301, 0.041666668
      %v6430 = vmul.f32 %v6302, 0.041666668
      %v6431 = vmul.f32 %v6303, 0.041666668
      %v6432 = vmul.f32 %v6304, 0.041666668
      %v6433 = vmul.f32 %v6305, 0.041666668
      %v6434 = vmul.f32 %v6306, 0.041666668
      %v6435 = vmul.f32 %v6307, 0.041666668
      %v6436 = vmul.f32 %v6308, 0.041666668
      %v6437 = vmul.f32 %v6309, 0.041666668
      %v6438 = vmul.f32 %v6310, 0.041666668
      %v6439 = vmul.f32 %v6311, 0.041666668
      %v6440 = vmul.f32 %v6312, 0.041666668
      %v6441 = vmul.f32 %v6313, 0.041666668
      %v6442 = vmul.f32 %v6314, 0.041666668
      %v6443 = vmul.f32 %v6315, 0.041666668
      %v6444 = vmul.f32 %v6316, 0.041666668
      %v6445 = vmul.f32 %v6317, 0.041666668
      %v6446 = vmul.f32 %v6318, 0.041666668
      %v6447 = vmul.f32 %v6319, 0.041666668
      %v6448 = vmul.f32 %v6320, 0.041666668
      %v6449 = vmul.f32 %v6321, 0.041666668
      %v6450 = vmul.f32 %v6322, 0.041666668
      %v6451 = vmul.f32 %v6323, 0.041666668
      %v6452 = vmul.f32 %v6324, 0.041666668
      %v6453 = vmul.f32 %v6325, 0.041666668
      %v6454 = vmul.f32 %v6326, 0.041666668
      %v6455 = vmul.f32 %v6327, 0.041666668
      %v6456 = vmul.f32 %v6328, 0.041666668
      %v6457 = vmul.f32 %v6329, 0.041666668
      %v6458 = vmul.f32 %v6330, 0.041666668
      %v6459 = vmul.f32 %v6331, 0.041666668
      %v6460 = vmul.f32 %v6332, 0.041666668
      %v6461 = vmul.f32 %v6333, 0.041666668
      %v6462 = vmul.f32 %v6334, 0.041666668
      %v6463 = vmul.f32 %v6335, 0.041666668
      %v6464 = vmul.f32 %v6336, 0.041666668
      %v6465 = vmul.f32 %v6337, 0.041666668
      %v6466 = vmul.f32 %v6338, 0.041666668
      %v6467 = vmul.f32 %v6339, 0.041666668
      %v6468 = vmul.f32 %v6340, 0.041666668
      %v6469 = vmul.f32 %v6341, 0.041666668
      %v6470 = vmul.f32 %v6342, 0.041666668
      %v6471 = vmul.f32 %v6343, 0.041666668
      %v6472 = vmul.f32 %v6344, 0.041666668
      %v6473 = vmul.f32 %v6345, 0.041666668
      %v6474 = vmul.f32 %v6346, 0.041666668
      %v6475 = vmul.f32 %v6347, 0.041666668
      %v6476 = vmul.f32 %v6348, 0.041666668
      %v6477 = vmul.f32 %v6349, 0.041666668
      %v6478 = vmul.f32 %v6350, 0.041666668
      %v6479 = vmul.f32 %v6351, 0.041666668
      %v6480 = vmul.f32 %v6352, 0.041666668
      %v6481 = vmul.f32 %v6353, 0.041666668
      %v6482 = vmul.f32 %v6354, 0.041666668
      %v6483 = vmul.f32 %v6355, 0.041666668
      %v6484 = vmul.f32 %v6356, 0.041666668
      %v6485 = vmul.f32 %v6357, 0.041666668
      %v6486 = vmul.f32 %v6358, 0.041666668
      %v6487 = vmul.f32 %v6359, 0.041666668
      %v6488 = vmul.f32 %v6360, 0.041666668
      %v6489 = vmul.f32 %v6361, 0.041666668
      %v6490 = vmul.f32 %v6362, 0.041666668
      %v6491 = vmul.f32 %v6363, 0.041666668
      %v6492 = vmul.f32 %v6364, 0.041666668
      %v6493 = vmul.f32 %v6365, 0.041666668
      %v6494 = vmul.f32 %v6366, 0.041666668
      %v6495 = vmul.f32 %v6367, 0.041666668
      %v6496 = vmul.f32 %v6368, 0.041666668
      %v6497 = vmul.f32 %v6369, 0.041666668
      %v6498 = vmul.f32 %v6370, 0.041666668
      %v6499 = vmul.f32 %v6371, 0.041666668
      %v6500 = vmul.f32 %v6372, 0.041666668
      %v6501 = vmul.f32 %v6373, 0.041666668
      %v6502 = vmul.f32 %v6374, 0.041666668
      %v6503 = vmul.f32 %v6375, 0.041666668
      %v6504 = vmul.f32 %v6376, 0.041666668
      %v6505 = vmul.f32 %v6377, 0.041666668
      %v6506 = vmul.f32 %v6378, 0.041666668
      %v6507 = vmul.f32 %v6379, 0.041666668
      %v6508 = vmul.f32 %v6380, 0.041666668
      %v6509 = vmul.f32 %v6381, 0.041666668
      %v6510 = vmul.f32 %v6382, 0.041666668
      %v6511 = vmul.f32 %v6383, 0.041666668
      %v6512 = vmul.f32 %v6384, 0.041666668
      %v6513 = vmul.f32 %v6385, 0.041666668
      %v6514 = vmul.f32 %v6386, 0.041666668
      %v6515 = vmul.f32 %v6387, 0.041666668
      %v6516 = vmul.f32 %v6388, 0.041666668
      %v6517 = vmul.f32 %v6389, 0.041666668
      %v6518 = vmul.f32 %v6390, 0.041666668
      %v6519 = vmul.f32 %v6391, 0.041666668
      %v6520 = vmul.f32 %v6392, 0.041666668
      %v6521 = vmul.f32 %v6393, 0.041666668
      %v6522 = vmul.f32 %v6394, 0.041666668
      %v6523 = vmul.f32 %v6395, 0.041666668
      %v6524 = vmul.f32 %v6396, 0.041666668
      %v6525 = vmul.f32 %v6397, 0.041666668
      %v6526 = vmul.f32 %v6398, 0.041666668
      %v6527 = vmul.f32 %v6399, 0.041666668
      %v6528 = vmul.f32 %v6400, 0.041666668
      %v6529 = vmul.f32 %v6401, 0.041666668
      %v6530 = vmul.f32 %v6402, 0.041666668
      %v6531 = vmul.f32 %v6403, 0.041666668
      %v6532 = vmul.f32 %v6404, 0.041666668
      %v6533 = vsub.f32 %v5893, 1.0
      %v6534 = vsub.f32 %v5894, 1.0
      %v6535 = vsub.f32 %v5895, 1.0
      %v6536 = vsub.f32 %v5896, 1.0
      %v6537 = vsub.f32 %v5897, 1.0
      %v6538 = vsub.f32 %v5898, 1.0
      %v6539 = vsub.f32 %v5899, 1.0
      %v6540 = vsub.f32 %v5900, 1.0
      %v6541 = vsub.f32 %v5901, 1.0
      %v6542 = vsub.f32 %v5902, 1.0
      %v6543 = vsub.f32 %v5903, 1.0
      %v6544 = vsub.f32 %v5904, 1.0
      %v6545 = vsub.f32 %v5905, 1.0
      %v6546 = vsub.f32 %v5906, 1.0
      %v6547 = vsub.f32 %v5907, 1.0
      %v6548 = vsub.f32 %v5908, 1.0
      %v6549 = vsub.f32 %v5909, 1.0
      %v6550 = vsub.f32 %v5910, 1.0
      %v6551 = vsub.f32 %v5911, 1.0
      %v6552 = vsub.f32 %v5912, 1.0
      %v6553 = vsub.f32 %v5913, 1.0
      %v6554 = vsub.f32 %v5914, 1.0
      %v6555 = vsub.f32 %v5915, 1.0
      %v6556 = vsub.f32 %v5916, 1.0
      %v6557 = vsub.f32 %v5917, 1.0
      %v6558 = vsub.f32 %v5918, 1.0
      %v6559 = vsub.f32 %v5919, 1.0
      %v6560 = vsub.f32 %v5920, 1.0
      %v6561 = vsub.f32 %v5921, 1.0
      %v6562 = vsub.f32 %v5922, 1.0
      %v6563 = vsub.f32 %v5923, 1.0
      %v6564 = vsub.f32 %v5924, 1.0
      %v6565 = vsub.f32 %v5925, 1.0
      %v6566 = vsub.f32 %v5926, 1.0
      %v6567 = vsub.f32 %v5927, 1.0
      %v6568 = vsub.f32 %v5928, 1.0
      %v6569 = vsub.f32 %v5929, 1.0
      %v6570 = vsub.f32 %v5930, 1.0
      %v6571 = vsub.f32 %v5931, 1.0
      %v6572 = vsub.f32 %v5932, 1.0
      %v6573 = vsub.f32 %v5933, 1.0
      %v6574 = vsub.f32 %v5934, 1.0
      %v6575 = vsub.f32 %v5935, 1.0
      %v6576 = vsub.f32 %v5936, 1.0
      %v6577 = vsub.f32 %v5937, 1.0
      %v6578 = vsub.f32 %v5938, 1.0
      %v6579 = vsub.f32 %v5939, 1.0
      %v6580 = vsub.f32 %v5940, 1.0
      %v6581 = vsub.f32 %v5941, 1.0
      %v6582 = vsub.f32 %v5942, 1.0
      %v6583 = vsub.f32 %v5943, 1.0
      %v6584 = vsub.f32 %v5944, 1.0
      %v6585 = vsub.f32 %v5945, 1.0
      %v6586 = vsub.f32 %v5946, 1.0
      %v6587 = vsub.f32 %v5947, 1.0
      %v6588 = vsub.f32 %v5948, 1.0
      %v6589 = vsub.f32 %v5949, 1.0
      %v6590 = vsub.f32 %v5950, 1.0
      %v6591 = vsub.f32 %v5951, 1.0
      %v6592 = vsub.f32 %v5952, 1.0
      %v6593 = vsub.f32 %v5953, 1.0
      %v6594 = vsub.f32 %v5954, 1.0
      %v6595 = vsub.f32 %v5955, 1.0
      %v6596 = vsub.f32 %v5956, 1.0
      %v6597 = vsub.f32 %v5957, 1.0
      %v6598 = vsub.f32 %v5958, 1.0
      %v6599 = vsub.f32 %v5959, 1.0
      %v6600 = vsub.f32 %v5960, 1.0
      %v6601 = vsub.f32 %v5961, 1.0
      %v6602 = vsub.f32 %v5962, 1.0
      %v6603 = vsub.f32 %v5963, 1.0
      %v6604 = vsub.f32 %v5964, 1.0
      %v6605 = vsub.f32 %v5965, 1.0
      %v6606 = vsub.f32 %v5966, 1.0
      %v6607 = vsub.f32 %v5967, 1.0
      %v6608 = vsub.f32 %v5968, 1.0
      %v6609 = vsub.f32 %v5969, 1.0
      %v6610 = vsub.f32 %v5970, 1.0
      %v6611 = vsub.f32 %v5971, 1.0
      %v6612 = vsub.f32 %v5972, 1.0
      %v6613 = vsub.f32 %v5973, 1.0
      %v6614 = vsub.f32 %v5974, 1.0
      %v6615 = vsub.f32 %v5975, 1.0
      %v6616 = vsub.f32 %v5976, 1.0
      %v6617 = vsub.f32 %v5977, 1.0
      %v6618 = vsub.f32 %v5978, 1.0
      %v6619 = vsub.f32 %v5979, 1.0
      %v6620 = vsub.f32 %v5980, 1.0
      %v6621 = vsub.f32 %v5981, 1.0
      %v6622 = vsub.f32 %v5982, 1.0
      %v6623 = vsub.f32 %v5983, 1.0
      %v6624 = vsub.f32 %v5984, 1.0
      %v6625 = vsub.f32 %v5985, 1.0
      %v6626 = vsub.f32 %v5986, 1.0
      %v6627 = vsub.f32 %v5987, 1.0
      %v6628 = vsub.f32 %v5988, 1.0
      %v6629 = vsub.f32 %v5989, 1.0
      %v6630 = vsub.f32 %v5990, 1.0
      %v6631 = vsub.f32 %v5991, 1.0
      %v6632 = vsub.f32 %v5992, 1.0
      %v6633 = vsub.f32 %v5993, 1.0
      %v6634 = vsub.f32 %v5994, 1.0
      %v6635 = vsub.f32 %v5995, 1.0
      %v6636 = vsub.f32 %v5996, 1.0
      %v6637 = vsub.f32 %v5997, 1.0
      %v6638 = vsub.f32 %v5998, 1.0
      %v6639 = vsub.f32 %v5999, 1.0
      %v6640 = vsub.f32 %v6000, 1.0
      %v6641 = vsub.f32 %v6001, 1.0
      %v6642 = vsub.f32 %v6002, 1.0
      %v6643 = vsub.f32 %v6003, 1.0
      %v6644 = vsub.f32 %v6004, 1.0
      %v6645 = vsub.f32 %v6005, 1.0
      %v6646 = vsub.f32 %v6006, 1.0
      %v6647 = vsub.f32 %v6007, 1.0
      %v6648 = vsub.f32 %v6008, 1.0
      %v6649 = vsub.f32 %v6009, 1.0
      %v6650 = vsub.f32 %v6010, 1.0
      %v6651 = vsub.f32 %v6011, 1.0
      %v6652 = vsub.f32 %v6012, 1.0
      %v6653 = vsub.f32 %v6013, 1.0
      %v6654 = vsub.f32 %v6014, 1.0
      %v6655 = vsub.f32 %v6015, 1.0
      %v6656 = vsub.f32 %v6016, 1.0
      %v6657 = vsub.f32 %v6017, 1.0
      %v6658 = vsub.f32 %v6018, 1.0
      %v6659 = vsub.f32 %v6019, 1.0
      %v6660 = vsub.f32 %v6020, 1.0
      %v6661 = vmax.f32 %v6533, 0.0
      %v6662 = vmax.f32 %v6534, 0.0
      %v6663 = vmax.f32 %v6535, 0.0
      %v6664 = vmax.f32 %v6536, 0.0
      %v6665 = vmax.f32 %v6537, 0.0
      %v6666 = vmax.f32 %v6538, 0.0
      %v6667 = vmax.f32 %v6539, 0.0
      %v6668 = vmax.f32 %v6540, 0.0
      %v6669 = vmax.f32 %v6541, 0.0
      %v6670 = vmax.f32 %v6542, 0.0
      %v6671 = vmax.f32 %v6543, 0.0
      %v6672 = vmax.f32 %v6544, 0.0
      %v6673 = vmax.f32 %v6545, 0.0
      %v6674 = vmax.f32 %v6546, 0.0
      %v6675 = vmax.f32 %v6547, 0.0
      %v6676 = vmax.f32 %v6548, 0.0
      %v6677 = vmax.f32 %v6549, 0.0
      %v6678 = vmax.f32 %v6550, 0.0
      %v6679 = vmax.f32 %v6551, 0.0
      %v6680 = vmax.f32 %v6552, 0.0
      %v6681 = vmax.f32 %v6553, 0.0
      %v6682 = vmax.f32 %v6554, 0.0
      %v6683 = vmax.f32 %v6555, 0.0
      %v6684 = vmax.f32 %v6556, 0.0
      %v6685 = vmax.f32 %v6557, 0.0
      %v6686 = vmax.f32 %v6558, 0.0
      %v6687 = vmax.f32 %v6559, 0.0
      %v6688 = vmax.f32 %v6560, 0.0
      %v6689 = vmax.f32 %v6561, 0.0
      %v6690 = vmax.f32 %v6562, 0.0
      %v6691 = vmax.f32 %v6563, 0.0
      %v6692 = vmax.f32 %v6564, 0.0
      %v6693 = vmax.f32 %v6565, 0.0
      %v6694 = vmax.f32 %v6566, 0.0
      %v6695 = vmax.f32 %v6567, 0.0
      %v6696 = vmax.f32 %v6568, 0.0
      %v6697 = vmax.f32 %v6569, 0.0
      %v6698 = vmax.f32 %v6570, 0.0
      %v6699 = vmax.f32 %v6571, 0.0
      %v6700 = vmax.f32 %v6572, 0.0
      %v6701 = vmax.f32 %v6573, 0.0
      %v6702 = vmax.f32 %v6574, 0.0
      %v6703 = vmax.f32 %v6575, 0.0
      %v6704 = vmax.f32 %v6576, 0.0
      %v6705 = vmax.f32 %v6577, 0.0
      %v6706 = vmax.f32 %v6578, 0.0
      %v6707 = vmax.f32 %v6579, 0.0
      %v6708 = vmax.f32 %v6580, 0.0
      %v6709 = vmax.f32 %v6581, 0.0
      %v6710 = vmax.f32 %v6582, 0.0
      %v6711 = vmax.f32 %v6583, 0.0
      %v6712 = vmax.f32 %v6584, 0.0
      %v6713 = vmax.f32 %v6585, 0.0
      %v6714 = vmax.f32 %v6586, 0.0
      %v6715 = vmax.f32 %v6587, 0.0
      %v6716 = vmax.f32 %v6588, 0.0
      %v6717 = vmax.f32 %v6589, 0.0
      %v6718 = vmax.f32 %v6590, 0.0
      %v6719 = vmax.f32 %v6591, 0.0
      %v6720 = vmax.f32 %v6592, 0.0
      %v6721 = vmax.f32 %v6593, 0.0
      %v6722 = vmax.f32 %v6594, 0.0
      %v6723 = vmax.f32 %v6595, 0.0
      %v6724 = vmax.f32 %v6596, 0.0
      %v6725 = vmax.f32 %v6597, 0.0
      %v6726 = vmax.f32 %v6598, 0.0
      %v6727 = vmax.f32 %v6599, 0.0
      %v6728 = vmax.f32 %v6600, 0.0
      %v6729 = vmax.f32 %v6601, 0.0
      %v6730 = vmax.f32 %v6602, 0.0
      %v6731 = vmax.f32 %v6603, 0.0
      %v6732 = vmax.f32 %v6604, 0.0
      %v6733 = vmax.f32 %v6605, 0.0
      %v6734 = vmax.f32 %v6606, 0.0
      %v6735 = vmax.f32 %v6607, 0.0
      %v6736 = vmax.f32 %v6608, 0.0
      %v6737 = vmax.f32 %v6609, 0.0
      %v6738 = vmax.f32 %v6610, 0.0
      %v6739 = vmax.f32 %v6611, 0.0
      %v6740 = vmax.f32 %v6612, 0.0
      %v6741 = vmax.f32 %v6613, 0.0
      %v6742 = vmax.f32 %v6614, 0.0
      %v6743 = vmax.f32 %v6615, 0.0
      %v6744 = vmax.f32 %v6616, 0.0
      %v6745 = vmax.f32 %v6617, 0.0
      %v6746 = vmax.f32 %v6618, 0.0
      %v6747 = vmax.f32 %v6619, 0.0
      %v6748 = vmax.f32 %v6620, 0.0
      %v6749 = vmax.f32 %v6621, 0.0
      %v6750 = vmax.f32 %v6622, 0.0
      %v6751 = vmax.f32 %v6623, 0.0
      %v6752 = vmax.f32 %v6624, 0.0
      %v6753 = vmax.f32 %v6625, 0.0
      %v6754 = vmax.f32 %v6626, 0.0
      %v6755 = vmax.f32 %v6627, 0.0
      %v6756 = vmax.f32 %v6628, 0.0
      %v6757 = vmax.f32 %v6629, 0.0
      %v6758 = vmax.f32 %v6630, 0.0
      %v6759 = vmax.f32 %v6631, 0.0
      %v6760 = vmax.f32 %v6632, 0.0
      %v6761 = vmax.f32 %v6633, 0.0
      %v6762 = vmax.f32 %v6634, 0.0
      %v6763 = vmax.f32 %v6635, 0.0
      %v6764 = vmax.f32 %v6636, 0.0
      %v6765 = vmax.f32 %v6637, 0.0
      %v6766 = vmax.f32 %v6638, 0.0
      %v6767 = vmax.f32 %v6639, 0.0
      %v6768 = vmax.f32 %v6640, 0.0
      %v6769 = vmax.f32 %v6641, 0.0
      %v6770 = vmax.f32 %v6642, 0.0
      %v6771 = vmax.f32 %v6643, 0.0
      %v6772 = vmax.f32 %v6644, 0.0
      %v6773 = vmax.f32 %v6645, 0.0
      %v6774 = vmax.f32 %v6646, 0.0
      %v6775 = vmax.f32 %v6647, 0.0
      %v6776 = vmax.f32 %v6648, 0.0
      %v6777 = vmax.f32 %v6649, 0.0
      %v6778 = vmax.f32 %v6650, 0.0
      %v6779 = vmax.f32 %v6651, 0.0
      %v6780 = vmax.f32 %v6652, 0.0
      %v6781 = vmax.f32 %v6653, 0.0
      %v6782 = vmax.f32 %v6654, 0.0
      %v6783 = vmax.f32 %v6655, 0.0
      %v6784 = vmax.f32 %v6656, 0.0
      %v6785 = vmax.f32 %v6657, 0.0
      %v6786 = vmax.f32 %v6658, 0.0
      %v6787 = vmax.f32 %v6659, 0.0
      %v6788 = vmax.f32 %v6660, 0.0
      %v6789 = vmul.f32 %v6661, %v6661
      %v6790 = vmul.f32 %v6662, %v6662
      %v6791 = vmul.f32 %v6663, %v6663
      %v6792 = vmul.f32 %v6664, %v6664
      %v6793 = vmul.f32 %v6665, %v6665
      %v6794 = vmul.f32 %v6666, %v6666
      %v6795 = vmul.f32 %v6667, %v6667
      %v6796 = vmul.f32 %v6668, %v6668
      %v6797 = vmul.f32 %v6669, %v6669
      %v6798 = vmul.f32 %v6670, %v6670
      %v6799 = vmul.f32 %v6671, %v6671
      %v6800 = vmul.f32 %v6672, %v6672
      %v6801 = vmul.f32 %v6673, %v6673
      %v6802 = vmul.f32 %v6674, %v6674
      %v6803 = vmul.f32 %v6675, %v6675
      %v6804 = vmul.f32 %v6676, %v6676
      %v6805 = vmul.f32 %v6677, %v6677
      %v6806 = vmul.f32 %v6678, %v6678
      %v6807 = vmul.f32 %v6679, %v6679
      %v6808 = vmul.f32 %v6680, %v6680
      %v6809 = vmul.f32 %v6681, %v6681
      %v6810 = vmul.f32 %v6682, %v6682
      %v6811 = vmul.f32 %v6683, %v6683
      %v6812 = vmul.f32 %v6684, %v6684
      %v6813 = vmul.f32 %v6685, %v6685
      %v6814 = vmul.f32 %v6686, %v6686
      %v6815 = vmul.f32 %v6687, %v6687
      %v6816 = vmul.f32 %v6688, %v6688
      %v6817 = vmul.f32 %v6689, %v6689
      %v6818 = vmul.f32 %v6690, %v6690
      %v6819 = vmul.f32 %v6691, %v6691
      %v6820 = vmul.f32 %v6692, %v6692
      %v6821 = vmul.f32 %v6693, %v6693
      %v6822 = vmul.f32 %v6694, %v6694
      %v6823 = vmul.f32 %v6695, %v6695
      %v6824 = vmul.f32 %v6696, %v6696
      %v6825 = vmul.f32 %v6697, %v6697
      %v6826 = vmul.f32 %v6698, %v6698
      %v6827 = vmul.f32 %v6699, %v6699
      %v6828 = vmul.f32 %v6700, %v6700
      %v6829 = vmul.f32 %v6701, %v6701
      %v6830 = vmul.f32 %v6702, %v6702
      %v6831 = vmul.f32 %v6703, %v6703
      %v6832 = vmul.f32 %v6704, %v6704
      %v6833 = vmul.f32 %v6705, %v6705
      %v6834 = vmul.f32 %v6706, %v6706
      %v6835 = vmul.f32 %v6707, %v6707
      %v6836 = vmul.f32 %v6708, %v6708
      %v6837 = vmul.f32 %v6709, %v6709
      %v6838 = vmul.f32 %v6710, %v6710
      %v6839 = vmul.f32 %v6711, %v6711
      %v6840 = vmul.f32 %v6712, %v6712
      %v6841 = vmul.f32 %v6713, %v6713
      %v6842 = vmul.f32 %v6714, %v6714
      %v6843 = vmul.f32 %v6715, %v6715
      %v6844 = vmul.f32 %v6716, %v6716
      %v6845 = vmul.f32 %v6717, %v6717
      %v6846 = vmul.f32 %v6718, %v6718
      %v6847 = vmul.f32 %v6719, %v6719
      %v6848 = vmul.f32 %v6720, %v6720
      %v6849 = vmul.f32 %v6721, %v6721
      %v6850 = vmul.f32 %v6722, %v6722
      %v6851 = vmul.f32 %v6723, %v6723
      %v6852 = vmul.f32 %v6724, %v6724
      %v6853 = vmul.f32 %v6725, %v6725
      %v6854 = vmul.f32 %v6726, %v6726
      %v6855 = vmul.f32 %v6727, %v6727
      %v6856 = vmul.f32 %v6728, %v6728
      %v6857 = vmul.f32 %v6729, %v6729
      %v6858 = vmul.f32 %v6730, %v6730
      %v6859 = vmul.f32 %v6731, %v6731
      %v6860 = vmul.f32 %v6732, %v6732
      %v6861 = vmul.f32 %v6733, %v6733
      %v6862 = vmul.f32 %v6734, %v6734
      %v6863 = vmul.f32 %v6735, %v6735
      %v6864 = vmul.f32 %v6736, %v6736
      %v6865 = vmul.f32 %v6737, %v6737
      %v6866 = vmul.f32 %v6738, %v6738
      %v6867 = vmul.f32 %v6739, %v6739
      %v6868 = vmul.f32 %v6740, %v6740
      %v6869 = vmul.f32 %v6741, %v6741
      %v6870 = vmul.f32 %v6742, %v6742
      %v6871 = vmul.f32 %v6743, %v6743
      %v6872 = vmul.f32 %v6744, %v6744
      %v6873 = vmul.f32 %v6745, %v6745
      %v6874 = vmul.f32 %v6746, %v6746
      %v6875 = vmul.f32 %v6747, %v6747
      %v6876 = vmul.f32 %v6748, %v6748
      %v6877 = vmul.f32 %v6749, %v6749
      %v6878 = vmul.f32 %v6750, %v6750
      %v6879 = vmul.f32 %v6751, %v6751
      %v6880 = vmul.f32 %v6752, %v6752
      %v6881 = vmul.f32 %v6753, %v6753
      %v6882 = vmul.f32 %v6754, %v6754
      %v6883 = vmul.f32 %v6755, %v6755
      %v6884 = vmul.f32 %v6756, %v6756
      %v6885 = vmul.f32 %v6757, %v6757
      %v6886 = vmul.f32 %v6758, %v6758
      %v6887 = vmul.f32 %v6759, %v6759
      %v6888 = vmul.f32 %v6760, %v6760
      %v6889 = vmul.f32 %v6761, %v6761
      %v6890 = vmul.f32 %v6762, %v6762
      %v6891 = vmul.f32 %v6763, %v6763
      %v6892 = vmul.f32 %v6764, %v6764
      %v6893 = vmul.f32 %v6765, %v6765
      %v6894 = vmul.f32 %v6766, %v6766
      %v6895 = vmul.f32 %v6767, %v6767
      %v6896 = vmul.f32 %v6768, %v6768
      %v6897 = vmul.f32 %v6769, %v6769
      %v6898 = vmul.f32 %v6770, %v6770
      %v6899 = vmul.f32 %v6771, %v6771
      %v6900 = vmul.f32 %v6772, %v6772
      %v6901 = vmul.f32 %v6773, %v6773
      %v6902 = vmul.f32 %v6774, %v6774
      %v6903 = vmul.f32 %v6775, %v6775
      %v6904 = vmul.f32 %v6776, %v6776
      %v6905 = vmul.f32 %v6777, %v6777
      %v6906 = vmul.f32 %v6778, %v6778
      %v6907 = vmul.f32 %v6779, %v6779
      %v6908 = vmul.f32 %v6780, %v6780
      %v6909 = vmul.f32 %v6781, %v6781
      %v6910 = vmul.f32 %v6782, %v6782
      %v6911 = vmul.f32 %v6783, %v6783
      %v6912 = vmul.f32 %v6784, %v6784
      %v6913 = vmul.f32 %v6785, %v6785
      %v6914 = vmul.f32 %v6786, %v6786
      %v6915 = vmul.f32 %v6787, %v6787
      %v6916 = vmul.f32 %v6788, %v6788
      %v6917 = vmul.f32 %v6789, %v6789
      %v6918 = vmul.f32 %v6790, %v6790
      %v6919 = vmul.f32 %v6791, %v6791
      %v6920 = vmul.f32 %v6792, %v6792
      %v6921 = vmul.f32 %v6793, %v6793
      %v6922 = vmul.f32 %v6794, %v6794
      %v6923 = vmul.f32 %v6795, %v6795
      %v6924 = vmul.f32 %v6796, %v6796
      %v6925 = vmul.f32 %v6797, %v6797
      %v6926 = vmul.f32 %v6798, %v6798
      %v6927 = vmul.f32 %v6799, %v6799
      %v6928 = vmul.f32 %v6800, %v6800
      %v6929 = vmul.f32 %v6801, %v6801
      %v6930 = vmul.f32 %v6802, %v6802
      %v6931 = vmul.f32 %v6803, %v6803
      %v6932 = vmul.f32 %v6804, %v6804
      %v6933 = vmul.f32 %v6805, %v6805
      %v6934 = vmul.f32 %v6806, %v6806
      %v6935 = vmul.f32 %v6807, %v6807
      %v6936 = vmul.f32 %v6808, %v6808
      %v6937 = vmul.f32 %v6809, %v6809
      %v6938 = vmul.f32 %v6810, %v6810
      %v6939 = vmul.f32 %v6811, %v6811
      %v6940 = vmul.f32 %v6812, %v6812
      %v6941 = vmul.f32 %v6813, %v6813
      %v6942 = vmul.f32 %v6814, %v6814
      %v6943 = vmul.f32 %v6815, %v6815
      %v6944 = vmul.f32 %v6816, %v6816
      %v6945 = vmul.f32 %v6817, %v6817
      %v6946 = vmul.f32 %v6818, %v6818
      %v6947 = vmul.f32 %v6819, %v6819
      %v6948 = vmul.f32 %v6820, %v6820
      %v6949 = vmul.f32 %v6821, %v6821
      %v6950 = vmul.f32 %v6822, %v6822
      %v6951 = vmul.f32 %v6823, %v6823
      %v6952 = vmul.f32 %v6824, %v6824
      %v6953 = vmul.f32 %v6825, %v6825
      %v6954 = vmul.f32 %v6826, %v6826
      %v6955 = vmul.f32 %v6827, %v6827
      %v6956 = vmul.f32 %v6828, %v6828
      %v6957 = vmul.f32 %v6829, %v6829
      %v6958 = vmul.f32 %v6830, %v6830
      %v6959 = vmul.f32 %v6831, %v6831
      %v6960 = vmul.f32 %v6832, %v6832
      %v6961 = vmul.f32 %v6833, %v6833
      %v6962 = vmul.f32 %v6834, %v6834
      %v6963 = vmul.f32 %v6835, %v6835
      %v6964 = vmul.f32 %v6836, %v6836
      %v6965 = vmul.f32 %v6837, %v6837
      %v6966 = vmul.f32 %v6838, %v6838
      %v6967 = vmul.f32 %v6839, %v6839
      %v6968 = vmul.f32 %v6840, %v6840
      %v6969 = vmul.f32 %v6841, %v6841
      %v6970 = vmul.f32 %v6842, %v6842
      %v6971 = vmul.f32 %v6843, %v6843
      %v6972 = vmul.f32 %v6844, %v6844
      %v6973 = vmul.f32 %v6845, %v6845
      %v6974 = vmul.f32 %v6846, %v6846
      %v6975 = vmul.f32 %v6847, %v6847
      %v6976 = vmul.f32 %v6848, %v6848
      %v6977 = vmul.f32 %v6849, %v6849
      %v6978 = vmul.f32 %v6850, %v6850
      %v6979 = vmul.f32 %v6851, %v6851
      %v6980 = vmul.f32 %v6852, %v6852
      %v6981 = vmul.f32 %v6853, %v6853
      %v6982 = vmul.f32 %v6854, %v6854
      %v6983 = vmul.f32 %v6855, %v6855
      %v6984 = vmul.f32 %v6856, %v6856
      %v6985 = vmul.f32 %v6857, %v6857
      %v6986 = vmul.f32 %v6858, %v6858
      %v6987 = vmul.f32 %v6859, %v6859
      %v6988 = vmul.f32 %v6860, %v6860
      %v6989 = vmul.f32 %v6861, %v6861
      %v6990 = vmul.f32 %v6862, %v6862
      %v6991 = vmul.f32 %v6863, %v6863
      %v6992 = vmul.f32 %v6864, %v6864
      %v6993 = vmul.f32 %v6865, %v6865
      %v6994 = vmul.f32 %v6866, %v6866
      %v6995 = vmul.f32 %v6867, %v6867
      %v6996 = vmul.f32 %v6868, %v6868
      %v6997 = vmul.f32 %v6869, %v6869
      %v6998 = vmul.f32 %v6870, %v6870
      %v6999 = vmul.f32 %v6871, %v6871
      %v7000 = vmul.f32 %v6872, %v6872
      %v7001 = vmul.f32 %v6873, %v6873
      %v7002 = vmul.f32 %v6874, %v6874
      %v7003 = vmul.f32 %v6875, %v6875
      %v7004 = vmul.f32 %v6876, %v6876
      %v7005 = vmul.f32 %v6877, %v6877
      %v7006 = vmul.f32 %v6878, %v6878
      %v7007 = vmul.f32 %v6879, %v6879
      %v7008 = vmul.f32 %v6880, %v6880
      %v7009 = vmul.f32 %v6881, %v6881
      %v7010 = vmul.f32 %v6882, %v6882
      %v7011 = vmul.f32 %v6883, %v6883
      %v7012 = vmul.f32 %v6884, %v6884
      %v7013 = vmul.f32 %v6885, %v6885
      %v7014 = vmul.f32 %v6886, %v6886
      %v7015 = vmul.f32 %v6887, %v6887
      %v7016 = vmul.f32 %v6888, %v6888
      %v7017 = vmul.f32 %v6889, %v6889
      %v7018 = vmul.f32 %v6890, %v6890
      %v7019 = vmul.f32 %v6891, %v6891
      %v7020 = vmul.f32 %v6892, %v6892
      %v7021 = vmul.f32 %v6893, %v6893
      %v7022 = vmul.f32 %v6894, %v6894
      %v7023 = vmul.f32 %v6895, %v6895
      %v7024 = vmul.f32 %v6896, %v6896
      %v7025 = vmul.f32 %v6897, %v6897
      %v7026 = vmul.f32 %v6898, %v6898
      %v7027 = vmul.f32 %v6899, %v6899
      %v7028 = vmul.f32 %v6900, %v6900
      %v7029 = vmul.f32 %v6901, %v6901
      %v7030 = vmul.f32 %v6902, %v6902
      %v7031 = vmul.f32 %v6903, %v6903
      %v7032 = vmul.f32 %v6904, %v6904
      %v7033 = vmul.f32 %v6905, %v6905
      %v7034 = vmul.f32 %v6906, %v6906
      %v7035 = vmul.f32 %v6907, %v6907
      %v7036 = vmul.f32 %v6908, %v6908
      %v7037 = vmul.f32 %v6909, %v6909
      %v7038 = vmul.f32 %v6910, %v6910
      %v7039 = vmul.f32 %v6911, %v6911
      %v7040 = vmul.f32 %v6912, %v6912
      %v7041 = vmul.f32 %v6913, %v6913
      %v7042 = vmul.f32 %v6914, %v6914
      %v7043 = vmul.f32 %v6915, %v6915
      %v7044 = vmul.f32 %v6916, %v6916
      %v7045 = vmul.f32 %v6917, -0.20833333
      %v7046 = vmul.f32 %v6918, -0.20833333
      %v7047 = vmul.f32 %v6919, -0.20833333
      %v7048 = vmul.f32 %v6920, -0.20833333
      %v7049 = vmul.f32 %v6921, -0.20833333
      %v7050 = vmul.f32 %v6922, -0.20833333
      %v7051 = vmul.f32 %v6923, -0.20833333
      %v7052 = vmul.f32 %v6924, -0.20833333
      %v7053 = vmul.f32 %v6925, -0.20833333
      %v7054 = vmul.f32 %v6926, -0.20833333
      %v7055 = vmul.f32 %v6927, -0.20833333
      %v7056 = vmul.f32 %v6928, -0.20833333
      %v7057 = vmul.f32 %v6929, -0.20833333
      %v7058 = vmul.f32 %v6930, -0.20833333
      %v7059 = vmul.f32 %v6931, -0.20833333
      %v7060 = vmul.f32 %v6932, -0.20833333
      %v7061 = vmul.f32 %v6933, -0.20833333
      %v7062 = vmul.f32 %v6934, -0.20833333
      %v7063 = vmul.f32 %v6935, -0.20833333
      %v7064 = vmul.f32 %v6936, -0.20833333
      %v7065 = vmul.f32 %v6937, -0.20833333
      %v7066 = vmul.f32 %v6938, -0.20833333
      %v7067 = vmul.f32 %v6939, -0.20833333
      %v7068 = vmul.f32 %v6940, -0.20833333
      %v7069 = vmul.f32 %v6941, -0.20833333
      %v7070 = vmul.f32 %v6942, -0.20833333
      %v7071 = vmul.f32 %v6943, -0.20833333
      %v7072 = vmul.f32 %v6944, -0.20833333
      %v7073 = vmul.f32 %v6945, -0.20833333
      %v7074 = vmul.f32 %v6946, -0.20833333
      %v7075 = vmul.f32 %v6947, -0.20833333
      %v7076 = vmul.f32 %v6948, -0.20833333
      %v7077 = vmul.f32 %v6949, -0.20833333
      %v7078 = vmul.f32 %v6950, -0.20833333
      %v7079 = vmul.f32 %v6951, -0.20833333
      %v7080 = vmul.f32 %v6952, -0.20833333
      %v7081 = vmul.f32 %v6953, -0.20833333
      %v7082 = vmul.f32 %v6954, -0.20833333
      %v7083 = vmul.f32 %v6955, -0.20833333
      %v7084 = vmul.f32 %v6956, -0.20833333
      %v7085 = vmul.f32 %v6957, -0.20833333
      %v7086 = vmul.f32 %v6958, -0.20833333
      %v7087 = vmul.f32 %v6959, -0.20833333
      %v7088 = vmul.f32 %v6960, -0.20833333
      %v7089 = vmul.f32 %v6961, -0.20833333
      %v7090 = vmul.f32 %v6962, -0.20833333
      %v7091 = vmul.f32 %v6963, -0.20833333
      %v7092 = vmul.f32 %v6964, -0.20833333
      %v7093 = vmul.f32 %v6965, -0.20833333
      %v7094 = vmul.f32 %v6966, -0.20833333
      %v7095 = vmul.f32 %v6967, -0.20833333
      %v7096 = vmul.f32 %v6968, -0.20833333
      %v7097 = vmul.f32 %v6969, -0.20833333
      %v7098 = vmul.f32 %v6970, -0.20833333
      %v7099 = vmul.f32 %v6971, -0.20833333
      %v7100 = vmul.f32 %v6972, -0.20833333
      %v7101 = vmul.f32 %v6973, -0.20833333
      %v7102 = vmul.f32 %v6974, -0.20833333
      %v7103 = vmul.f32 %v6975, -0.20833333
      %v7104 = vmul.f32 %v6976, -0.20833333
      %v7105 = vmul.f32 %v6977, -0.20833333
      %v7106 = vmul.f32 %v6978, -0.20833333
      %v7107 = vmul.f32 %v6979, -0.20833333
      %v7108 = vmul.f32 %v6980, -0.20833333
      %v7109 = vmul.f32 %v6981, -0.20833333
      %v7110 = vmul.f32 %v6982, -0.20833333
      %v7111 = vmul.f32 %v6983, -0.20833333
      %v7112 = vmul.f32 %v6984, -0.20833333
      %v7113 = vmul.f32 %v6985, -0.20833333
      %v7114 = vmul.f32 %v6986, -0.20833333
      %v7115 = vmul.f32 %v6987, -0.20833333
      %v7116 = vmul.f32 %v6988, -0.20833333
      %v7117 = vmul.f32 %v6989, -0.20833333
      %v7118 = vmul.f32 %v6990, -0.20833333
      %v7119 = vmul.f32 %v6991, -0.20833333
      %v7120 = vmul.f32 %v6992, -0.20833333
      %v7121 = vmul.f32 %v6993, -0.20833333
      %v7122 = vmul.f32 %v6994, -0.20833333
      %v7123 = vmul.f32 %v6995, -0.20833333
      %v7124 = vmul.f32 %v6996, -0.20833333
      %v7125 = vmul.f32 %v6997, -0.20833333
      %v7126 = vmul.f32 %v6998, -0.20833333
      %v7127 = vmul.f32 %v6999, -0.20833333
      %v7128 = vmul.f32 %v7000, -0.20833333
      %v7129 = vmul.f32 %v7001, -0.20833333
      %v7130 = vmul.f32 %v7002, -0.20833333
      %v7131 = vmul.f32 %v7003, -0.20833333
      %v7132 = vmul.f32 %v7004, -0.20833333
      %v7133 = vmul.f32 %v7005, -0.20833333
      %v7134 = vmul.f32 %v7006, -0.20833333
      %v7135 = vmul.f32 %v7007, -0.20833333
      %v7136 = vmul.f32 %v7008, -0.20833333
      %v7137 = vmul.f32 %v7009, -0.20833333
      %v7138 = vmul.f32 %v7010, -0.20833333
      %v7139 = vmul.f32 %v7011, -0.20833333
      %v7140 = vmul.f32 %v7012, -0.20833333
      %v7141 = vmul.f32 %v7013, -0.20833333
      %v7142 = vmul.f32 %v7014, -0.20833333
      %v7143 = vmul.f32 %v7015, -0.20833333
      %v7144 = vmul.f32 %v7016, -0.20833333
      %v7145 = vmul.f32 %v7017, -0.20833333
      %v7146 = vmul.f32 %v7018, -0.20833333
      %v7147 = vmul.f32 %v7019, -0.20833333
      %v7148 = vmul.f32 %v7020, -0.20833333
      %v7149 = vmul.f32 %v7021, -0.20833333
      %v7150 = vmul.f32 %v7022, -0.20833333
      %v7151 = vmul.f32 %v7023, -0.20833333
      %v7152 = vmul.f32 %v7024, -0.20833333
      %v7153 = vmul.f32 %v7025, -0.20833333
      %v7154 = vmul.f32 %v7026, -0.20833333
      %v7155 = vmul.f32 %v7027, -0.20833333
      %v7156 = vmul.f32 %v7028, -0.20833333
      %v7157 = vmul.f32 %v7029, -0.20833333
      %v7158 = vmul.f32 %v7030, -0.20833333
      %v7159 = vmul.f32 %v7031, -0.20833333
      %v7160 = vmul.f32 %v7032, -0.20833333
      %v7161 = vmul.f32 %v7033, -0.20833333
      %v7162 = vmul.f32 %v7034, -0.20833333
      %v7163 = vmul.f32 %v7035, -0.20833333
      %v7164 = vmul.f32 %v7036, -0.20833333
      %v7165 = vmul.f32 %v7037, -0.20833333
      %v7166 = vmul.f32 %v7038, -0.20833333
      %v7167 = vmul.f32 %v7039, -0.20833333
      %v7168 = vmul.f32 %v7040, -0.20833333
      %v7169 = vmul.f32 %v7041, -0.20833333
      %v7170 = vmul.f32 %v7042, -0.20833333
      %v7171 = vmul.f32 %v7043, -0.20833333
      %v7172 = vmul.f32 %v7044, -0.20833333
      %v7173 = vadd.f32 %v6405, %v7045
      %v7174 = vadd.f32 %v6406, %v7046
      %v7175 = vadd.f32 %v6407, %v7047
      %v7176 = vadd.f32 %v6408, %v7048
      %v7177 = vadd.f32 %v6409, %v7049
      %v7178 = vadd.f32 %v6410, %v7050
      %v7179 = vadd.f32 %v6411, %v7051
      %v7180 = vadd.f32 %v6412, %v7052
      %v7181 = vadd.f32 %v6413, %v7053
      %v7182 = vadd.f32 %v6414, %v7054
      %v7183 = vadd.f32 %v6415, %v7055
      %v7184 = vadd.f32 %v6416, %v7056
      %v7185 = vadd.f32 %v6417, %v7057
      %v7186 = vadd.f32 %v6418, %v7058
      %v7187 = vadd.f32 %v6419, %v7059
      %v7188 = vadd.f32 %v6420, %v7060
      %v7189 = vadd.f32 %v6421, %v7061
      %v7190 = vadd.f32 %v6422, %v7062
      %v7191 = vadd.f32 %v6423, %v7063
      %v7192 = vadd.f32 %v6424, %v7064
      %v7193 = vadd.f32 %v6425, %v7065
      %v7194 = vadd.f32 %v6426, %v7066
      %v7195 = vadd.f32 %v6427, %v7067
      %v7196 = vadd.f32 %v6428, %v7068
      %v7197 = vadd.f32 %v6429, %v7069
      %v7198 = vadd.f32 %v6430, %v7070
      %v7199 = vadd.f32 %v6431, %v7071
      %v7200 = vadd.f32 %v6432, %v7072
      %v7201 = vadd.f32 %v6433, %v7073
      %v7202 = vadd.f32 %v6434, %v7074
      %v7203 = vadd.f32 %v6435, %v7075
      %v7204 = vadd.f32 %v6436, %v7076
      %v7205 = vadd.f32 %v6437, %v7077
      %v7206 = vadd.f32 %v6438, %v7078
      %v7207 = vadd.f32 %v6439, %v7079
      %v7208 = vadd.f32 %v6440, %v7080
      %v7209 = vadd.f32 %v6441, %v7081
      %v7210 = vadd.f32 %v6442, %v7082
      %v7211 = vadd.f32 %v6443, %v7083
      %v7212 = vadd.f32 %v6444, %v7084
      %v7213 = vadd.f32 %v6445, %v7085
      %v7214 = vadd.f32 %v6446, %v7086
      %v7215 = vadd.f32 %v6447, %v7087
      %v7216 = vadd.f32 %v6448, %v7088
      %v7217 = vadd.f32 %v6449, %v7089
      %v7218 = vadd.f32 %v6450, %v7090
      %v7219 = vadd.f32 %v6451, %v7091
      %v7220 = vadd.f32 %v6452, %v7092
      %v7221 = vadd.f32 %v6453, %v7093
      %v7222 = vadd.f32 %v6454, %v7094
      %v7223 = vadd.f32 %v6455, %v7095
      %v7224 = vadd.f32 %v6456, %v7096
      %v7225 = vadd.f32 %v6457, %v7097
      %v7226 = vadd.f32 %v6458, %v7098
      %v7227 = vadd.f32 %v6459, %v7099
      %v7228 = vadd.f32 %v6460, %v7100
      %v7229 = vadd.f32 %v6461, %v7101
      %v7230 = vadd.f32 %v6462, %v7102
      %v7231 = vadd.f32 %v6463, %v7103
      %v7232 = vadd.f32 %v6464, %v7104
      %v7233 = vadd.f32 %v6465, %v7105
      %v7234 = vadd.f32 %v6466, %v7106
      %v7235 = vadd.f32 %v6467, %v7107
      %v7236 = vadd.f32 %v6468, %v7108
      %v7237 = vadd.f32 %v6469, %v7109
      %v7238 = vadd.f32 %v6470, %v7110
      %v7239 = vadd.f32 %v6471, %v7111
      %v7240 = vadd.f32 %v6472, %v7112
      %v7241 = vadd.f32 %v6473, %v7113
      %v7242 = vadd.f32 %v6474, %v7114
      %v7243 = vadd.f32 %v6475, %v7115
      %v7244 = vadd.f32 %v6476, %v7116
      %v7245 = vadd.f32 %v6477, %v7117
      %v7246 = vadd.f32 %v6478, %v7118
      %v7247 = vadd.f32 %v6479, %v7119
      %v7248 = vadd.f32 %v6480, %v7120
      %v7249 = vadd.f32 %v6481, %v7121
      %v7250 = vadd.f32 %v6482, %v7122
      %v7251 = vadd.f32 %v6483, %v7123
      %v7252 = vadd.f32 %v6484, %v7124
      %v7253 = vadd.f32 %v6485, %v7125
      %v7254 = vadd.f32 %v6486, %v7126
      %v7255 = vadd.f32 %v6487, %v7127
      %v7256 = vadd.f32 %v6488, %v7128
      %v7257 = vadd.f32 %v6489, %v7129
      %v7258 = vadd.f32 %v6490, %v7130
      %v7259 = vadd.f32 %v6491, %v7131
      %v7260 = vadd.f32 %v6492, %v7132
      %v7261 = vadd.f32 %v6493, %v7133
      %v7262 = vadd.f32 %v6494, %v7134
      %v7263 = vadd.f32 %v6495, %v7135
      %v7264 = vadd.f32 %v6496, %v7136
      %v7265 = vadd.f32 %v6497, %v7137
      %v7266 = vadd.f32 %v6498, %v7138
      %v7267 = vadd.f32 %v6499, %v7139
      %v7268 = vadd.f32 %v6500, %v7140
      %v7269 = vadd.f32 %v6501, %v7141
      %v7270 = vadd.f32 %v6502, %v7142
      %v7271 = vadd.f32 %v6503, %v7143
      %v7272 = vadd.f32 %v6504, %v7144
      %v7273 = vadd.f32 %v6505, %v7145
      %v7274 = vadd.f32 %v6506, %v7146
      %v7275 = vadd.f32 %v6507, %v7147
      %v7276 = vadd.f32 %v6508, %v7148
      %v7277 = vadd.f32 %v6509, %v7149
      %v7278 = vadd.f32 %v6510, %v7150
      %v7279 = vadd.f32 %v6511, %v7151
      %v7280 = vadd.f32 %v6512, %v7152
      %v7281 = vadd.f32 %v6513, %v7153
      %v7282 = vadd.f32 %v6514, %v7154
      %v7283 = vadd.f32 %v6515, %v7155
      %v7284 = vadd.f32 %v6516, %v7156
      %v7285 = vadd.f32 %v6517, %v7157
      %v7286 = vadd.f32 %v6518, %v7158
      %v7287 = vadd.f32 %v6519, %v7159
      %v7288 = vadd.f32 %v6520, %v7160
      %v7289 = vadd.f32 %v6521, %v7161
      %v7290 = vadd.f32 %v6522, %v7162
      %v7291 = vadd.f32 %v6523, %v7163
      %v7292 = vadd.f32 %v6524, %v7164
      %v7293 = vadd.f32 %v6525, %v7165
      %v7294 = vadd.f32 %v6526, %v7166
      %v7295 = vadd.f32 %v6527, %v7167
      %v7296 = vadd.f32 %v6528, %v7168
      %v7297 = vadd.f32 %v6529, %v7169
      %v7298 = vadd.f32 %v6530, %v7170
      %v7299 = vadd.f32 %v6531, %v7171
      %v7300 = vadd.f32 %v6532, %v7172
      %v7301 = vsub.f32 %v5893, 2.0
      %v7302 = vsub.f32 %v5894, 2.0
      %v7303 = vsub.f32 %v5895, 2.0
      %v7304 = vsub.f32 %v5896, 2.0
      %v7305 = vsub.f32 %v5897, 2.0
      %v7306 = vsub.f32 %v5898, 2.0
      %v7307 = vsub.f32 %v5899, 2.0
      %v7308 = vsub.f32 %v5900, 2.0
      %v7309 = vsub.f32 %v5901, 2.0
      %v7310 = vsub.f32 %v5902, 2.0
      %v7311 = vsub.f32 %v5903, 2.0
      %v7312 = vsub.f32 %v5904, 2.0
      %v7313 = vsub.f32 %v5905, 2.0
      %v7314 = vsub.f32 %v5906, 2.0
      %v7315 = vsub.f32 %v5907, 2.0
      %v7316 = vsub.f32 %v5908, 2.0
      %v7317 = vsub.f32 %v5909, 2.0
      %v7318 = vsub.f32 %v5910, 2.0
      %v7319 = vsub.f32 %v5911, 2.0
      %v7320 = vsub.f32 %v5912, 2.0
      %v7321 = vsub.f32 %v5913, 2.0
      %v7322 = vsub.f32 %v5914, 2.0
      %v7323 = vsub.f32 %v5915, 2.0
      %v7324 = vsub.f32 %v5916, 2.0
      %v7325 = vsub.f32 %v5917, 2.0
      %v7326 = vsub.f32 %v5918, 2.0
      %v7327 = vsub.f32 %v5919, 2.0
      %v7328 = vsub.f32 %v5920, 2.0
      %v7329 = vsub.f32 %v5921, 2.0
      %v7330 = vsub.f32 %v5922, 2.0
      %v7331 = vsub.f32 %v5923, 2.0
      %v7332 = vsub.f32 %v5924, 2.0
      %v7333 = vsub.f32 %v5925, 2.0
      %v7334 = vsub.f32 %v5926, 2.0
      %v7335 = vsub.f32 %v5927, 2.0
      %v7336 = vsub.f32 %v5928, 2.0
      %v7337 = vsub.f32 %v5929, 2.0
      %v7338 = vsub.f32 %v5930, 2.0
      %v7339 = vsub.f32 %v5931, 2.0
      %v7340 = vsub.f32 %v5932, 2.0
      %v7341 = vsub.f32 %v5933, 2.0
      %v7342 = vsub.f32 %v5934, 2.0
      %v7343 = vsub.f32 %v5935, 2.0
      %v7344 = vsub.f32 %v5936, 2.0
      %v7345 = vsub.f32 %v5937, 2.0
      %v7346 = vsub.f32 %v5938, 2.0
      %v7347 = vsub.f32 %v5939, 2.0
      %v7348 = vsub.f32 %v5940, 2.0
      %v7349 = vsub.f32 %v5941, 2.0
      %v7350 = vsub.f32 %v5942, 2.0
      %v7351 = vsub.f32 %v5943, 2.0
      %v7352 = vsub.f32 %v5944, 2.0
      %v7353 = vsub.f32 %v5945, 2.0
      %v7354 = vsub.f32 %v5946, 2.0
      %v7355 = vsub.f32 %v5947, 2.0
      %v7356 = vsub.f32 %v5948, 2.0
      %v7357 = vsub.f32 %v5949, 2.0
      %v7358 = vsub.f32 %v5950, 2.0
      %v7359 = vsub.f32 %v5951, 2.0
      %v7360 = vsub.f32 %v5952, 2.0
      %v7361 = vsub.f32 %v5953, 2.0
      %v7362 = vsub.f32 %v5954, 2.0
      %v7363 = vsub.f32 %v5955, 2.0
      %v7364 = vsub.f32 %v5956, 2.0
      %v7365 = vsub.f32 %v5957, 2.0
      %v7366 = vsub.f32 %v5958, 2.0
      %v7367 = vsub.f32 %v5959, 2.0
      %v7368 = vsub.f32 %v5960, 2.0
      %v7369 = vsub.f32 %v5961, 2.0
      %v7370 = vsub.f32 %v5962, 2.0
      %v7371 = vsub.f32 %v5963, 2.0
      %v7372 = vsub.f32 %v5964, 2.0
      %v7373 = vsub.f32 %v5965, 2.0
      %v7374 = vsub.f32 %v5966, 2.0
      %v7375 = vsub.f32 %v5967, 2.0
      %v7376 = vsub.f32 %v5968, 2.0
      %v7377 = vsub.f32 %v5969, 2.0
      %v7378 = vsub.f32 %v5970, 2.0
      %v7379 = vsub.f32 %v5971, 2.0
      %v7380 = vsub.f32 %v5972, 2.0
      %v7381 = vsub.f32 %v5973, 2.0
      %v7382 = vsub.f32 %v5974, 2.0
      %v7383 = vsub.f32 %v5975, 2.0
      %v7384 = vsub.f32 %v5976, 2.0
      %v7385 = vsub.f32 %v5977, 2.0
      %v7386 = vsub.f32 %v5978, 2.0
      %v7387 = vsub.f32 %v5979, 2.0
      %v7388 = vsub.f32 %v5980, 2.0
      %v7389 = vsub.f32 %v5981, 2.0
      %v7390 = vsub.f32 %v5982, 2.0
      %v7391 = vsub.f32 %v5983, 2.0
      %v7392 = vsub.f32 %v5984, 2.0
      %v7393 = vsub.f32 %v5985, 2.0
      %v7394 = vsub.f32 %v5986, 2.0
      %v7395 = vsub.f32 %v5987, 2.0
      %v7396 = vsub.f32 %v5988, 2.0
      %v7397 = vsub.f32 %v5989, 2.0
      %v7398 = vsub.f32 %v5990, 2.0
      %v7399 = vsub.f32 %v5991, 2.0
      %v7400 = vsub.f32 %v5992, 2.0
      %v7401 = vsub.f32 %v5993, 2.0
      %v7402 = vsub.f32 %v5994, 2.0
      %v7403 = vsub.f32 %v5995, 2.0
      %v7404 = vsub.f32 %v5996, 2.0
      %v7405 = vsub.f32 %v5997, 2.0
      %v7406 = vsub.f32 %v5998, 2.0
      %v7407 = vsub.f32 %v5999, 2.0
      %v7408 = vsub.f32 %v6000, 2.0
      %v7409 = vsub.f32 %v6001, 2.0
      %v7410 = vsub.f32 %v6002, 2.0
      %v7411 = vsub.f32 %v6003, 2.0
      %v7412 = vsub.f32 %v6004, 2.0
      %v7413 = vsub.f32 %v6005, 2.0
      %v7414 = vsub.f32 %v6006, 2.0
      %v7415 = vsub.f32 %v6007, 2.0
      %v7416 = vsub.f32 %v6008, 2.0
      %v7417 = vsub.f32 %v6009, 2.0
      %v7418 = vsub.f32 %v6010, 2.0
      %v7419 = vsub.f32 %v6011, 2.0
      %v7420 = vsub.f32 %v6012, 2.0
      %v7421 = vsub.f32 %v6013, 2.0
      %v7422 = vsub.f32 %v6014, 2.0
      %v7423 = vsub.f32 %v6015, 2.0
      %v7424 = vsub.f32 %v6016, 2.0
      %v7425 = vsub.f32 %v6017, 2.0
      %v7426 = vsub.f32 %v6018, 2.0
      %v7427 = vsub.f32 %v6019, 2.0
      %v7428 = vsub.f32 %v6020, 2.0
      %v7429 = vmax.f32 %v7301, 0.0
      %v7430 = vmax.f32 %v7302, 0.0
      %v7431 = vmax.f32 %v7303, 0.0
      %v7432 = vmax.f32 %v7304, 0.0
      %v7433 = vmax.f32 %v7305, 0.0
      %v7434 = vmax.f32 %v7306, 0.0
      %v7435 = vmax.f32 %v7307, 0.0
      %v7436 = vmax.f32 %v7308, 0.0
      %v7437 = vmax.f32 %v7309, 0.0
      %v7438 = vmax.f32 %v7310, 0.0
      %v7439 = vmax.f32 %v7311, 0.0
      %v7440 = vmax.f32 %v7312, 0.0
      %v7441 = vmax.f32 %v7313, 0.0
      %v7442 = vmax.f32 %v7314, 0.0
      %v7443 = vmax.f32 %v7315, 0.0
      %v7444 = vmax.f32 %v7316, 0.0
      %v7445 = vmax.f32 %v7317, 0.0
      %v7446 = vmax.f32 %v7318, 0.0
      %v7447 = vmax.f32 %v7319, 0.0
      %v7448 = vmax.f32 %v7320, 0.0
      %v7449 = vmax.f32 %v7321, 0.0
      %v7450 = vmax.f32 %v7322, 0.0
      %v7451 = vmax.f32 %v7323, 0.0
      %v7452 = vmax.f32 %v7324, 0.0
      %v7453 = vmax.f32 %v7325, 0.0
      %v7454 = vmax.f32 %v7326, 0.0
      %v7455 = vmax.f32 %v7327, 0.0
      %v7456 = vmax.f32 %v7328, 0.0
      %v7457 = vmax.f32 %v7329, 0.0
      %v7458 = vmax.f32 %v7330, 0.0
      %v7459 = vmax.f32 %v7331, 0.0
      %v7460 = vmax.f32 %v7332, 0.0
      %v7461 = vmax.f32 %v7333, 0.0
      %v7462 = vmax.f32 %v7334, 0.0
      %v7463 = vmax.f32 %v7335, 0.0
      %v7464 = vmax.f32 %v7336, 0.0
      %v7465 = vmax.f32 %v7337, 0.0
      %v7466 = vmax.f32 %v7338, 0.0
      %v7467 = vmax.f32 %v7339, 0.0
      %v7468 = vmax.f32 %v7340, 0.0
      %v7469 = vmax.f32 %v7341, 0.0
      %v7470 = vmax.f32 %v7342, 0.0
      %v7471 = vmax.f32 %v7343, 0.0
      %v7472 = vmax.f32 %v7344, 0.0
      %v7473 = vmax.f32 %v7345, 0.0
      %v7474 = vmax.f32 %v7346, 0.0
      %v7475 = vmax.f32 %v7347, 0.0
      %v7476 = vmax.f32 %v7348, 0.0
      %v7477 = vmax.f32 %v7349, 0.0
      %v7478 = vmax.f32 %v7350, 0.0
      %v7479 = vmax.f32 %v7351, 0.0
      %v7480 = vmax.f32 %v7352, 0.0
      %v7481 = vmax.f32 %v7353, 0.0
      %v7482 = vmax.f32 %v7354, 0.0
      %v7483 = vmax.f32 %v7355, 0.0
      %v7484 = vmax.f32 %v7356, 0.0
      %v7485 = vmax.f32 %v7357, 0.0
      %v7486 = vmax.f32 %v7358, 0.0
      %v7487 = vmax.f32 %v7359, 0.0
      %v7488 = vmax.f32 %v7360, 0.0
      %v7489 = vmax.f32 %v7361, 0.0
      %v7490 = vmax.f32 %v7362, 0.0
      %v7491 = vmax.f32 %v7363, 0.0
      %v7492 = vmax.f32 %v7364, 0.0
      %v7493 = vmax.f32 %v7365, 0.0
      %v7494 = vmax.f32 %v7366, 0.0
      %v7495 = vmax.f32 %v7367, 0.0
      %v7496 = vmax.f32 %v7368, 0.0
      %v7497 = vmax.f32 %v7369, 0.0
      %v7498 = vmax.f32 %v7370, 0.0
      %v7499 = vmax.f32 %v7371, 0.0
      %v7500 = vmax.f32 %v7372, 0.0
      %v7501 = vmax.f32 %v7373, 0.0
      %v7502 = vmax.f32 %v7374, 0.0
      %v7503 = vmax.f32 %v7375, 0.0
      %v7504 = vmax.f32 %v7376, 0.0
      %v7505 = vmax.f32 %v7377, 0.0
      %v7506 = vmax.f32 %v7378, 0.0
      %v7507 = vmax.f32 %v7379, 0.0
      %v7508 = vmax.f32 %v7380, 0.0
      %v7509 = vmax.f32 %v7381, 0.0
      %v7510 = vmax.f32 %v7382, 0.0
      %v7511 = vmax.f32 %v7383, 0.0
      %v7512 = vmax.f32 %v7384, 0.0
      %v7513 = vmax.f32 %v7385, 0.0
      %v7514 = vmax.f32 %v7386, 0.0
      %v7515 = vmax.f32 %v7387, 0.0
      %v7516 = vmax.f32 %v7388, 0.0
      %v7517 = vmax.f32 %v7389, 0.0
      %v7518 = vmax.f32 %v7390, 0.0
      %v7519 = vmax.f32 %v7391, 0.0
      %v7520 = vmax.f32 %v7392, 0.0
      %v7521 = vmax.f32 %v7393, 0.0
      %v7522 = vmax.f32 %v7394, 0.0
      %v7523 = vmax.f32 %v7395, 0.0
      %v7524 = vmax.f32 %v7396, 0.0
      %v7525 = vmax.f32 %v7397, 0.0
      %v7526 = vmax.f32 %v7398, 0.0
      %v7527 = vmax.f32 %v7399, 0.0
      %v7528 = vmax.f32 %v7400, 0.0
      %v7529 = vmax.f32 %v7401, 0.0
      %v7530 = vmax.f32 %v7402, 0.0
      %v7531 = vmax.f32 %v7403, 0.0
      %v7532 = vmax.f32 %v7404, 0.0
      %v7533 = vmax.f32 %v7405, 0.0
      %v7534 = vmax.f32 %v7406, 0.0
      %v7535 = vmax.f32 %v7407, 0.0
      %v7536 = vmax.f32 %v7408, 0.0
      %v7537 = vmax.f32 %v7409, 0.0
      %v7538 = vmax.f32 %v7410, 0.0
      %v7539 = vmax.f32 %v7411, 0.0
      %v7540 = vmax.f32 %v7412, 0.0
      %v7541 = vmax.f32 %v7413, 0.0
      %v7542 = vmax.f32 %v7414, 0.0
      %v7543 = vmax.f32 %v7415, 0.0
      %v7544 = vmax.f32 %v7416, 0.0
      %v7545 = vmax.f32 %v7417, 0.0
      %v7546 = vmax.f32 %v7418, 0.0
      %v7547 = vmax.f32 %v7419, 0.0
      %v7548 = vmax.f32 %v7420, 0.0
      %v7549 = vmax.f32 %v7421, 0.0
      %v7550 = vmax.f32 %v7422, 0.0
      %v7551 = vmax.f32 %v7423, 0.0
      %v7552 = vmax.f32 %v7424, 0.0
      %v7553 = vmax.f32 %v7425, 0.0
      %v7554 = vmax.f32 %v7426, 0.0
      %v7555 = vmax.f32 %v7427, 0.0
      %v7556 = vmax.f32 %v7428, 0.0
      %v7557 = vmul.f32 %v7429, %v7429
      %v7558 = vmul.f32 %v7430, %v7430
      %v7559 = vmul.f32 %v7431, %v7431
      %v7560 = vmul.f32 %v7432, %v7432
      %v7561 = vmul.f32 %v7433, %v7433
      %v7562 = vmul.f32 %v7434, %v7434
      %v7563 = vmul.f32 %v7435, %v7435
      %v7564 = vmul.f32 %v7436, %v7436
      %v7565 = vmul.f32 %v7437, %v7437
      %v7566 = vmul.f32 %v7438, %v7438
      %v7567 = vmul.f32 %v7439, %v7439
      %v7568 = vmul.f32 %v7440, %v7440
      %v7569 = vmul.f32 %v7441, %v7441
      %v7570 = vmul.f32 %v7442, %v7442
      %v7571 = vmul.f32 %v7443, %v7443
      %v7572 = vmul.f32 %v7444, %v7444
      %v7573 = vmul.f32 %v7445, %v7445
      %v7574 = vmul.f32 %v7446, %v7446
      %v7575 = vmul.f32 %v7447, %v7447
      %v7576 = vmul.f32 %v7448, %v7448
      %v7577 = vmul.f32 %v7449, %v7449
      %v7578 = vmul.f32 %v7450, %v7450
      %v7579 = vmul.f32 %v7451, %v7451
      %v7580 = vmul.f32 %v7452, %v7452
      %v7581 = vmul.f32 %v7453, %v7453
      %v7582 = vmul.f32 %v7454, %v7454
      %v7583 = vmul.f32 %v7455, %v7455
      %v7584 = vmul.f32 %v7456, %v7456
      %v7585 = vmul.f32 %v7457, %v7457
      %v7586 = vmul.f32 %v7458, %v7458
      %v7587 = vmul.f32 %v7459, %v7459
      %v7588 = vmul.f32 %v7460, %v7460
      %v7589 = vmul.f32 %v7461, %v7461
      %v7590 = vmul.f32 %v7462, %v7462
      %v7591 = vmul.f32 %v7463, %v7463
      %v7592 = vmul.f32 %v7464, %v7464
      %v7593 = vmul.f32 %v7465, %v7465
      %v7594 = vmul.f32 %v7466, %v7466
      %v7595 = vmul.f32 %v7467, %v7467
      %v7596 = vmul.f32 %v7468, %v7468
      %v7597 = vmul.f32 %v7469, %v7469
      %v7598 = vmul.f32 %v7470, %v7470
      %v7599 = vmul.f32 %v7471, %v7471
      %v7600 = vmul.f32 %v7472, %v7472
      %v7601 = vmul.f32 %v7473, %v7473
      %v7602 = vmul.f32 %v7474, %v7474
      %v7603 = vmul.f32 %v7475, %v7475
      %v7604 = vmul.f32 %v7476, %v7476
      %v7605 = vmul.f32 %v7477, %v7477
      %v7606 = vmul.f32 %v7478, %v7478
      %v7607 = vmul.f32 %v7479, %v7479
      %v7608 = vmul.f32 %v7480, %v7480
      %v7609 = vmul.f32 %v7481, %v7481
      %v7610 = vmul.f32 %v7482, %v7482
      %v7611 = vmul.f32 %v7483, %v7483
      %v7612 = vmul.f32 %v7484, %v7484
      %v7613 = vmul.f32 %v7485, %v7485
      %v7614 = vmul.f32 %v7486, %v7486
      %v7615 = vmul.f32 %v7487, %v7487
      %v7616 = vmul.f32 %v7488, %v7488
      %v7617 = vmul.f32 %v7489, %v7489
      %v7618 = vmul.f32 %v7490, %v7490
      %v7619 = vmul.f32 %v7491, %v7491
      %v7620 = vmul.f32 %v7492, %v7492
      %v7621 = vmul.f32 %v7493, %v7493
      %v7622 = vmul.f32 %v7494, %v7494
      %v7623 = vmul.f32 %v7495, %v7495
      %v7624 = vmul.f32 %v7496, %v7496
      %v7625 = vmul.f32 %v7497, %v7497
      %v7626 = vmul.f32 %v7498, %v7498
      %v7627 = vmul.f32 %v7499, %v7499
      %v7628 = vmul.f32 %v7500, %v7500
      %v7629 = vmul.f32 %v7501, %v7501
      %v7630 = vmul.f32 %v7502, %v7502
      %v7631 = vmul.f32 %v7503, %v7503
      %v7632 = vmul.f32 %v7504, %v7504
      %v7633 = vmul.f32 %v7505, %v7505
      %v7634 = vmul.f32 %v7506, %v7506
      %v7635 = vmul.f32 %v7507, %v7507
      %v7636 = vmul.f32 %v7508, %v7508
      %v7637 = vmul.f32 %v7509, %v7509
      %v7638 = vmul.f32 %v7510, %v7510
      %v7639 = vmul.f32 %v7511, %v7511
      %v7640 = vmul.f32 %v7512, %v7512
      %v7641 = vmul.f32 %v7513, %v7513
      %v7642 = vmul.f32 %v7514, %v7514
      %v7643 = vmul.f32 %v7515, %v7515
      %v7644 = vmul.f32 %v7516, %v7516
      %v7645 = vmul.f32 %v7517, %v7517
      %v7646 = vmul.f32 %v7518, %v7518
      %v7647 = vmul.f32 %v7519, %v7519
      %v7648 = vmul.f32 %v7520, %v7520
      %v7649 = vmul.f32 %v7521, %v7521
      %v7650 = vmul.f32 %v7522, %v7522
      %v7651 = vmul.f32 %v7523, %v7523
      %v7652 = vmul.f32 %v7524, %v7524
      %v7653 = vmul.f32 %v7525, %v7525
      %v7654 = vmul.f32 %v7526, %v7526
      %v7655 = vmul.f32 %v7527, %v7527
      %v7656 = vmul.f32 %v7528, %v7528
      %v7657 = vmul.f32 %v7529, %v7529
      %v7658 = vmul.f32 %v7530, %v7530
      %v7659 = vmul.f32 %v7531, %v7531
      %v7660 = vmul.f32 %v7532, %v7532
      %v7661 = vmul.f32 %v7533, %v7533
      %v7662 = vmul.f32 %v7534, %v7534
      %v7663 = vmul.f32 %v7535, %v7535
      %v7664 = vmul.f32 %v7536, %v7536
      %v7665 = vmul.f32 %v7537, %v7537
      %v7666 = vmul.f32 %v7538, %v7538
      %v7667 = vmul.f32 %v7539, %v7539
      %v7668 = vmul.f32 %v7540, %v7540
      %v7669 = vmul.f32 %v7541, %v7541
      %v7670 = vmul.f32 %v7542, %v7542
      %v7671 = vmul.f32 %v7543, %v7543
      %v7672 = vmul.f32 %v7544, %v7544
      %v7673 = vmul.f32 %v7545, %v7545
      %v7674 = vmul.f32 %v7546, %v7546
      %v7675 = vmul.f32 %v7547, %v7547
      %v7676 = vmul.f32 %v7548, %v7548
      %v7677 = vmul.f32 %v7549, %v7549
      %v7678 = vmul.f32 %v7550, %v7550
      %v7679 = vmul.f32 %v7551, %v7551
      %v7680 = vmul.f32 %v7552, %v7552
      %v7681 = vmul.f32 %v7553, %v7553
      %v7682 = vmul.f32 %v7554, %v7554
      %v7683 = vmul.f32 %v7555, %v7555
      %v7684 = vmul.f32 %v7556, %v7556
      %v7685 = vmul.f32 %v7557, %v7557
      %v7686 = vmul.f32 %v7558, %v7558
      %v7687 = vmul.f32 %v7559, %v7559
      %v7688 = vmul.f32 %v7560, %v7560
      %v7689 = vmul.f32 %v7561, %v7561
      %v7690 = vmul.f32 %v7562, %v7562
      %v7691 = vmul.f32 %v7563, %v7563
      %v7692 = vmul.f32 %v7564, %v7564
      %v7693 = vmul.f32 %v7565, %v7565
      %v7694 = vmul.f32 %v7566, %v7566
      %v7695 = vmul.f32 %v7567, %v7567
      %v7696 = vmul.f32 %v7568, %v7568
      %v7697 = vmul.f32 %v7569, %v7569
      %v7698 = vmul.f32 %v7570, %v7570
      %v7699 = vmul.f32 %v7571, %v7571
      %v7700 = vmul.f32 %v7572, %v7572
      %v7701 = vmul.f32 %v7573, %v7573
      %v7702 = vmul.f32 %v7574, %v7574
      %v7703 = vmul.f32 %v7575, %v7575
      %v7704 = vmul.f32 %v7576, %v7576
      %v7705 = vmul.f32 %v7577, %v7577
      %v7706 = vmul.f32 %v7578, %v7578
      %v7707 = vmul.f32 %v7579, %v7579
      %v7708 = vmul.f32 %v7580, %v7580
      %v7709 = vmul.f32 %v7581, %v7581
      %v7710 = vmul.f32 %v7582, %v7582
      %v7711 = vmul.f32 %v7583, %v7583
      %v7712 = vmul.f32 %v7584, %v7584
      %v7713 = vmul.f32 %v7585, %v7585
      %v7714 = vmul.f32 %v7586, %v7586
      %v7715 = vmul.f32 %v7587, %v7587
      %v7716 = vmul.f32 %v7588, %v7588
      %v7717 = vmul.f32 %v7589, %v7589
      %v7718 = vmul.f32 %v7590, %v7590
      %v7719 = vmul.f32 %v7591, %v7591
      %v7720 = vmul.f32 %v7592, %v7592
      %v7721 = vmul.f32 %v7593, %v7593
      %v7722 = vmul.f32 %v7594, %v7594
      %v7723 = vmul.f32 %v7595, %v7595
      %v7724 = vmul.f32 %v7596, %v7596
      %v7725 = vmul.f32 %v7597, %v7597
      %v7726 = vmul.f32 %v7598, %v7598
      %v7727 = vmul.f32 %v7599, %v7599
      %v7728 = vmul.f32 %v7600, %v7600
      %v7729 = vmul.f32 %v7601, %v7601
      %v7730 = vmul.f32 %v7602, %v7602
      %v7731 = vmul.f32 %v7603, %v7603
      %v7732 = vmul.f32 %v7604, %v7604
      %v7733 = vmul.f32 %v7605, %v7605
      %v7734 = vmul.f32 %v7606, %v7606
      %v7735 = vmul.f32 %v7607, %v7607
      %v7736 = vmul.f32 %v7608, %v7608
      %v7737 = vmul.f32 %v7609, %v7609
      %v7738 = vmul.f32 %v7610, %v7610
      %v7739 = vmul.f32 %v7611, %v7611
      %v7740 = vmul.f32 %v7612, %v7612
      %v7741 = vmul.f32 %v7613, %v7613
      %v7742 = vmul.f32 %v7614, %v7614
      %v7743 = vmul.f32 %v7615, %v7615
      %v7744 = vmul.f32 %v7616, %v7616
      %v7745 = vmul.f32 %v7617, %v7617
      %v7746 = vmul.f32 %v7618, %v7618
      %v7747 = vmul.f32 %v7619, %v7619
      %v7748 = vmul.f32 %v7620, %v7620
      %v7749 = vmul.f32 %v7621, %v7621
      %v7750 = vmul.f32 %v7622, %v7622
      %v7751 = vmul.f32 %v7623, %v7623
      %v7752 = vmul.f32 %v7624, %v7624
      %v7753 = vmul.f32 %v7625, %v7625
      %v7754 = vmul.f32 %v7626, %v7626
      %v7755 = vmul.f32 %v7627, %v7627
      %v7756 = vmul.f32 %v7628, %v7628
      %v7757 = vmul.f32 %v7629, %v7629
      %v7758 = vmul.f32 %v7630, %v7630
      %v7759 = vmul.f32 %v7631, %v7631
      %v7760 = vmul.f32 %v7632, %v7632
      %v7761 = vmul.f32 %v7633, %v7633
      %v7762 = vmul.f32 %v7634, %v7634
      %v7763 = vmul.f32 %v7635, %v7635
      %v7764 = vmul.f32 %v7636, %v7636
      %v7765 = vmul.f32 %v7637, %v7637
      %v7766 = vmul.f32 %v7638, %v7638
      %v7767 = vmul.f32 %v7639, %v7639
      %v7768 = vmul.f32 %v7640, %v7640
      %v7769 = vmul.f32 %v7641, %v7641
      %v7770 = vmul.f32 %v7642, %v7642
      %v7771 = vmul.f32 %v7643, %v7643
      %v7772 = vmul.f32 %v7644, %v7644
      %v7773 = vmul.f32 %v7645, %v7645
      %v7774 = vmul.f32 %v7646, %v7646
      %v7775 = vmul.f32 %v7647, %v7647
      %v7776 = vmul.f32 %v7648, %v7648
      %v7777 = vmul.f32 %v7649, %v7649
      %v7778 = vmul.f32 %v7650, %v7650
      %v7779 = vmul.f32 %v7651, %v7651
      %v7780 = vmul.f32 %v7652, %v7652
      %v7781 = vmul.f32 %v7653, %v7653
      %v7782 = vmul.f32 %v7654, %v7654
      %v7783 = vmul.f32 %v7655, %v7655
      %v7784 = vmul.f32 %v7656, %v7656
      %v7785 = vmul.f32 %v7657, %v7657
      %v7786 = vmul.f32 %v7658, %v7658
      %v7787 = vmul.f32 %v7659, %v7659
      %v7788 = vmul.f32 %v7660, %v7660
      %v7789 = vmul.f32 %v7661, %v7661
      %v7790 = vmul.f32 %v7662, %v7662
      %v7791 = vmul.f32 %v7663, %v7663
      %v7792 = vmul.f32 %v7664, %v7664
      %v7793 = vmul.f32 %v7665, %v7665
      %v7794 = vmul.f32 %v7666, %v7666
      %v7795 = vmul.f32 %v7667, %v7667
      %v7796 = vmul.f32 %v7668, %v7668
      %v7797 = vmul.f32 %v7669, %v7669
      %v7798 = vmul.f32 %v7670, %v7670
      %v7799 = vmul.f32 %v7671, %v7671
      %v7800 = vmul.f32 %v7672, %v7672
      %v7801 = vmul.f32 %v7673, %v7673
      %v7802 = vmul.f32 %v7674, %v7674
      %v7803 = vmul.f32 %v7675, %v7675
      %v7804 = vmul.f32 %v7676, %v7676
      %v7805 = vmul.f32 %v7677, %v7677
      %v7806 = vmul.f32 %v7678, %v7678
      %v7807 = vmul.f32 %v7679, %v7679
      %v7808 = vmul.f32 %v7680, %v7680
      %v7809 = vmul.f32 %v7681, %v7681
      %v7810 = vmul.f32 %v7682, %v7682
      %v7811 = vmul.f32 %v7683, %v7683
      %v7812 = vmul.f32 %v7684, %v7684
      %v7813 = vmul.f32 %v7685, 0.41666666
      %v7814 = vmul.f32 %v7686, 0.41666666
      %v7815 = vmul.f32 %v7687, 0.41666666
      %v7816 = vmul.f32 %v7688, 0.41666666
      %v7817 = vmul.f32 %v7689, 0.41666666
      %v7818 = vmul.f32 %v7690, 0.41666666
      %v7819 = vmul.f32 %v7691, 0.41666666
      %v7820 = vmul.f32 %v7692, 0.41666666
      %v7821 = vmul.f32 %v7693, 0.41666666
      %v7822 = vmul.f32 %v7694, 0.41666666
      %v7823 = vmul.f32 %v7695, 0.41666666
      %v7824 = vmul.f32 %v7696, 0.41666666
      %v7825 = vmul.f32 %v7697, 0.41666666
      %v7826 = vmul.f32 %v7698, 0.41666666
      %v7827 = vmul.f32 %v7699, 0.41666666
      %v7828 = vmul.f32 %v7700, 0.41666666
      %v7829 = vmul.f32 %v7701, 0.41666666
      %v7830 = vmul.f32 %v7702, 0.41666666
      %v7831 = vmul.f32 %v7703, 0.41666666
      %v7832 = vmul.f32 %v7704, 0.41666666
      %v7833 = vmul.f32 %v7705, 0.41666666
      %v7834 = vmul.f32 %v7706, 0.41666666
      %v7835 = vmul.f32 %v7707, 0.41666666
      %v7836 = vmul.f32 %v7708, 0.41666666
      %v7837 = vmul.f32 %v7709, 0.41666666
      %v7838 = vmul.f32 %v7710, 0.41666666
      %v7839 = vmul.f32 %v7711, 0.41666666
      %v7840 = vmul.f32 %v7712, 0.41666666
      %v7841 = vmul.f32 %v7713, 0.41666666
      %v7842 = vmul.f32 %v7714, 0.41666666
      %v7843 = vmul.f32 %v7715, 0.41666666
      %v7844 = vmul.f32 %v7716, 0.41666666
      %v7845 = vmul.f32 %v7717, 0.41666666
      %v7846 = vmul.f32 %v7718, 0.41666666
      %v7847 = vmul.f32 %v7719, 0.41666666
      %v7848 = vmul.f32 %v7720, 0.41666666
      %v7849 = vmul.f32 %v7721, 0.41666666
      %v7850 = vmul.f32 %v7722, 0.41666666
      %v7851 = vmul.f32 %v7723, 0.41666666
      %v7852 = vmul.f32 %v7724, 0.41666666
      %v7853 = vmul.f32 %v7725, 0.41666666
      %v7854 = vmul.f32 %v7726, 0.41666666
      %v7855 = vmul.f32 %v7727, 0.41666666
      %v7856 = vmul.f32 %v7728, 0.41666666
      %v7857 = vmul.f32 %v7729, 0.41666666
      %v7858 = vmul.f32 %v7730, 0.41666666
      %v7859 = vmul.f32 %v7731, 0.41666666
      %v7860 = vmul.f32 %v7732, 0.41666666
      %v7861 = vmul.f32 %v7733, 0.41666666
      %v7862 = vmul.f32 %v7734, 0.41666666
      %v7863 = vmul.f32 %v7735, 0.41666666
      %v7864 = vmul.f32 %v7736, 0.41666666
      %v7865 = vmul.f32 %v7737, 0.41666666
      %v7866 = vmul.f32 %v7738, 0.41666666
      %v7867 = vmul.f32 %v7739, 0.41666666
      %v7868 = vmul.f32 %v7740, 0.41666666
      %v7869 = vmul.f32 %v7741, 0.41666666
      %v7870 = vmul.f32 %v7742, 0.41666666
      %v7871 = vmul.f32 %v7743, 0.41666666
      %v7872 = vmul.f32 %v7744, 0.41666666
      %v7873 = vmul.f32 %v7745, 0.41666666
      %v7874 = vmul.f32 %v7746, 0.41666666
      %v7875 = vmul.f32 %v7747, 0.41666666
      %v7876 = vmul.f32 %v7748, 0.41666666
      %v7877 = vmul.f32 %v7749, 0.41666666
      %v7878 = vmul.f32 %v7750, 0.41666666
      %v7879 = vmul.f32 %v7751, 0.41666666
      %v7880 = vmul.f32 %v7752, 0.41666666
      %v7881 = vmul.f32 %v7753, 0.41666666
      %v7882 = vmul.f32 %v7754, 0.41666666
      %v7883 = vmul.f32 %v7755, 0.41666666
      %v7884 = vmul.f32 %v7756, 0.41666666
      %v7885 = vmul.f32 %v7757, 0.41666666
      %v7886 = vmul.f32 %v7758, 0.41666666
      %v7887 = vmul.f32 %v7759, 0.41666666
      %v7888 = vmul.f32 %v7760, 0.41666666
      %v7889 = vmul.f32 %v7761, 0.41666666
      %v7890 = vmul.f32 %v7762, 0.41666666
      %v7891 = vmul.f32 %v7763, 0.41666666
      %v7892 = vmul.f32 %v7764, 0.41666666
      %v7893 = vmul.f32 %v7765, 0.41666666
      %v7894 = vmul.f32 %v7766, 0.41666666
      %v7895 = vmul.f32 %v7767, 0.41666666
      %v7896 = vmul.f32 %v7768, 0.41666666
      %v7897 = vmul.f32 %v7769, 0.41666666
      %v7898 = vmul.f32 %v7770, 0.41666666
      %v7899 = vmul.f32 %v7771, 0.41666666
      %v7900 = vmul.f32 %v7772, 0.41666666
      %v7901 = vmul.f32 %v7773, 0.41666666
      %v7902 = vmul.f32 %v7774, 0.41666666
      %v7903 = vmul.f32 %v7775, 0.41666666
      %v7904 = vmul.f32 %v7776, 0.41666666
      %v7905 = vmul.f32 %v7777, 0.41666666
      %v7906 = vmul.f32 %v7778, 0.41666666
      %v7907 = vmul.f32 %v7779, 0.41666666
      %v7908 = vmul.f32 %v7780, 0.41666666
      %v7909 = vmul.f32 %v7781, 0.41666666
      %v7910 = vmul.f32 %v7782, 0.41666666
      %v7911 = vmul.f32 %v7783, 0.41666666
      %v7912 = vmul.f32 %v7784, 0.41666666
      %v7913 = vmul.f32 %v7785, 0.41666666
      %v7914 = vmul.f32 %v7786, 0.41666666
      %v7915 = vmul.f32 %v7787, 0.41666666
      %v7916 = vmul.f32 %v7788, 0.41666666
      %v7917 = vmul.f32 %v7789, 0.41666666
      %v7918 = vmul.f32 %v7790, 0.41666666
      %v7919 = vmul.f32 %v7791, 0.41666666
      %v7920 = vmul.f32 %v7792, 0.41666666
      %v7921 = vmul.f32 %v7793, 0.41666666
      %v7922 = vmul.f32 %v7794, 0.41666666
      %v7923 = vmul.f32 %v7795, 0.41666666
      %v7924 = vmul.f32 %v7796, 0.41666666
      %v7925 = vmul.f32 %v7797, 0.41666666
      %v7926 = vmul.f32 %v7798, 0.41666666
      %v7927 = vmul.f32 %v7799, 0.41666666
      %v7928 = vmul.f32 %v7800, 0.41666666
      %v7929 = vmul.f32 %v7801, 0.41666666
      %v7930 = vmul.f32 %v7802, 0.41666666
      %v7931 = vmul.f32 %v7803, 0.41666666
      %v7932 = vmul.f32 %v7804, 0.41666666
      %v7933 = vmul.f32 %v7805, 0.41666666
      %v7934 = vmul.f32 %v7806, 0.41666666
      %v7935 = vmul.f32 %v7807, 0.41666666
      %v7936 = vmul.f32 %v7808, 0.41666666
      %v7937 = vmul.f32 %v7809, 0.41666666
      %v7938 = vmul.f32 %v7810, 0.41666666
      %v7939 = vmul.f32 %v7811, 0.41666666
      %v7940 = vmul.f32 %v7812, 0.41666666
      %v7941 = vadd.f32 %v7173, %v7813
      %v7942 = vadd.f32 %v7174, %v7814
      %v7943 = vadd.f32 %v7175, %v7815
      %v7944 = vadd.f32 %v7176, %v7816
      %v7945 = vadd.f32 %v7177, %v7817
      %v7946 = vadd.f32 %v7178, %v7818
      %v7947 = vadd.f32 %v7179, %v7819
      %v7948 = vadd.f32 %v7180, %v7820
      %v7949 = vadd.f32 %v7181, %v7821
      %v7950 = vadd.f32 %v7182, %v7822
      %v7951 = vadd.f32 %v7183, %v7823
      %v7952 = vadd.f32 %v7184, %v7824
      %v7953 = vadd.f32 %v7185, %v7825
      %v7954 = vadd.f32 %v7186, %v7826
      %v7955 = vadd.f32 %v7187, %v7827
      %v7956 = vadd.f32 %v7188, %v7828
      %v7957 = vadd.f32 %v7189, %v7829
      %v7958 = vadd.f32 %v7190, %v7830
      %v7959 = vadd.f32 %v7191, %v7831
      %v7960 = vadd.f32 %v7192, %v7832
      %v7961 = vadd.f32 %v7193, %v7833
      %v7962 = vadd.f32 %v7194, %v7834
      %v7963 = vadd.f32 %v7195, %v7835
      %v7964 = vadd.f32 %v7196, %v7836
      %v7965 = vadd.f32 %v7197, %v7837
      %v7966 = vadd.f32 %v7198, %v7838
      %v7967 = vadd.f32 %v7199, %v7839
      %v7968 = vadd.f32 %v7200, %v7840
      %v7969 = vadd.f32 %v7201, %v7841
      %v7970 = vadd.f32 %v7202, %v7842
      %v7971 = vadd.f32 %v7203, %v7843
      %v7972 = vadd.f32 %v7204, %v7844
      %v7973 = vadd.f32 %v7205, %v7845
      %v7974 = vadd.f32 %v7206, %v7846
      %v7975 = vadd.f32 %v7207, %v7847
      %v7976 = vadd.f32 %v7208, %v7848
      %v7977 = vadd.f32 %v7209, %v7849
      %v7978 = vadd.f32 %v7210, %v7850
      %v7979 = vadd.f32 %v7211, %v7851
      %v7980 = vadd.f32 %v7212, %v7852
      %v7981 = vadd.f32 %v7213, %v7853
      %v7982 = vadd.f32 %v7214, %v7854
      %v7983 = vadd.f32 %v7215, %v7855
      %v7984 = vadd.f32 %v7216, %v7856
      %v7985 = vadd.f32 %v7217, %v7857
      %v7986 = vadd.f32 %v7218, %v7858
      %v7987 = vadd.f32 %v7219, %v7859
      %v7988 = vadd.f32 %v7220, %v7860
      %v7989 = vadd.f32 %v7221, %v7861
      %v7990 = vadd.f32 %v7222, %v7862
      %v7991 = vadd.f32 %v7223, %v7863
      %v7992 = vadd.f32 %v7224, %v7864
      %v7993 = vadd.f32 %v7225, %v7865
      %v7994 = vadd.f32 %v7226, %v7866
      %v7995 = vadd.f32 %v7227, %v7867
      %v7996 = vadd.f32 %v7228, %v7868
      %v7997 = vadd.f32 %v7229, %v7869
      %v7998 = vadd.f32 %v7230, %v7870
      %v7999 = vadd.f32 %v7231, %v7871
      %v8000 = vadd.f32 %v7232, %v7872
      %v8001 = vadd.f32 %v7233, %v7873
      %v8002 = vadd.f32 %v7234, %v7874
      %v8003 = vadd.f32 %v7235, %v7875
      %v8004 = vadd.f32 %v7236, %v7876
      %v8005 = vadd.f32 %v7237, %v7877
      %v8006 = vadd.f32 %v7238, %v7878
      %v8007 = vadd.f32 %v7239, %v7879
      %v8008 = vadd.f32 %v7240, %v7880
      %v8009 = vadd.f32 %v7241, %v7881
      %v8010 = vadd.f32 %v7242, %v7882
      %v8011 = vadd.f32 %v7243, %v7883
      %v8012 = vadd.f32 %v7244, %v7884
      %v8013 = vadd.f32 %v7245, %v7885
      %v8014 = vadd.f32 %v7246, %v7886
      %v8015 = vadd.f32 %v7247, %v7887
      %v8016 = vadd.f32 %v7248, %v7888
      %v8017 = vadd.f32 %v7249, %v7889
      %v8018 = vadd.f32 %v7250, %v7890
      %v8019 = vadd.f32 %v7251, %v7891
      %v8020 = vadd.f32 %v7252, %v7892
      %v8021 = vadd.f32 %v7253, %v7893
      %v8022 = vadd.f32 %v7254, %v7894
      %v8023 = vadd.f32 %v7255, %v7895
      %v8024 = vadd.f32 %v7256, %v7896
      %v8025 = vadd.f32 %v7257, %v7897
      %v8026 = vadd.f32 %v7258, %v7898
      %v8027 = vadd.f32 %v7259, %v7899
      %v8028 = vadd.f32 %v7260, %v7900
      %v8029 = vadd.f32 %v7261, %v7901
      %v8030 = vadd.f32 %v7262, %v7902
      %v8031 = vadd.f32 %v7263, %v7903
      %v8032 = vadd.f32 %v7264, %v7904
      %v8033 = vadd.f32 %v7265, %v7905
      %v8034 = vadd.f32 %v7266, %v7906
      %v8035 = vadd.f32 %v7267, %v7907
      %v8036 = vadd.f32 %v7268, %v7908
      %v8037 = vadd.f32 %v7269, %v7909
      %v8038 = vadd.f32 %v7270, %v7910
      %v8039 = vadd.f32 %v7271, %v7911
      %v8040 = vadd.f32 %v7272, %v7912
      %v8041 = vadd.f32 %v7273, %v7913
      %v8042 = vadd.f32 %v7274, %v7914
      %v8043 = vadd.f32 %v7275, %v7915
      %v8044 = vadd.f32 %v7276, %v7916
      %v8045 = vadd.f32 %v7277, %v7917
      %v8046 = vadd.f32 %v7278, %v7918
      %v8047 = vadd.f32 %v7279, %v7919
      %v8048 = vadd.f32 %v7280, %v7920
      %v8049 = vadd.f32 %v7281, %v7921
      %v8050 = vadd.f32 %v7282, %v7922
      %v8051 = vadd.f32 %v7283, %v7923
      %v8052 = vadd.f32 %v7284, %v7924
      %v8053 = vadd.f32 %v7285, %v7925
      %v8054 = vadd.f32 %v7286, %v7926
      %v8055 = vadd.f32 %v7287, %v7927
      %v8056 = vadd.f32 %v7288, %v7928
      %v8057 = vadd.f32 %v7289, %v7929
      %v8058 = vadd.f32 %v7290, %v7930
      %v8059 = vadd.f32 %v7291, %v7931
      %v8060 = vadd.f32 %v7292, %v7932
      %v8061 = vadd.f32 %v7293, %v7933
      %v8062 = vadd.f32 %v7294, %v7934
      %v8063 = vadd.f32 %v7295, %v7935
      %v8064 = vadd.f32 %v7296, %v7936
      %v8065 = vadd.f32 %v7297, %v7937
      %v8066 = vadd.f32 %v7298, %v7938
      %v8067 = vadd.f32 %v7299, %v7939
      %v8068 = vadd.f32 %v7300, %v7940
      %v8069 = vsub.f32 %v5893, 3.0
      %v8070 = vsub.f32 %v5894, 3.0
      %v8071 = vsub.f32 %v5895, 3.0
      %v8072 = vsub.f32 %v5896, 3.0
      %v8073 = vsub.f32 %v5897, 3.0
      %v8074 = vsub.f32 %v5898, 3.0
      %v8075 = vsub.f32 %v5899, 3.0
      %v8076 = vsub.f32 %v5900, 3.0
      %v8077 = vsub.f32 %v5901, 3.0
      %v8078 = vsub.f32 %v5902, 3.0
      %v8079 = vsub.f32 %v5903, 3.0
      %v8080 = vsub.f32 %v5904, 3.0
      %v8081 = vsub.f32 %v5905, 3.0
      %v8082 = vsub.f32 %v5906, 3.0
      %v8083 = vsub.f32 %v5907, 3.0
      %v8084 = vsub.f32 %v5908, 3.0
      %v8085 = vsub.f32 %v5909, 3.0
      %v8086 = vsub.f32 %v5910, 3.0
      %v8087 = vsub.f32 %v5911, 3.0
      %v8088 = vsub.f32 %v5912, 3.0
      %v8089 = vsub.f32 %v5913, 3.0
      %v8090 = vsub.f32 %v5914, 3.0
      %v8091 = vsub.f32 %v5915, 3.0
      %v8092 = vsub.f32 %v5916, 3.0
      %v8093 = vsub.f32 %v5917, 3.0
      %v8094 = vsub.f32 %v5918, 3.0
      %v8095 = vsub.f32 %v5919, 3.0
      %v8096 = vsub.f32 %v5920, 3.0
      %v8097 = vsub.f32 %v5921, 3.0
      %v8098 = vsub.f32 %v5922, 3.0
      %v8099 = vsub.f32 %v5923, 3.0
      %v8100 = vsub.f32 %v5924, 3.0
      %v8101 = vsub.f32 %v5925, 3.0
      %v8102 = vsub.f32 %v5926, 3.0
      %v8103 = vsub.f32 %v5927, 3.0
      %v8104 = vsub.f32 %v5928, 3.0
      %v8105 = vsub.f32 %v5929, 3.0
      %v8106 = vsub.f32 %v5930, 3.0
      %v8107 = vsub.f32 %v5931, 3.0
      %v8108 = vsub.f32 %v5932, 3.0
      %v8109 = vsub.f32 %v5933, 3.0
      %v8110 = vsub.f32 %v5934, 3.0
      %v8111 = vsub.f32 %v5935, 3.0
      %v8112 = vsub.f32 %v5936, 3.0
      %v8113 = vsub.f32 %v5937, 3.0
      %v8114 = vsub.f32 %v5938, 3.0
      %v8115 = vsub.f32 %v5939, 3.0
      %v8116 = vsub.f32 %v5940, 3.0
      %v8117 = vsub.f32 %v5941, 3.0
      %v8118 = vsub.f32 %v5942, 3.0
      %v8119 = vsub.f32 %v5943, 3.0
      %v8120 = vsub.f32 %v5944, 3.0
      %v8121 = vsub.f32 %v5945, 3.0
      %v8122 = vsub.f32 %v5946, 3.0
      %v8123 = vsub.f32 %v5947, 3.0
      %v8124 = vsub.f32 %v5948, 3.0
      %v8125 = vsub.f32 %v5949, 3.0
      %v8126 = vsub.f32 %v5950, 3.0
      %v8127 = vsub.f32 %v5951, 3.0
      %v8128 = vsub.f32 %v5952, 3.0
      %v8129 = vsub.f32 %v5953, 3.0
      %v8130 = vsub.f32 %v5954, 3.0
      %v8131 = vsub.f32 %v5955, 3.0
      %v8132 = vsub.f32 %v5956, 3.0
      %v8133 = vsub.f32 %v5957, 3.0
      %v8134 = vsub.f32 %v5958, 3.0
      %v8135 = vsub.f32 %v5959, 3.0
      %v8136 = vsub.f32 %v5960, 3.0
      %v8137 = vsub.f32 %v5961, 3.0
      %v8138 = vsub.f32 %v5962, 3.0
      %v8139 = vsub.f32 %v5963, 3.0
      %v8140 = vsub.f32 %v5964, 3.0
      %v8141 = vsub.f32 %v5965, 3.0
      %v8142 = vsub.f32 %v5966, 3.0
      %v8143 = vsub.f32 %v5967, 3.0
      %v8144 = vsub.f32 %v5968, 3.0
      %v8145 = vsub.f32 %v5969, 3.0
      %v8146 = vsub.f32 %v5970, 3.0
      %v8147 = vsub.f32 %v5971, 3.0
      %v8148 = vsub.f32 %v5972, 3.0
      %v8149 = vsub.f32 %v5973, 3.0
      %v8150 = vsub.f32 %v5974, 3.0
      %v8151 = vsub.f32 %v5975, 3.0
      %v8152 = vsub.f32 %v5976, 3.0
      %v8153 = vsub.f32 %v5977, 3.0
      %v8154 = vsub.f32 %v5978, 3.0
      %v8155 = vsub.f32 %v5979, 3.0
      %v8156 = vsub.f32 %v5980, 3.0
      %v8157 = vsub.f32 %v5981, 3.0
      %v8158 = vsub.f32 %v5982, 3.0
      %v8159 = vsub.f32 %v5983, 3.0
      %v8160 = vsub.f32 %v5984, 3.0
      %v8161 = vsub.f32 %v5985, 3.0
      %v8162 = vsub.f32 %v5986, 3.0
      %v8163 = vsub.f32 %v5987, 3.0
      %v8164 = vsub.f32 %v5988, 3.0
      %v8165 = vsub.f32 %v5989, 3.0
      %v8166 = vsub.f32 %v5990, 3.0
      %v8167 = vsub.f32 %v5991, 3.0
      %v8168 = vsub.f32 %v5992, 3.0
      %v8169 = vsub.f32 %v5993, 3.0
      %v8170 = vsub.f32 %v5994, 3.0
      %v8171 = vsub.f32 %v5995, 3.0
      %v8172 = vsub.f32 %v5996, 3.0
      %v8173 = vsub.f32 %v5997, 3.0
      %v8174 = vsub.f32 %v5998, 3.0
      %v8175 = vsub.f32 %v5999, 3.0
      %v8176 = vsub.f32 %v6000, 3.0
      %v8177 = vsub.f32 %v6001, 3.0
      %v8178 = vsub.f32 %v6002, 3.0
      %v8179 = vsub.f32 %v6003, 3.0
      %v8180 = vsub.f32 %v6004, 3.0
      %v8181 = vsub.f32 %v6005, 3.0
      %v8182 = vsub.f32 %v6006, 3.0
      %v8183 = vsub.f32 %v6007, 3.0
      %v8184 = vsub.f32 %v6008, 3.0
      %v8185 = vsub.f32 %v6009, 3.0
      %v8186 = vsub.f32 %v6010, 3.0
      %v8187 = vsub.f32 %v6011, 3.0
      %v8188 = vsub.f32 %v6012, 3.0
      %v8189 = vsub.f32 %v6013, 3.0
      %v8190 = vsub.f32 %v6014, 3.0
      %v8191 = vsub.f32 %v6015, 3.0
      %v8192 = vsub.f32 %v6016, 3.0
      %v8193 = vsub.f32 %v6017, 3.0
      %v8194 = vsub.f32 %v6018, 3.0
      %v8195 = vsub.f32 %v6019, 3.0
      %v8196 = vsub.f32 %v6020, 3.0
      %v8197 = vmax.f32 %v8069, 0.0
      %v8198 = vmax.f32 %v8070, 0.0
      %v8199 = vmax.f32 %v8071, 0.0
      %v8200 = vmax.f32 %v8072, 0.0
      %v8201 = vmax.f32 %v8073, 0.0
      %v8202 = vmax.f32 %v8074, 0.0
      %v8203 = vmax.f32 %v8075, 0.0
      %v8204 = vmax.f32 %v8076, 0.0
      %v8205 = vmax.f32 %v8077, 0.0
      %v8206 = vmax.f32 %v8078, 0.0
      %v8207 = vmax.f32 %v8079, 0.0
      %v8208 = vmax.f32 %v8080, 0.0
      %v8209 = vmax.f32 %v8081, 0.0
      %v8210 = vmax.f32 %v8082, 0.0
      %v8211 = vmax.f32 %v8083, 0.0
      %v8212 = vmax.f32 %v8084, 0.0
      %v8213 = vmax.f32 %v8085, 0.0
      %v8214 = vmax.f32 %v8086, 0.0
      %v8215 = vmax.f32 %v8087, 0.0
      %v8216 = vmax.f32 %v8088, 0.0
      %v8217 = vmax.f32 %v8089, 0.0
      %v8218 = vmax.f32 %v8090, 0.0
      %v8219 = vmax.f32 %v8091, 0.0
      %v8220 = vmax.f32 %v8092, 0.0
      %v8221 = vmax.f32 %v8093, 0.0
      %v8222 = vmax.f32 %v8094, 0.0
      %v8223 = vmax.f32 %v8095, 0.0
      %v8224 = vmax.f32 %v8096, 0.0
      %v8225 = vmax.f32 %v8097, 0.0
      %v8226 = vmax.f32 %v8098, 0.0
      %v8227 = vmax.f32 %v8099, 0.0
      %v8228 = vmax.f32 %v8100, 0.0
      %v8229 = vmax.f32 %v8101, 0.0
      %v8230 = vmax.f32 %v8102, 0.0
      %v8231 = vmax.f32 %v8103, 0.0
      %v8232 = vmax.f32 %v8104, 0.0
      %v8233 = vmax.f32 %v8105, 0.0
      %v8234 = vmax.f32 %v8106, 0.0
      %v8235 = vmax.f32 %v8107, 0.0
      %v8236 = vmax.f32 %v8108, 0.0
      %v8237 = vmax.f32 %v8109, 0.0
      %v8238 = vmax.f32 %v8110, 0.0
      %v8239 = vmax.f32 %v8111, 0.0
      %v8240 = vmax.f32 %v8112, 0.0
      %v8241 = vmax.f32 %v8113, 0.0
      %v8242 = vmax.f32 %v8114, 0.0
      %v8243 = vmax.f32 %v8115, 0.0
      %v8244 = vmax.f32 %v8116, 0.0
      %v8245 = vmax.f32 %v8117, 0.0
      %v8246 = vmax.f32 %v8118, 0.0
      %v8247 = vmax.f32 %v8119, 0.0
      %v8248 = vmax.f32 %v8120, 0.0
      %v8249 = vmax.f32 %v8121, 0.0
      %v8250 = vmax.f32 %v8122, 0.0
      %v8251 = vmax.f32 %v8123, 0.0
      %v8252 = vmax.f32 %v8124, 0.0
      %v8253 = vmax.f32 %v8125, 0.0
      %v8254 = vmax.f32 %v8126, 0.0
      %v8255 = vmax.f32 %v8127, 0.0
      %v8256 = vmax.f32 %v8128, 0.0
      %v8257 = vmax.f32 %v8129, 0.0
      %v8258 = vmax.f32 %v8130, 0.0
      %v8259 = vmax.f32 %v8131, 0.0
      %v8260 = vmax.f32 %v8132, 0.0
      %v8261 = vmax.f32 %v8133, 0.0
      %v8262 = vmax.f32 %v8134, 0.0
      %v8263 = vmax.f32 %v8135, 0.0
      %v8264 = vmax.f32 %v8136, 0.0
      %v8265 = vmax.f32 %v8137, 0.0
      %v8266 = vmax.f32 %v8138, 0.0
      %v8267 = vmax.f32 %v8139, 0.0
      %v8268 = vmax.f32 %v8140, 0.0
      %v8269 = vmax.f32 %v8141, 0.0
      %v8270 = vmax.f32 %v8142, 0.0
      %v8271 = vmax.f32 %v8143, 0.0
      %v8272 = vmax.f32 %v8144, 0.0
      %v8273 = vmax.f32 %v8145, 0.0
      %v8274 = vmax.f32 %v8146, 0.0
      %v8275 = vmax.f32 %v8147, 0.0
      %v8276 = vmax.f32 %v8148, 0.0
      %v8277 = vmax.f32 %v8149, 0.0
      %v8278 = vmax.f32 %v8150, 0.0
      %v8279 = vmax.f32 %v8151, 0.0
      %v8280 = vmax.f32 %v8152, 0.0
      %v8281 = vmax.f32 %v8153, 0.0
      %v8282 = vmax.f32 %v8154, 0.0
      %v8283 = vmax.f32 %v8155, 0.0
      %v8284 = vmax.f32 %v8156, 0.0
      %v8285 = vmax.f32 %v8157, 0.0
      %v8286 = vmax.f32 %v8158, 0.0
      %v8287 = vmax.f32 %v8159, 0.0
      %v8288 = vmax.f32 %v8160, 0.0
      %v8289 = vmax.f32 %v8161, 0.0
      %v8290 = vmax.f32 %v8162, 0.0
      %v8291 = vmax.f32 %v8163, 0.0
      %v8292 = vmax.f32 %v8164, 0.0
      %v8293 = vmax.f32 %v8165, 0.0
      %v8294 = vmax.f32 %v8166, 0.0
      %v8295 = vmax.f32 %v8167, 0.0
      %v8296 = vmax.f32 %v8168, 0.0
      %v8297 = vmax.f32 %v8169, 0.0
      %v8298 = vmax.f32 %v8170, 0.0
      %v8299 = vmax.f32 %v8171, 0.0
      %v8300 = vmax.f32 %v8172, 0.0
      %v8301 = vmax.f32 %v8173, 0.0
      %v8302 = vmax.f32 %v8174, 0.0
      %v8303 = vmax.f32 %v8175, 0.0
      %v8304 = vmax.f32 %v8176, 0.0
      %v8305 = vmax.f32 %v8177, 0.0
      %v8306 = vmax.f32 %v8178, 0.0
      %v8307 = vmax.f32 %v8179, 0.0
      %v8308 = vmax.f32 %v8180, 0.0
      %v8309 = vmax.f32 %v8181, 0.0
      %v8310 = vmax.f32 %v8182, 0.0
      %v8311 = vmax.f32 %v8183, 0.0
      %v8312 = vmax.f32 %v8184, 0.0
      %v8313 = vmax.f32 %v8185, 0.0
      %v8314 = vmax.f32 %v8186, 0.0
      %v8315 = vmax.f32 %v8187, 0.0
      %v8316 = vmax.f32 %v8188, 0.0
      %v8317 = vmax.f32 %v8189, 0.0
      %v8318 = vmax.f32 %v8190, 0.0
      %v8319 = vmax.f32 %v8191, 0.0
      %v8320 = vmax.f32 %v8192, 0.0
      %v8321 = vmax.f32 %v8193, 0.0
      %v8322 = vmax.f32 %v8194, 0.0
      %v8323 = vmax.f32 %v8195, 0.0
      %v8324 = vmax.f32 %v8196, 0.0
      %v8325 = vmul.f32 %v8197, %v8197
      %v8326 = vmul.f32 %v8198, %v8198
      %v8327 = vmul.f32 %v8199, %v8199
      %v8328 = vmul.f32 %v8200, %v8200
      %v8329 = vmul.f32 %v8201, %v8201
      %v8330 = vmul.f32 %v8202, %v8202
      %v8331 = vmul.f32 %v8203, %v8203
      %v8332 = vmul.f32 %v8204, %v8204
      %v8333 = vmul.f32 %v8205, %v8205
      %v8334 = vmul.f32 %v8206, %v8206
      %v8335 = vmul.f32 %v8207, %v8207
      %v8336 = vmul.f32 %v8208, %v8208
      %v8337 = vmul.f32 %v8209, %v8209
      %v8338 = vmul.f32 %v8210, %v8210
      %v8339 = vmul.f32 %v8211, %v8211
      %v8340 = vmul.f32 %v8212, %v8212
      %v8341 = vmul.f32 %v8213, %v8213
      %v8342 = vmul.f32 %v8214, %v8214
      %v8343 = vmul.f32 %v8215, %v8215
      %v8344 = vmul.f32 %v8216, %v8216
      %v8345 = vmul.f32 %v8217, %v8217
      %v8346 = vmul.f32 %v8218, %v8218
      %v8347 = vmul.f32 %v8219, %v8219
      %v8348 = vmul.f32 %v8220, %v8220
      %v8349 = vmul.f32 %v8221, %v8221
      %v8350 = vmul.f32 %v8222, %v8222
      %v8351 = vmul.f32 %v8223, %v8223
      %v8352 = vmul.f32 %v8224, %v8224
      %v8353 = vmul.f32 %v8225, %v8225
      %v8354 = vmul.f32 %v8226, %v8226
      %v8355 = vmul.f32 %v8227, %v8227
      %v8356 = vmul.f32 %v8228, %v8228
      %v8357 = vmul.f32 %v8229, %v8229
      %v8358 = vmul.f32 %v8230, %v8230
      %v8359 = vmul.f32 %v8231, %v8231
      %v8360 = vmul.f32 %v8232, %v8232
      %v8361 = vmul.f32 %v8233, %v8233
      %v8362 = vmul.f32 %v8234, %v8234
      %v8363 = vmul.f32 %v8235, %v8235
      %v8364 = vmul.f32 %v8236, %v8236
      %v8365 = vmul.f32 %v8237, %v8237
      %v8366 = vmul.f32 %v8238, %v8238
      %v8367 = vmul.f32 %v8239, %v8239
      %v8368 = vmul.f32 %v8240, %v8240
      %v8369 = vmul.f32 %v8241, %v8241
      %v8370 = vmul.f32 %v8242, %v8242
      %v8371 = vmul.f32 %v8243, %v8243
      %v8372 = vmul.f32 %v8244, %v8244
      %v8373 = vmul.f32 %v8245, %v8245
      %v8374 = vmul.f32 %v8246, %v8246
      %v8375 = vmul.f32 %v8247, %v8247
      %v8376 = vmul.f32 %v8248, %v8248
      %v8377 = vmul.f32 %v8249, %v8249
      %v8378 = vmul.f32 %v8250, %v8250
      %v8379 = vmul.f32 %v8251, %v8251
      %v8380 = vmul.f32 %v8252, %v8252
      %v8381 = vmul.f32 %v8253, %v8253
      %v8382 = vmul.f32 %v8254, %v8254
      %v8383 = vmul.f32 %v8255, %v8255
      %v8384 = vmul.f32 %v8256, %v8256
      %v8385 = vmul.f32 %v8257, %v8257
      %v8386 = vmul.f32 %v8258, %v8258
      %v8387 = vmul.f32 %v8259, %v8259
      %v8388 = vmul.f32 %v8260, %v8260
      %v8389 = vmul.f32 %v8261, %v8261
      %v8390 = vmul.f32 %v8262, %v8262
      %v8391 = vmul.f32 %v8263, %v8263
      %v8392 = vmul.f32 %v8264, %v8264
      %v8393 = vmul.f32 %v8265, %v8265
      %v8394 = vmul.f32 %v8266, %v8266
      %v8395 = vmul.f32 %v8267, %v8267
      %v8396 = vmul.f32 %v8268, %v8268
      %v8397 = vmul.f32 %v8269, %v8269
      %v8398 = vmul.f32 %v8270, %v8270
      %v8399 = vmul.f32 %v8271, %v8271
      %v8400 = vmul.f32 %v8272, %v8272
      %v8401 = vmul.f32 %v8273, %v8273
      %v8402 = vmul.f32 %v8274, %v8274
      %v8403 = vmul.f32 %v8275, %v8275
      %v8404 = vmul.f32 %v8276, %v8276
      %v8405 = vmul.f32 %v8277, %v8277
      %v8406 = vmul.f32 %v8278, %v8278
      %v8407 = vmul.f32 %v8279, %v8279
      %v8408 = vmul.f32 %v8280, %v8280
      %v8409 = vmul.f32 %v8281, %v8281
      %v8410 = vmul.f32 %v8282, %v8282
      %v8411 = vmul.f32 %v8283, %v8283
      %v8412 = vmul.f32 %v8284, %v8284
      %v8413 = vmul.f32 %v8285, %v8285
      %v8414 = vmul.f32 %v8286, %v8286
      %v8415 = vmul.f32 %v8287, %v8287
      %v8416 = vmul.f32 %v8288, %v8288
      %v8417 = vmul.f32 %v8289, %v8289
      %v8418 = vmul.f32 %v8290, %v8290
      %v8419 = vmul.f32 %v8291, %v8291
      %v8420 = vmul.f32 %v8292, %v8292
      %v8421 = vmul.f32 %v8293, %v8293
      %v8422 = vmul.f32 %v8294, %v8294
      %v8423 = vmul.f32 %v8295, %v8295
      %v8424 = vmul.f32 %v8296, %v8296
      %v8425 = vmul.f32 %v8297, %v8297
      %v8426 = vmul.f32 %v8298, %v8298
      %v8427 = vmul.f32 %v8299, %v8299
      %v8428 = vmul.f32 %v8300, %v8300
      %v8429 = vmul.f32 %v8301, %v8301
      %v8430 = vmul.f32 %v8302, %v8302
      %v8431 = vmul.f32 %v8303, %v8303
      %v8432 = vmul.f32 %v8304, %v8304
      %v8433 = vmul.f32 %v8305, %v8305
      %v8434 = vmul.f32 %v8306, %v8306
      %v8435 = vmul.f32 %v8307, %v8307
      %v8436 = vmul.f32 %v8308, %v8308
      %v8437 = vmul.f32 %v8309, %v8309
      %v8438 = vmul.f32 %v8310, %v8310
      %v8439 = vmul.f32 %v8311, %v8311
      %v8440 = vmul.f32 %v8312, %v8312
      %v8441 = vmul.f32 %v8313, %v8313
      %v8442 = vmul.f32 %v8314, %v8314
      %v8443 = vmul.f32 %v8315, %v8315
      %v8444 = vmul.f32 %v8316, %v8316
      %v8445 = vmul.f32 %v8317, %v8317
      %v8446 = vmul.f32 %v8318, %v8318
      %v8447 = vmul.f32 %v8319, %v8319
      %v8448 = vmul.f32 %v8320, %v8320
      %v8449 = vmul.f32 %v8321, %v8321
      %v8450 = vmul.f32 %v8322, %v8322
      %v8451 = vmul.f32 %v8323, %v8323
      %v8452 = vmul.f32 %v8324, %v8324
      %v8453 = vmul.f32 %v8325, %v8325
      %v8454 = vmul.f32 %v8326, %v8326
      %v8455 = vmul.f32 %v8327, %v8327
      %v8456 = vmul.f32 %v8328, %v8328
      %v8457 = vmul.f32 %v8329, %v8329
      %v8458 = vmul.f32 %v8330, %v8330
      %v8459 = vmul.f32 %v8331, %v8331
      %v8460 = vmul.f32 %v8332, %v8332
      %v8461 = vmul.f32 %v8333, %v8333
      %v8462 = vmul.f32 %v8334, %v8334
      %v8463 = vmul.f32 %v8335, %v8335
      %v8464 = vmul.f32 %v8336, %v8336
      %v8465 = vmul.f32 %v8337, %v8337
      %v8466 = vmul.f32 %v8338, %v8338
      %v8467 = vmul.f32 %v8339, %v8339
      %v8468 = vmul.f32 %v8340, %v8340
      %v8469 = vmul.f32 %v8341, %v8341
      %v8470 = vmul.f32 %v8342, %v8342
      %v8471 = vmul.f32 %v8343, %v8343
      %v8472 = vmul.f32 %v8344, %v8344
      %v8473 = vmul.f32 %v8345, %v8345
      %v8474 = vmul.f32 %v8346, %v8346
      %v8475 = vmul.f32 %v8347, %v8347
      %v8476 = vmul.f32 %v8348, %v8348
      %v8477 = vmul.f32 %v8349, %v8349
      %v8478 = vmul.f32 %v8350, %v8350
      %v8479 = vmul.f32 %v8351, %v8351
      %v8480 = vmul.f32 %v8352, %v8352
      %v8481 = vmul.f32 %v8353, %v8353
      %v8482 = vmul.f32 %v8354, %v8354
      %v8483 = vmul.f32 %v8355, %v8355
      %v8484 = vmul.f32 %v8356, %v8356
      %v8485 = vmul.f32 %v8357, %v8357
      %v8486 = vmul.f32 %v8358, %v8358
      %v8487 = vmul.f32 %v8359, %v8359
      %v8488 = vmul.f32 %v8360, %v8360
      %v8489 = vmul.f32 %v8361, %v8361
      %v8490 = vmul.f32 %v8362, %v8362
      %v8491 = vmul.f32 %v8363, %v8363
      %v8492 = vmul.f32 %v8364, %v8364
      %v8493 = vmul.f32 %v8365, %v8365
      %v8494 = vmul.f32 %v8366, %v8366
      %v8495 = vmul.f32 %v8367, %v8367
      %v8496 = vmul.f32 %v8368, %v8368
      %v8497 = vmul.f32 %v8369, %v8369
      %v8498 = vmul.f32 %v8370, %v8370
      %v8499 = vmul.f32 %v8371, %v8371
      %v8500 = vmul.f32 %v8372, %v8372
      %v8501 = vmul.f32 %v8373, %v8373
      %v8502 = vmul.f32 %v8374, %v8374
      %v8503 = vmul.f32 %v8375, %v8375
      %v8504 = vmul.f32 %v8376, %v8376
      %v8505 = vmul.f32 %v8377, %v8377
      %v8506 = vmul.f32 %v8378, %v8378
      %v8507 = vmul.f32 %v8379, %v8379
      %v8508 = vmul.f32 %v8380, %v8380
      %v8509 = vmul.f32 %v8381, %v8381
      %v8510 = vmul.f32 %v8382, %v8382
      %v8511 = vmul.f32 %v8383, %v8383
      %v8512 = vmul.f32 %v8384, %v8384
      %v8513 = vmul.f32 %v8385, %v8385
      %v8514 = vmul.f32 %v8386, %v8386
      %v8515 = vmul.f32 %v8387, %v8387
      %v8516 = vmul.f32 %v8388, %v8388
      %v8517 = vmul.f32 %v8389, %v8389
      %v8518 = vmul.f32 %v8390, %v8390
      %v8519 = vmul.f32 %v8391, %v8391
      %v8520 = vmul.f32 %v8392, %v8392
      %v8521 = vmul.f32 %v8393, %v8393
      %v8522 = vmul.f32 %v8394, %v8394
      %v8523 = vmul.f32 %v8395, %v8395
      %v8524 = vmul.f32 %v8396, %v8396
      %v8525 = vmul.f32 %v8397, %v8397
      %v8526 = vmul.f32 %v8398, %v8398
      %v8527 = vmul.f32 %v8399, %v8399
      %v8528 = vmul.f32 %v8400, %v8400
      %v8529 = vmul.f32 %v8401, %v8401
      %v8530 = vmul.f32 %v8402, %v8402
      %v8531 = vmul.f32 %v8403, %v8403
      %v8532 = vmul.f32 %v8404, %v8404
      %v8533 = vmul.f32 %v8405, %v8405
      %v8534 = vmul.f32 %v8406, %v8406
      %v8535 = vmul.f32 %v8407, %v8407
      %v8536 = vmul.f32 %v8408, %v8408
      %v8537 = vmul.f32 %v8409, %v8409
      %v8538 = vmul.f32 %v8410, %v8410
      %v8539 = vmul.f32 %v8411, %v8411
      %v8540 = vmul.f32 %v8412, %v8412
      %v8541 = vmul.f32 %v8413, %v8413
      %v8542 = vmul.f32 %v8414, %v8414
      %v8543 = vmul.f32 %v8415, %v8415
      %v8544 = vmul.f32 %v8416, %v8416
      %v8545 = vmul.f32 %v8417, %v8417
      %v8546 = vmul.f32 %v8418, %v8418
      %v8547 = vmul.f32 %v8419, %v8419
      %v8548 = vmul.f32 %v8420, %v8420
      %v8549 = vmul.f32 %v8421, %v8421
      %v8550 = vmul.f32 %v8422, %v8422
      %v8551 = vmul.f32 %v8423, %v8423
      %v8552 = vmul.f32 %v8424, %v8424
      %v8553 = vmul.f32 %v8425, %v8425
      %v8554 = vmul.f32 %v8426, %v8426
      %v8555 = vmul.f32 %v8427, %v8427
      %v8556 = vmul.f32 %v8428, %v8428
      %v8557 = vmul.f32 %v8429, %v8429
      %v8558 = vmul.f32 %v8430, %v8430
      %v8559 = vmul.f32 %v8431, %v8431
      %v8560 = vmul.f32 %v8432, %v8432
      %v8561 = vmul.f32 %v8433, %v8433
      %v8562 = vmul.f32 %v8434, %v8434
      %v8563 = vmul.f32 %v8435, %v8435
      %v8564 = vmul.f32 %v8436, %v8436
      %v8565 = vmul.f32 %v8437, %v8437
      %v8566 = vmul.f32 %v8438, %v8438
      %v8567 = vmul.f32 %v8439, %v8439
      %v8568 = vmul.f32 %v8440, %v8440
      %v8569 = vmul.f32 %v8441, %v8441
      %v8570 = vmul.f32 %v8442, %v8442
      %v8571 = vmul.f32 %v8443, %v8443
      %v8572 = vmul.f32 %v8444, %v8444
      %v8573 = vmul.f32 %v8445, %v8445
      %v8574 = vmul.f32 %v8446, %v8446
      %v8575 = vmul.f32 %v8447, %v8447
      %v8576 = vmul.f32 %v8448, %v8448
      %v8577 = vmul.f32 %v8449, %v8449
      %v8578 = vmul.f32 %v8450, %v8450
      %v8579 = vmul.f32 %v8451, %v8451
      %v8580 = vmul.f32 %v8452, %v8452
      %v8581 = vmul.f32 %v8453, -0.41666666
      %v8582 = vmul.f32 %v8454, -0.41666666
      %v8583 = vmul.f32 %v8455, -0.41666666
      %v8584 = vmul.f32 %v8456, -0.41666666
      %v8585 = vmul.f32 %v8457, -0.41666666
      %v8586 = vmul.f32 %v8458, -0.41666666
      %v8587 = vmul.f32 %v8459, -0.41666666
      %v8588 = vmul.f32 %v8460, -0.41666666
      %v8589 = vmul.f32 %v8461, -0.41666666
      %v8590 = vmul.f32 %v8462, -0.41666666
      %v8591 = vmul.f32 %v8463, -0.41666666
      %v8592 = vmul.f32 %v8464, -0.41666666
      %v8593 = vmul.f32 %v8465, -0.41666666
      %v8594 = vmul.f32 %v8466, -0.41666666
      %v8595 = vmul.f32 %v8467, -0.41666666
      %v8596 = vmul.f32 %v8468, -0.41666666
      %v8597 = vmul.f32 %v8469, -0.41666666
      %v8598 = vmul.f32 %v8470, -0.41666666
      %v8599 = vmul.f32 %v8471, -0.41666666
      %v8600 = vmul.f32 %v8472, -0.41666666
      %v8601 = vmul.f32 %v8473, -0.41666666
      %v8602 = vmul.f32 %v8474, -0.41666666
      %v8603 = vmul.f32 %v8475, -0.41666666
      %v8604 = vmul.f32 %v8476, -0.41666666
      %v8605 = vmul.f32 %v8477, -0.41666666
      %v8606 = vmul.f32 %v8478, -0.41666666
      %v8607 = vmul.f32 %v8479, -0.41666666
      %v8608 = vmul.f32 %v8480, -0.41666666
      %v8609 = vmul.f32 %v8481, -0.41666666
      %v8610 = vmul.f32 %v8482, -0.41666666
      %v8611 = vmul.f32 %v8483, -0.41666666
      %v8612 = vmul.f32 %v8484, -0.41666666
      %v8613 = vmul.f32 %v8485, -0.41666666
      %v8614 = vmul.f32 %v8486, -0.41666666
      %v8615 = vmul.f32 %v8487, -0.41666666
      %v8616 = vmul.f32 %v8488, -0.41666666
      %v8617 = vmul.f32 %v8489, -0.41666666
      %v8618 = vmul.f32 %v8490, -0.41666666
      %v8619 = vmul.f32 %v8491, -0.41666666
      %v8620 = vmul.f32 %v8492, -0.41666666
      %v8621 = vmul.f32 %v8493, -0.41666666
      %v8622 = vmul.f32 %v8494, -0.41666666
      %v8623 = vmul.f32 %v8495, -0.41666666
      %v8624 = vmul.f32 %v8496, -0.41666666
      %v8625 = vmul.f32 %v8497, -0.41666666
      %v8626 = vmul.f32 %v8498, -0.41666666
      %v8627 = vmul.f32 %v8499, -0.41666666
      %v8628 = vmul.f32 %v8500, -0.41666666
      %v8629 = vmul.f32 %v8501, -0.41666666
      %v8630 = vmul.f32 %v8502, -0.41666666
      %v8631 = vmul.f32 %v8503, -0.41666666
      %v8632 = vmul.f32 %v8504, -0.41666666
      %v8633 = vmul.f32 %v8505, -0.41666666
      %v8634 = vmul.f32 %v8506, -0.41666666
      %v8635 = vmul.f32 %v8507, -0.41666666
      %v8636 = vmul.f32 %v8508, -0.41666666
      %v8637 = vmul.f32 %v8509, -0.41666666
      %v8638 = vmul.f32 %v8510, -0.41666666
      %v8639 = vmul.f32 %v8511, -0.41666666
      %v8640 = vmul.f32 %v8512, -0.41666666
      %v8641 = vmul.f32 %v8513, -0.41666666
      %v8642 = vmul.f32 %v8514, -0.41666666
      %v8643 = vmul.f32 %v8515, -0.41666666
      %v8644 = vmul.f32 %v8516, -0.41666666
      %v8645 = vmul.f32 %v8517, -0.41666666
      %v8646 = vmul.f32 %v8518, -0.41666666
      %v8647 = vmul.f32 %v8519, -0.41666666
      %v8648 = vmul.f32 %v8520, -0.41666666
      %v8649 = vmul.f32 %v8521, -0.41666666
      %v8650 = vmul.f32 %v8522, -0.41666666
      %v8651 = vmul.f32 %v8523, -0.41666666
      %v8652 = vmul.f32 %v8524, -0.41666666
      %v8653 = vmul.f32 %v8525, -0.41666666
      %v8654 = vmul.f32 %v8526, -0.41666666
      %v8655 = vmul.f32 %v8527, -0.41666666
      %v8656 = vmul.f32 %v8528, -0.41666666
      %v8657 = vmul.f32 %v8529, -0.41666666
      %v8658 = vmul.f32 %v8530, -0.41666666
      %v8659 = vmul.f32 %v8531, -0.41666666
      %v8660 = vmul.f32 %v8532, -0.41666666
      %v8661 = vmul.f32 %v8533, -0.41666666
      %v8662 = vmul.f32 %v8534, -0.41666666
      %v8663 = vmul.f32 %v8535, -0.41666666
      %v8664 = vmul.f32 %v8536, -0.41666666
      %v8665 = vmul.f32 %v8537, -0.41666666
      %v8666 = vmul.f32 %v8538, -0.41666666
      %v8667 = vmul.f32 %v8539, -0.41666666
      %v8668 = vmul.f32 %v8540, -0.41666666
      %v8669 = vmul.f32 %v8541, -0.41666666
      %v8670 = vmul.f32 %v8542, -0.41666666
      %v8671 = vmul.f32 %v8543, -0.41666666
      %v8672 = vmul.f32 %v8544, -0.41666666
      %v8673 = vmul.f32 %v8545, -0.41666666
      %v8674 = vmul.f32 %v8546, -0.41666666
      %v8675 = vmul.f32 %v8547, -0.41666666
      %v8676 = vmul.f32 %v8548, -0.41666666
      %v8677 = vmul.f32 %v8549, -0.41666666
      %v8678 = vmul.f32 %v8550, -0.41666666
      %v8679 = vmul.f32 %v8551, -0.41666666
      %v8680 = vmul.f32 %v8552, -0.41666666
      %v8681 = vmul.f32 %v8553, -0.41666666
      %v8682 = vmul.f32 %v8554, -0.41666666
      %v8683 = vmul.f32 %v8555, -0.41666666
      %v8684 = vmul.f32 %v8556, -0.41666666
      %v8685 = vmul.f32 %v8557, -0.41666666
      %v8686 = vmul.f32 %v8558, -0.41666666
      %v8687 = vmul.f32 %v8559, -0.41666666
      %v8688 = vmul.f32 %v8560, -0.41666666
      %v8689 = vmul.f32 %v8561, -0.41666666
      %v8690 = vmul.f32 %v8562, -0.41666666
      %v8691 = vmul.f32 %v8563, -0.41666666
      %v8692 = vmul.f32 %v8564, -0.41666666
      %v8693 = vmul.f32 %v8565, -0.41666666
      %v8694 = vmul.f32 %v8566, -0.41666666
      %v8695 = vmul.f32 %v8567, -0.41666666
      %v8696 = vmul.f32 %v8568, -0.41666666
      %v8697 = vmul.f32 %v8569, -0.41666666
      %v8698 = vmul.f32 %v8570, -0.41666666
      %v8699 = vmul.f32 %v8571, -0.41666666
      %v8700 = vmul.f32 %v8572, -0.41666666
      %v8701 = vmul.f32 %v8573, -0.41666666
      %v8702 = vmul.f32 %v8574, -0.41666666
      %v8703 = vmul.f32 %v8575, -0.41666666
      %v8704 = vmul.f32 %v8576, -0.41666666
      %v8705 = vmul.f32 %v8577, -0.41666666
      %v8706 = vmul.f32 %v8578, -0.41666666
      %v8707 = vmul.f32 %v8579, -0.41666666
      %v8708 = vmul.f32 %v8580, -0.41666666
      %v8709 = vadd.f32 %v7941, %v8581
      %v8710 = vadd.f32 %v7942, %v8582
      %v8711 = vadd.f32 %v7943, %v8583
      %v8712 = vadd.f32 %v7944, %v8584
      %v8713 = vadd.f32 %v7945, %v8585
      %v8714 = vadd.f32 %v7946, %v8586
      %v8715 = vadd.f32 %v7947, %v8587
      %v8716 = vadd.f32 %v7948, %v8588
      %v8717 = vadd.f32 %v7949, %v8589
      %v8718 = vadd.f32 %v7950, %v8590
      %v8719 = vadd.f32 %v7951, %v8591
      %v8720 = vadd.f32 %v7952, %v8592
      %v8721 = vadd.f32 %v7953, %v8593
      %v8722 = vadd.f32 %v7954, %v8594
      %v8723 = vadd.f32 %v7955, %v8595
      %v8724 = vadd.f32 %v7956, %v8596
      %v8725 = vadd.f32 %v7957, %v8597
      %v8726 = vadd.f32 %v7958, %v8598
      %v8727 = vadd.f32 %v7959, %v8599
      %v8728 = vadd.f32 %v7960, %v8600
      %v8729 = vadd.f32 %v7961, %v8601
      %v8730 = vadd.f32 %v7962, %v8602
      %v8731 = vadd.f32 %v7963, %v8603
      %v8732 = vadd.f32 %v7964, %v8604
      %v8733 = vadd.f32 %v7965, %v8605
      %v8734 = vadd.f32 %v7966, %v8606
      %v8735 = vadd.f32 %v7967, %v8607
      %v8736 = vadd.f32 %v7968, %v8608
      %v8737 = vadd.f32 %v7969, %v8609
      %v8738 = vadd.f32 %v7970, %v8610
      %v8739 = vadd.f32 %v7971, %v8611
      %v8740 = vadd.f32 %v7972, %v8612
      %v8741 = vadd.f32 %v7973, %v8613
      %v8742 = vadd.f32 %v7974, %v8614
      %v8743 = vadd.f32 %v7975, %v8615
      %v8744 = vadd.f32 %v7976, %v8616
      %v8745 = vadd.f32 %v7977, %v8617
      %v8746 = vadd.f32 %v7978, %v8618
      %v8747 = vadd.f32 %v7979, %v8619
      %v8748 = vadd.f32 %v7980, %v8620
      %v8749 = vadd.f32 %v7981, %v8621
      %v8750 = vadd.f32 %v7982, %v8622
      %v8751 = vadd.f32 %v7983, %v8623
      %v8752 = vadd.f32 %v7984, %v8624
      %v8753 = vadd.f32 %v7985, %v8625
      %v8754 = vadd.f32 %v7986, %v8626
      %v8755 = vadd.f32 %v7987, %v8627
      %v8756 = vadd.f32 %v7988, %v8628
      %v8757 = vadd.f32 %v7989, %v8629
      %v8758 = vadd.f32 %v7990, %v8630
      %v8759 = vadd.f32 %v7991, %v8631
      %v8760 = vadd.f32 %v7992, %v8632
      %v8761 = vadd.f32 %v7993, %v8633
      %v8762 = vadd.f32 %v7994, %v8634
      %v8763 = vadd.f32 %v7995, %v8635
      %v8764 = vadd.f32 %v7996, %v8636
      %v8765 = vadd.f32 %v7997, %v8637
      %v8766 = vadd.f32 %v7998, %v8638
      %v8767 = vadd.f32 %v7999, %v8639
      %v8768 = vadd.f32 %v8000, %v8640
      %v8769 = vadd.f32 %v8001, %v8641
      %v8770 = vadd.f32 %v8002, %v8642
      %v8771 = vadd.f32 %v8003, %v8643
      %v8772 = vadd.f32 %v8004, %v8644
      %v8773 = vadd.f32 %v8005, %v8645
      %v8774 = vadd.f32 %v8006, %v8646
      %v8775 = vadd.f32 %v8007, %v8647
      %v8776 = vadd.f32 %v8008, %v8648
      %v8777 = vadd.f32 %v8009, %v8649
      %v8778 = vadd.f32 %v8010, %v8650
      %v8779 = vadd.f32 %v8011, %v8651
      %v8780 = vadd.f32 %v8012, %v8652
      %v8781 = vadd.f32 %v8013, %v8653
      %v8782 = vadd.f32 %v8014, %v8654
      %v8783 = vadd.f32 %v8015, %v8655
      %v8784 = vadd.f32 %v8016, %v8656
      %v8785 = vadd.f32 %v8017, %v8657
      %v8786 = vadd.f32 %v8018, %v8658
      %v8787 = vadd.f32 %v8019, %v8659
      %v8788 = vadd.f32 %v8020, %v8660
      %v8789 = vadd.f32 %v8021, %v8661
      %v8790 = vadd.f32 %v8022, %v8662
      %v8791 = vadd.f32 %v8023, %v8663
      %v8792 = vadd.f32 %v8024, %v8664
      %v8793 = vadd.f32 %v8025, %v8665
      %v8794 = vadd.f32 %v8026, %v8666
      %v8795 = vadd.f32 %v8027, %v8667
      %v8796 = vadd.f32 %v8028, %v8668
      %v8797 = vadd.f32 %v8029, %v8669
      %v8798 = vadd.f32 %v8030, %v8670
      %v8799 = vadd.f32 %v8031, %v8671
      %v8800 = vadd.f32 %v8032, %v8672
      %v8801 = vadd.f32 %v8033, %v8673
      %v8802 = vadd.f32 %v8034, %v8674
      %v8803 = vadd.f32 %v8035, %v8675
      %v8804 = vadd.f32 %v8036, %v8676
      %v8805 = vadd.f32 %v8037, %v8677
      %v8806 = vadd.f32 %v8038, %v8678
      %v8807 = vadd.f32 %v8039, %v8679
      %v8808 = vadd.f32 %v8040, %v8680
      %v8809 = vadd.f32 %v8041, %v8681
      %v8810 = vadd.f32 %v8042, %v8682
      %v8811 = vadd.f32 %v8043, %v8683
      %v8812 = vadd.f32 %v8044, %v8684
      %v8813 = vadd.f32 %v8045, %v8685
      %v8814 = vadd.f32 %v8046, %v8686
      %v8815 = vadd.f32 %v8047, %v8687
      %v8816 = vadd.f32 %v8048, %v8688
      %v8817 = vadd.f32 %v8049, %v8689
      %v8818 = vadd.f32 %v8050, %v8690
      %v8819 = vadd.f32 %v8051, %v8691
      %v8820 = vadd.f32 %v8052, %v8692
      %v8821 = vadd.f32 %v8053, %v8693
      %v8822 = vadd.f32 %v8054, %v8694
      %v8823 = vadd.f32 %v8055, %v8695
      %v8824 = vadd.f32 %v8056, %v8696
      %v8825 = vadd.f32 %v8057, %v8697
      %v8826 = vadd.f32 %v8058, %v8698
      %v8827 = vadd.f32 %v8059, %v8699
      %v8828 = vadd.f32 %v8060, %v8700
      %v8829 = vadd.f32 %v8061, %v8701
      %v8830 = vadd.f32 %v8062, %v8702
      %v8831 = vadd.f32 %v8063, %v8703
      %v8832 = vadd.f32 %v8064, %v8704
      %v8833 = vadd.f32 %v8065, %v8705
      %v8834 = vadd.f32 %v8066, %v8706
      %v8835 = vadd.f32 %v8067, %v8707
      %v8836 = vadd.f32 %v8068, %v8708
      %v8837 = vsub.f32 %v5893, 4.0
      %v8838 = vsub.f32 %v5894, 4.0
      %v8839 = vsub.f32 %v5895, 4.0
      %v8840 = vsub.f32 %v5896, 4.0
      %v8841 = vsub.f32 %v5897, 4.0
      %v8842 = vsub.f32 %v5898, 4.0
      %v8843 = vsub.f32 %v5899, 4.0
      %v8844 = vsub.f32 %v5900, 4.0
      %v8845 = vsub.f32 %v5901, 4.0
      %v8846 = vsub.f32 %v5902, 4.0
      %v8847 = vsub.f32 %v5903, 4.0
      %v8848 = vsub.f32 %v5904, 4.0
      %v8849 = vsub.f32 %v5905, 4.0
      %v8850 = vsub.f32 %v5906, 4.0
      %v8851 = vsub.f32 %v5907, 4.0
      %v8852 = vsub.f32 %v5908, 4.0
      %v8853 = vsub.f32 %v5909, 4.0
      %v8854 = vsub.f32 %v5910, 4.0
      %v8855 = vsub.f32 %v5911, 4.0
      %v8856 = vsub.f32 %v5912, 4.0
      %v8857 = vsub.f32 %v5913, 4.0
      %v8858 = vsub.f32 %v5914, 4.0
      %v8859 = vsub.f32 %v5915, 4.0
      %v8860 = vsub.f32 %v5916, 4.0
      %v8861 = vsub.f32 %v5917, 4.0
      %v8862 = vsub.f32 %v5918, 4.0
      %v8863 = vsub.f32 %v5919, 4.0
      %v8864 = vsub.f32 %v5920, 4.0
      %v8865 = vsub.f32 %v5921, 4.0
      %v8866 = vsub.f32 %v5922, 4.0
      %v8867 = vsub.f32 %v5923, 4.0
      %v8868 = vsub.f32 %v5924, 4.0
      %v8869 = vsub.f32 %v5925, 4.0
      %v8870 = vsub.f32 %v5926, 4.0
      %v8871 = vsub.f32 %v5927, 4.0
      %v8872 = vsub.f32 %v5928, 4.0
      %v8873 = vsub.f32 %v5929, 4.0
      %v8874 = vsub.f32 %v5930, 4.0
      %v8875 = vsub.f32 %v5931, 4.0
      %v8876 = vsub.f32 %v5932, 4.0
      %v8877 = vsub.f32 %v5933, 4.0
      %v8878 = vsub.f32 %v5934, 4.0
      %v8879 = vsub.f32 %v5935, 4.0
      %v8880 = vsub.f32 %v5936, 4.0
      %v8881 = vsub.f32 %v5937, 4.0
      %v8882 = vsub.f32 %v5938, 4.0
      %v8883 = vsub.f32 %v5939, 4.0
      %v8884 = vsub.f32 %v5940, 4.0
      %v8885 = vsub.f32 %v5941, 4.0
      %v8886 = vsub.f32 %v5942, 4.0
      %v8887 = vsub.f32 %v5943, 4.0
      %v8888 = vsub.f32 %v5944, 4.0
      %v8889 = vsub.f32 %v5945, 4.0
      %v8890 = vsub.f32 %v5946, 4.0
      %v8891 = vsub.f32 %v5947, 4.0
      %v8892 = vsub.f32 %v5948, 4.0
      %v8893 = vsub.f32 %v5949, 4.0
      %v8894 = vsub.f32 %v5950, 4.0
      %v8895 = vsub.f32 %v5951, 4.0
      %v8896 = vsub.f32 %v5952, 4.0
      %v8897 = vsub.f32 %v5953, 4.0
      %v8898 = vsub.f32 %v5954, 4.0
      %v8899 = vsub.f32 %v5955, 4.0
      %v8900 = vsub.f32 %v5956, 4.0
      %v8901 = vsub.f32 %v5957, 4.0
      %v8902 = vsub.f32 %v5958, 4.0
      %v8903 = vsub.f32 %v5959, 4.0
      %v8904 = vsub.f32 %v5960, 4.0
      %v8905 = vsub.f32 %v5961, 4.0
      %v8906 = vsub.f32 %v5962, 4.0
      %v8907 = vsub.f32 %v5963, 4.0
      %v8908 = vsub.f32 %v5964, 4.0
      %v8909 = vsub.f32 %v5965, 4.0
      %v8910 = vsub.f32 %v5966, 4.0
      %v8911 = vsub.f32 %v5967, 4.0
      %v8912 = vsub.f32 %v5968, 4.0
      %v8913 = vsub.f32 %v5969, 4.0
      %v8914 = vsub.f32 %v5970, 4.0
      %v8915 = vsub.f32 %v5971, 4.0
      %v8916 = vsub.f32 %v5972, 4.0
      %v8917 = vsub.f32 %v5973, 4.0
      %v8918 = vsub.f32 %v5974, 4.0
      %v8919 = vsub.f32 %v5975, 4.0
      %v8920 = vsub.f32 %v5976, 4.0
      %v8921 = vsub.f32 %v5977, 4.0
      %v8922 = vsub.f32 %v5978, 4.0
      %v8923 = vsub.f32 %v5979, 4.0
      %v8924 = vsub.f32 %v5980, 4.0
      %v8925 = vsub.f32 %v5981, 4.0
      %v8926 = vsub.f32 %v5982, 4.0
      %v8927 = vsub.f32 %v5983, 4.0
      %v8928 = vsub.f32 %v5984, 4.0
      %v8929 = vsub.f32 %v5985, 4.0
      %v8930 = vsub.f32 %v5986, 4.0
      %v8931 = vsub.f32 %v5987, 4.0
      %v8932 = vsub.f32 %v5988, 4.0
      %v8933 = vsub.f32 %v5989, 4.0
      %v8934 = vsub.f32 %v5990, 4.0
      %v8935 = vsub.f32 %v5991, 4.0
      %v8936 = vsub.f32 %v5992, 4.0
      %v8937 = vsub.f32 %v5993, 4.0
      %v8938 = vsub.f32 %v5994, 4.0
      %v8939 = vsub.f32 %v5995, 4.0
      %v8940 = vsub.f32 %v5996, 4.0
      %v8941 = vsub.f32 %v5997, 4.0
      %v8942 = vsub.f32 %v5998, 4.0
      %v8943 = vsub.f32 %v5999, 4.0
      %v8944 = vsub.f32 %v6000, 4.0
      %v8945 = vsub.f32 %v6001, 4.0
      %v8946 = vsub.f32 %v6002, 4.0
      %v8947 = vsub.f32 %v6003, 4.0
      %v8948 = vsub.f32 %v6004, 4.0
      %v8949 = vsub.f32 %v6005, 4.0
      %v8950 = vsub.f32 %v6006, 4.0
      %v8951 = vsub.f32 %v6007, 4.0
      %v8952 = vsub.f32 %v6008, 4.0
      %v8953 = vsub.f32 %v6009, 4.0
      %v8954 = vsub.f32 %v6010, 4.0
      %v8955 = vsub.f32 %v6011, 4.0
      %v8956 = vsub.f32 %v6012, 4.0
      %v8957 = vsub.f32 %v6013, 4.0
      %v8958 = vsub.f32 %v6014, 4.0
      %v8959 = vsub.f32 %v6015, 4.0
      %v8960 = vsub.f32 %v6016, 4.0
      %v8961 = vsub.f32 %v6017, 4.0
      %v8962 = vsub.f32 %v6018, 4.0
      %v8963 = vsub.f32 %v6019, 4.0
      %v8964 = vsub.f32 %v6020, 4.0
      %v8965 = vmax.f32 %v8837, 0.0
      %v8966 = vmax.f32 %v8838, 0.0
      %v8967 = vmax.f32 %v8839, 0.0
      %v8968 = vmax.f32 %v8840, 0.0
      %v8969 = vmax.f32 %v8841, 0.0
      %v8970 = vmax.f32 %v8842, 0.0
      %v8971 = vmax.f32 %v8843, 0.0
      %v8972 = vmax.f32 %v8844, 0.0
      %v8973 = vmax.f32 %v8845, 0.0
      %v8974 = vmax.f32 %v8846, 0.0
      %v8975 = vmax.f32 %v8847, 0.0
      %v8976 = vmax.f32 %v8848, 0.0
      %v8977 = vmax.f32 %v8849, 0.0
      %v8978 = vmax.f32 %v8850, 0.0
      %v8979 = vmax.f32 %v8851, 0.0
      %v8980 = vmax.f32 %v8852, 0.0
      %v8981 = vmax.f32 %v8853, 0.0
      %v8982 = vmax.f32 %v8854, 0.0
      %v8983 = vmax.f32 %v8855, 0.0
      %v8984 = vmax.f32 %v8856, 0.0
      %v8985 = vmax.f32 %v8857, 0.0
      %v8986 = vmax.f32 %v8858, 0.0
      %v8987 = vmax.f32 %v8859, 0.0
      %v8988 = vmax.f32 %v8860, 0.0
      %v8989 = vmax.f32 %v8861, 0.0
      %v8990 = vmax.f32 %v8862, 0.0
      %v8991 = vmax.f32 %v8863, 0.0
      %v8992 = vmax.f32 %v8864, 0.0
      %v8993 = vmax.f32 %v8865, 0.0
      %v8994 = vmax.f32 %v8866, 0.0
      %v8995 = vmax.f32 %v8867, 0.0
      %v8996 = vmax.f32 %v8868, 0.0
      %v8997 = vmax.f32 %v8869, 0.0
      %v8998 = vmax.f32 %v8870, 0.0
      %v8999 = vmax.f32 %v8871, 0.0
      %v9000 = vmax.f32 %v8872, 0.0
      %v9001 = vmax.f32 %v8873, 0.0
      %v9002 = vmax.f32 %v8874, 0.0
      %v9003 = vmax.f32 %v8875, 0.0
      %v9004 = vmax.f32 %v8876, 0.0
      %v9005 = vmax.f32 %v8877, 0.0
      %v9006 = vmax.f32 %v8878, 0.0
      %v9007 = vmax.f32 %v8879, 0.0
      %v9008 = vmax.f32 %v8880, 0.0
      %v9009 = vmax.f32 %v8881, 0.0
      %v9010 = vmax.f32 %v8882, 0.0
      %v9011 = vmax.f32 %v8883, 0.0
      %v9012 = vmax.f32 %v8884, 0.0
      %v9013 = vmax.f32 %v8885, 0.0
      %v9014 = vmax.f32 %v8886, 0.0
      %v9015 = vmax.f32 %v8887, 0.0
      %v9016 = vmax.f32 %v8888, 0.0
      %v9017 = vmax.f32 %v8889, 0.0
      %v9018 = vmax.f32 %v8890, 0.0
      %v9019 = vmax.f32 %v8891, 0.0
      %v9020 = vmax.f32 %v8892, 0.0
      %v9021 = vmax.f32 %v8893, 0.0
      %v9022 = vmax.f32 %v8894, 0.0
      %v9023 = vmax.f32 %v8895, 0.0
      %v9024 = vmax.f32 %v8896, 0.0
      %v9025 = vmax.f32 %v8897, 0.0
      %v9026 = vmax.f32 %v8898, 0.0
      %v9027 = vmax.f32 %v8899, 0.0
      %v9028 = vmax.f32 %v8900, 0.0
      %v9029 = vmax.f32 %v8901, 0.0
      %v9030 = vmax.f32 %v8902, 0.0
      %v9031 = vmax.f32 %v8903, 0.0
      %v9032 = vmax.f32 %v8904, 0.0
      %v9033 = vmax.f32 %v8905, 0.0
      %v9034 = vmax.f32 %v8906, 0.0
      %v9035 = vmax.f32 %v8907, 0.0
      %v9036 = vmax.f32 %v8908, 0.0
      %v9037 = vmax.f32 %v8909, 0.0
      %v9038 = vmax.f32 %v8910, 0.0
      %v9039 = vmax.f32 %v8911, 0.0
      %v9040 = vmax.f32 %v8912, 0.0
      %v9041 = vmax.f32 %v8913, 0.0
      %v9042 = vmax.f32 %v8914, 0.0
      %v9043 = vmax.f32 %v8915, 0.0
      %v9044 = vmax.f32 %v8916, 0.0
      %v9045 = vmax.f32 %v8917, 0.0
      %v9046 = vmax.f32 %v8918, 0.0
      %v9047 = vmax.f32 %v8919, 0.0
      %v9048 = vmax.f32 %v8920, 0.0
      %v9049 = vmax.f32 %v8921, 0.0
      %v9050 = vmax.f32 %v8922, 0.0
      %v9051 = vmax.f32 %v8923, 0.0
      %v9052 = vmax.f32 %v8924, 0.0
      %v9053 = vmax.f32 %v8925, 0.0
      %v9054 = vmax.f32 %v8926, 0.0
      %v9055 = vmax.f32 %v8927, 0.0
      %v9056 = vmax.f32 %v8928, 0.0
      %v9057 = vmax.f32 %v8929, 0.0
      %v9058 = vmax.f32 %v8930, 0.0
      %v9059 = vmax.f32 %v8931, 0.0
      %v9060 = vmax.f32 %v8932, 0.0
      %v9061 = vmax.f32 %v8933, 0.0
      %v9062 = vmax.f32 %v8934, 0.0
      %v9063 = vmax.f32 %v8935, 0.0
      %v9064 = vmax.f32 %v8936, 0.0
      %v9065 = vmax.f32 %v8937, 0.0
      %v9066 = vmax.f32 %v8938, 0.0
      %v9067 = vmax.f32 %v8939, 0.0
      %v9068 = vmax.f32 %v8940, 0.0
      %v9069 = vmax.f32 %v8941, 0.0
      %v9070 = vmax.f32 %v8942, 0.0
      %v9071 = vmax.f32 %v8943, 0.0
      %v9072 = vmax.f32 %v8944, 0.0
      %v9073 = vmax.f32 %v8945, 0.0
      %v9074 = vmax.f32 %v8946, 0.0
      %v9075 = vmax.f32 %v8947, 0.0
      %v9076 = vmax.f32 %v8948, 0.0
      %v9077 = vmax.f32 %v8949, 0.0
      %v9078 = vmax.f32 %v8950, 0.0
      %v9079 = vmax.f32 %v8951, 0.0
      %v9080 = vmax.f32 %v8952, 0.0
      %v9081 = vmax.f32 %v8953, 0.0
      %v9082 = vmax.f32 %v8954, 0.0
      %v9083 = vmax.f32 %v8955, 0.0
      %v9084 = vmax.f32 %v8956, 0.0
      %v9085 = vmax.f32 %v8957, 0.0
      %v9086 = vmax.f32 %v8958, 0.0
      %v9087 = vmax.f32 %v8959, 0.0
      %v9088 = vmax.f32 %v8960, 0.0
      %v9089 = vmax.f32 %v8961, 0.0
      %v9090 = vmax.f32 %v8962, 0.0
      %v9091 = vmax.f32 %v8963, 0.0
      %v9092 = vmax.f32 %v8964, 0.0
      %v9093 = vmul.f32 %v8965, %v8965
      %v9094 = vmul.f32 %v8966, %v8966
      %v9095 = vmul.f32 %v8967, %v8967
      %v9096 = vmul.f32 %v8968, %v8968
      %v9097 = vmul.f32 %v8969, %v8969
      %v9098 = vmul.f32 %v8970, %v8970
      %v9099 = vmul.f32 %v8971, %v8971
      %v9100 = vmul.f32 %v8972, %v8972
      %v9101 = vmul.f32 %v8973, %v8973
      %v9102 = vmul.f32 %v8974, %v8974
      %v9103 = vmul.f32 %v8975, %v8975
      %v9104 = vmul.f32 %v8976, %v8976
      %v9105 = vmul.f32 %v8977, %v8977
      %v9106 = vmul.f32 %v8978, %v8978
      %v9107 = vmul.f32 %v8979, %v8979
      %v9108 = vmul.f32 %v8980, %v8980
      %v9109 = vmul.f32 %v8981, %v8981
      %v9110 = vmul.f32 %v8982, %v8982
      %v9111 = vmul.f32 %v8983, %v8983
      %v9112 = vmul.f32 %v8984, %v8984
      %v9113 = vmul.f32 %v8985, %v8985
      %v9114 = vmul.f32 %v8986, %v8986
      %v9115 = vmul.f32 %v8987, %v8987
      %v9116 = vmul.f32 %v8988, %v8988
      %v9117 = vmul.f32 %v8989, %v8989
      %v9118 = vmul.f32 %v8990, %v8990
      %v9119 = vmul.f32 %v8991, %v8991
      %v9120 = vmul.f32 %v8992, %v8992
      %v9121 = vmul.f32 %v8993, %v8993
      %v9122 = vmul.f32 %v8994, %v8994
      %v9123 = vmul.f32 %v8995, %v8995
      %v9124 = vmul.f32 %v8996, %v8996
      %v9125 = vmul.f32 %v8997, %v8997
      %v9126 = vmul.f32 %v8998, %v8998
      %v9127 = vmul.f32 %v8999, %v8999
      %v9128 = vmul.f32 %v9000, %v9000
      %v9129 = vmul.f32 %v9001, %v9001
      %v9130 = vmul.f32 %v9002, %v9002
      %v9131 = vmul.f32 %v9003, %v9003
      %v9132 = vmul.f32 %v9004, %v9004
      %v9133 = vmul.f32 %v9005, %v9005
      %v9134 = vmul.f32 %v9006, %v9006
      %v9135 = vmul.f32 %v9007, %v9007
      %v9136 = vmul.f32 %v9008, %v9008
      %v9137 = vmul.f32 %v9009, %v9009
      %v9138 = vmul.f32 %v9010, %v9010
      %v9139 = vmul.f32 %v9011, %v9011
      %v9140 = vmul.f32 %v9012, %v9012
      %v9141 = vmul.f32 %v9013, %v9013
      %v9142 = vmul.f32 %v9014, %v9014
      %v9143 = vmul.f32 %v9015, %v9015
      %v9144 = vmul.f32 %v9016, %v9016
      %v9145 = vmul.f32 %v9017, %v9017
      %v9146 = vmul.f32 %v9018, %v9018
      %v9147 = vmul.f32 %v9019, %v9019
      %v9148 = vmul.f32 %v9020, %v9020
      %v9149 = vmul.f32 %v9021, %v9021
      %v9150 = vmul.f32 %v9022, %v9022
      %v9151 = vmul.f32 %v9023, %v9023
      %v9152 = vmul.f32 %v9024, %v9024
      %v9153 = vmul.f32 %v9025, %v9025
      %v9154 = vmul.f32 %v9026, %v9026
      %v9155 = vmul.f32 %v9027, %v9027
      %v9156 = vmul.f32 %v9028, %v9028
      %v9157 = vmul.f32 %v9029, %v9029
      %v9158 = vmul.f32 %v9030, %v9030
      %v9159 = vmul.f32 %v9031, %v9031
      %v9160 = vmul.f32 %v9032, %v9032
      %v9161 = vmul.f32 %v9033, %v9033
      %v9162 = vmul.f32 %v9034, %v9034
      %v9163 = vmul.f32 %v9035, %v9035
      %v9164 = vmul.f32 %v9036, %v9036
      %v9165 = vmul.f32 %v9037, %v9037
      %v9166 = vmul.f32 %v9038, %v9038
      %v9167 = vmul.f32 %v9039, %v9039
      %v9168 = vmul.f32 %v9040, %v9040
      %v9169 = vmul.f32 %v9041, %v9041
      %v9170 = vmul.f32 %v9042, %v9042
      %v9171 = vmul.f32 %v9043, %v9043
      %v9172 = vmul.f32 %v9044, %v9044
      %v9173 = vmul.f32 %v9045, %v9045
      %v9174 = vmul.f32 %v9046, %v9046
      %v9175 = vmul.f32 %v9047, %v9047
      %v9176 = vmul.f32 %v9048, %v9048
      %v9177 = vmul.f32 %v9049, %v9049
      %v9178 = vmul.f32 %v9050, %v9050
      %v9179 = vmul.f32 %v9051, %v9051
      %v9180 = vmul.f32 %v9052, %v9052
      %v9181 = vmul.f32 %v9053, %v9053
      %v9182 = vmul.f32 %v9054, %v9054
      %v9183 = vmul.f32 %v9055, %v9055
      %v9184 = vmul.f32 %v9056, %v9056
      %v9185 = vmul.f32 %v9057, %v9057
      %v9186 = vmul.f32 %v9058, %v9058
      %v9187 = vmul.f32 %v9059, %v9059
      %v9188 = vmul.f32 %v9060, %v9060
      %v9189 = vmul.f32 %v9061, %v9061
      %v9190 = vmul.f32 %v9062, %v9062
      %v9191 = vmul.f32 %v9063, %v9063
      %v9192 = vmul.f32 %v9064, %v9064
      %v9193 = vmul.f32 %v9065, %v9065
      %v9194 = vmul.f32 %v9066, %v9066
      %v9195 = vmul.f32 %v9067, %v9067
      %v9196 = vmul.f32 %v9068, %v9068
      %v9197 = vmul.f32 %v9069, %v9069
      %v9198 = vmul.f32 %v9070, %v9070
      %v9199 = vmul.f32 %v9071, %v9071
      %v9200 = vmul.f32 %v9072, %v9072
      %v9201 = vmul.f32 %v9073, %v9073
      %v9202 = vmul.f32 %v9074, %v9074
      %v9203 = vmul.f32 %v9075, %v9075
      %v9204 = vmul.f32 %v9076, %v9076
      %v9205 = vmul.f32 %v9077, %v9077
      %v9206 = vmul.f32 %v9078, %v9078
      %v9207 = vmul.f32 %v9079, %v9079
      %v9208 = vmul.f32 %v9080, %v9080
      %v9209 = vmul.f32 %v9081, %v9081
      %v9210 = vmul.f32 %v9082, %v9082
      %v9211 = vmul.f32 %v9083, %v9083
      %v9212 = vmul.f32 %v9084, %v9084
      %v9213 = vmul.f32 %v9085, %v9085
      %v9214 = vmul.f32 %v9086, %v9086
      %v9215 = vmul.f32 %v9087, %v9087
      %v9216 = vmul.f32 %v9088, %v9088
      %v9217 = vmul.f32 %v9089, %v9089
      %v9218 = vmul.f32 %v9090, %v9090
      %v9219 = vmul.f32 %v9091, %v9091
      %v9220 = vmul.f32 %v9092, %v9092
      %v9221 = vmul.f32 %v9093, %v9093
      %v9222 = vmul.f32 %v9094, %v9094
      %v9223 = vmul.f32 %v9095, %v9095
      %v9224 = vmul.f32 %v9096, %v9096
      %v9225 = vmul.f32 %v9097, %v9097
      %v9226 = vmul.f32 %v9098, %v9098
      %v9227 = vmul.f32 %v9099, %v9099
      %v9228 = vmul.f32 %v9100, %v9100
      %v9229 = vmul.f32 %v9101, %v9101
      %v9230 = vmul.f32 %v9102, %v9102
      %v9231 = vmul.f32 %v9103, %v9103
      %v9232 = vmul.f32 %v9104, %v9104
      %v9233 = vmul.f32 %v9105, %v9105
      %v9234 = vmul.f32 %v9106, %v9106
      %v9235 = vmul.f32 %v9107, %v9107
      %v9236 = vmul.f32 %v9108, %v9108
      %v9237 = vmul.f32 %v9109, %v9109
      %v9238 = vmul.f32 %v9110, %v9110
      %v9239 = vmul.f32 %v9111, %v9111
      %v9240 = vmul.f32 %v9112, %v9112
      %v9241 = vmul.f32 %v9113, %v9113
      %v9242 = vmul.f32 %v9114, %v9114
      %v9243 = vmul.f32 %v9115, %v9115
      %v9244 = vmul.f32 %v9116, %v9116
      %v9245 = vmul.f32 %v9117, %v9117
      %v9246 = vmul.f32 %v9118, %v9118
      %v9247 = vmul.f32 %v9119, %v9119
      %v9248 = vmul.f32 %v9120, %v9120
      %v9249 = vmul.f32 %v9121, %v9121
      %v9250 = vmul.f32 %v9122, %v9122
      %v9251 = vmul.f32 %v9123, %v9123
      %v9252 = vmul.f32 %v9124, %v9124
      %v9253 = vmul.f32 %v9125, %v9125
      %v9254 = vmul.f32 %v9126, %v9126
      %v9255 = vmul.f32 %v9127, %v9127
      %v9256 = vmul.f32 %v9128, %v9128
      %v9257 = vmul.f32 %v9129, %v9129
      %v9258 = vmul.f32 %v9130, %v9130
      %v9259 = vmul.f32 %v9131, %v9131
      %v9260 = vmul.f32 %v9132, %v9132
      %v9261 = vmul.f32 %v9133, %v9133
      %v9262 = vmul.f32 %v9134, %v9134
      %v9263 = vmul.f32 %v9135, %v9135
      %v9264 = vmul.f32 %v9136, %v9136
      %v9265 = vmul.f32 %v9137, %v9137
      %v9266 = vmul.f32 %v9138, %v9138
      %v9267 = vmul.f32 %v9139, %v9139
      %v9268 = vmul.f32 %v9140, %v9140
      %v9269 = vmul.f32 %v9141, %v9141
      %v9270 = vmul.f32 %v9142, %v9142
      %v9271 = vmul.f32 %v9143, %v9143
      %v9272 = vmul.f32 %v9144, %v9144
      %v9273 = vmul.f32 %v9145, %v9145
      %v9274 = vmul.f32 %v9146, %v9146
      %v9275 = vmul.f32 %v9147, %v9147
      %v9276 = vmul.f32 %v9148, %v9148
      %v9277 = vmul.f32 %v9149, %v9149
      %v9278 = vmul.f32 %v9150, %v9150
      %v9279 = vmul.f32 %v9151, %v9151
      %v9280 = vmul.f32 %v9152, %v9152
      %v9281 = vmul.f32 %v9153, %v9153
      %v9282 = vmul.f32 %v9154, %v9154
      %v9283 = vmul.f32 %v9155, %v9155
      %v9284 = vmul.f32 %v9156, %v9156
      %v9285 = vmul.f32 %v9157, %v9157
      %v9286 = vmul.f32 %v9158, %v9158
      %v9287 = vmul.f32 %v9159, %v9159
      %v9288 = vmul.f32 %v9160, %v9160
      %v9289 = vmul.f32 %v9161, %v9161
      %v9290 = vmul.f32 %v9162, %v9162
      %v9291 = vmul.f32 %v9163, %v9163
      %v9292 = vmul.f32 %v9164, %v9164
      %v9293 = vmul.f32 %v9165, %v9165
      %v9294 = vmul.f32 %v9166, %v9166
      %v9295 = vmul.f32 %v9167, %v9167
      %v9296 = vmul.f32 %v9168, %v9168
      %v9297 = vmul.f32 %v9169, %v9169
      %v9298 = vmul.f32 %v9170, %v9170
      %v9299 = vmul.f32 %v9171, %v9171
      %v9300 = vmul.f32 %v9172, %v9172
      %v9301 = vmul.f32 %v9173, %v9173
      %v9302 = vmul.f32 %v9174, %v9174
      %v9303 = vmul.f32 %v9175, %v9175
      %v9304 = vmul.f32 %v9176, %v9176
      %v9305 = vmul.f32 %v9177, %v9177
      %v9306 = vmul.f32 %v9178, %v9178
      %v9307 = vmul.f32 %v9179, %v9179
      %v9308 = vmul.f32 %v9180, %v9180
      %v9309 = vmul.f32 %v9181, %v9181
      %v9310 = vmul.f32 %v9182, %v9182
      %v9311 = vmul.f32 %v9183, %v9183
      %v9312 = vmul.f32 %v9184, %v9184
      %v9313 = vmul.f32 %v9185, %v9185
      %v9314 = vmul.f32 %v9186, %v9186
      %v9315 = vmul.f32 %v9187, %v9187
      %v9316 = vmul.f32 %v9188, %v9188
      %v9317 = vmul.f32 %v9189, %v9189
      %v9318 = vmul.f32 %v9190, %v9190
      %v9319 = vmul.f32 %v9191, %v9191
      %v9320 = vmul.f32 %v9192, %v9192
      %v9321 = vmul.f32 %v9193, %v9193
      %v9322 = vmul.f32 %v9194, %v9194
      %v9323 = vmul.f32 %v9195, %v9195
      %v9324 = vmul.f32 %v9196, %v9196
      %v9325 = vmul.f32 %v9197, %v9197
      %v9326 = vmul.f32 %v9198, %v9198
      %v9327 = vmul.f32 %v9199, %v9199
      %v9328 = vmul.f32 %v9200, %v9200
      %v9329 = vmul.f32 %v9201, %v9201
      %v9330 = vmul.f32 %v9202, %v9202
      %v9331 = vmul.f32 %v9203, %v9203
      %v9332 = vmul.f32 %v9204, %v9204
      %v9333 = vmul.f32 %v9205, %v9205
      %v9334 = vmul.f32 %v9206, %v9206
      %v9335 = vmul.f32 %v9207, %v9207
      %v9336 = vmul.f32 %v9208, %v9208
      %v9337 = vmul.f32 %v9209, %v9209
      %v9338 = vmul.f32 %v9210, %v9210
      %v9339 = vmul.f32 %v9211, %v9211
      %v9340 = vmul.f32 %v9212, %v9212
      %v9341 = vmul.f32 %v9213, %v9213
      %v9342 = vmul.f32 %v9214, %v9214
      %v9343 = vmul.f32 %v9215, %v9215
      %v9344 = vmul.f32 %v9216, %v9216
      %v9345 = vmul.f32 %v9217, %v9217
      %v9346 = vmul.f32 %v9218, %v9218
      %v9347 = vmul.f32 %v9219, %v9219
      %v9348 = vmul.f32 %v9220, %v9220
      %v9349 = vmul.f32 %v9221, 0.20833333
      %v9350 = vmul.f32 %v9222, 0.20833333
      %v9351 = vmul.f32 %v9223, 0.20833333
      %v9352 = vmul.f32 %v9224, 0.20833333
      %v9353 = vmul.f32 %v9225, 0.20833333
      %v9354 = vmul.f32 %v9226, 0.20833333
      %v9355 = vmul.f32 %v9227, 0.20833333
      %v9356 = vmul.f32 %v9228, 0.20833333
      %v9357 = vmul.f32 %v9229, 0.20833333
      %v9358 = vmul.f32 %v9230, 0.20833333
      %v9359 = vmul.f32 %v9231, 0.20833333
      %v9360 = vmul.f32 %v9232, 0.20833333
      %v9361 = vmul.f32 %v9233, 0.20833333
      %v9362 = vmul.f32 %v9234, 0.20833333
      %v9363 = vmul.f32 %v9235, 0.20833333
      %v9364 = vmul.f32 %v9236, 0.20833333
      %v9365 = vmul.f32 %v9237, 0.20833333
      %v9366 = vmul.f32 %v9238, 0.20833333
      %v9367 = vmul.f32 %v9239, 0.20833333
      %v9368 = vmul.f32 %v9240, 0.20833333
      %v9369 = vmul.f32 %v9241, 0.20833333
      %v9370 = vmul.f32 %v9242, 0.20833333
      %v9371 = vmul.f32 %v9243, 0.20833333
      %v9372 = vmul.f32 %v9244, 0.20833333
      %v9373 = vmul.f32 %v9245, 0.20833333
      %v9374 = vmul.f32 %v9246, 0.20833333
      %v9375 = vmul.f32 %v9247, 0.20833333
      %v9376 = vmul.f32 %v9248, 0.20833333
      %v9377 = vmul.f32 %v9249, 0.20833333
      %v9378 = vmul.f32 %v9250, 0.20833333
      %v9379 = vmul.f32 %v9251, 0.20833333
      %v9380 = vmul.f32 %v9252, 0.20833333
      %v9381 = vmul.f32 %v9253, 0.20833333
      %v9382 = vmul.f32 %v9254, 0.20833333
      %v9383 = vmul.f32 %v9255, 0.20833333
      %v9384 = vmul.f32 %v9256, 0.20833333
      %v9385 = vmul.f32 %v9257, 0.20833333
      %v9386 = vmul.f32 %v9258, 0.20833333
      %v9387 = vmul.f32 %v9259, 0.20833333
      %v9388 = vmul.f32 %v9260, 0.20833333
      %v9389 = vmul.f32 %v9261, 0.20833333
      %v9390 = vmul.f32 %v9262, 0.20833333
      %v9391 = vmul.f32 %v9263, 0.20833333
      %v9392 = vmul.f32 %v9264, 0.20833333
      %v9393 = vmul.f32 %v9265, 0.20833333
      %v9394 = vmul.f32 %v9266, 0.20833333
      %v9395 = vmul.f32 %v9267, 0.20833333
      %v9396 = vmul.f32 %v9268, 0.20833333
      %v9397 = vmul.f32 %v9269, 0.20833333
      %v9398 = vmul.f32 %v9270, 0.20833333
      %v9399 = vmul.f32 %v9271, 0.20833333
      %v9400 = vmul.f32 %v9272, 0.20833333
      %v9401 = vmul.f32 %v9273, 0.20833333
      %v9402 = vmul.f32 %v9274, 0.20833333
      %v9403 = vmul.f32 %v9275, 0.20833333
      %v9404 = vmul.f32 %v9276, 0.20833333
      %v9405 = vmul.f32 %v9277, 0.20833333
      %v9406 = vmul.f32 %v9278, 0.20833333
      %v9407 = vmul.f32 %v9279, 0.20833333
      %v9408 = vmul.f32 %v9280, 0.20833333
      %v9409 = vmul.f32 %v9281, 0.20833333
      %v9410 = vmul.f32 %v9282, 0.20833333
      %v9411 = vmul.f32 %v9283, 0.20833333
      %v9412 = vmul.f32 %v9284, 0.20833333
      %v9413 = vmul.f32 %v9285, 0.20833333
      %v9414 = vmul.f32 %v9286, 0.20833333
      %v9415 = vmul.f32 %v9287, 0.20833333
      %v9416 = vmul.f32 %v9288, 0.20833333
      %v9417 = vmul.f32 %v9289, 0.20833333
      %v9418 = vmul.f32 %v9290, 0.20833333
      %v9419 = vmul.f32 %v9291, 0.20833333
      %v9420 = vmul.f32 %v9292, 0.20833333
      %v9421 = vmul.f32 %v9293, 0.20833333
      %v9422 = vmul.f32 %v9294, 0.20833333
      %v9423 = vmul.f32 %v9295, 0.20833333
      %v9424 = vmul.f32 %v9296, 0.20833333
      %v9425 = vmul.f32 %v9297, 0.20833333
      %v9426 = vmul.f32 %v9298, 0.20833333
      %v9427 = vmul.f32 %v9299, 0.20833333
      %v9428 = vmul.f32 %v9300, 0.20833333
      %v9429 = vmul.f32 %v9301, 0.20833333
      %v9430 = vmul.f32 %v9302, 0.20833333
      %v9431 = vmul.f32 %v9303, 0.20833333
      %v9432 = vmul.f32 %v9304, 0.20833333
      %v9433 = vmul.f32 %v9305, 0.20833333
      %v9434 = vmul.f32 %v9306, 0.20833333
      %v9435 = vmul.f32 %v9307, 0.20833333
      %v9436 = vmul.f32 %v9308, 0.20833333
      %v9437 = vmul.f32 %v9309, 0.20833333
      %v9438 = vmul.f32 %v9310, 0.20833333
      %v9439 = vmul.f32 %v9311, 0.20833333
      %v9440 = vmul.f32 %v9312, 0.20833333
      %v9441 = vmul.f32 %v9313, 0.20833333
      %v9442 = vmul.f32 %v9314, 0.20833333
      %v9443 = vmul.f32 %v9315, 0.20833333
      %v9444 = vmul.f32 %v9316, 0.20833333
      %v9445 = vmul.f32 %v9317, 0.20833333
      %v9446 = vmul.f32 %v9318, 0.20833333
      %v9447 = vmul.f32 %v9319, 0.20833333
      %v9448 = vmul.f32 %v9320, 0.20833333
      %v9449 = vmul.f32 %v9321, 0.20833333
      %v9450 = vmul.f32 %v9322, 0.20833333
      %v9451 = vmul.f32 %v9323, 0.20833333
      %v9452 = vmul.f32 %v9324, 0.20833333
      %v9453 = vmul.f32 %v9325, 0.20833333
      %v9454 = vmul.f32 %v9326, 0.20833333
      %v9455 = vmul.f32 %v9327, 0.20833333
      %v9456 = vmul.f32 %v9328, 0.20833333
      %v9457 = vmul.f32 %v9329, 0.20833333
      %v9458 = vmul.f32 %v9330, 0.20833333
      %v9459 = vmul.f32 %v9331, 0.20833333
      %v9460 = vmul.f32 %v9332, 0.20833333
      %v9461 = vmul.f32 %v9333, 0.20833333
      %v9462 = vmul.f32 %v9334, 0.20833333
      %v9463 = vmul.f32 %v9335, 0.20833333
      %v9464 = vmul.f32 %v9336, 0.20833333
      %v9465 = vmul.f32 %v9337, 0.20833333
      %v9466 = vmul.f32 %v9338, 0.20833333
      %v9467 = vmul.f32 %v9339, 0.20833333
      %v9468 = vmul.f32 %v9340, 0.20833333
      %v9469 = vmul.f32 %v9341, 0.20833333
      %v9470 = vmul.f32 %v9342, 0.20833333
      %v9471 = vmul.f32 %v9343, 0.20833333
      %v9472 = vmul.f32 %v9344, 0.20833333
      %v9473 = vmul.f32 %v9345, 0.20833333
      %v9474 = vmul.f32 %v9346, 0.20833333
      %v9475 = vmul.f32 %v9347, 0.20833333
      %v9476 = vmul.f32 %v9348, 0.20833333
      %v9477 = vadd.f32 %v8709, %v9349
      %v9478 = vadd.f32 %v8710, %v9350
      %v9479 = vadd.f32 %v8711, %v9351
      %v9480 = vadd.f32 %v8712, %v9352
      %v9481 = vadd.f32 %v8713, %v9353
      %v9482 = vadd.f32 %v8714, %v9354
      %v9483 = vadd.f32 %v8715, %v9355
      %v9484 = vadd.f32 %v8716, %v9356
      %v9485 = vadd.f32 %v8717, %v9357
      %v9486 = vadd.f32 %v8718, %v9358
      %v9487 = vadd.f32 %v8719, %v9359
      %v9488 = vadd.f32 %v8720, %v9360
      %v9489 = vadd.f32 %v8721, %v9361
      %v9490 = vadd.f32 %v8722, %v9362
      %v9491 = vadd.f32 %v8723, %v9363
      %v9492 = vadd.f32 %v8724, %v9364
      %v9493 = vadd.f32 %v8725, %v9365
      %v9494 = vadd.f32 %v8726, %v9366
      %v9495 = vadd.f32 %v8727, %v9367
      %v9496 = vadd.f32 %v8728, %v9368
      %v9497 = vadd.f32 %v8729, %v9369
      %v9498 = vadd.f32 %v8730, %v9370
      %v9499 = vadd.f32 %v8731, %v9371
      %v9500 = vadd.f32 %v8732, %v9372
      %v9501 = vadd.f32 %v8733, %v9373
      %v9502 = vadd.f32 %v8734, %v9374
      %v9503 = vadd.f32 %v8735, %v9375
      %v9504 = vadd.f32 %v8736, %v9376
      %v9505 = vadd.f32 %v8737, %v9377
      %v9506 = vadd.f32 %v8738, %v9378
      %v9507 = vadd.f32 %v8739, %v9379
      %v9508 = vadd.f32 %v8740, %v9380
      %v9509 = vadd.f32 %v8741, %v9381
      %v9510 = vadd.f32 %v8742, %v9382
      %v9511 = vadd.f32 %v8743, %v9383
      %v9512 = vadd.f32 %v8744, %v9384
      %v9513 = vadd.f32 %v8745, %v9385
      %v9514 = vadd.f32 %v8746, %v9386
      %v9515 = vadd.f32 %v8747, %v9387
      %v9516 = vadd.f32 %v8748, %v9388
      %v9517 = vadd.f32 %v8749, %v9389
      %v9518 = vadd.f32 %v8750, %v9390
      %v9519 = vadd.f32 %v8751, %v9391
      %v9520 = vadd.f32 %v8752, %v9392
      %v9521 = vadd.f32 %v8753, %v9393
      %v9522 = vadd.f32 %v8754, %v9394
      %v9523 = vadd.f32 %v8755, %v9395
      %v9524 = vadd.f32 %v8756, %v9396
      %v9525 = vadd.f32 %v8757, %v9397
      %v9526 = vadd.f32 %v8758, %v9398
      %v9527 = vadd.f32 %v8759, %v9399
      %v9528 = vadd.f32 %v8760, %v9400
      %v9529 = vadd.f32 %v8761, %v9401
      %v9530 = vadd.f32 %v8762, %v9402
      %v9531 = vadd.f32 %v8763, %v9403
      %v9532 = vadd.f32 %v8764, %v9404
      %v9533 = vadd.f32 %v8765, %v9405
      %v9534 = vadd.f32 %v8766, %v9406
      %v9535 = vadd.f32 %v8767, %v9407
      %v9536 = vadd.f32 %v8768, %v9408
      %v9537 = vadd.f32 %v8769, %v9409
      %v9538 = vadd.f32 %v8770, %v9410
      %v9539 = vadd.f32 %v8771, %v9411
      %v9540 = vadd.f32 %v8772, %v9412
      %v9541 = vadd.f32 %v8773, %v9413
      %v9542 = vadd.f32 %v8774, %v9414
      %v9543 = vadd.f32 %v8775, %v9415
      %v9544 = vadd.f32 %v8776, %v9416
      %v9545 = vadd.f32 %v8777, %v9417
      %v9546 = vadd.f32 %v8778, %v9418
      %v9547 = vadd.f32 %v8779, %v9419
      %v9548 = vadd.f32 %v8780, %v9420
      %v9549 = vadd.f32 %v8781, %v9421
      %v9550 = vadd.f32 %v8782, %v9422
      %v9551 = vadd.f32 %v8783, %v9423
      %v9552 = vadd.f32 %v8784, %v9424
      %v9553 = vadd.f32 %v8785, %v9425
      %v9554 = vadd.f32 %v8786, %v9426
      %v9555 = vadd.f32 %v8787, %v9427
      %v9556 = vadd.f32 %v8788, %v9428
      %v9557 = vadd.f32 %v8789, %v9429
      %v9558 = vadd.f32 %v8790, %v9430
      %v9559 = vadd.f32 %v8791, %v9431
      %v9560 = vadd.f32 %v8792, %v9432
      %v9561 = vadd.f32 %v8793, %v9433
      %v9562 = vadd.f32 %v8794, %v9434
      %v9563 = vadd.f32 %v8795, %v9435
      %v9564 = vadd.f32 %v8796, %v9436
      %v9565 = vadd.f32 %v8797, %v9437
      %v9566 = vadd.f32 %v8798, %v9438
      %v9567 = vadd.f32 %v8799, %v9439
      %v9568 = vadd.f32 %v8800, %v9440
      %v9569 = vadd.f32 %v8801, %v9441
      %v9570 = vadd.f32 %v8802, %v9442
      %v9571 = vadd.f32 %v8803, %v9443
      %v9572 = vadd.f32 %v8804, %v9444
      %v9573 = vadd.f32 %v8805, %v9445
      %v9574 = vadd.f32 %v8806, %v9446
      %v9575 = vadd.f32 %v8807, %v9447
      %v9576 = vadd.f32 %v8808, %v9448
      %v9577 = vadd.f32 %v8809, %v9449
      %v9578 = vadd.f32 %v8810, %v9450
      %v9579 = vadd.f32 %v8811, %v9451
      %v9580 = vadd.f32 %v8812, %v9452
      %v9581 = vadd.f32 %v8813, %v9453
      %v9582 = vadd.f32 %v8814, %v9454
      %v9583 = vadd.f32 %v8815, %v9455
      %v9584 = vadd.f32 %v8816, %v9456
      %v9585 = vadd.f32 %v8817, %v9457
      %v9586 = vadd.f32 %v8818, %v9458
      %v9587 = vadd.f32 %v8819, %v9459
      %v9588 = vadd.f32 %v8820, %v9460
      %v9589 = vadd.f32 %v8821, %v9461
      %v9590 = vadd.f32 %v8822, %v9462
      %v9591 = vadd.f32 %v8823, %v9463
      %v9592 = vadd.f32 %v8824, %v9464
      %v9593 = vadd.f32 %v8825, %v9465
      %v9594 = vadd.f32 %v8826, %v9466
      %v9595 = vadd.f32 %v8827, %v9467
      %v9596 = vadd.f32 %v8828, %v9468
      %v9597 = vadd.f32 %v8829, %v9469
      %v9598 = vadd.f32 %v8830, %v9470
      %v9599 = vadd.f32 %v8831, %v9471
      %v9600 = vadd.f32 %v8832, %v9472
      %v9601 = vadd.f32 %v8833, %v9473
      %v9602 = vadd.f32 %v8834, %v9474
      %v9603 = vadd.f32 %v8835, %v9475
      %v9604 = vadd.f32 %v8836, %v9476
      %v9605 = vld [vmem:[%s8] sm:$0xff]
      %v9606 = vld [vmem:[%s8 + $0x8] sm:$0xff]
      %v9607 = vld [vmem:[%s8 + $0x10] sm:$0xff]
      %v9608 = vld [vmem:[%s8 + $0x18] sm:$0xff]
      %v9609 = vld [vmem:[%s8 + $0x20] sm:$0xff]
      %v9610 = vld [vmem:[%s8 + $0x28] sm:$0xff]
      %v9611 = vld [vmem:[%s8 + $0x30] sm:$0xff]
      %v9612 = vld [vmem:[%s8 + $0x38] sm:$0xff]
      %v9613 = vld [vmem:[%s8 + $0x40] sm:$0xff]
      %v9614 = vld [vmem:[%s8 + $0x48] sm:$0xff]
      %v9615 = vld [vmem:[%s8 + $0x50] sm:$0xff]
      %v9616 = vld [vmem:[%s8 + $0x58] sm:$0xff]
      %v9617 = vld [vmem:[%s8 + $0x60] sm:$0xff]
      %v9618 = vld [vmem:[%s8 + $0x68] sm:$0xff]
      %v9619 = vld [vmem:[%s8 + $0x70] sm:$0xff]
      %v9620 = vld [vmem:[%s8 + $0x78] sm:$0xff]
      %v9621 = vld [vmem:[%s8 + $0x80] sm:$0xff]
      %v9622 = vld [vmem:[%s8 + $0x88] sm:$0xff]
      %v9623 = vld [vmem:[%s8 + $0x90] sm:$0xff]
      %v9624 = vld [vmem:[%s8 + $0x98] sm:$0xff]
      %v9625 = vld [vmem:[%s8 + $0xa0] sm:$0xff]
      %v9626 = vld [vmem:[%s8 + $0xa8] sm:$0xff]
      %v9627 = vld [vmem:[%s8 + $0xb0] sm:$0xff]
      %v9628 = vld [vmem:[%s8 + $0xb8] sm:$0xff]
      %v9629 = vld [vmem:[%s8 + $0xc0] sm:$0xff]
      %v9630 = vld [vmem:[%s8 + $0xc8] sm:$0xff]
      %v9631 = vld [vmem:[%s8 + $0xd0] sm:$0xff]
      %v9632 = vld [vmem:[%s8 + $0xd8] sm:$0xff]
      %v9633 = vld [vmem:[%s8 + $0xe0] sm:$0xff]
      %v9634 = vld [vmem:[%s8 + $0xe8] sm:$0xff]
      %v9635 = vld [vmem:[%s8 + $0xf0] sm:$0xff]
      %v9636 = vld [vmem:[%s8 + $0xf8] sm:$0xff]
      %9637 = vmatpush.msra.mxu0 %v9620
      %9638 = vmatpush.msra.mxu0 %v9619
      %9639 = vmatpush.msra.mxu0 %v9618
      %9640 = vmatpush.msra.mxu0 %v9617
      %9641 = vmatpush.msra.mxu0 %v9616
      %9642 = vmatpush.msra.mxu0 %v9615
      %9643 = vmatpush.msra.mxu0 %v9614
      %9644 = vmatpush.msra.mxu0 %v9613
      %9645 = vmatpush.msra.mxu0 %v9612
      %9646 = vmatpush.msra.mxu0 %v9611
      %9647 = vmatpush.msra.mxu0 %v9610
      %9648 = vmatpush.msra.mxu0 %v9609
      %9649 = vmatpush.msra.mxu0 %v9608
      %9650 = vmatpush.msra.mxu0 %v9607
      %9651 = vmatpush.msra.mxu0 %v9606
      %9652 = vmatpush.msra.mxu0 %v9605
      %9653 = vmatmul.f32.gmra.mxu0 %v9477
      %v9654 = vpop.f32.mrf.mxu0
      %v9655 = vadd.f32 0.0, %v9654
      %9656 = vmatmul.f32.gmra.mxu0 %v9479
      %v9657 = vpop.f32.mrf.mxu0
      %v9658 = vadd.f32 0.0, %v9657
      %9659 = vmatmul.f32.gmra.mxu0 %v9481
      %v9660 = vpop.f32.mrf.mxu0
      %v9661 = vadd.f32 0.0, %v9660
      %9662 = vmatmul.f32.gmra.mxu0 %v9483
      %v9663 = vpop.f32.mrf.mxu0
      %v9664 = vadd.f32 0.0, %v9663
      %9665 = vmatmul.f32.gmra.mxu0 %v9485
      %v9666 = vpop.f32.mrf.mxu0
      %v9667 = vadd.f32 0.0, %v9666
      %9668 = vmatmul.f32.gmra.mxu0 %v9487
      %v9669 = vpop.f32.mrf.mxu0
      %v9670 = vadd.f32 0.0, %v9669
      %9671 = vmatmul.f32.gmra.mxu0 %v9489
      %v9672 = vpop.f32.mrf.mxu0
      %v9673 = vadd.f32 0.0, %v9672
      %9674 = vmatmul.f32.gmra.mxu0 %v9491
      %v9675 = vpop.f32.mrf.mxu0
      %v9676 = vadd.f32 0.0, %v9675
      %9677 = vmatmul.f32.gmra.mxu0 %v9493
      %v9678 = vpop.f32.mrf.mxu0
      %v9679 = vadd.f32 0.0, %v9678
      %9680 = vmatmul.f32.gmra.mxu0 %v9495
      %v9681 = vpop.f32.mrf.mxu0
      %v9682 = vadd.f32 0.0, %v9681
      %9683 = vmatmul.f32.gmra.mxu0 %v9497
      %v9684 = vpop.f32.mrf.mxu0
      %v9685 = vadd.f32 0.0, %v9684
      %9686 = vmatmul.f32.gmra.mxu0 %v9499
      %v9687 = vpop.f32.mrf.mxu0
      %v9688 = vadd.f32 0.0, %v9687
      %9689 = vmatmul.f32.gmra.mxu0 %v9501
      %v9690 = vpop.f32.mrf.mxu0
      %v9691 = vadd.f32 0.0, %v9690
      %9692 = vmatmul.f32.gmra.mxu0 %v9503
      %v9693 = vpop.f32.mrf.mxu0
      %v9694 = vadd.f32 0.0, %v9693
      %9695 = vmatmul.f32.gmra.mxu0 %v9505
      %v9696 = vpop.f32.mrf.mxu0
      %v9697 = vadd.f32 0.0, %v9696
      %9698 = vmatmul.f32.gmra.mxu0 %v9507
      %v9699 = vpop.f32.mrf.mxu0
      %v9700 = vadd.f32 0.0, %v9699
      %9701 = vmatmul.f32.gmra.mxu0 %v9509
      %v9702 = vpop.f32.mrf.mxu0
      %v9703 = vadd.f32 0.0, %v9702
      %9704 = vmatmul.f32.gmra.mxu0 %v9511
      %v9705 = vpop.f32.mrf.mxu0
      %v9706 = vadd.f32 0.0, %v9705
      %9707 = vmatmul.f32.gmra.mxu0 %v9513
      %v9708 = vpop.f32.mrf.mxu0
      %v9709 = vadd.f32 0.0, %v9708
      %9710 = vmatmul.f32.gmra.mxu0 %v9515
      %v9711 = vpop.f32.mrf.mxu0
      %v9712 = vadd.f32 0.0, %v9711
      %9713 = vmatmul.f32.gmra.mxu0 %v9517
      %v9714 = vpop.f32.mrf.mxu0
      %v9715 = vadd.f32 0.0, %v9714
      %9716 = vmatmul.f32.gmra.mxu0 %v9519
      %v9717 = vpop.f32.mrf.mxu0
      %v9718 = vadd.f32 0.0, %v9717
      %9719 = vmatmul.f32.gmra.mxu0 %v9521
      %v9720 = vpop.f32.mrf.mxu0
      %v9721 = vadd.f32 0.0, %v9720
      %9722 = vmatmul.f32.gmra.mxu0 %v9523
      %v9723 = vpop.f32.mrf.mxu0
      %v9724 = vadd.f32 0.0, %v9723
      %9725 = vmatmul.f32.gmra.mxu0 %v9525
      %v9726 = vpop.f32.mrf.mxu0
      %v9727 = vadd.f32 0.0, %v9726
      %9728 = vmatmul.f32.gmra.mxu0 %v9527
      %v9729 = vpop.f32.mrf.mxu0
      %v9730 = vadd.f32 0.0, %v9729
      %9731 = vmatmul.f32.gmra.mxu0 %v9529
      %v9732 = vpop.f32.mrf.mxu0
      %v9733 = vadd.f32 0.0, %v9732
      %9734 = vmatmul.f32.gmra.mxu0 %v9531
      %v9735 = vpop.f32.mrf.mxu0
      %v9736 = vadd.f32 0.0, %v9735
      %9737 = vmatmul.f32.gmra.mxu0 %v9533
      %v9738 = vpop.f32.mrf.mxu0
      %v9739 = vadd.f32 0.0, %v9738
      %9740 = vmatmul.f32.gmra.mxu0 %v9535
      %v9741 = vpop.f32.mrf.mxu0
      %v9742 = vadd.f32 0.0, %v9741
      %9743 = vmatmul.f32.gmra.mxu0 %v9537
      %v9744 = vpop.f32.mrf.mxu0
      %v9745 = vadd.f32 0.0, %v9744
      %9746 = vmatmul.f32.gmra.mxu0 %v9539
      %v9747 = vpop.f32.mrf.mxu0
      %v9748 = vadd.f32 0.0, %v9747
      %9749 = vmatmul.f32.gmra.mxu0 %v9541
      %v9750 = vpop.f32.mrf.mxu0
      %v9751 = vadd.f32 0.0, %v9750
      %9752 = vmatmul.f32.gmra.mxu0 %v9543
      %v9753 = vpop.f32.mrf.mxu0
      %v9754 = vadd.f32 0.0, %v9753
      %9755 = vmatmul.f32.gmra.mxu0 %v9545
      %v9756 = vpop.f32.mrf.mxu0
      %v9757 = vadd.f32 0.0, %v9756
      %9758 = vmatmul.f32.gmra.mxu0 %v9547
      %v9759 = vpop.f32.mrf.mxu0
      %v9760 = vadd.f32 0.0, %v9759
      %9761 = vmatmul.f32.gmra.mxu0 %v9549
      %v9762 = vpop.f32.mrf.mxu0
      %v9763 = vadd.f32 0.0, %v9762
      %9764 = vmatmul.f32.gmra.mxu0 %v9551
      %v9765 = vpop.f32.mrf.mxu0
      %v9766 = vadd.f32 0.0, %v9765
      %9767 = vmatmul.f32.gmra.mxu0 %v9553
      %v9768 = vpop.f32.mrf.mxu0
      %v9769 = vadd.f32 0.0, %v9768
      %9770 = vmatmul.f32.gmra.mxu0 %v9555
      %v9771 = vpop.f32.mrf.mxu0
      %v9772 = vadd.f32 0.0, %v9771
      %9773 = vmatmul.f32.gmra.mxu0 %v9557
      %v9774 = vpop.f32.mrf.mxu0
      %v9775 = vadd.f32 0.0, %v9774
      %9776 = vmatmul.f32.gmra.mxu0 %v9559
      %v9777 = vpop.f32.mrf.mxu0
      %v9778 = vadd.f32 0.0, %v9777
      %9779 = vmatmul.f32.gmra.mxu0 %v9561
      %v9780 = vpop.f32.mrf.mxu0
      %v9781 = vadd.f32 0.0, %v9780
      %9782 = vmatmul.f32.gmra.mxu0 %v9563
      %v9783 = vpop.f32.mrf.mxu0
      %v9784 = vadd.f32 0.0, %v9783
      %9785 = vmatmul.f32.gmra.mxu0 %v9565
      %v9786 = vpop.f32.mrf.mxu0
      %v9787 = vadd.f32 0.0, %v9786
      %9788 = vmatmul.f32.gmra.mxu0 %v9567
      %v9789 = vpop.f32.mrf.mxu0
      %v9790 = vadd.f32 0.0, %v9789
      %9791 = vmatmul.f32.gmra.mxu0 %v9569
      %v9792 = vpop.f32.mrf.mxu0
      %v9793 = vadd.f32 0.0, %v9792
      %9794 = vmatmul.f32.gmra.mxu0 %v9571
      %v9795 = vpop.f32.mrf.mxu0
      %v9796 = vadd.f32 0.0, %v9795
      %9797 = vmatmul.f32.gmra.mxu0 %v9573
      %v9798 = vpop.f32.mrf.mxu0
      %v9799 = vadd.f32 0.0, %v9798
      %9800 = vmatmul.f32.gmra.mxu0 %v9575
      %v9801 = vpop.f32.mrf.mxu0
      %v9802 = vadd.f32 0.0, %v9801
      %9803 = vmatmul.f32.gmra.mxu0 %v9577
      %v9804 = vpop.f32.mrf.mxu0
      %v9805 = vadd.f32 0.0, %v9804
      %9806 = vmatmul.f32.gmra.mxu0 %v9579
      %v9807 = vpop.f32.mrf.mxu0
      %v9808 = vadd.f32 0.0, %v9807
      %9809 = vmatmul.f32.gmra.mxu0 %v9581
      %v9810 = vpop.f32.mrf.mxu0
      %v9811 = vadd.f32 0.0, %v9810
      %9812 = vmatmul.f32.gmra.mxu0 %v9583
      %v9813 = vpop.f32.mrf.mxu0
      %v9814 = vadd.f32 0.0, %v9813
      %9815 = vmatmul.f32.gmra.mxu0 %v9585
      %v9816 = vpop.f32.mrf.mxu0
      %v9817 = vadd.f32 0.0, %v9816
      %9818 = vmatmul.f32.gmra.mxu0 %v9587
      %v9819 = vpop.f32.mrf.mxu0
      %v9820 = vadd.f32 0.0, %v9819
      %9821 = vmatmul.f32.gmra.mxu0 %v9589
      %v9822 = vpop.f32.mrf.mxu0
      %v9823 = vadd.f32 0.0, %v9822
      %9824 = vmatmul.f32.gmra.mxu0 %v9591
      %v9825 = vpop.f32.mrf.mxu0
      %v9826 = vadd.f32 0.0, %v9825
      %9827 = vmatmul.f32.gmra.mxu0 %v9593
      %v9828 = vpop.f32.mrf.mxu0
      %v9829 = vadd.f32 0.0, %v9828
      %9830 = vmatmul.f32.gmra.mxu0 %v9595
      %v9831 = vpop.f32.mrf.mxu0
      %v9832 = vadd.f32 0.0, %v9831
      %9833 = vmatmul.f32.gmra.mxu0 %v9597
      %v9834 = vpop.f32.mrf.mxu0
      %v9835 = vadd.f32 0.0, %v9834
      %9836 = vmatmul.f32.gmra.mxu0 %v9599
      %v9837 = vpop.f32.mrf.mxu0
      %v9838 = vadd.f32 0.0, %v9837
      %9839 = vmatmul.f32.gmra.mxu0 %v9601
      %v9840 = vpop.f32.mrf.mxu0
      %v9841 = vadd.f32 0.0, %v9840
      %9842 = vmatmul.f32.gmra.mxu0 %v9603
      %v9843 = vpop.f32.mrf.mxu0
      %v9844 = vadd.f32 0.0, %v9843
      %9845 = vdwg.mxu0
      %9846 = vmatpush.msra.mxu0 %v9636
      %9847 = vmatpush.msra.mxu0 %v9635
      %9848 = vmatpush.msra.mxu0 %v9634
      %9849 = vmatpush.msra.mxu0 %v9633
      %9850 = vmatpush.msra.mxu0 %v9632
      %9851 = vmatpush.msra.mxu0 %v9631
      %9852 = vmatpush.msra.mxu0 %v9630
      %9853 = vmatpush.msra.mxu0 %v9629
      %9854 = vmatpush.msra.mxu0 %v9628
      %9855 = vmatpush.msra.mxu0 %v9627
      %9856 = vmatpush.msra.mxu0 %v9626
      %9857 = vmatpush.msra.mxu0 %v9625
      %9858 = vmatpush.msra.mxu0 %v9624
      %9859 = vmatpush.msra.mxu0 %v9623
      %9860 = vmatpush.msra.mxu0 %v9622
      %9861 = vmatpush.msra.mxu0 %v9621
      %9862 = vmatmul.f32.gmra.mxu0 %v9478
      %v9863 = vpop.f32.mrf.mxu0
      %v9864 = vadd.f32 %v9655, %v9863
      %9865 = vmatmul.f32.gmra.mxu0 %v9480
      %v9866 = vpop.f32.mrf.mxu0
      %v9867 = vadd.f32 %v9658, %v9866
      %9868 = vmatmul.f32.gmra.mxu0 %v9482
      %v9869 = vpop.f32.mrf.mxu0
      %v9870 = vadd.f32 %v9661, %v9869
      %9871 = vmatmul.f32.gmra.mxu0 %v9484
      %v9872 = vpop.f32.mrf.mxu0
      %v9873 = vadd.f32 %v9664, %v9872
      %9874 = vmatmul.f32.gmra.mxu0 %v9486
      %v9875 = vpop.f32.mrf.mxu0
      %v9876 = vadd.f32 %v9667, %v9875
      %9877 = vmatmul.f32.gmra.mxu0 %v9488
      %v9878 = vpop.f32.mrf.mxu0
      %v9879 = vadd.f32 %v9670, %v9878
      %9880 = vmatmul.f32.gmra.mxu0 %v9490
      %v9881 = vpop.f32.mrf.mxu0
      %v9882 = vadd.f32 %v9673, %v9881
      %9883 = vmatmul.f32.gmra.mxu0 %v9492
      %v9884 = vpop.f32.mrf.mxu0
      %v9885 = vadd.f32 %v9676, %v9884
      %9886 = vmatmul.f32.gmra.mxu0 %v9494
      %v9887 = vpop.f32.mrf.mxu0
      %v9888 = vadd.f32 %v9679, %v9887
      %9889 = vmatmul.f32.gmra.mxu0 %v9496
      %v9890 = vpop.f32.mrf.mxu0
      %v9891 = vadd.f32 %v9682, %v9890
      %9892 = vmatmul.f32.gmra.mxu0 %v9498
      %v9893 = vpop.f32.mrf.mxu0
      %v9894 = vadd.f32 %v9685, %v9893
      %9895 = vmatmul.f32.gmra.mxu0 %v9500
      %v9896 = vpop.f32.mrf.mxu0
      %v9897 = vadd.f32 %v9688, %v9896
      %9898 = vmatmul.f32.gmra.mxu0 %v9502
      %v9899 = vpop.f32.mrf.mxu0
      %v9900 = vadd.f32 %v9691, %v9899
      %9901 = vmatmul.f32.gmra.mxu0 %v9504
      %v9902 = vpop.f32.mrf.mxu0
      %v9903 = vadd.f32 %v9694, %v9902
      %9904 = vmatmul.f32.gmra.mxu0 %v9506
      %v9905 = vpop.f32.mrf.mxu0
      %v9906 = vadd.f32 %v9697, %v9905
      %9907 = vmatmul.f32.gmra.mxu0 %v9508
      %v9908 = vpop.f32.mrf.mxu0
      %v9909 = vadd.f32 %v9700, %v9908
      %9910 = vmatmul.f32.gmra.mxu0 %v9510
      %v9911 = vpop.f32.mrf.mxu0
      %v9912 = vadd.f32 %v9703, %v9911
      %9913 = vmatmul.f32.gmra.mxu0 %v9512
      %v9914 = vpop.f32.mrf.mxu0
      %v9915 = vadd.f32 %v9706, %v9914
      %9916 = vmatmul.f32.gmra.mxu0 %v9514
      %v9917 = vpop.f32.mrf.mxu0
      %v9918 = vadd.f32 %v9709, %v9917
      %9919 = vmatmul.f32.gmra.mxu0 %v9516
      %v9920 = vpop.f32.mrf.mxu0
      %v9921 = vadd.f32 %v9712, %v9920
      %9922 = vmatmul.f32.gmra.mxu0 %v9518
      %v9923 = vpop.f32.mrf.mxu0
      %v9924 = vadd.f32 %v9715, %v9923
      %9925 = vmatmul.f32.gmra.mxu0 %v9520
      %v9926 = vpop.f32.mrf.mxu0
      %v9927 = vadd.f32 %v9718, %v9926
      %9928 = vmatmul.f32.gmra.mxu0 %v9522
      %v9929 = vpop.f32.mrf.mxu0
      %v9930 = vadd.f32 %v9721, %v9929
      %9931 = vmatmul.f32.gmra.mxu0 %v9524
      %v9932 = vpop.f32.mrf.mxu0
      %v9933 = vadd.f32 %v9724, %v9932
      %9934 = vmatmul.f32.gmra.mxu0 %v9526
      %v9935 = vpop.f32.mrf.mxu0
      %v9936 = vadd.f32 %v9727, %v9935
      %9937 = vmatmul.f32.gmra.mxu0 %v9528
      %v9938 = vpop.f32.mrf.mxu0
      %v9939 = vadd.f32 %v9730, %v9938
      %9940 = vmatmul.f32.gmra.mxu0 %v9530
      %v9941 = vpop.f32.mrf.mxu0
      %v9942 = vadd.f32 %v9733, %v9941
      %9943 = vmatmul.f32.gmra.mxu0 %v9532
      %v9944 = vpop.f32.mrf.mxu0
      %v9945 = vadd.f32 %v9736, %v9944
      %9946 = vmatmul.f32.gmra.mxu0 %v9534
      %v9947 = vpop.f32.mrf.mxu0
      %v9948 = vadd.f32 %v9739, %v9947
      %9949 = vmatmul.f32.gmra.mxu0 %v9536
      %v9950 = vpop.f32.mrf.mxu0
      %v9951 = vadd.f32 %v9742, %v9950
      %9952 = vmatmul.f32.gmra.mxu0 %v9538
      %v9953 = vpop.f32.mrf.mxu0
      %v9954 = vadd.f32 %v9745, %v9953
      %9955 = vmatmul.f32.gmra.mxu0 %v9540
      %v9956 = vpop.f32.mrf.mxu0
      %v9957 = vadd.f32 %v9748, %v9956
      %9958 = vmatmul.f32.gmra.mxu0 %v9542
      %v9959 = vpop.f32.mrf.mxu0
      %v9960 = vadd.f32 %v9751, %v9959
      %9961 = vmatmul.f32.gmra.mxu0 %v9544
      %v9962 = vpop.f32.mrf.mxu0
      %v9963 = vadd.f32 %v9754, %v9962
      %9964 = vmatmul.f32.gmra.mxu0 %v9546
      %v9965 = vpop.f32.mrf.mxu0
      %v9966 = vadd.f32 %v9757, %v9965
      %9967 = vmatmul.f32.gmra.mxu0 %v9548
      %v9968 = vpop.f32.mrf.mxu0
      %v9969 = vadd.f32 %v9760, %v9968
      %9970 = vmatmul.f32.gmra.mxu0 %v9550
      %v9971 = vpop.f32.mrf.mxu0
      %v9972 = vadd.f32 %v9763, %v9971
      %9973 = vmatmul.f32.gmra.mxu0 %v9552
      %v9974 = vpop.f32.mrf.mxu0
      %v9975 = vadd.f32 %v9766, %v9974
      %9976 = vmatmul.f32.gmra.mxu0 %v9554
      %v9977 = vpop.f32.mrf.mxu0
      %v9978 = vadd.f32 %v9769, %v9977
      %9979 = vmatmul.f32.gmra.mxu0 %v9556
      %v9980 = vpop.f32.mrf.mxu0
      %v9981 = vadd.f32 %v9772, %v9980
      %9982 = vmatmul.f32.gmra.mxu0 %v9558
      %v9983 = vpop.f32.mrf.mxu0
      %v9984 = vadd.f32 %v9775, %v9983
      %9985 = vmatmul.f32.gmra.mxu0 %v9560
      %v9986 = vpop.f32.mrf.mxu0
      %v9987 = vadd.f32 %v9778, %v9986
      %9988 = vmatmul.f32.gmra.mxu0 %v9562
      %v9989 = vpop.f32.mrf.mxu0
      %v9990 = vadd.f32 %v9781, %v9989
      %9991 = vmatmul.f32.gmra.mxu0 %v9564
      %v9992 = vpop.f32.mrf.mxu0
      %v9993 = vadd.f32 %v9784, %v9992
      %9994 = vmatmul.f32.gmra.mxu0 %v9566
      %v9995 = vpop.f32.mrf.mxu0
      %v9996 = vadd.f32 %v9787, %v9995
      %9997 = vmatmul.f32.gmra.mxu0 %v9568
      %v9998 = vpop.f32.mrf.mxu0
      %v9999 = vadd.f32 %v9790, %v9998
      %10000 = vmatmul.f32.gmra.mxu0 %v9570
      %v10001 = vpop.f32.mrf.mxu0
      %v10002 = vadd.f32 %v9793, %v10001
      %10003 = vmatmul.f32.gmra.mxu0 %v9572
      %v10004 = vpop.f32.mrf.mxu0
      %v10005 = vadd.f32 %v9796, %v10004
      %10006 = vmatmul.f32.gmra.mxu0 %v9574
      %v10007 = vpop.f32.mrf.mxu0
      %v10008 = vadd.f32 %v9799, %v10007
      %10009 = vmatmul.f32.gmra.mxu0 %v9576
      %v10010 = vpop.f32.mrf.mxu0
      %v10011 = vadd.f32 %v9802, %v10010
      %10012 = vmatmul.f32.gmra.mxu0 %v9578
      %v10013 = vpop.f32.mrf.mxu0
      %v10014 = vadd.f32 %v9805, %v10013
      %10015 = vmatmul.f32.gmra.mxu0 %v9580
      %v10016 = vpop.f32.mrf.mxu0
      %v10017 = vadd.f32 %v9808, %v10016
      %10018 = vmatmul.f32.gmra.mxu0 %v9582
      %v10019 = vpop.f32.mrf.mxu0
      %v10020 = vadd.f32 %v9811, %v10019
      %10021 = vmatmul.f32.gmra.mxu0 %v9584
      %v10022 = vpop.f32.mrf.mxu0
      %v10023 = vadd.f32 %v9814, %v10022
      %10024 = vmatmul.f32.gmra.mxu0 %v9586
      %v10025 = vpop.f32.mrf.mxu0
      %v10026 = vadd.f32 %v9817, %v10025
      %10027 = vmatmul.f32.gmra.mxu0 %v9588
      %v10028 = vpop.f32.mrf.mxu0
      %v10029 = vadd.f32 %v9820, %v10028
      %10030 = vmatmul.f32.gmra.mxu0 %v9590
      %v10031 = vpop.f32.mrf.mxu0
      %v10032 = vadd.f32 %v9823, %v10031
      %10033 = vmatmul.f32.gmra.mxu0 %v9592
      %v10034 = vpop.f32.mrf.mxu0
      %v10035 = vadd.f32 %v9826, %v10034
      %10036 = vmatmul.f32.gmra.mxu0 %v9594
      %v10037 = vpop.f32.mrf.mxu0
      %v10038 = vadd.f32 %v9829, %v10037
      %10039 = vmatmul.f32.gmra.mxu0 %v9596
      %v10040 = vpop.f32.mrf.mxu0
      %v10041 = vadd.f32 %v9832, %v10040
      %10042 = vmatmul.f32.gmra.mxu0 %v9598
      %v10043 = vpop.f32.mrf.mxu0
      %v10044 = vadd.f32 %v9835, %v10043
      %10045 = vmatmul.f32.gmra.mxu0 %v9600
      %v10046 = vpop.f32.mrf.mxu0
      %v10047 = vadd.f32 %v9838, %v10046
      %10048 = vmatmul.f32.gmra.mxu0 %v9602
      %v10049 = vpop.f32.mrf.mxu0
      %v10050 = vadd.f32 %v9841, %v10049
      %10051 = vmatmul.f32.gmra.mxu0 %v9604
      %v10052 = vpop.f32.mrf.mxu0
      %v10053 = vadd.f32 %v9844, %v10052
      %10054 = vdwg.mxu0
      %v10056 = vsel %vm3107, %v4793, 0
      %v10059 = vsel %vm3107, %v4794, 0
      %v10062 = vsel %vm3107, %v4795, 0
      %v10065 = vsel %vm3107, %v4796, 0
      %v10068 = vsel %vm3107, %v4797, 0
      %v10071 = vsel %vm3107, %v4798, 0
      %v10074 = vsel %vm3107, %v4799, 0
      %v10077 = vsel %vm3107, %v4800, 0
      %v10080 = vsel %vm3107, %v4801, 0
      %v10083 = vsel %vm3107, %v4802, 0
      %v10086 = vsel %vm3107, %v4803, 0
      %v10089 = vsel %vm3107, %v4804, 0
      %v10092 = vsel %vm3107, %v4805, 0
      %v10095 = vsel %vm3107, %v4806, 0
      %v10098 = vsel %vm3107, %v4807, 0
      %v10101 = vsel %vm3107, %v4808, 0
      %v10104 = vsel %vm3107, %v4809, 0
      %v10107 = vsel %vm3107, %v4810, 0
      %v10110 = vsel %vm3107, %v4811, 0
      %v10113 = vsel %vm3107, %v4812, 0
      %v10116 = vsel %vm3107, %v4813, 0
      %v10119 = vsel %vm3107, %v4814, 0
      %v10122 = vsel %vm3107, %v4815, 0
      %v10125 = vsel %vm3107, %v4816, 0
      %v10128 = vsel %vm3107, %v4817, 0
      %v10131 = vsel %vm3107, %v4818, 0
      %v10134 = vsel %vm3107, %v4819, 0
      %v10137 = vsel %vm3107, %v4820, 0
      %v10140 = vsel %vm3107, %v4821, 0
      %v10143 = vsel %vm3107, %v4822, 0
      %v10146 = vsel %vm3107, %v4823, 0
      %v10149 = vsel %vm3107, %v4824, 0
      %v10152 = vsel %vm3107, %v4825, 0
      %v10155 = vsel %vm3107, %v4826, 0
      %v10158 = vsel %vm3107, %v4827, 0
      %v10161 = vsel %vm3107, %v4828, 0
      %v10164 = vsel %vm3107, %v4829, 0
      %v10167 = vsel %vm3107, %v4830, 0
      %v10170 = vsel %vm3107, %v4831, 0
      %v10173 = vsel %vm3107, %v4832, 0
      %v10176 = vsel %vm3107, %v4833, 0
      %v10179 = vsel %vm3107, %v4834, 0
      %v10182 = vsel %vm3107, %v4835, 0
      %v10185 = vsel %vm3107, %v4836, 0
      %v10188 = vsel %vm3107, %v4837, 0
      %v10191 = vsel %vm3107, %v4838, 0
      %v10194 = vsel %vm3107, %v4839, 0
      %v10197 = vsel %vm3107, %v4840, 0
      %v10200 = vsel %vm3107, %v4841, 0
      %v10203 = vsel %vm3107, %v4842, 0
      %v10206 = vsel %vm3107, %v4843, 0
      %v10209 = vsel %vm3107, %v4844, 0
      %v10212 = vsel %vm3107, %v4845, 0
      %v10215 = vsel %vm3107, %v4846, 0
      %v10218 = vsel %vm3107, %v4847, 0
      %v10221 = vsel %vm3107, %v4848, 0
      %v10224 = vsel %vm3107, %v4849, 0
      %v10227 = vsel %vm3107, %v4850, 0
      %v10230 = vsel %vm3107, %v4851, 0
      %v10233 = vsel %vm3107, %v4852, 0
      %v10236 = vsel %vm3107, %v4853, 0
      %v10239 = vsel %vm3107, %v4854, 0
      %v10242 = vsel %vm3107, %v4855, 0
      %v10245 = vsel %vm3107, %v4856, 0
      %10247 = vmatpush.msra.mxu0 0.0
      %10248 = vmatpush.msra.mxu0 0.0
      %10249 = vmatpush.msra.mxu0 0.0
      %10250 = vmatpush.msra.mxu0 0.0
      %10251 = vmatpush.msra.mxu0 0.0
      %10252 = vmatpush.msra.mxu0 0.0
      %10253 = vmatpush.msra.mxu0 0.0
      %10254 = vmatpush.msra.mxu0 0.0
      %10255 = vmatpush.msra.mxu0 0.0
      %10256 = vmatpush.msra.mxu0 0.0
      %10257 = vmatpush.msra.mxu0 0.0
      %10258 = vmatpush.msra.mxu0 0.0
      %10259 = vmatpush.msra.mxu0 %v4860
      %10260 = vmatpush.msra.mxu0 %v4859
      %10261 = vmatpush.msra.mxu0 %v4858
      %10262 = vmatpush.msra.mxu0 %v4857
      %10263 = vmatmul.f32.gmra.mxu0 %v10056
      %v10264 = vpop.f32.mrf.mxu0
      %v10265 = vadd.f32 %v9864, %v10264
      %10266 = vmatmul.f32.gmra.mxu0 %v10059
      %v10267 = vpop.f32.mrf.mxu0
      %v10268 = vadd.f32 %v9867, %v10267
      %10269 = vmatmul.f32.gmra.mxu0 %v10062
      %v10270 = vpop.f32.mrf.mxu0
      %v10271 = vadd.f32 %v9870, %v10270
      %10272 = vmatmul.f32.gmra.mxu0 %v10065
      %v10273 = vpop.f32.mrf.mxu0
      %v10274 = vadd.f32 %v9873, %v10273
      %10275 = vmatmul.f32.gmra.mxu0 %v10068
      %v10276 = vpop.f32.mrf.mxu0
      %v10277 = vadd.f32 %v9876, %v10276
      %10278 = vmatmul.f32.gmra.mxu0 %v10071
      %v10279 = vpop.f32.mrf.mxu0
      %v10280 = vadd.f32 %v9879, %v10279
      %10281 = vmatmul.f32.gmra.mxu0 %v10074
      %v10282 = vpop.f32.mrf.mxu0
      %v10283 = vadd.f32 %v9882, %v10282
      %10284 = vmatmul.f32.gmra.mxu0 %v10077
      %v10285 = vpop.f32.mrf.mxu0
      %v10286 = vadd.f32 %v9885, %v10285
      %10287 = vmatmul.f32.gmra.mxu0 %v10080
      %v10288 = vpop.f32.mrf.mxu0
      %v10289 = vadd.f32 %v9888, %v10288
      %10290 = vmatmul.f32.gmra.mxu0 %v10083
      %v10291 = vpop.f32.mrf.mxu0
      %v10292 = vadd.f32 %v9891, %v10291
      %10293 = vmatmul.f32.gmra.mxu0 %v10086
      %v10294 = vpop.f32.mrf.mxu0
      %v10295 = vadd.f32 %v9894, %v10294
      %10296 = vmatmul.f32.gmra.mxu0 %v10089
      %v10297 = vpop.f32.mrf.mxu0
      %v10298 = vadd.f32 %v9897, %v10297
      %10299 = vmatmul.f32.gmra.mxu0 %v10092
      %v10300 = vpop.f32.mrf.mxu0
      %v10301 = vadd.f32 %v9900, %v10300
      %10302 = vmatmul.f32.gmra.mxu0 %v10095
      %v10303 = vpop.f32.mrf.mxu0
      %v10304 = vadd.f32 %v9903, %v10303
      %10305 = vmatmul.f32.gmra.mxu0 %v10098
      %v10306 = vpop.f32.mrf.mxu0
      %v10307 = vadd.f32 %v9906, %v10306
      %10308 = vmatmul.f32.gmra.mxu0 %v10101
      %v10309 = vpop.f32.mrf.mxu0
      %v10310 = vadd.f32 %v9909, %v10309
      %10311 = vmatmul.f32.gmra.mxu0 %v10104
      %v10312 = vpop.f32.mrf.mxu0
      %v10313 = vadd.f32 %v9912, %v10312
      %10314 = vmatmul.f32.gmra.mxu0 %v10107
      %v10315 = vpop.f32.mrf.mxu0
      %v10316 = vadd.f32 %v9915, %v10315
      %10317 = vmatmul.f32.gmra.mxu0 %v10110
      %v10318 = vpop.f32.mrf.mxu0
      %v10319 = vadd.f32 %v9918, %v10318
      %10320 = vmatmul.f32.gmra.mxu0 %v10113
      %v10321 = vpop.f32.mrf.mxu0
      %v10322 = vadd.f32 %v9921, %v10321
      %10323 = vmatmul.f32.gmra.mxu0 %v10116
      %v10324 = vpop.f32.mrf.mxu0
      %v10325 = vadd.f32 %v9924, %v10324
      %10326 = vmatmul.f32.gmra.mxu0 %v10119
      %v10327 = vpop.f32.mrf.mxu0
      %v10328 = vadd.f32 %v9927, %v10327
      %10329 = vmatmul.f32.gmra.mxu0 %v10122
      %v10330 = vpop.f32.mrf.mxu0
      %v10331 = vadd.f32 %v9930, %v10330
      %10332 = vmatmul.f32.gmra.mxu0 %v10125
      %v10333 = vpop.f32.mrf.mxu0
      %v10334 = vadd.f32 %v9933, %v10333
      %10335 = vmatmul.f32.gmra.mxu0 %v10128
      %v10336 = vpop.f32.mrf.mxu0
      %v10337 = vadd.f32 %v9936, %v10336
      %10338 = vmatmul.f32.gmra.mxu0 %v10131
      %v10339 = vpop.f32.mrf.mxu0
      %v10340 = vadd.f32 %v9939, %v10339
      %10341 = vmatmul.f32.gmra.mxu0 %v10134
      %v10342 = vpop.f32.mrf.mxu0
      %v10343 = vadd.f32 %v9942, %v10342
      %10344 = vmatmul.f32.gmra.mxu0 %v10137
      %v10345 = vpop.f32.mrf.mxu0
      %v10346 = vadd.f32 %v9945, %v10345
      %10347 = vmatmul.f32.gmra.mxu0 %v10140
      %v10348 = vpop.f32.mrf.mxu0
      %v10349 = vadd.f32 %v9948, %v10348
      %10350 = vmatmul.f32.gmra.mxu0 %v10143
      %v10351 = vpop.f32.mrf.mxu0
      %v10352 = vadd.f32 %v9951, %v10351
      %10353 = vmatmul.f32.gmra.mxu0 %v10146
      %v10354 = vpop.f32.mrf.mxu0
      %v10355 = vadd.f32 %v9954, %v10354
      %10356 = vmatmul.f32.gmra.mxu0 %v10149
      %v10357 = vpop.f32.mrf.mxu0
      %v10358 = vadd.f32 %v9957, %v10357
      %10359 = vmatmul.f32.gmra.mxu0 %v10152
      %v10360 = vpop.f32.mrf.mxu0
      %v10361 = vadd.f32 %v9960, %v10360
      %10362 = vmatmul.f32.gmra.mxu0 %v10155
      %v10363 = vpop.f32.mrf.mxu0
      %v10364 = vadd.f32 %v9963, %v10363
      %10365 = vmatmul.f32.gmra.mxu0 %v10158
      %v10366 = vpop.f32.mrf.mxu0
      %v10367 = vadd.f32 %v9966, %v10366
      %10368 = vmatmul.f32.gmra.mxu0 %v10161
      %v10369 = vpop.f32.mrf.mxu0
      %v10370 = vadd.f32 %v9969, %v10369
      %10371 = vmatmul.f32.gmra.mxu0 %v10164
      %v10372 = vpop.f32.mrf.mxu0
      %v10373 = vadd.f32 %v9972, %v10372
      %10374 = vmatmul.f32.gmra.mxu0 %v10167
      %v10375 = vpop.f32.mrf.mxu0
      %v10376 = vadd.f32 %v9975, %v10375
      %10377 = vmatmul.f32.gmra.mxu0 %v10170
      %v10378 = vpop.f32.mrf.mxu0
      %v10379 = vadd.f32 %v9978, %v10378
      %10380 = vmatmul.f32.gmra.mxu0 %v10173
      %v10381 = vpop.f32.mrf.mxu0
      %v10382 = vadd.f32 %v9981, %v10381
      %10383 = vmatmul.f32.gmra.mxu0 %v10176
      %v10384 = vpop.f32.mrf.mxu0
      %v10385 = vadd.f32 %v9984, %v10384
      %10386 = vmatmul.f32.gmra.mxu0 %v10179
      %v10387 = vpop.f32.mrf.mxu0
      %v10388 = vadd.f32 %v9987, %v10387
      %10389 = vmatmul.f32.gmra.mxu0 %v10182
      %v10390 = vpop.f32.mrf.mxu0
      %v10391 = vadd.f32 %v9990, %v10390
      %10392 = vmatmul.f32.gmra.mxu0 %v10185
      %v10393 = vpop.f32.mrf.mxu0
      %v10394 = vadd.f32 %v9993, %v10393
      %10395 = vmatmul.f32.gmra.mxu0 %v10188
      %v10396 = vpop.f32.mrf.mxu0
      %v10397 = vadd.f32 %v9996, %v10396
      %10398 = vmatmul.f32.gmra.mxu0 %v10191
      %v10399 = vpop.f32.mrf.mxu0
      %v10400 = vadd.f32 %v9999, %v10399
      %10401 = vmatmul.f32.gmra.mxu0 %v10194
      %v10402 = vpop.f32.mrf.mxu0
      %v10403 = vadd.f32 %v10002, %v10402
      %10404 = vmatmul.f32.gmra.mxu0 %v10197
      %v10405 = vpop.f32.mrf.mxu0
      %v10406 = vadd.f32 %v10005, %v10405
      %10407 = vmatmul.f32.gmra.mxu0 %v10200
      %v10408 = vpop.f32.mrf.mxu0
      %v10409 = vadd.f32 %v10008, %v10408
      %10410 = vmatmul.f32.gmra.mxu0 %v10203
      %v10411 = vpop.f32.mrf.mxu0
      %v10412 = vadd.f32 %v10011, %v10411
      %10413 = vmatmul.f32.gmra.mxu0 %v10206
      %v10414 = vpop.f32.mrf.mxu0
      %v10415 = vadd.f32 %v10014, %v10414
      %10416 = vmatmul.f32.gmra.mxu0 %v10209
      %v10417 = vpop.f32.mrf.mxu0
      %v10418 = vadd.f32 %v10017, %v10417
      %10419 = vmatmul.f32.gmra.mxu0 %v10212
      %v10420 = vpop.f32.mrf.mxu0
      %v10421 = vadd.f32 %v10020, %v10420
      %10422 = vmatmul.f32.gmra.mxu0 %v10215
      %v10423 = vpop.f32.mrf.mxu0
      %v10424 = vadd.f32 %v10023, %v10423
      %10425 = vmatmul.f32.gmra.mxu0 %v10218
      %v10426 = vpop.f32.mrf.mxu0
      %v10427 = vadd.f32 %v10026, %v10426
      %10428 = vmatmul.f32.gmra.mxu0 %v10221
      %v10429 = vpop.f32.mrf.mxu0
      %v10430 = vadd.f32 %v10029, %v10429
      %10431 = vmatmul.f32.gmra.mxu0 %v10224
      %v10432 = vpop.f32.mrf.mxu0
      %v10433 = vadd.f32 %v10032, %v10432
      %10434 = vmatmul.f32.gmra.mxu0 %v10227
      %v10435 = vpop.f32.mrf.mxu0
      %v10436 = vadd.f32 %v10035, %v10435
      %10437 = vmatmul.f32.gmra.mxu0 %v10230
      %v10438 = vpop.f32.mrf.mxu0
      %v10439 = vadd.f32 %v10038, %v10438
      %10440 = vmatmul.f32.gmra.mxu0 %v10233
      %v10441 = vpop.f32.mrf.mxu0
      %v10442 = vadd.f32 %v10041, %v10441
      %10443 = vmatmul.f32.gmra.mxu0 %v10236
      %v10444 = vpop.f32.mrf.mxu0
      %v10445 = vadd.f32 %v10044, %v10444
      %10446 = vmatmul.f32.gmra.mxu0 %v10239
      %v10447 = vpop.f32.mrf.mxu0
      %v10448 = vadd.f32 %v10047, %v10447
      %10449 = vmatmul.f32.gmra.mxu0 %v10242
      %v10450 = vpop.f32.mrf.mxu0
      %v10451 = vadd.f32 %v10050, %v10450
      %10452 = vmatmul.f32.gmra.mxu0 %v10245
      %v10453 = vpop.f32.mrf.mxu0
      %v10454 = vadd.f32 %v10053, %v10453
      %10455 = vdwg.mxu0
      %vm10456 = vcmp.gt.f32.partialorder %v675, 0.0
      %vm10457 = vcmp.gt.f32.partialorder %v676, 0.0
      %vm10458 = vcmp.gt.f32.partialorder %v677, 0.0
      %vm10459 = vcmp.gt.f32.partialorder %v678, 0.0
      %vm10460 = vcmp.gt.f32.partialorder %v679, 0.0
      %vm10461 = vcmp.gt.f32.partialorder %v680, 0.0
      %vm10462 = vcmp.gt.f32.partialorder %v681, 0.0
      %vm10463 = vcmp.gt.f32.partialorder %v682, 0.0
      %vm10464 = vcmp.gt.f32.partialorder %v683, 0.0
      %vm10465 = vcmp.gt.f32.partialorder %v684, 0.0
      %vm10466 = vcmp.gt.f32.partialorder %v685, 0.0
      %vm10467 = vcmp.gt.f32.partialorder %v686, 0.0
      %vm10468 = vcmp.gt.f32.partialorder %v687, 0.0
      %vm10469 = vcmp.gt.f32.partialorder %v688, 0.0
      %vm10470 = vcmp.gt.f32.partialorder %v689, 0.0
      %vm10471 = vcmp.gt.f32.partialorder %v690, 0.0
      %vm10472 = vcmp.gt.f32.partialorder %v691, 0.0
      %vm10473 = vcmp.gt.f32.partialorder %v692, 0.0
      %vm10474 = vcmp.gt.f32.partialorder %v693, 0.0
      %vm10475 = vcmp.gt.f32.partialorder %v694, 0.0
      %vm10476 = vcmp.gt.f32.partialorder %v695, 0.0
      %vm10477 = vcmp.gt.f32.partialorder %v696, 0.0
      %vm10478 = vcmp.gt.f32.partialorder %v697, 0.0
      %vm10479 = vcmp.gt.f32.partialorder %v698, 0.0
      %vm10480 = vcmp.gt.f32.partialorder %v699, 0.0
      %vm10481 = vcmp.gt.f32.partialorder %v700, 0.0
      %vm10482 = vcmp.gt.f32.partialorder %v701, 0.0
      %vm10483 = vcmp.gt.f32.partialorder %v702, 0.0
      %vm10484 = vcmp.gt.f32.partialorder %v703, 0.0
      %vm10485 = vcmp.gt.f32.partialorder %v704, 0.0
      %vm10486 = vcmp.gt.f32.partialorder %v705, 0.0
      %vm10487 = vcmp.gt.f32.partialorder %v706, 0.0
      %vm10488 = vcmp.gt.f32.partialorder %v707, 0.0
      %vm10489 = vcmp.gt.f32.partialorder %v708, 0.0
      %vm10490 = vcmp.gt.f32.partialorder %v709, 0.0
      %vm10491 = vcmp.gt.f32.partialorder %v710, 0.0
      %vm10492 = vcmp.gt.f32.partialorder %v711, 0.0
      %vm10493 = vcmp.gt.f32.partialorder %v712, 0.0
      %vm10494 = vcmp.gt.f32.partialorder %v713, 0.0
      %vm10495 = vcmp.gt.f32.partialorder %v714, 0.0
      %vm10496 = vcmp.gt.f32.partialorder %v715, 0.0
      %vm10497 = vcmp.gt.f32.partialorder %v716, 0.0
      %vm10498 = vcmp.gt.f32.partialorder %v717, 0.0
      %vm10499 = vcmp.gt.f32.partialorder %v718, 0.0
      %vm10500 = vcmp.gt.f32.partialorder %v719, 0.0
      %vm10501 = vcmp.gt.f32.partialorder %v720, 0.0
      %vm10502 = vcmp.gt.f32.partialorder %v721, 0.0
      %vm10503 = vcmp.gt.f32.partialorder %v722, 0.0
      %vm10504 = vcmp.gt.f32.partialorder %v723, 0.0
      %vm10505 = vcmp.gt.f32.partialorder %v724, 0.0
      %vm10506 = vcmp.gt.f32.partialorder %v725, 0.0
      %vm10507 = vcmp.gt.f32.partialorder %v726, 0.0
      %vm10508 = vcmp.gt.f32.partialorder %v727, 0.0
      %vm10509 = vcmp.gt.f32.partialorder %v728, 0.0
      %vm10510 = vcmp.gt.f32.partialorder %v729, 0.0
      %vm10511 = vcmp.gt.f32.partialorder %v730, 0.0
      %vm10512 = vcmp.gt.f32.partialorder %v731, 0.0
      %vm10513 = vcmp.gt.f32.partialorder %v732, 0.0
      %vm10514 = vcmp.gt.f32.partialorder %v733, 0.0
      %vm10515 = vcmp.gt.f32.partialorder %v734, 0.0
      %vm10516 = vcmp.gt.f32.partialorder %v735, 0.0
      %vm10517 = vcmp.gt.f32.partialorder %v736, 0.0
      %vm10518 = vcmp.gt.f32.partialorder %v737, 0.0
      %vm10519 = vcmp.gt.f32.partialorder %v738, 0.0
      %v10520 = vsel %vm10456, 1, 0
      %v10521 = vsel %vm10457, 1, 0
      %v10522 = vsel %vm10458, 1, 0
      %v10523 = vsel %vm10459, 1, 0
      %v10524 = vsel %vm10460, 1, 0
      %v10525 = vsel %vm10461, 1, 0
      %v10526 = vsel %vm10462, 1, 0
      %v10527 = vsel %vm10463, 1, 0
      %v10528 = vsel %vm10464, 1, 0
      %v10529 = vsel %vm10465, 1, 0
      %v10530 = vsel %vm10466, 1, 0
      %v10531 = vsel %vm10467, 1, 0
      %v10532 = vsel %vm10468, 1, 0
      %v10533 = vsel %vm10469, 1, 0
      %v10534 = vsel %vm10470, 1, 0
      %v10535 = vsel %vm10471, 1, 0
      %v10536 = vsel %vm10472, 1, 0
      %v10537 = vsel %vm10473, 1, 0
      %v10538 = vsel %vm10474, 1, 0
      %v10539 = vsel %vm10475, 1, 0
      %v10540 = vsel %vm10476, 1, 0
      %v10541 = vsel %vm10477, 1, 0
      %v10542 = vsel %vm10478, 1, 0
      %v10543 = vsel %vm10479, 1, 0
      %v10544 = vsel %vm10480, 1, 0
      %v10545 = vsel %vm10481, 1, 0
      %v10546 = vsel %vm10482, 1, 0
      %v10547 = vsel %vm10483, 1, 0
      %v10548 = vsel %vm10484, 1, 0
      %v10549 = vsel %vm10485, 1, 0
      %v10550 = vsel %vm10486, 1, 0
      %v10551 = vsel %vm10487, 1, 0
      %v10552 = vsel %vm10488, 1, 0
      %v10553 = vsel %vm10489, 1, 0
      %v10554 = vsel %vm10490, 1, 0
      %v10555 = vsel %vm10491, 1, 0
      %v10556 = vsel %vm10492, 1, 0
      %v10557 = vsel %vm10493, 1, 0
      %v10558 = vsel %vm10494, 1, 0
      %v10559 = vsel %vm10495, 1, 0
      %v10560 = vsel %vm10496, 1, 0
      %v10561 = vsel %vm10497, 1, 0
      %v10562 = vsel %vm10498, 1, 0
      %v10563 = vsel %vm10499, 1, 0
      %v10564 = vsel %vm10500, 1, 0
      %v10565 = vsel %vm10501, 1, 0
      %v10566 = vsel %vm10502, 1, 0
      %v10567 = vsel %vm10503, 1, 0
      %v10568 = vsel %vm10504, 1, 0
      %v10569 = vsel %vm10505, 1, 0
      %v10570 = vsel %vm10506, 1, 0
      %v10571 = vsel %vm10507, 1, 0
      %v10572 = vsel %vm10508, 1, 0
      %v10573 = vsel %vm10509, 1, 0
      %v10574 = vsel %vm10510, 1, 0
      %v10575 = vsel %vm10511, 1, 0
      %v10576 = vsel %vm10512, 1, 0
      %v10577 = vsel %vm10513, 1, 0
      %v10578 = vsel %vm10514, 1, 0
      %v10579 = vsel %vm10515, 1, 0
      %v10580 = vsel %vm10516, 1, 0
      %v10581 = vsel %vm10517, 1, 0
      %v10582 = vsel %vm10518, 1, 0
      %v10583 = vsel %vm10519, 1, 0
      %10584 = vset.pattern.permute.xlu0 0
      %10585 = vperm.xlu0 %10584, %v10520
      %v10586 = vpop.permute.xlu0 %10585
      %10587 = vset.pattern.permute.xlu0 0
      %10588 = vperm.xlu0 %10587, %v10521
      %v10589 = vpop.permute.xlu0 %10588
      %10590 = vset.pattern.permute.xlu0 0
      %10591 = vperm.xlu0 %10590, %v10522
      %v10592 = vpop.permute.xlu0 %10591
      %10593 = vset.pattern.permute.xlu0 0
      %10594 = vperm.xlu0 %10593, %v10523
      %v10595 = vpop.permute.xlu0 %10594
      %10596 = vset.pattern.permute.xlu0 0
      %10597 = vperm.xlu0 %10596, %v10524
      %v10598 = vpop.permute.xlu0 %10597
      %10599 = vset.pattern.permute.xlu0 0
      %10600 = vperm.xlu0 %10599, %v10525
      %v10601 = vpop.permute.xlu0 %10600
      %10602 = vset.pattern.permute.xlu0 0
      %10603 = vperm.xlu0 %10602, %v10526
      %v10604 = vpop.permute.xlu0 %10603
      %10605 = vset.pattern.permute.xlu0 0
      %10606 = vperm.xlu0 %10605, %v10527
      %v10607 = vpop.permute.xlu0 %10606
      %10608 = vset.pattern.permute.xlu0 0
      %10609 = vperm.xlu0 %10608, %v10528
      %v10610 = vpop.permute.xlu0 %10609
      %10611 = vset.pattern.permute.xlu0 0
      %10612 = vperm.xlu0 %10611, %v10529
      %v10613 = vpop.permute.xlu0 %10612
      %10614 = vset.pattern.permute.xlu0 0
      %10615 = vperm.xlu0 %10614, %v10530
      %v10616 = vpop.permute.xlu0 %10615
      %10617 = vset.pattern.permute.xlu0 0
      %10618 = vperm.xlu0 %10617, %v10531
      %v10619 = vpop.permute.xlu0 %10618
      %10620 = vset.pattern.permute.xlu0 0
      %10621 = vperm.xlu0 %10620, %v10532
      %v10622 = vpop.permute.xlu0 %10621
      %10623 = vset.pattern.permute.xlu0 0
      %10624 = vperm.xlu0 %10623, %v10533
      %v10625 = vpop.permute.xlu0 %10624
      %10626 = vset.pattern.permute.xlu0 0
      %10627 = vperm.xlu0 %10626, %v10534
      %v10628 = vpop.permute.xlu0 %10627
      %10629 = vset.pattern.permute.xlu0 0
      %10630 = vperm.xlu0 %10629, %v10535
      %v10631 = vpop.permute.xlu0 %10630
      %10632 = vset.pattern.permute.xlu0 0
      %10633 = vperm.xlu0 %10632, %v10536
      %v10634 = vpop.permute.xlu0 %10633
      %10635 = vset.pattern.permute.xlu0 0
      %10636 = vperm.xlu0 %10635, %v10537
      %v10637 = vpop.permute.xlu0 %10636
      %10638 = vset.pattern.permute.xlu0 0
      %10639 = vperm.xlu0 %10638, %v10538
      %v10640 = vpop.permute.xlu0 %10639
      %10641 = vset.pattern.permute.xlu0 0
      %10642 = vperm.xlu0 %10641, %v10539
      %v10643 = vpop.permute.xlu0 %10642
      %10644 = vset.pattern.permute.xlu0 0
      %10645 = vperm.xlu0 %10644, %v10540
      %v10646 = vpop.permute.xlu0 %10645
      %10647 = vset.pattern.permute.xlu0 0
      %10648 = vperm.xlu0 %10647, %v10541
      %v10649 = vpop.permute.xlu0 %10648
      %10650 = vset.pattern.permute.xlu0 0
      %10651 = vperm.xlu0 %10650, %v10542
      %v10652 = vpop.permute.xlu0 %10651
      %10653 = vset.pattern.permute.xlu0 0
      %10654 = vperm.xlu0 %10653, %v10543
      %v10655 = vpop.permute.xlu0 %10654
      %10656 = vset.pattern.permute.xlu0 0
      %10657 = vperm.xlu0 %10656, %v10544
      %v10658 = vpop.permute.xlu0 %10657
      %10659 = vset.pattern.permute.xlu0 0
      %10660 = vperm.xlu0 %10659, %v10545
      %v10661 = vpop.permute.xlu0 %10660
      %10662 = vset.pattern.permute.xlu0 0
      %10663 = vperm.xlu0 %10662, %v10546
      %v10664 = vpop.permute.xlu0 %10663
      %10665 = vset.pattern.permute.xlu0 0
      %10666 = vperm.xlu0 %10665, %v10547
      %v10667 = vpop.permute.xlu0 %10666
      %10668 = vset.pattern.permute.xlu0 0
      %10669 = vperm.xlu0 %10668, %v10548
      %v10670 = vpop.permute.xlu0 %10669
      %10671 = vset.pattern.permute.xlu0 0
      %10672 = vperm.xlu0 %10671, %v10549
      %v10673 = vpop.permute.xlu0 %10672
      %10674 = vset.pattern.permute.xlu0 0
      %10675 = vperm.xlu0 %10674, %v10550
      %v10676 = vpop.permute.xlu0 %10675
      %10677 = vset.pattern.permute.xlu0 0
      %10678 = vperm.xlu0 %10677, %v10551
      %v10679 = vpop.permute.xlu0 %10678
      %10680 = vset.pattern.permute.xlu0 0
      %10681 = vperm.xlu0 %10680, %v10552
      %v10682 = vpop.permute.xlu0 %10681
      %10683 = vset.pattern.permute.xlu0 0
      %10684 = vperm.xlu0 %10683, %v10553
      %v10685 = vpop.permute.xlu0 %10684
      %10686 = vset.pattern.permute.xlu0 0
      %10687 = vperm.xlu0 %10686, %v10554
      %v10688 = vpop.permute.xlu0 %10687
      %10689 = vset.pattern.permute.xlu0 0
      %10690 = vperm.xlu0 %10689, %v10555
      %v10691 = vpop.permute.xlu0 %10690
      %10692 = vset.pattern.permute.xlu0 0
      %10693 = vperm.xlu0 %10692, %v10556
      %v10694 = vpop.permute.xlu0 %10693
      %10695 = vset.pattern.permute.xlu0 0
      %10696 = vperm.xlu0 %10695, %v10557
      %v10697 = vpop.permute.xlu0 %10696
      %10698 = vset.pattern.permute.xlu0 0
      %10699 = vperm.xlu0 %10698, %v10558
      %v10700 = vpop.permute.xlu0 %10699
      %10701 = vset.pattern.permute.xlu0 0
      %10702 = vperm.xlu0 %10701, %v10559
      %v10703 = vpop.permute.xlu0 %10702
      %10704 = vset.pattern.permute.xlu0 0
      %10705 = vperm.xlu0 %10704, %v10560
      %v10706 = vpop.permute.xlu0 %10705
      %10707 = vset.pattern.permute.xlu0 0
      %10708 = vperm.xlu0 %10707, %v10561
      %v10709 = vpop.permute.xlu0 %10708
      %10710 = vset.pattern.permute.xlu0 0
      %10711 = vperm.xlu0 %10710, %v10562
      %v10712 = vpop.permute.xlu0 %10711
      %10713 = vset.pattern.permute.xlu0 0
      %10714 = vperm.xlu0 %10713, %v10563
      %v10715 = vpop.permute.xlu0 %10714
      %10716 = vset.pattern.permute.xlu0 0
      %10717 = vperm.xlu0 %10716, %v10564
      %v10718 = vpop.permute.xlu0 %10717
      %10719 = vset.pattern.permute.xlu0 0
      %10720 = vperm.xlu0 %10719, %v10565
      %v10721 = vpop.permute.xlu0 %10720
      %10722 = vset.pattern.permute.xlu0 0
      %10723 = vperm.xlu0 %10722, %v10566
      %v10724 = vpop.permute.xlu0 %10723
      %10725 = vset.pattern.permute.xlu0 0
      %10726 = vperm.xlu0 %10725, %v10567
      %v10727 = vpop.permute.xlu0 %10726
      %10728 = vset.pattern.permute.xlu0 0
      %10729 = vperm.xlu0 %10728, %v10568
      %v10730 = vpop.permute.xlu0 %10729
      %10731 = vset.pattern.permute.xlu0 0
      %10732 = vperm.xlu0 %10731, %v10569
      %v10733 = vpop.permute.xlu0 %10732
      %10734 = vset.pattern.permute.xlu0 0
      %10735 = vperm.xlu0 %10734, %v10570
      %v10736 = vpop.permute.xlu0 %10735
      %10737 = vset.pattern.permute.xlu0 0
      %10738 = vperm.xlu0 %10737, %v10571
      %v10739 = vpop.permute.xlu0 %10738
      %10740 = vset.pattern.permute.xlu0 0
      %10741 = vperm.xlu0 %10740, %v10572
      %v10742 = vpop.permute.xlu0 %10741
      %10743 = vset.pattern.permute.xlu0 0
      %10744 = vperm.xlu0 %10743, %v10573
      %v10745 = vpop.permute.xlu0 %10744
      %10746 = vset.pattern.permute.xlu0 0
      %10747 = vperm.xlu0 %10746, %v10574
      %v10748 = vpop.permute.xlu0 %10747
      %10749 = vset.pattern.permute.xlu0 0
      %10750 = vperm.xlu0 %10749, %v10575
      %v10751 = vpop.permute.xlu0 %10750
      %10752 = vset.pattern.permute.xlu0 0
      %10753 = vperm.xlu0 %10752, %v10576
      %v10754 = vpop.permute.xlu0 %10753
      %10755 = vset.pattern.permute.xlu0 0
      %10756 = vperm.xlu0 %10755, %v10577
      %v10757 = vpop.permute.xlu0 %10756
      %10758 = vset.pattern.permute.xlu0 0
      %10759 = vperm.xlu0 %10758, %v10578
      %v10760 = vpop.permute.xlu0 %10759
      %10761 = vset.pattern.permute.xlu0 0
      %10762 = vperm.xlu0 %10761, %v10579
      %v10763 = vpop.permute.xlu0 %10762
      %10764 = vset.pattern.permute.xlu0 0
      %10765 = vperm.xlu0 %10764, %v10580
      %v10766 = vpop.permute.xlu0 %10765
      %10767 = vset.pattern.permute.xlu0 0
      %10768 = vperm.xlu0 %10767, %v10581
      %v10769 = vpop.permute.xlu0 %10768
      %10770 = vset.pattern.permute.xlu0 0
      %10771 = vperm.xlu0 %10770, %v10582
      %v10772 = vpop.permute.xlu0 %10771
      %10773 = vset.pattern.permute.xlu0 0
      %10774 = vperm.xlu0 %10773, %v10583
      %v10775 = vpop.permute.xlu0 %10774
      %vm10776 = vcmp.eq.s32.totalorder %v10586, 1
      %vm10777 = vcmp.eq.s32.totalorder %v10589, 1
      %vm10778 = vcmp.eq.s32.totalorder %v10592, 1
      %vm10779 = vcmp.eq.s32.totalorder %v10595, 1
      %vm10780 = vcmp.eq.s32.totalorder %v10598, 1
      %vm10781 = vcmp.eq.s32.totalorder %v10601, 1
      %vm10782 = vcmp.eq.s32.totalorder %v10604, 1
      %vm10783 = vcmp.eq.s32.totalorder %v10607, 1
      %vm10784 = vcmp.eq.s32.totalorder %v10610, 1
      %vm10785 = vcmp.eq.s32.totalorder %v10613, 1
      %vm10786 = vcmp.eq.s32.totalorder %v10616, 1
      %vm10787 = vcmp.eq.s32.totalorder %v10619, 1
      %vm10788 = vcmp.eq.s32.totalorder %v10622, 1
      %vm10789 = vcmp.eq.s32.totalorder %v10625, 1
      %vm10790 = vcmp.eq.s32.totalorder %v10628, 1
      %vm10791 = vcmp.eq.s32.totalorder %v10631, 1
      %vm10792 = vcmp.eq.s32.totalorder %v10634, 1
      %vm10793 = vcmp.eq.s32.totalorder %v10637, 1
      %vm10794 = vcmp.eq.s32.totalorder %v10640, 1
      %vm10795 = vcmp.eq.s32.totalorder %v10643, 1
      %vm10796 = vcmp.eq.s32.totalorder %v10646, 1
      %vm10797 = vcmp.eq.s32.totalorder %v10649, 1
      %vm10798 = vcmp.eq.s32.totalorder %v10652, 1
      %vm10799 = vcmp.eq.s32.totalorder %v10655, 1
      %vm10800 = vcmp.eq.s32.totalorder %v10658, 1
      %vm10801 = vcmp.eq.s32.totalorder %v10661, 1
      %vm10802 = vcmp.eq.s32.totalorder %v10664, 1
      %vm10803 = vcmp.eq.s32.totalorder %v10667, 1
      %vm10804 = vcmp.eq.s32.totalorder %v10670, 1
      %vm10805 = vcmp.eq.s32.totalorder %v10673, 1
      %vm10806 = vcmp.eq.s32.totalorder %v10676, 1
      %vm10807 = vcmp.eq.s32.totalorder %v10679, 1
      %vm10808 = vcmp.eq.s32.totalorder %v10682, 1
      %vm10809 = vcmp.eq.s32.totalorder %v10685, 1
      %vm10810 = vcmp.eq.s32.totalorder %v10688, 1
      %vm10811 = vcmp.eq.s32.totalorder %v10691, 1
      %vm10812 = vcmp.eq.s32.totalorder %v10694, 1
      %vm10813 = vcmp.eq.s32.totalorder %v10697, 1
      %vm10814 = vcmp.eq.s32.totalorder %v10700, 1
      %vm10815 = vcmp.eq.s32.totalorder %v10703, 1
      %vm10816 = vcmp.eq.s32.totalorder %v10706, 1
      %vm10817 = vcmp.eq.s32.totalorder %v10709, 1
      %vm10818 = vcmp.eq.s32.totalorder %v10712, 1
      %vm10819 = vcmp.eq.s32.totalorder %v10715, 1
      %vm10820 = vcmp.eq.s32.totalorder %v10718, 1
      %vm10821 = vcmp.eq.s32.totalorder %v10721, 1
      %vm10822 = vcmp.eq.s32.totalorder %v10724, 1
      %vm10823 = vcmp.eq.s32.totalorder %v10727, 1
      %vm10824 = vcmp.eq.s32.totalorder %v10730, 1
      %vm10825 = vcmp.eq.s32.totalorder %v10733, 1
      %vm10826 = vcmp.eq.s32.totalorder %v10736, 1
      %vm10827 = vcmp.eq.s32.totalorder %v10739, 1
      %vm10828 = vcmp.eq.s32.totalorder %v10742, 1
      %vm10829 = vcmp.eq.s32.totalorder %v10745, 1
      %vm10830 = vcmp.eq.s32.totalorder %v10748, 1
      %vm10831 = vcmp.eq.s32.totalorder %v10751, 1
      %vm10832 = vcmp.eq.s32.totalorder %v10754, 1
      %vm10833 = vcmp.eq.s32.totalorder %v10757, 1
      %vm10834 = vcmp.eq.s32.totalorder %v10760, 1
      %vm10835 = vcmp.eq.s32.totalorder %v10763, 1
      %vm10836 = vcmp.eq.s32.totalorder %v10766, 1
      %vm10837 = vcmp.eq.s32.totalorder %v10769, 1
      %vm10838 = vcmp.eq.s32.totalorder %v10772, 1
      %vm10839 = vcmp.eq.s32.totalorder %v10775, 1
      %v10840 = vsel %vm10776, %v10265, %v483
      %v10841 = vsel %vm10777, %v10268, %v484
      %v10842 = vsel %vm10778, %v10271, %v485
      %v10843 = vsel %vm10779, %v10274, %v486
      %v10844 = vsel %vm10780, %v10277, %v487
      %v10845 = vsel %vm10781, %v10280, %v488
      %v10846 = vsel %vm10782, %v10283, %v489
      %v10847 = vsel %vm10783, %v10286, %v490
      %v10848 = vsel %vm10784, %v10289, %v491
      %v10849 = vsel %vm10785, %v10292, %v492
      %v10850 = vsel %vm10786, %v10295, %v493
      %v10851 = vsel %vm10787, %v10298, %v494
      %v10852 = vsel %vm10788, %v10301, %v495
      %v10853 = vsel %vm10789, %v10304, %v496
      %v10854 = vsel %vm10790, %v10307, %v497
      %v10855 = vsel %vm10791, %v10310, %v498
      %v10856 = vsel %vm10792, %v10313, %v499
      %v10857 = vsel %vm10793, %v10316, %v500
      %v10858 = vsel %vm10794, %v10319, %v501
      %v10859 = vsel %vm10795, %v10322, %v502
      %v10860 = vsel %vm10796, %v10325, %v503
      %v10861 = vsel %vm10797, %v10328, %v504
      %v10862 = vsel %vm10798, %v10331, %v505
      %v10863 = vsel %vm10799, %v10334, %v506
      %v10864 = vsel %vm10800, %v10337, %v507
      %v10865 = vsel %vm10801, %v10340, %v508
      %v10866 = vsel %vm10802, %v10343, %v509
      %v10867 = vsel %vm10803, %v10346, %v510
      %v10868 = vsel %vm10804, %v10349, %v511
      %v10869 = vsel %vm10805, %v10352, %v512
      %v10870 = vsel %vm10806, %v10355, %v513
      %v10871 = vsel %vm10807, %v10358, %v514
      %v10872 = vsel %vm10808, %v10361, %v515
      %v10873 = vsel %vm10809, %v10364, %v516
      %v10874 = vsel %vm10810, %v10367, %v517
      %v10875 = vsel %vm10811, %v10370, %v518
      %v10876 = vsel %vm10812, %v10373, %v519
      %v10877 = vsel %vm10813, %v10376, %v520
      %v10878 = vsel %vm10814, %v10379, %v521
      %v10879 = vsel %vm10815, %v10382, %v522
      %v10880 = vsel %vm10816, %v10385, %v523
      %v10881 = vsel %vm10817, %v10388, %v524
      %v10882 = vsel %vm10818, %v10391, %v525
      %v10883 = vsel %vm10819, %v10394, %v526
      %v10884 = vsel %vm10820, %v10397, %v527
      %v10885 = vsel %vm10821, %v10400, %v528
      %v10886 = vsel %vm10822, %v10403, %v529
      %v10887 = vsel %vm10823, %v10406, %v530
      %v10888 = vsel %vm10824, %v10409, %v531
      %v10889 = vsel %vm10825, %v10412, %v532
      %v10890 = vsel %vm10826, %v10415, %v533
      %v10891 = vsel %vm10827, %v10418, %v534
      %v10892 = vsel %vm10828, %v10421, %v535
      %v10893 = vsel %vm10829, %v10424, %v536
      %v10894 = vsel %vm10830, %v10427, %v537
      %v10895 = vsel %vm10831, %v10430, %v538
      %v10896 = vsel %vm10832, %v10433, %v539
      %v10897 = vsel %vm10833, %v10436, %v540
      %v10898 = vsel %vm10834, %v10439, %v541
      %v10899 = vsel %vm10835, %v10442, %v542
      %v10900 = vsel %vm10836, %v10445, %v543
      %v10901 = vsel %vm10837, %v10448, %v544
      %v10902 = vsel %vm10838, %v10451, %v545
      %v10903 = vsel %vm10839, %v10454, %v546
      %10904 = vst.msk [vmem:[%s481] sm:$0xff] %vm3107, %v10840
      %10905 = vst.msk [vmem:[%s481 + $0x8] sm:$0xff] %vm3107, %v10841
      %10906 = vst.msk [vmem:[%s481 + $0x10] sm:$0xff] %vm3107, %v10842
      %10907 = vst.msk [vmem:[%s481 + $0x18] sm:$0xff] %vm3107, %v10843
      %10908 = vst.msk [vmem:[%s481 + $0x20] sm:$0xff] %vm3107, %v10844
      %10909 = vst.msk [vmem:[%s481 + $0x28] sm:$0xff] %vm3107, %v10845
      %10910 = vst.msk [vmem:[%s481 + $0x30] sm:$0xff] %vm3107, %v10846
      %10911 = vst.msk [vmem:[%s481 + $0x38] sm:$0xff] %vm3107, %v10847
      %10912 = vst.msk [vmem:[%s481 + $0x40] sm:$0xff] %vm3107, %v10848
      %10913 = vst.msk [vmem:[%s481 + $0x48] sm:$0xff] %vm3107, %v10849
      %10914 = vst.msk [vmem:[%s481 + $0x50] sm:$0xff] %vm3107, %v10850
      %10915 = vst.msk [vmem:[%s481 + $0x58] sm:$0xff] %vm3107, %v10851
      %10916 = vst.msk [vmem:[%s481 + $0x60] sm:$0xff] %vm3107, %v10852
      %10917 = vst.msk [vmem:[%s481 + $0x68] sm:$0xff] %vm3107, %v10853
      %10918 = vst.msk [vmem:[%s481 + $0x70] sm:$0xff] %vm3107, %v10854
      %10919 = vst.msk [vmem:[%s481 + $0x78] sm:$0xff] %vm3107, %v10855
      %10920 = vst.msk [vmem:[%s481 + $0x80] sm:$0xff] %vm3107, %v10856
      %10921 = vst.msk [vmem:[%s481 + $0x88] sm:$0xff] %vm3107, %v10857
      %10922 = vst.msk [vmem:[%s481 + $0x90] sm:$0xff] %vm3107, %v10858
      %10923 = vst.msk [vmem:[%s481 + $0x98] sm:$0xff] %vm3107, %v10859
      %10924 = vst.msk [vmem:[%s481 + $0xa0] sm:$0xff] %vm3107, %v10860
      %10925 = vst.msk [vmem:[%s481 + $0xa8] sm:$0xff] %vm3107, %v10861
      %10926 = vst.msk [vmem:[%s481 + $0xb0] sm:$0xff] %vm3107, %v10862
      %10927 = vst.msk [vmem:[%s481 + $0xb8] sm:$0xff] %vm3107, %v10863
      %10928 = vst.msk [vmem:[%s481 + $0xc0] sm:$0xff] %vm3107, %v10864
      %10929 = vst.msk [vmem:[%s481 + $0xc8] sm:$0xff] %vm3107, %v10865
      %10930 = vst.msk [vmem:[%s481 + $0xd0] sm:$0xff] %vm3107, %v10866
      %10931 = vst.msk [vmem:[%s481 + $0xd8] sm:$0xff] %vm3107, %v10867
      %10932 = vst.msk [vmem:[%s481 + $0xe0] sm:$0xff] %vm3107, %v10868
      %10933 = vst.msk [vmem:[%s481 + $0xe8] sm:$0xff] %vm3107, %v10869
      %10934 = vst.msk [vmem:[%s481 + $0xf0] sm:$0xff] %vm3107, %v10870
      %10935 = vst.msk [vmem:[%s481 + $0xf8] sm:$0xff] %vm3107, %v10871
      %10936 = vst.msk [vmem:[%s481 + $0x100] sm:$0xff] %vm3107, %v10872
      %10937 = vst.msk [vmem:[%s481 + $0x108] sm:$0xff] %vm3107, %v10873
      %10938 = vst.msk [vmem:[%s481 + $0x110] sm:$0xff] %vm3107, %v10874
      %10939 = vst.msk [vmem:[%s481 + $0x118] sm:$0xff] %vm3107, %v10875
      %10940 = vst.msk [vmem:[%s481 + $0x120] sm:$0xff] %vm3107, %v10876
      %10941 = vst.msk [vmem:[%s481 + $0x128] sm:$0xff] %vm3107, %v10877
      %10942 = vst.msk [vmem:[%s481 + $0x130] sm:$0xff] %vm3107, %v10878
      %10943 = vst.msk [vmem:[%s481 + $0x138] sm:$0xff] %vm3107, %v10879
      %10944 = vst.msk [vmem:[%s481 + $0x140] sm:$0xff] %vm3107, %v10880
      %10945 = vst.msk [vmem:[%s481 + $0x148] sm:$0xff] %vm3107, %v10881
      %10946 = vst.msk [vmem:[%s481 + $0x150] sm:$0xff] %vm3107, %v10882
      %10947 = vst.msk [vmem:[%s481 + $0x158] sm:$0xff] %vm3107, %v10883
      %10948 = vst.msk [vmem:[%s481 + $0x160] sm:$0xff] %vm3107, %v10884
      %10949 = vst.msk [vmem:[%s481 + $0x168] sm:$0xff] %vm3107, %v10885
      %10950 = vst.msk [vmem:[%s481 + $0x170] sm:$0xff] %vm3107, %v10886
      %10951 = vst.msk [vmem:[%s481 + $0x178] sm:$0xff] %vm3107, %v10887
      %10952 = vst.msk [vmem:[%s481 + $0x180] sm:$0xff] %vm3107, %v10888
      %10953 = vst.msk [vmem:[%s481 + $0x188] sm:$0xff] %vm3107, %v10889
      %10954 = vst.msk [vmem:[%s481 + $0x190] sm:$0xff] %vm3107, %v10890
      %10955 = vst.msk [vmem:[%s481 + $0x198] sm:$0xff] %vm3107, %v10891
      %10956 = vst.msk [vmem:[%s481 + $0x1a0] sm:$0xff] %vm3107, %v10892
      %10957 = vst.msk [vmem:[%s481 + $0x1a8] sm:$0xff] %vm3107, %v10893
      %10958 = vst.msk [vmem:[%s481 + $0x1b0] sm:$0xff] %vm3107, %v10894
      %10959 = vst.msk [vmem:[%s481 + $0x1b8] sm:$0xff] %vm3107, %v10895
      %10960 = vst.msk [vmem:[%s481 + $0x1c0] sm:$0xff] %vm3107, %v10896
      %10961 = vst.msk [vmem:[%s481 + $0x1c8] sm:$0xff] %vm3107, %v10897
      %10962 = vst.msk [vmem:[%s481 + $0x1d0] sm:$0xff] %vm3107, %v10898
      %10963 = vst.msk [vmem:[%s481 + $0x1d8] sm:$0xff] %vm3107, %v10899
      %10964 = vst.msk [vmem:[%s481 + $0x1e0] sm:$0xff] %vm3107, %v10900
      %10965 = vst.msk [vmem:[%s481 + $0x1e8] sm:$0xff] %vm3107, %v10901
      %10966 = vst.msk [vmem:[%s481 + $0x1f0] sm:$0xff] %vm3107, %v10902
      %10967 = vst.msk [vmem:[%s481 + $0x1f8] sm:$0xff] %vm3107, %v10903
      %s10968 = smul.u32 64, %s23
      %p10969 = scmp.lt.s32.totalorder %s10968, 127
      %s10970 = scalar_select %p10969, %s10968, 127
      %s10971 = smul.addr %s10970, 8
      %s10972 = scalar_lea.vmem %s12, %s10971
      // Predicated region
      $region69: #{tpu_custom_call.1} parent=67 // pred_check
        %p10973 = pneg %p313
      $region70: #{tpu_custom_call.1} parent=67 // pred_check_branch
        %10975 = sbr.rel (%p10973) target = $region72
      $region71: #{tpu_custom_call.1} parent=67 // pred_region
        %s10976 = smul.u32 64, %s23
      $region72: #{tpu_custom_call.1} parent=67 // pred_fallthru
        _
    $region68: #{tpu_custom_call.1} parent=5 // pred_fallthru
      _
    %p10977 = scmp.le.s32.totalorder 2, %s18
    // Predicated region
    $region73: #{tpu_custom_call.1} parent=5 // pred_check
      %p10978 = pneg %p10977
    $region74: #{tpu_custom_call.1} parent=5 // pred_check_branch
      %10980 = sbr.rel (%p10978) target = $region76
    $region75: #{tpu_custom_call.1} parent=5 // pred_region
      %s10981 = ssub.s32 %s18, 2
      // Predicated region
      $region77: #{tpu_custom_call.1} parent=75 // pred_check
        %p10982 = pneg %p319
      $region78: #{tpu_custom_call.1} parent=75 // pred_check_branch
        %10984 = sbr.rel (%p10982) target = $region80
      $region79: #{tpu_custom_call.1} parent=75 // pred_region
        %s10985 = smul.u32 64, %s24
        %p10986 = scmp.lt.s32.totalorder %s10985, 127
        %s10987 = scalar_select %p10986, %s10985, 127
        %s10988 = smul.addr %s10987, 8
        %s10989 = scalar_lea.vmem %s12, %s10988
      $region80: #{tpu_custom_call.1} parent=75 // pred_fallthru
        _
    $region76: #{tpu_custom_call.1} parent=5 // pred_fallthru
      _
  $region6: #{tpu_custom_call.1} parent=0 // loop_footer
    %s22 = sadd.s32 1, %s18
  $region7: #{tpu_custom_call.1} parent=0 // loop_footer_branch
    %17 = sbr.rel target = $region3
  $region8: #{tpu_custom_call.1} parent=0 // loop_exit
    _

</llo_original>
